<compile_context>
chip_gen: v7x
topology: tpu7x:2x2x1
jax: 0.10.0
libtpu: 0.0.40
codegen_flags: <defaults>
</compile_context>

<pallas_src>
import functools
import math

import jax
import jax.numpy as jnp
from jax.experimental import pallas as pl
from jax.experimental.pallas import tpu as pltpu

PAD = 128          # lane-dense feature width carried through the whole fused kernel
HIDDEN = 128       # MLP hidden dim (matches get_mlp(..., 128, ...))
NUM_LAYERS = 3


# ---------------------------------------------------------------------------
# Startup probe: does this Mosaic build lower a dynamic row gather (jnp.take, axis=0)?
# ---------------------------------------------------------------------------
def _take_gather_supported():
    def probe_kernel(t_ref, i_ref, o_ref):
        o_ref[...] = jnp.take(t_ref[...], i_ref[...][:, 0], axis=0,
                              mode="promise_in_bounds")

    try:
        table = jnp.arange(8 * PAD, dtype=jnp.float32).reshape(8, PAD)
        idx = jnp.array([3, 1, 7, 0, 5, 2, 6, 4, 0, 7, 1, 6, 2, 5, 3, 4],
                        dtype=jnp.int32).reshape(16, 1)
        vmem = pl.BlockSpec(memory_space=pltpu.MemorySpace.VMEM)
        out = pl.pallas_call(
            probe_kernel,
            out_shape=jax.ShapeDtypeStruct((16, PAD), jnp.float32),
            in_specs=[vmem, vmem],
            out_specs=vmem,
        )(table, idx)
        jax.block_until_ready(out)
        return bool(jnp.allclose(out, table[idx[:, 0]]))
    except Exception:
        # Lowering (or the gather result) not available/correct on this jax version:
        # fall back to the in-kernel one-hot gather path.
        return False


# ---------------------------------------------------------------------------
# Fused Pallas kernel: 3 x (phi_e -> scatter-mean -> phi_v -> scatter-means -> phi_u -> ReLU)
# ---------------------------------------------------------------------------
def _make_fused_kernel(use_take):
    def kernel(*refs):
        (src_ref, tgt_ref, eb_ref, nb_ref,
         tgt_row_ref, eb_row_ref, nb_row_ref,
         inv_deg_ref, inv_eg_ref, inv_ng_ref,
         x_ref, e_ref, f_ref) = refs[:13]
        (we1_src, we1_tgt, we1_ea, we1_fid, be1, we2, be2,
         wv1_ae, wv1_x, wv1_fid, bv1, wv2, bv2,
         wu1_n, wu1_ae, wu1_fid, bu1, wu2, bu2) = refs[13:32]
        x_out_ref, e_out_ref, f_out_ref = refs[32:]

        f32 = jnp.float32
        bf16 = jnp.bfloat16

        def mm(a, w):
            # Weights are pre-cast to bf16; cast the activation operand at the dot so the MXU
            # runs bf16 x bf16 with an f32 accumulator.
            return jnp.dot(a.astype(w.dtype), w, preferred_element_type=f32)

        if use_take:
            def gather_rows(table, idx_col):
                # O(rows) row gather on VMEM-resident data (Mosaic dynamic-gather).
                return jnp.take(table, idx_col[:, 0], axis=0, mode="promise_in_bounds")
        else:
            def gather_rows(table, idx_col):
                # Fallback: one-hot gather built in-kernel on the VPU (never touches HBM),
                # contracted on the MXU.  Exact (0/1 values), but O(rows * table_rows).
                n_rows = table.shape[0]
                cols = jax.lax.broadcasted_iota(jnp.int32, (idx_col.shape[0], n_rows), 1)
                oh = jnp.where(cols == idx_col, 1.0, 0.0)
                return jnp.dot(oh, table, preferred_element_type=f32)

        def scatter_sum(values, idx_row, num_segments):
            # Transposed 0/1 one-hot built directly in-kernel (no materialized transpose, no
            # HBM copy); 0/1 is exact in bf16, so the contraction rides the bf16 MXU path.
            seg = jax.lax.broadcasted_iota(jnp.int32, (num_segments, idx_row.shape[1]), 0)
            oh_t = jnp.where(seg == idx_row, 1.0, 0.0).astype(bf16)
            return jnp.dot(oh_t, values.astype(bf16), preferred_element_type=f32)

        src, tgt = src_ref[...], tgt_ref[...]                     # [E,1] int32
        eb, nb = eb_ref[...], nb_ref[...]                         # [E,1], [N,1] int32
        tgt_row = tgt_row_ref[...]                                # [1,E] int32
        eb_row, nb_row = eb_row_ref[...], nb_row_ref[...]         # [1,E], [1,N] int32
        inv_deg = inv_deg_ref[...]                                # [N,1]  1/clamp(in-deg,1)
        inv_eg, inv_ng = inv_eg_ref[...], inv_ng_ref[...]         # [G,1]

        x, e, f = x_ref[...], e_ref[...], f_ref[...]              # f32, lane-dense (PAD wide)
        num_nodes = x.shape[0]
        num_graphs = f.shape[0]

        # TODO(synk): at large N/E switch this static unroll to lax.fori_loop over the stacked
        # [3, ...] weights (bounds live ranges) and add a row-tiled "parallel" grid.
        for l in range(NUM_LAYERS):
            # ---- phi_e: MLP([x[src], x[tgt], e, fid[edge_batch]]) as split-K matmuls.
            #      Gathers are applied AFTER the per-block matmul (N rows <= E rows).
            h = (gather_rows(mm(x, we1_src[l]), src)
                 + gather_rows(mm(x, we1_tgt[l]), tgt)
                 + mm(e, we1_ea[l])
                 + gather_rows(mm(f, we1_fid[l]), eb)
                 + be1[l])                                                    # [E, H]
            e_new = mm(jnp.maximum(h, 0.0), we2[l]) + be2[l]                  # [E, PAD]

            # ---- phi_v: MLP([scatter_mean(e_new, tgt), x, fid[batch]])
            ae_n = scatter_sum(e_new, tgt_row, num_nodes) * inv_deg           # [N, PAD]
            h = (mm(ae_n, wv1_ae[l]) + mm(x, wv1_x[l])
                 + gather_rows(mm(f, wv1_fid[l]), nb)
                 + bv1[l])                                                    # [N, H]
            x_new = mm(jnp.maximum(h, 0.0), wv2[l]) + bv2[l]                  # [N, PAD]

            # ---- phi_u: MLP([mean(x_new per graph), mean(e_new per graph), fid])
            mean_x = scatter_sum(x_new, nb_row, num_graphs) * inv_ng          # [G, PAD]
            mean_e = scatter_sum(e_new, eb_row, num_graphs) * inv_eg          # [G, PAD]
            h = (mm(mean_x, wu1_n[l]) + mm(mean_e, wu1_ae[l])
                 + mm(f, wu1_fid[l]) + bu1[l])                                # [G, H]
            f_new = mm(jnp.maximum(h, 0.0), wu2[l]) + bu2[l]                  # [G, PAD]

            # Post-layer ReLU (reference ReLUs x, edge_attr AND the fidelity state after
            # every MFMPN layer, including the last).
            x = jnp.maximum(x_new, 0.0)
            e = jnp.maximum(e_new, 0.0)
            f = jnp.maximum(f_new, 0.0)

        x_out_ref[...] = x
        e_out_ref[...] = e
        f_out_ref[...] = f

    return kernel


def _kernel_cost(num_nodes, num_edges, num_graphs, in_bytes, out_bytes):
    mm2 = lambda m, k, n: 2 * m * k * n
    n, e, g, h = num_nodes, num_edges, num_graphs, HIDDEN
    per_layer = (
        mm2(n, PAD, h) * 2 + mm2(e, PAD, h) + mm2(g, PAD, h) + mm2(e, h, PAD)   # phi_e
        + mm2(n, PAD, h) * 2 + mm2(g, PAD, h) + mm2(n, h, PAD)                  # phi_v
        + mm2(g, PAD, h) * 3 + mm2(g, h, PAD)                                   # phi_u
        + mm2(n, e, PAD) + mm2(g, e, PAD) + mm2(g, n, PAD)                      # one-hot scatters
    )
    return pl.CostEstimate(flops=int(NUM_LAYERS * per_layer), transcendentals=0,
                           bytes_accessed=int(in_bytes + out_bytes))


def fused_mfmpn_stack(graph_ops, x0, e0, f0, fused_weights, *, use_take):
    vmem = pl.BlockSpec(memory_space=pltpu.MemorySpace.VMEM)
    inputs = (*graph_ops, x0, e0, f0, *fused_weights)
    out_shape = (
        jax.ShapeDtypeStruct((x0.shape[0], PAD), jnp.float32),
        jax.ShapeDtypeStruct((e0.shape[0], PAD), jnp.float32),
        jax.ShapeDtypeStruct((f0.shape[0], PAD), jnp.float32),
    )
    in_bytes = sum(int(math.prod(a.shape)) * a.dtype.itemsize for a in inputs)
    out_bytes = sum(int(math.prod(s.shape)) * s.dtype.itemsize for s in out_shape)
    # Explicit scoped-VMEM budget from actual buffer sizes + headroom for in-kernel
    # intermediates; capped at 64 MiB so the same budget is legal on v7x.
    vmem_limit = int(min(max(3 * (in_bytes + out_bytes) + (8 << 20), 16 << 20), 64 << 20))

    return pl.pallas_call(
        _make_fused_kernel(use_take),
        out_shape=out_shape,
        in_specs=[vmem] * len(inputs),
        out_specs=(vmem, vmem, vmem),
        compiler_params=pltpu.CompilerParams(vmem_limit_bytes=vmem_limit),
        cost_estimate=_kernel_cost(x0.shape[0], e0.shape[0], f0.shape[0],
                                   in_bytes, out_bytes),
    )(*inputs)


# ---------------------------------------------------------------------------
# One-time parameter prep: split W1 along K, pad to 128 lanes, cast W to bf16, stack 3 layers.
# NOTE: weights are stored [din, dout] and applied as x @ W (self-consistent with the local
# init).  Loading a real PyTorch checkpoint requires transposing nn.Linear weights first.
# ---------------------------------------------------------------------------
def _pad_cols(a, width=PAD):
    pad = width - a.shape[-1]
    return jnp.pad(a, ((0, 0), (0, pad))) if pad > 0 else a


def _pad_w1_block(w):                  # [k, HIDDEN] -> [PAD, HIDDEN] bf16 (zero rows)
    return jnp.pad(w, ((0, PAD - w.shape[0]), (0, 0))).astype(jnp.bfloat16)


def _pad_w2(w):                        # [HIDDEN, dout] -> [HIDDEN, PAD] bf16 (zero cols)
    return jnp.pad(w, ((0, 0), (0, PAD - w.shape[1]))).astype(jnp.bfloat16)


def _bias1(b):                         # [HIDDEN] -> [1, HIDDEN] f32
    return b.reshape(1, HIDDEN).astype(jnp.float32)


def _pad_b2(b):                        # [dout] -> [1, PAD] f32 (zero pad)
    return jnp.pad(b, (0, PAD - b.shape[0])).reshape(1, PAD).astype(jnp.float32)


def prepare_fused_params(params, node_in, edge_in, node_out, edge_out, fdim):
    per_layer_in = [(node_in, edge_in), (node_out, edge_out), (node_out, edge_out)]
    cols = [[] for _ in range(19)]
    for l, name in enumerate(("mfmp_0", "mfmp_1", "mfmp_2")):
        ni, ei = per_layer_in[l]

        w1, b1, w2, b2 = params[name]["phi_e"]
        blocks = [
            _pad_w1_block(w1[:ni]),                            # src-node rows
            _pad_w1_block(w1[ni:2 * ni]),                      # tgt-node rows
            _pad_w1_block(w1[2 * ni:2 * ni + ei]),             # edge-attr rows
            _pad_w1_block(w1[2 * ni + ei:]),                   # fidelity rows
            _bias1(b1), _pad_w2(w2), _pad_b2(b2),
        ]
        w1, b1, w2, b2 = params[name]["phi_v"]
        blocks += [
            _pad_w1_block(w1[:edge_out]),                      # aggregated-edge rows
            _pad_w1_block(w1[edge_out:edge_out + ni]),         # node-feature rows
            _pad_w1_block(w1[edge_out + ni:]),                 # fidelity rows
            _bias1(b1), _pad_w2(w2), _pad_b2(b2),
        ]
        w1, b1, w2, b2 = params[name]["phi_u"]
        blocks += [
            _pad_w1_block(w1[:node_out]),                      # avg-node rows
            _pad_w1_block(w1[node_out:node_out + edge_out]),   # avg-edge rows
            _pad_w1_block(w1[node_out + edge_out:]),           # fidelity rows
            _bias1(b1), _pad_w2(w2), _pad_b2(b2),
        ]
        for i, blk in enumerate(blocks):
            cols[i].append(blk)

    fused = tuple(jnp.stack(c, axis=0) for c in cols)          # 19 arrays, each [3, ...]
    return {
        "fused": fused,
        "embedding": _pad_cols(params["embedding"].astype(jnp.float32)),   # [2, PAD]
        "node_set2set": params["node_set2set"],
        "edge_set2set": params["edge_set2set"],
    }


# ---------------------------------------------------------------------------
# Set2Set pooling (plain JAX; scatter-free: segment ops via tiny one-hot matmuls)
# ---------------------------------------------------------------------------
def _lstm_cell(x, h, c, w_ih, w_hh, b_ih, b_hh):
    gates = x @ w_ih.T + b_ih + h @ w_hh.T + b_hh      # PyTorch gate order: i, f, g, o
    i, f, g, o = jnp.split(gates, 4, axis=-1)
    i = jax.nn.sigmoid(i)
    f = jax.nn.sigmoid(f)
    g = jnp.tanh(g)
    o = jax.nn.sigmoid(o)
    c_new = f * c + i * g
    h_new = o * jnp.tanh(c_new)
    return h_new, c_new


def set2set(x, onehot_batch, lstm_params, processing_steps=2):
    # TODO(synk): tiny sequential LSTM recurrence kept in plain JAX (dispatch-bound only).
    num_graphs = onehot_batch.shape[1]
    c_dim = x.shape[1]
    seg_sum = lambda v: onehot_batch.T @ v             # [G, *]
    gather = lambda v: onehot_batch @ v                # [rows, *]
    mask_t = onehot_batch.T > 0.5                      # [G, rows]

    h = jnp.zeros((num_graphs, c_dim), jnp.float32)
    c = jnp.zeros((num_graphs, c_dim), jnp.float32)
    q_star = jnp.zeros((num_graphs, 2 * c_dim), jnp.float32)
    for _ in range(processing_steps):
        h, c = _lstm_cell(q_star, h, c, *lstm_params)
        q = h
        e = jnp.sum(x * gather(q), axis=-1, keepdims=True)                       # [rows, 1]
        e_max = jnp.max(jnp.where(mask_t, e[:, 0][None, :], -jnp.inf),
                        axis=1, keepdims=True)                                   # [G, 1]
        e_max = jnp.where(jnp.isfinite(e_max), e_max, 0.0)                       # empty-graph guard
        e_exp = jnp.exp(e - gather(e_max))
        denom = seg_sum(e_exp)
        a = e_exp / (gather(denom) + 1e-16)
        r = seg_sum(a * x)
        q_star = jnp.concatenate([q, r], axis=-1)
    return q_star


# ---------------------------------------------------------------------------
# Full FidelityGNN forward (use_bn=False, use_set2set=True, processing_steps=2)
# ---------------------------------------------------------------------------
def fidelity_gnn_forward(prep, x, edge_index, edge_attr, fidelity_indicator, batch_mapping,
                         *, num_graphs, node_out, edge_out, fdim,
                         processing_steps=2, use_take_gather=False):
    num_nodes = x.shape[0]
    num_edges = edge_index.shape[1]
    g_pad = max(8, -(-num_graphs // 8) * 8)     # graph rows padded to a sublane multiple

    src = edge_index[0].astype(jnp.int32)
    tgt = edge_index[1].astype(jnp.int32)
    batch = batch_mapping.astype(jnp.int32)
    edge_batch = batch[src]                     # reference derives edge graph id from src node

    # 1/count columns for the scatter-means (count clamped >= 1, like torch_scatter 'mean').
    ones_e = jnp.ones((num_edges,), jnp.float32)
    ones_n = jnp.ones((num_nodes,), jnp.float32)
    inv_deg = 1.0 / jnp.maximum(jax.ops.segment_sum(ones_e, tgt, num_nodes), 1.0)
    inv_eg = 1.0 / jnp.maximum(jax.ops.segment_sum(ones_e, edge_batch, g_pad), 1.0)
    inv_ng = 1.0 / jnp.maximum(jax.ops.segment_sum(ones_n, batch, g_pad), 1.0)

    graph_ops = (
        src[:, None], tgt[:, None], edge_batch[:, None], batch[:, None],   # gather layouts
        tgt[None, :], edge_batch[None, :], batch[None, :],                 # scatter layouts
        inv_deg[:, None], inv_eg[:, None], inv_ng[:, None],
    )

    x0 = _pad_cols(x.astype(jnp.float32))                             # [N, PAD]
    e0 = _pad_cols(edge_attr.astype(jnp.float32))                     # [E, PAD]
    f0 = prep["embedding"][fidelity_indicator]                        # [G, PAD]
    f0 = jnp.pad(f0, ((0, g_pad - num_graphs), (0, 0)))               # [G_pad, PAD]

    xp, ep, fp = fused_mfmpn_stack(graph_ops, x0, e0, f0, prep["fused"],
                                   use_take=use_take_gather)

    x3 = xp[:, :node_out]                 # slice padded lanes/rows back to natural sizes, once
    e3 = ep[:, :edge_out]
    f3 = fp[:num_graphs, :fdim]

    onehot_nb = jax.nn.one_hot(batch, num_graphs, dtype=jnp.float32)        # [N, G]
    onehot_eb = jax.nn.one_hot(edge_batch, num_graphs, dtype=jnp.float32)   # [E, G]
    x_batched = set2set(x3, onehot_nb, prep["node_set2set"], processing_steps)
    edge_attr_batched = set2set(e3, onehot_eb, prep["edge_set2set"], processing_steps)
    return x_batched, edge_attr_batched, f3


# ---------------------------------------------------------------------------
# Deterministic parameter construction (shapes match the PyTorch module)
# ---------------------------------------------------------------------------
def _init_linear(key, din, dout):
    kw, kb = jax.random.split(key)
    w = jax.random.normal(kw, (din, dout), jnp.float32) * 0.1
    b = jax.random.normal(kb, (dout,), jnp.float32) * 0.1
    return w, b


def _init_mlp(key, din, hidden, dout):
    k1, k2 = jax.random.split(key)
    w1, b1 = _init_linear(k1, din, hidden)
    w2, b2 = _init_linear(k2, hidden, dout)
    return (w1, b1, w2, b2)


def _init_mfmpn(key, node_in, edge_in, node_out, edge_out, fdim, hidden=HIDDEN):
    ke, kv, ku = jax.random.split(key, 3)
    return {
        "phi_e": _init_mlp(ke, 2 * node_in + edge_in + fdim, hidden, edge_out),
        "phi_v": _init_mlp(kv, edge_out + node_in + fdim, hidden, node_out),
        "phi_u": _init_mlp(ku, edge_out + node_out + fdim, hidden, fdim),
    }


def _init_lstm(key, in_dim, hidden_dim):
    k1, k2, k3, k4 = jax.random.split(key, 4)
    w_ih = jax.random.normal(k1, (4 * hidden_dim, in_dim), jnp.float32) * 0.1
    w_hh = jax.random.normal(k2, (4 * hidden_dim, hidden_dim), jnp.float32) * 0.1
    b_ih = jax.random.normal(k3, (4 * hidden_dim,), jnp.float32) * 0.1
    b_hh = jax.random.normal(k4, (4 * hidden_dim,), jnp.float32) * 0.1
    return (w_ih, w_hh, b_ih, b_hh)


def init_fidelity_gnn(key, node_in, edge_in, fdim, edge_out, node_out):
    keys = jax.random.split(key, 6)
    return {
        "embedding": jax.random.normal(keys[0], (2, fdim), jnp.float32),
        "mfmp_0": _init_mfmpn(keys[1], node_in, edge_in, node_out, edge_out, fdim),
        "mfmp_1": _init_mfmpn(keys[2], node_out, edge_out, node_out, edge_out, fdim),
        "mfmp_2": _init_mfmpn(keys[3], node_out, edge_out, node_out, edge_out, fdim),
        "node_set2set": _init_lstm(keys[4], 2 * node_out, node_out),
        "edge_set2set": _init_lstm(keys[5], 2 * edge_out, edge_out),
    }


# ---------------------------------------------------------------------------
# Main
# ---------------------------------------------------------------------------
if __name__ == "__main__":
    node_in_channels = 6
    edge_in_channels = 4
    fidelity_embedding_dim = 8
    edge_out_channels = 16
    node_out_channels = 16

    num_graphs = 2
    nodes_per_graph = 4
    num_nodes = num_graphs * nodes_per_graph      # 8

    key = jax.random.PRNGKey(0)
    k_params, k_x, k_e = jax.random.split(key, 3)

    params = init_fidelity_gnn(
        k_params, node_in_channels, edge_in_channels,
        fidelity_embedding_dim, edge_out_channels, node_out_channels,
    )
    prep = prepare_fused_params(
        params, node_in_channels, edge_in_channels,
        node_out_channels, edge_out_channels, fidelity_embedding_dim,
    )

    # Graph structure: bidirectional ring within each graph (every node is both a source
    # and a target, so scatter-mean covers all nodes/graphs).
    src_list, tgt_list = [], []
    for g in range(num_graphs):
        base = g * nodes_per_graph
        for i in range(nodes_per_graph):
            u = base + i
            v = base + (i + 1) % nodes_per_graph
            src_list += [u, v]
            tgt_list += [v, u]
    edge_index = jnp.array([src_list, tgt_list], dtype=jnp.int32)   # [2, 16]
    num_edges = edge_index.shape[1]

    x = jax.random.normal(k_x, (num_nodes, node_in_channels), jnp.float32)
    edge_attr = jax.random.normal(k_e, (num_edges, edge_in_channels), jnp.float32)
    fidelity_indicator = jnp.array([0, 1], dtype=jnp.int32)
    batch_mapping = jnp.repeat(jnp.arange(num_graphs, dtype=jnp.int32), nodes_per_graph)

    # Pick the gather implementation once, before tracing the forward pass.
    use_take = _take_gather_supported()

    fwd = jax.jit(functools.partial(
        fidelity_gnn_forward,
        num_graphs=num_graphs,
        node_out=node_out_channels,
        edge_out=edge_out_channels,
        fdim=fidelity_embedding_dim,
        use_take_gather=use_take,
    ))
    x_batched, edge_attr_batched, fidelity_emb = fwd(
        prep, x, edge_index, edge_attr, fidelity_indicator, batch_mapping
    )
    jax.block_until_ready((x_batched, edge_attr_batched, fidelity_emb))

    assert x_batched.shape == (num_graphs, 2 * node_out_channels)
    assert edge_attr_batched.shape == (num_graphs, 2 * edge_out_channels)
    assert fidelity_emb.shape == (num_graphs, fidelity_embedding_dim)
    assert bool(jnp.all(jnp.isfinite(x_batched)))
    assert bool(jnp.all(jnp.isfinite(edge_attr_batched)))
    assert bool(jnp.all(jnp.isfinite(fidelity_emb)))
    print("KERNEL_OK")
</pallas_src>

<mosaic_0001>
module attributes {stable_mosaic.version = 11 : i64} {
  func.func private @main(%arg0: i32) attributes {dimension_semantics = [#tpu.dimension_semantics<core_parallel>], iteration_bounds = array<i64: 2>, tpu.core_type = #tpu.core_type<sc_scalar_subcore>, window_params = []} {
    return
  }
}

module attributes {stable_mosaic.version = 11 : i64} {
  func.func private @main(%arg0: i32) attributes {dimension_semantics = [#tpu.dimension_semantics<core_parallel>], iteration_bounds = array<i64: 2>, tpu.core_type = #tpu.core_type<sc_scalar_subcore>, window_params = []} {
    return
  }
}

module attributes {stable_mosaic.version = 11 : i64} {
  func.func @kernel(%arg0: memref<16x1xi32, #tpu.memory_space<vmem>>, %arg1: memref<16x1xi32, #tpu.memory_space<vmem>>, %arg2: memref<16x1xi32, #tpu.memory_space<vmem>>, %arg3: memref<8x1xi32, #tpu.memory_space<vmem>>, %arg4: memref<1x16xi32, #tpu.memory_space<vmem>>, %arg5: memref<1x16xi32, #tpu.memory_space<vmem>>, %arg6: memref<1x8xi32, #tpu.memory_space<vmem>>, %arg7: memref<8x1xf32, #tpu.memory_space<vmem>>, %arg8: memref<8x1xf32, #tpu.memory_space<vmem>>, %arg9: memref<8x1xf32, #tpu.memory_space<vmem>>, %arg10: memref<8x128xf32, #tpu.memory_space<vmem>>, %arg11: memref<16x128xf32, #tpu.memory_space<vmem>>, %arg12: memref<8x128xf32, #tpu.memory_space<vmem>>, %arg13: memref<3x128x128xbf16, #tpu.memory_space<vmem>>, %arg14: memref<3x128x128xbf16, #tpu.memory_space<vmem>>, %arg15: memref<3x128x128xbf16, #tpu.memory_space<vmem>>, %arg16: memref<3x128x128xbf16, #tpu.memory_space<vmem>>, %arg17: memref<3x1x128xf32, #tpu.memory_space<vmem>>, %arg18: memref<3x128x128xbf16, #tpu.memory_space<vmem>>, %arg19: memref<3x1x128xf32, #tpu.memory_space<vmem>>, %arg20: memref<3x128x128xbf16, #tpu.memory_space<vmem>>, %arg21: memref<3x128x128xbf16, #tpu.memory_space<vmem>>, %arg22: memref<3x128x128xbf16, #tpu.memory_space<vmem>>, %arg23: memref<3x1x128xf32, #tpu.memory_space<vmem>>, %arg24: memref<3x128x128xbf16, #tpu.memory_space<vmem>>, %arg25: memref<3x1x128xf32, #tpu.memory_space<vmem>>, %arg26: memref<3x128x128xbf16, #tpu.memory_space<vmem>>, %arg27: memref<3x128x128xbf16, #tpu.memory_space<vmem>>, %arg28: memref<3x128x128xbf16, #tpu.memory_space<vmem>>, %arg29: memref<3x1x128xf32, #tpu.memory_space<vmem>>, %arg30: memref<3x128x128xbf16, #tpu.memory_space<vmem>>, %arg31: memref<3x1x128xf32, #tpu.memory_space<vmem>>, %arg32: memref<8x128xf32, #tpu.memory_space<vmem>>, %arg33: memref<16x128xf32, #tpu.memory_space<vmem>>, %arg34: memref<8x128xf32, #tpu.memory_space<vmem>>) attributes {dimension_semantics = [], scalar_prefetch = 0 : i64, scratch_operands = 0 : i64, tpu.core_type = #tpu.core_type<tc>} {
    %c0 = arith.constant 0 : index
    %c0_0 = arith.constant 0 : index
    %0 = vector.load %arg0[%c0, %c0_0] : memref<16x1xi32, #tpu.memory_space<vmem>>, vector<16x1xi32>
    %c0_1 = arith.constant 0 : index
    %c0_2 = arith.constant 0 : index
    %1 = vector.load %arg1[%c0_1, %c0_2] : memref<16x1xi32, #tpu.memory_space<vmem>>, vector<16x1xi32>
    %c0_3 = arith.constant 0 : index
    %c0_4 = arith.constant 0 : index
    %2 = vector.load %arg2[%c0_3, %c0_4] : memref<16x1xi32, #tpu.memory_space<vmem>>, vector<16x1xi32>
    %c0_5 = arith.constant 0 : index
    %c0_6 = arith.constant 0 : index
    %3 = vector.load %arg3[%c0_5, %c0_6] : memref<8x1xi32, #tpu.memory_space<vmem>>, vector<8x1xi32>
    %c0_7 = arith.constant 0 : index
    %c0_8 = arith.constant 0 : index
    %4 = vector.load %arg4[%c0_7, %c0_8] : memref<1x16xi32, #tpu.memory_space<vmem>>, vector<1x16xi32>
    %c0_9 = arith.constant 0 : index
    %c0_10 = arith.constant 0 : index
    %5 = vector.load %arg5[%c0_9, %c0_10] : memref<1x16xi32, #tpu.memory_space<vmem>>, vector<1x16xi32>
    %c0_11 = arith.constant 0 : index
    %c0_12 = arith.constant 0 : index
    %6 = vector.load %arg6[%c0_11, %c0_12] : memref<1x8xi32, #tpu.memory_space<vmem>>, vector<1x8xi32>
    %c0_13 = arith.constant 0 : index
    %c0_14 = arith.constant 0 : index
    %7 = vector.load %arg7[%c0_13, %c0_14] : memref<8x1xf32, #tpu.memory_space<vmem>>, vector<8x1xf32>
    %c0_15 = arith.constant 0 : index
    %c0_16 = arith.constant 0 : index
    %8 = vector.load %arg8[%c0_15, %c0_16] : memref<8x1xf32, #tpu.memory_space<vmem>>, vector<8x1xf32>
    %c0_17 = arith.constant 0 : index
    %c0_18 = arith.constant 0 : index
    %9 = vector.load %arg9[%c0_17, %c0_18] : memref<8x1xf32, #tpu.memory_space<vmem>>, vector<8x1xf32>
    %c0_19 = arith.constant 0 : index
    %c0_20 = arith.constant 0 : index
    %10 = vector.load %arg10[%c0_19, %c0_20] : memref<8x128xf32, #tpu.memory_space<vmem>>, vector<8x128xf32>
    %c0_21 = arith.constant 0 : index
    %c0_22 = arith.constant 0 : index
    %11 = vector.load %arg11[%c0_21, %c0_22] : memref<16x128xf32, #tpu.memory_space<vmem>>, vector<16x128xf32>
    %c0_23 = arith.constant 0 : index
    %c0_24 = arith.constant 0 : index
    %12 = vector.load %arg12[%c0_23, %c0_24] : memref<8x128xf32, #tpu.memory_space<vmem>>, vector<8x128xf32>
    %c0_25 = arith.constant 0 : index
    %c0_26 = arith.constant 0 : index
    %c0_27 = arith.constant 0 : index
    %13 = vector.load %arg13[%c0_25, %c0_26, %c0_27] : memref<3x128x128xbf16, #tpu.memory_space<vmem>>, vector<1x128x128xbf16>
    %14 = vector.shape_cast %13 : vector<1x128x128xbf16> to vector<128x128xbf16>
    %15 = arith.truncf %10 : vector<8x128xf32> to vector<8x128xbf16>
    %cst = arith.constant dense<0.000000e+00> : vector<8x128xf32>
    %16 = tpu.matmul %15, %14, %cst {dimension_numbers = #tpu.dot_dimension_numbers<[1], [0], [0], [1], [0, 0, 1, 1], [], []>} : vector<8x128xbf16>, vector<128x128xbf16>, vector<8x128xf32> -> vector<8x128xf32>
    %17 = tpu.iota {dimensions = array<i32: 1>} : vector<16x8xi32>
    %18 = vector.broadcast %0 : vector<16x1xi32> to vector<16x8xi32>
    %19 = arith.cmpi eq, %17, %18 : vector<16x8xi32>
    %cst_28 = arith.constant 1.000000e+00 : f32
    %cst_29 = arith.constant 0.000000e+00 : f32
    %20 = vector.broadcast %cst_28 : f32 to vector<16x8xf32>
    %21 = vector.broadcast %cst_29 : f32 to vector<16x8xf32>
    %22 = arith.select %19, %20, %21 : vector<16x8xi1>, vector<16x8xf32>
    %cst_30 = arith.constant dense<0.000000e+00> : vector<16x128xf32>
    %23 = tpu.matmul %22, %16, %cst_30 {dimension_numbers = #tpu.dot_dimension_numbers<[1], [0], [0], [1], [0, 0, 1, 1], [], []>} : vector<16x8xf32>, vector<8x128xf32>, vector<16x128xf32> -> vector<16x128xf32>
    %c0_31 = arith.constant 0 : index
    %c0_32 = arith.constant 0 : index
    %c0_33 = arith.constant 0 : index
    %24 = vector.load %arg14[%c0_31, %c0_32, %c0_33] : memref<3x128x128xbf16, #tpu.memory_space<vmem>>, vector<1x128x128xbf16>
    %25 = vector.shape_cast %24 : vector<1x128x128xbf16> to vector<128x128xbf16>
    %26 = arith.truncf %10 : vector<8x128xf32> to vector<8x128xbf16>
    %cst_34 = arith.constant dense<0.000000e+00> : vector<8x128xf32>
    %27 = tpu.matmul %26, %25, %cst_34 {dimension_numbers = #tpu.dot_dimension_numbers<[1], [0], [0], [1], [0, 0, 1, 1], [], []>} : vector<8x128xbf16>, vector<128x128xbf16>, vector<8x128xf32> -> vector<8x128xf32>
    %28 = tpu.iota {dimensions = array<i32: 1>} : vector<16x8xi32>
    %29 = vector.broadcast %1 : vector<16x1xi32> to vector<16x8xi32>
    %30 = arith.cmpi eq, %28, %29 : vector<16x8xi32>
    %cst_35 = arith.constant 1.000000e+00 : f32
    %cst_36 = arith.constant 0.000000e+00 : f32
    %31 = vector.broadcast %cst_35 : f32 to vector<16x8xf32>
    %32 = vector.broadcast %cst_36 : f32 to vector<16x8xf32>
    %33 = arith.select %30, %31, %32 : vector<16x8xi1>, vector<16x8xf32>
    %cst_37 = arith.constant dense<0.000000e+00> : vector<16x128xf32>
    %34 = tpu.matmul %33, %27, %cst_37 {dimension_numbers = #tpu.dot_dimension_numbers<[1], [0], [0], [1], [0, 0, 1, 1], [], []>} : vector<16x8xf32>, vector<8x128xf32>, vector<16x128xf32> -> vector<16x128xf32>
    %35 = arith.addf %23, %34 : vector<16x128xf32>
    %c0_38 = arith.constant 0 : index
    %c0_39 = arith.constant 0 : index
    %c0_40 = arith.constant 0 : index
    %36 = vector.load %arg15[%c0_38, %c0_39, %c0_40] : memref<3x128x128xbf16, #tpu.memory_space<vmem>>, vector<1x128x128xbf16>
    %37 = vector.shape_cast %36 : vector<1x128x128xbf16> to vector<128x128xbf16>
    %38 = arith.truncf %11 : vector<16x128xf32> to vector<16x128xbf16>
    %cst_41 = arith.constant dense<0.000000e+00> : vector<16x128xf32>
    %39 = tpu.matmul %38, %37, %cst_41 {dimension_numbers = #tpu.dot_dimension_numbers<[1], [0], [0], [1], [0, 0, 1, 1], [], []>} : vector<16x128xbf16>, vector<128x128xbf16>, vector<16x128xf32> -> vector<16x128xf32>
    %40 = arith.addf %35, %39 : vector<16x128xf32>
    %c0_42 = arith.constant 0 : index
    %c0_43 = arith.constant 0 : index
    %c0_44 = arith.constant 0 : index
    %41 = vector.load %arg16[%c0_42, %c0_43, %c0_44] : memref<3x128x128xbf16, #tpu.memory_space<vmem>>, vector<1x128x128xbf16>
    %42 = vector.shape_cast %41 : vector<1x128x128xbf16> to vector<128x128xbf16>
    %43 = arith.truncf %12 : vector<8x128xf32> to vector<8x128xbf16>
    %cst_45 = arith.constant dense<0.000000e+00> : vector<8x128xf32>
    %44 = tpu.matmul %43, %42, %cst_45 {dimension_numbers = #tpu.dot_dimension_numbers<[1], [0], [0], [1], [0, 0, 1, 1], [], []>} : vector<8x128xbf16>, vector<128x128xbf16>, vector<8x128xf32> -> vector<8x128xf32>
    %45 = tpu.iota {dimensions = array<i32: 1>} : vector<16x8xi32>
    %46 = vector.broadcast %2 : vector<16x1xi32> to vector<16x8xi32>
    %47 = arith.cmpi eq, %45, %46 : vector<16x8xi32>
    %cst_46 = arith.constant 1.000000e+00 : f32
    %cst_47 = arith.constant 0.000000e+00 : f32
    %48 = vector.broadcast %cst_46 : f32 to vector<16x8xf32>
    %49 = vector.broadcast %cst_47 : f32 to vector<16x8xf32>
    %50 = arith.select %47, %48, %49 : vector<16x8xi1>, vector<16x8xf32>
    %cst_48 = arith.constant dense<0.000000e+00> : vector<16x128xf32>
    %51 = tpu.matmul %50, %44, %cst_48 {dimension_numbers = #tpu.dot_dimension_numbers<[1], [0], [0], [1], [0, 0, 1, 1], [], []>} : vector<16x8xf32>, vector<8x128xf32>, vector<16x128xf32> -> vector<16x128xf32>
    %52 = arith.addf %40, %51 : vector<16x128xf32>
    %c0_49 = arith.constant 0 : index
    %c0_50 = arith.constant 0 : index
    %c0_51 = arith.constant 0 : index
    %53 = vector.load %arg17[%c0_49, %c0_50, %c0_51] : memref<3x1x128xf32, #tpu.memory_space<vmem>>, vector<1x1x128xf32>
    %54 = vector.shape_cast %53 : vector<1x1x128xf32> to vector<1x128xf32>
    %55 = vector.broadcast %54 : vector<1x128xf32> to vector<16x128xf32>
    %56 = arith.addf %52, %55 : vector<16x128xf32>
    %cst_52 = arith.constant 0.000000e+00 : f32
    %57 = vector.broadcast %cst_52 : f32 to vector<16x128xf32>
    %58 = arith.maximumf %56, %57 : vector<16x128xf32>
    %c0_53 = arith.constant 0 : index
    %c0_54 = arith.constant 0 : index
    %c0_55 = arith.constant 0 : index
    %59 = vector.load %arg18[%c0_53, %c0_54, %c0_55] : memref<3x128x128xbf16, #tpu.memory_space<vmem>>, vector<1x128x128xbf16>
    %60 = vector.shape_cast %59 : vector<1x128x128xbf16> to vector<128x128xbf16>
    %61 = arith.truncf %58 : vector<16x128xf32> to vector<16x128xbf16>
    %cst_56 = arith.constant dense<0.000000e+00> : vector<16x128xf32>
    %62 = tpu.matmul %61, %60, %cst_56 {dimension_numbers = #tpu.dot_dimension_numbers<[1], [0], [0], [1], [0, 0, 1, 1], [], []>} : vector<16x128xbf16>, vector<128x128xbf16>, vector<16x128xf32> -> vector<16x128xf32>
    %c0_57 = arith.constant 0 : index
    %c0_58 = arith.constant 0 : index
    %c0_59 = arith.constant 0 : index
    %63 = vector.load %arg19[%c0_57, %c0_58, %c0_59] : memref<3x1x128xf32, #tpu.memory_space<vmem>>, vector<1x1x128xf32>
    %64 = vector.shape_cast %63 : vector<1x1x128xf32> to vector<1x128xf32>
    %65 = vector.broadcast %64 : vector<1x128xf32> to vector<16x128xf32>
    %66 = arith.addf %62, %65 : vector<16x128xf32>
    %67 = tpu.iota {dimensions = array<i32: 0>} : vector<8x16xi32>
    %68 = vector.broadcast %4 : vector<1x16xi32> to vector<8x16xi32>
    %69 = arith.cmpi eq, %67, %68 : vector<8x16xi32>
    %cst_60 = arith.constant 1.000000e+00 : f32
    %cst_61 = arith.constant 0.000000e+00 : f32
    %70 = vector.broadcast %cst_60 : f32 to vector<8x16xf32>
    %71 = vector.broadcast %cst_61 : f32 to vector<8x16xf32>
    %72 = arith.select %69, %70, %71 : vector<8x16xi1>, vector<8x16xf32>
    %73 = arith.truncf %72 : vector<8x16xf32> to vector<8x16xbf16>
    %74 = arith.truncf %66 : vector<16x128xf32> to vector<16x128xbf16>
    %cst_62 = arith.constant dense<0.000000e+00> : vector<8x128xf32>
    %75 = tpu.matmul %73, %74, %cst_62 {dimension_numbers = #tpu.dot_dimension_numbers<[1], [0], [0], [1], [0, 0, 1, 1], [], []>} : vector<8x16xbf16>, vector<16x128xbf16>, vector<8x128xf32> -> vector<8x128xf32>
    %76 = vector.broadcast %7 : vector<8x1xf32> to vector<8x128xf32>
    %77 = arith.mulf %75, %76 : vector<8x128xf32>
    %c0_63 = arith.constant 0 : index
    %c0_64 = arith.constant 0 : index
    %c0_65 = arith.constant 0 : index
    %78 = vector.load %arg20[%c0_63, %c0_64, %c0_65] : memref<3x128x128xbf16, #tpu.memory_space<vmem>>, vector<1x128x128xbf16>
    %79 = vector.shape_cast %78 : vector<1x128x128xbf16> to vector<128x128xbf16>
    %80 = arith.truncf %77 : vector<8x128xf32> to vector<8x128xbf16>
    %cst_66 = arith.constant dense<0.000000e+00> : vector<8x128xf32>
    %81 = tpu.matmul %80, %79, %cst_66 {dimension_numbers = #tpu.dot_dimension_numbers<[1], [0], [0], [1], [0, 0, 1, 1], [], []>} : vector<8x128xbf16>, vector<128x128xbf16>, vector<8x128xf32> -> vector<8x128xf32>
    %c0_67 = arith.constant 0 : index
    %c0_68 = arith.constant 0 : index
    %c0_69 = arith.constant 0 : index
    %82 = vector.load %arg21[%c0_67, %c0_68, %c0_69] : memref<3x128x128xbf16, #tpu.memory_space<vmem>>, vector<1x128x128xbf16>
    %83 = vector.shape_cast %82 : vector<1x128x128xbf16> to vector<128x128xbf16>
    %84 = arith.truncf %10 : vector<8x128xf32> to vector<8x128xbf16>
    %cst_70 = arith.constant dense<0.000000e+00> : vector<8x128xf32>
    %85 = tpu.matmul %84, %83, %cst_70 {dimension_numbers = #tpu.dot_dimension_numbers<[1], [0], [0], [1], [0, 0, 1, 1], [], []>} : vector<8x128xbf16>, vector<128x128xbf16>, vector<8x128xf32> -> vector<8x128xf32>
    %86 = arith.addf %81, %85 : vector<8x128xf32>
    %c0_71 = arith.constant 0 : index
    %c0_72 = arith.constant 0 : index
    %c0_73 = arith.constant 0 : index
    %87 = vector.load %arg22[%c0_71, %c0_72, %c0_73] : memref<3x128x128xbf16, #tpu.memory_space<vmem>>, vector<1x128x128xbf16>
    %88 = vector.shape_cast %87 : vector<1x128x128xbf16> to vector<128x128xbf16>
    %89 = arith.truncf %12 : vector<8x128xf32> to vector<8x128xbf16>
    %cst_74 = arith.constant dense<0.000000e+00> : vector<8x128xf32>
    %90 = tpu.matmul %89, %88, %cst_74 {dimension_numbers = #tpu.dot_dimension_numbers<[1], [0], [0], [1], [0, 0, 1, 1], [], []>} : vector<8x128xbf16>, vector<128x128xbf16>, vector<8x128xf32> -> vector<8x128xf32>
    %91 = tpu.iota {dimensions = array<i32: 1>} : vector<8x8xi32>
    %92 = vector.broadcast %3 : vector<8x1xi32> to vector<8x8xi32>
    %93 = arith.cmpi eq, %91, %92 : vector<8x8xi32>
    %cst_75 = arith.constant 1.000000e+00 : f32
    %cst_76 = arith.constant 0.000000e+00 : f32
    %94 = vector.broadcast %cst_75 : f32 to vector<8x8xf32>
    %95 = vector.broadcast %cst_76 : f32 to vector<8x8xf32>
    %96 = arith.select %93, %94, %95 : vector<8x8xi1>, vector<8x8xf32>
    %cst_77 = arith.constant dense<0.000000e+00> : vector<8x128xf32>
    %97 = tpu.matmul %96, %90, %cst_77 {dimension_numbers = #tpu.dot_dimension_numbers<[1], [0], [0], [1], [0, 0, 1, 1], [], []>} : vector<8x8xf32>, vector<8x128xf32>, vector<8x128xf32> -> vector<8x128xf32>
    %98 = arith.addf %86, %97 : vector<8x128xf32>
    %c0_78 = arith.constant 0 : index
    %c0_79 = arith.constant 0 : index
    %c0_80 = arith.constant 0 : index
    %99 = vector.load %arg23[%c0_78, %c0_79, %c0_80] : memref<3x1x128xf32, #tpu.memory_space<vmem>>, vector<1x1x128xf32>
    %100 = vector.shape_cast %99 : vector<1x1x128xf32> to vector<1x128xf32>
    %101 = vector.broadcast %100 : vector<1x128xf32> to vector<8x128xf32>
    %102 = arith.addf %98, %101 : vector<8x128xf32>
    %cst_81 = arith.constant 0.000000e+00 : f32
    %103 = vector.broadcast %cst_81 : f32 to vector<8x128xf32>
    %104 = arith.maximumf %102, %103 : vector<8x128xf32>
    %c0_82 = arith.constant 0 : index
    %c0_83 = arith.constant 0 : index
    %c0_84 = arith.constant 0 : index
    %105 = vector.load %arg24[%c0_82, %c0_83, %c0_84] : memref<3x128x128xbf16, #tpu.memory_space<vmem>>, vector<1x128x128xbf16>
    %106 = vector.shape_cast %105 : vector<1x128x128xbf16> to vector<128x128xbf16>
    %107 = arith.truncf %104 : vector<8x128xf32> to vector<8x128xbf16>
    %cst_85 = arith.constant dense<0.000000e+00> : vector<8x128xf32>
    %108 = tpu.matmul %107, %106, %cst_85 {dimension_numbers = #tpu.dot_dimension_numbers<[1], [0], [0], [1], [0, 0, 1, 1], [], []>} : vector<8x128xbf16>, vector<128x128xbf16>, vector<8x128xf32> -> vector<8x128xf32>
    %c0_86 = arith.constant 0 : index
    %c0_87 = arith.constant 0 : index
    %c0_88 = arith.constant 0 : index
    %109 = vector.load %arg25[%c0_86, %c0_87, %c0_88] : memref<3x1x128xf32, #tpu.memory_space<vmem>>, vector<1x1x128xf32>
    %110 = vector.shape_cast %109 : vector<1x1x128xf32> to vector<1x128xf32>
    %111 = vector.broadcast %110 : vector<1x128xf32> to vector<8x128xf32>
    %112 = arith.addf %108, %111 : vector<8x128xf32>
    %113 = tpu.iota {dimensions = array<i32: 0>} : vector<8x8xi32>
    %114 = vector.broadcast %6 : vector<1x8xi32> to vector<8x8xi32>
    %115 = arith.cmpi eq, %113, %114 : vector<8x8xi32>
    %cst_89 = arith.constant 1.000000e+00 : f32
    %cst_90 = arith.constant 0.000000e+00 : f32
    %116 = vector.broadcast %cst_89 : f32 to vector<8x8xf32>
    %117 = vector.broadcast %cst_90 : f32 to vector<8x8xf32>
    %118 = arith.select %115, %116, %117 : vector<8x8xi1>, vector<8x8xf32>
    %119 = arith.truncf %118 : vector<8x8xf32> to vector<8x8xbf16>
    %120 = arith.truncf %112 : vector<8x128xf32> to vector<8x128xbf16>
    %cst_91 = arith.constant dense<0.000000e+00> : vector<8x128xf32>
    %121 = tpu.matmul %119, %120, %cst_91 {dimension_numbers = #tpu.dot_dimension_numbers<[1], [0], [0], [1], [0, 0, 1, 1], [], []>} : vector<8x8xbf16>, vector<8x128xbf16>, vector<8x128xf32> -> vector<8x128xf32>
    %122 = vector.broadcast %9 : vector<8x1xf32> to vector<8x128xf32>
    %123 = arith.mulf %121, %122 : vector<8x128xf32>
    %124 = tpu.iota {dimensions = array<i32: 0>} : vector<8x16xi32>
    %125 = vector.broadcast %5 : vector<1x16xi32> to vector<8x16xi32>
    %126 = arith.cmpi eq, %124, %125 : vector<8x16xi32>
    %cst_92 = arith.constant 1.000000e+00 : f32
    %cst_93 = arith.constant 0.000000e+00 : f32
    %127 = vector.broadcast %cst_92 : f32 to vector<8x16xf32>
    %128 = vector.broadcast %cst_93 : f32 to vector<8x16xf32>
    %129 = arith.select %126, %127, %128 : vector<8x16xi1>, vector<8x16xf32>
    %130 = arith.truncf %129 : vector<8x16xf32> to vector<8x16xbf16>
    %131 = arith.truncf %66 : vector<16x128xf32> to vector<16x128xbf16>
    %cst_94 = arith.constant dense<0.000000e+00> : vector<8x128xf32>
    %132 = tpu.matmul %130, %131, %cst_94 {dimension_numbers = #tpu.dot_dimension_numbers<[1], [0], [0], [1], [0, 0, 1, 1], [], []>} : vector<8x16xbf16>, vector<16x128xbf16>, vector<8x128xf32> -> vector<8x128xf32>
    %133 = vector.broadcast %8 : vector<8x1xf32> to vector<8x128xf32>
    %134 = arith.mulf %132, %133 : vector<8x128xf32>
    %c0_95 = arith.constant 0 : index
    %c0_96 = arith.constant 0 : index
    %c0_97 = arith.constant 0 : index
    %135 = vector.load %arg26[%c0_95, %c0_96, %c0_97] : memref<3x128x128xbf16, #tpu.memory_space<vmem>>, vector<1x128x128xbf16>
    %136 = vector.shape_cast %135 : vector<1x128x128xbf16> to vector<128x128xbf16>
    %137 = arith.truncf %123 : vector<8x128xf32> to vector<8x128xbf16>
    %cst_98 = arith.constant dense<0.000000e+00> : vector<8x128xf32>
    %138 = tpu.matmul %137, %136, %cst_98 {dimension_numbers = #tpu.dot_dimension_numbers<[1], [0], [0], [1], [0, 0, 1, 1], [], []>} : vector<8x128xbf16>, vector<128x128xbf16>, vector<8x128xf32> -> vector<8x128xf32>
    %c0_99 = arith.constant 0 : index
    %c0_100 = arith.constant 0 : index
    %c0_101 = arith.constant 0 : index
    %139 = vector.load %arg27[%c0_99, %c0_100, %c0_101] : memref<3x128x128xbf16, #tpu.memory_space<vmem>>, vector<1x128x128xbf16>
    %140 = vector.shape_cast %139 : vector<1x128x128xbf16> to vector<128x128xbf16>
    %141 = arith.truncf %134 : vector<8x128xf32> to vector<8x128xbf16>
    %cst_102 = arith.constant dense<0.000000e+00> : vector<8x128xf32>
    %142 = tpu.matmul %141, %140, %cst_102 {dimension_numbers = #tpu.dot_dimension_numbers<[1], [0], [0], [1], [0, 0, 1, 1], [], []>} : vector<8x128xbf16>, vector<128x128xbf16>, vector<8x128xf32> -> vector<8x128xf32>
    %143 = arith.addf %138, %142 : vector<8x128xf32>
    %c0_103 = arith.constant 0 : index
    %c0_104 = arith.constant 0 : index
    %c0_105 = arith.constant 0 : index
    %144 = vector.load %arg28[%c0_103, %c0_104, %c0_105] : memref<3x128x128xbf16, #tpu.memory_space<vmem>>, vector<1x128x128xbf16>
    %145 = vector.shape_cast %144 : vector<1x128x128xbf16> to vector<128x128xbf16>
    %146 = arith.truncf %12 : vector<8x128xf32> to vector<8x128xbf16>
    %cst_106 = arith.constant dense<0.000000e+00> : vector<8x128xf32>
    %147 = tpu.matmul %146, %145, %cst_106 {dimension_numbers = #tpu.dot_dimension_numbers<[1], [0], [0], [1], [0, 0, 1, 1], [], []>} : vector<8x128xbf16>, vector<128x128xbf16>, vector<8x128xf32> -> vector<8x128xf32>
    %148 = arith.addf %143, %147 : vector<8x128xf32>
    %c0_107 = arith.constant 0 : index
    %c0_108 = arith.constant 0 : index
    %c0_109 = arith.constant 0 : index
    %149 = vector.load %arg29[%c0_107, %c0_108, %c0_109] : memref<3x1x128xf32, #tpu.memory_space<vmem>>, vector<1x1x128xf32>
    %150 = vector.shape_cast %149 : vector<1x1x128xf32> to vector<1x128xf32>
    %151 = vector.broadcast %150 : vector<1x128xf32> to vector<8x128xf32>
    %152 = arith.addf %148, %151 : vector<8x128xf32>
    %cst_110 = arith.constant 0.000000e+00 : f32
    %153 = vector.broadcast %cst_110 : f32 to vector<8x128xf32>
    %154 = arith.maximumf %152, %153 : vector<8x128xf32>
    %c0_111 = arith.constant 0 : index
    %c0_112 = arith.constant 0 : index
    %c0_113 = arith.constant 0 : index
    %155 = vector.load %arg30[%c0_111, %c0_112, %c0_113] : memref<3x128x128xbf16, #tpu.memory_space<vmem>>, vector<1x128x128xbf16>
    %156 = vector.shape_cast %155 : vector<1x128x128xbf16> to vector<128x128xbf16>
    %157 = arith.truncf %154 : vector<8x128xf32> to vector<8x128xbf16>
    %cst_114 = arith.constant dense<0.000000e+00> : vector<8x128xf32>
    %158 = tpu.matmul %157, %156, %cst_114 {dimension_numbers = #tpu.dot_dimension_numbers<[1], [0], [0], [1], [0, 0, 1, 1], [], []>} : vector<8x128xbf16>, vector<128x128xbf16>, vector<8x128xf32> -> vector<8x128xf32>
    %c0_115 = arith.constant 0 : index
    %c0_116 = arith.constant 0 : index
    %c0_117 = arith.constant 0 : index
    %159 = vector.load %arg31[%c0_115, %c0_116, %c0_117] : memref<3x1x128xf32, #tpu.memory_space<vmem>>, vector<1x1x128xf32>
    %160 = vector.shape_cast %159 : vector<1x1x128xf32> to vector<1x128xf32>
    %161 = vector.broadcast %160 : vector<1x128xf32> to vector<8x128xf32>
    %162 = arith.addf %158, %161 : vector<8x128xf32>
    %cst_118 = arith.constant 0.000000e+00 : f32
    %163 = vector.broadcast %cst_118 : f32 to vector<8x128xf32>
    %164 = arith.maximumf %112, %163 : vector<8x128xf32>
    %cst_119 = arith.constant 0.000000e+00 : f32
    %165 = vector.broadcast %cst_119 : f32 to vector<16x128xf32>
    %166 = arith.maximumf %66, %165 : vector<16x128xf32>
    %cst_120 = arith.constant 0.000000e+00 : f32
    %167 = vector.broadcast %cst_120 : f32 to vector<8x128xf32>
    %168 = arith.maximumf %162, %167 : vector<8x128xf32>
    %c1 = arith.constant 1 : index
    %c0_121 = arith.constant 0 : index
    %c0_122 = arith.constant 0 : index
    %169 = vector.load %arg13[%c1, %c0_121, %c0_122] : memref<3x128x128xbf16, #tpu.memory_space<vmem>>, vector<1x128x128xbf16>
    %170 = vector.shape_cast %169 : vector<1x128x128xbf16> to vector<128x128xbf16>
    %171 = arith.truncf %164 : vector<8x128xf32> to vector<8x128xbf16>
    %cst_123 = arith.constant dense<0.000000e+00> : vector<8x128xf32>
    %172 = tpu.matmul %171, %170, %cst_123 {dimension_numbers = #tpu.dot_dimension_numbers<[1], [0], [0], [1], [0, 0, 1, 1], [], []>} : vector<8x128xbf16>, vector<128x128xbf16>, vector<8x128xf32> -> vector<8x128xf32>
    %173 = tpu.iota {dimensions = array<i32: 1>} : vector<16x8xi32>
    %174 = vector.broadcast %0 : vector<16x1xi32> to vector<16x8xi32>
    %175 = arith.cmpi eq, %173, %174 : vector<16x8xi32>
    %cst_124 = arith.constant 1.000000e+00 : f32
    %cst_125 = arith.constant 0.000000e+00 : f32
    %176 = vector.broadcast %cst_124 : f32 to vector<16x8xf32>
    %177 = vector.broadcast %cst_125 : f32 to vector<16x8xf32>
    %178 = arith.select %175, %176, %177 : vector<16x8xi1>, vector<16x8xf32>
    %cst_126 = arith.constant dense<0.000000e+00> : vector<16x128xf32>
    %179 = tpu.matmul %178, %172, %cst_126 {dimension_numbers = #tpu.dot_dimension_numbers<[1], [0], [0], [1], [0, 0, 1, 1], [], []>} : vector<16x8xf32>, vector<8x128xf32>, vector<16x128xf32> -> vector<16x128xf32>
    %c1_127 = arith.constant 1 : index
    %c0_128 = arith.constant 0 : index
    %c0_129 = arith.constant 0 : index
    %180 = vector.load %arg14[%c1_127, %c0_128, %c0_129] : memref<3x128x128xbf16, #tpu.memory_space<vmem>>, vector<1x128x128xbf16>
    %181 = vector.shape_cast %180 : vector<1x128x128xbf16> to vector<128x128xbf16>
    %182 = arith.truncf %164 : vector<8x128xf32> to vector<8x128xbf16>
    %cst_130 = arith.constant dense<0.000000e+00> : vector<8x128xf32>
    %183 = tpu.matmul %182, %181, %cst_130 {dimension_numbers = #tpu.dot_dimension_numbers<[1], [0], [0], [1], [0, 0, 1, 1], [], []>} : vector<8x128xbf16>, vector<128x128xbf16>, vector<8x128xf32> -> vector<8x128xf32>
    %184 = tpu.iota {dimensions = array<i32: 1>} : vector<16x8xi32>
    %185 = vector.broadcast %1 : vector<16x1xi32> to vector<16x8xi32>
    %186 = arith.cmpi eq, %184, %185 : vector<16x8xi32>
    %cst_131 = arith.constant 1.000000e+00 : f32
    %cst_132 = arith.constant 0.000000e+00 : f32
    %187 = vector.broadcast %cst_131 : f32 to vector<16x8xf32>
    %188 = vector.broadcast %cst_132 : f32 to vector<16x8xf32>
    %189 = arith.select %186, %187, %188 : vector<16x8xi1>, vector<16x8xf32>
    %cst_133 = arith.constant dense<0.000000e+00> : vector<16x128xf32>
    %190 = tpu.matmul %189, %183, %cst_133 {dimension_numbers = #tpu.dot_dimension_numbers<[1], [0], [0], [1], [0, 0, 1, 1], [], []>} : vector<16x8xf32>, vector<8x128xf32>, vector<16x128xf32> -> vector<16x128xf32>
    %191 = arith.addf %179, %190 : vector<16x128xf32>
    %c1_134 = arith.constant 1 : index
    %c0_135 = arith.constant 0 : index
    %c0_136 = arith.constant 0 : index
    %192 = vector.load %arg15[%c1_134, %c0_135, %c0_136] : memref<3x128x128xbf16, #tpu.memory_space<vmem>>, vector<1x128x128xbf16>
    %193 = vector.shape_cast %192 : vector<1x128x128xbf16> to vector<128x128xbf16>
    %194 = arith.truncf %166 : vector<16x128xf32> to vector<16x128xbf16>
    %cst_137 = arith.constant dense<0.000000e+00> : vector<16x128xf32>
    %195 = tpu.matmul %194, %193, %cst_137 {dimension_numbers = #tpu.dot_dimension_numbers<[1], [0], [0], [1], [0, 0, 1, 1], [], []>} : vector<16x128xbf16>, vector<128x128xbf16>, vector<16x128xf32> -> vector<16x128xf32>
    %196 = arith.addf %191, %195 : vector<16x128xf32>
    %c1_138 = arith.constant 1 : index
    %c0_139 = arith.constant 0 : index
    %c0_140 = arith.constant 0 : index
    %197 = vector.load %arg16[%c1_138, %c0_139, %c0_140] : memref<3x128x128xbf16, #tpu.memory_space<vmem>>, vector<1x128x128xbf16>
    %198 = vector.shape_cast %197 : vector<1x128x128xbf16> to vector<128x128xbf16>
    %199 = arith.truncf %168 : vector<8x128xf32> to vector<8x128xbf16>
    %cst_141 = arith.constant dense<0.000000e+00> : vector<8x128xf32>
    %200 = tpu.matmul %199, %198, %cst_141 {dimension_numbers = #tpu.dot_dimension_numbers<[1], [0], [0], [1], [0, 0, 1, 1], [], []>} : vector<8x128xbf16>, vector<128x128xbf16>, vector<8x128xf32> -> vector<8x128xf32>
    %201 = tpu.iota {dimensions = array<i32: 1>} : vector<16x8xi32>
    %202 = vector.broadcast %2 : vector<16x1xi32> to vector<16x8xi32>
    %203 = arith.cmpi eq, %201, %202 : vector<16x8xi32>
    %cst_142 = arith.constant 1.000000e+00 : f32
    %cst_143 = arith.constant 0.000000e+00 : f32
    %204 = vector.broadcast %cst_142 : f32 to vector<16x8xf32>
    %205 = vector.broadcast %cst_143 : f32 to vector<16x8xf32>
    %206 = arith.select %203, %204, %205 : vector<16x8xi1>, vector<16x8xf32>
    %cst_144 = arith.constant dense<0.000000e+00> : vector<16x128xf32>
    %207 = tpu.matmul %206, %200, %cst_144 {dimension_numbers = #tpu.dot_dimension_numbers<[1], [0], [0], [1], [0, 0, 1, 1], [], []>} : vector<16x8xf32>, vector<8x128xf32>, vector<16x128xf32> -> vector<16x128xf32>
    %208 = arith.addf %196, %207 : vector<16x128xf32>
    %c1_145 = arith.constant 1 : index
    %c0_146 = arith.constant 0 : index
    %c0_147 = arith.constant 0 : index
    %209 = vector.load %arg17[%c1_145, %c0_146, %c0_147] : memref<3x1x128xf32, #tpu.memory_space<vmem>>, vector<1x1x128xf32>
    %210 = vector.shape_cast %209 : vector<1x1x128xf32> to vector<1x128xf32>
    %211 = vector.broadcast %210 : vector<1x128xf32> to vector<16x128xf32>
    %212 = arith.addf %208, %211 : vector<16x128xf32>
    %cst_148 = arith.constant 0.000000e+00 : f32
    %213 = vector.broadcast %cst_148 : f32 to vector<16x128xf32>
    %214 = arith.maximumf %212, %213 : vector<16x128xf32>
    %c1_149 = arith.constant 1 : index
    %c0_150 = arith.constant 0 : index
    %c0_151 = arith.constant 0 : index
    %215 = vector.load %arg18[%c1_149, %c0_150, %c0_151] : memref<3x128x128xbf16, #tpu.memory_space<vmem>>, vector<1x128x128xbf16>
    %216 = vector.shape_cast %215 : vector<1x128x128xbf16> to vector<128x128xbf16>
    %217 = arith.truncf %214 : vector<16x128xf32> to vector<16x128xbf16>
    %cst_152 = arith.constant dense<0.000000e+00> : vector<16x128xf32>
    %218 = tpu.matmul %217, %216, %cst_152 {dimension_numbers = #tpu.dot_dimension_numbers<[1], [0], [0], [1], [0, 0, 1, 1], [], []>} : vector<16x128xbf16>, vector<128x128xbf16>, vector<16x128xf32> -> vector<16x128xf32>
    %c1_153 = arith.constant 1 : index
    %c0_154 = arith.constant 0 : index
    %c0_155 = arith.constant 0 : index
    %219 = vector.load %arg19[%c1_153, %c0_154, %c0_155] : memref<3x1x128xf32, #tpu.memory_space<vmem>>, vector<1x1x128xf32>
    %220 = vector.shape_cast %219 : vector<1x1x128xf32> to vector<1x128xf32>
    %221 = vector.broadcast %220 : vector<1x128xf32> to vector<16x128xf32>
    %222 = arith.addf %218, %221 : vector<16x128xf32>
    %223 = tpu.iota {dimensions = array<i32: 0>} : vector<8x16xi32>
    %224 = vector.broadcast %4 : vector<1x16xi32> to vector<8x16xi32>
    %225 = arith.cmpi eq, %223, %224 : vector<8x16xi32>
    %cst_156 = arith.constant 1.000000e+00 : f32
    %cst_157 = arith.constant 0.000000e+00 : f32
    %226 = vector.broadcast %cst_156 : f32 to vector<8x16xf32>
    %227 = vector.broadcast %cst_157 : f32 to vector<8x16xf32>
    %228 = arith.select %225, %226, %227 : vector<8x16xi1>, vector<8x16xf32>
    %229 = arith.truncf %228 : vector<8x16xf32> to vector<8x16xbf16>
    %230 = arith.truncf %222 : vector<16x128xf32> to vector<16x128xbf16>
    %cst_158 = arith.constant dense<0.000000e+00> : vector<8x128xf32>
    %231 = tpu.matmul %229, %230, %cst_158 {dimension_numbers = #tpu.dot_dimension_numbers<[1], [0], [0], [1], [0, 0, 1, 1], [], []>} : vector<8x16xbf16>, vector<16x128xbf16>, vector<8x128xf32> -> vector<8x128xf32>
    %232 = vector.broadcast %7 : vector<8x1xf32> to vector<8x128xf32>
    %233 = arith.mulf %231, %232 : vector<8x128xf32>
    %c1_159 = arith.constant 1 : index
    %c0_160 = arith.constant 0 : index
    %c0_161 = arith.constant 0 : index
    %234 = vector.load %arg20[%c1_159, %c0_160, %c0_161] : memref<3x128x128xbf16, #tpu.memory_space<vmem>>, vector<1x128x128xbf16>
    %235 = vector.shape_cast %234 : vector<1x128x128xbf16> to vector<128x128xbf16>
    %236 = arith.truncf %233 : vector<8x128xf32> to vector<8x128xbf16>
    %cst_162 = arith.constant dense<0.000000e+00> : vector<8x128xf32>
    %237 = tpu.matmul %236, %235, %cst_162 {dimension_numbers = #tpu.dot_dimension_numbers<[1], [0], [0], [1], [0, 0, 1, 1], [], []>} : vector<8x128xbf16>, vector<128x128xbf16>, vector<8x128xf32> -> vector<8x128xf32>
    %c1_163 = arith.constant 1 : index
    %c0_164 = arith.constant 0 : index
    %c0_165 = arith.constant 0 : index
    %238 = vector.load %arg21[%c1_163, %c0_164, %c0_165] : memref<3x128x128xbf16, #tpu.memory_space<vmem>>, vector<1x128x128xbf16>
    %239 = vector.shape_cast %238 : vector<1x128x128xbf16> to vector<128x128xbf16>
    %240 = arith.truncf %164 : vector<8x128xf32> to vector<8x128xbf16>
    %cst_166 = arith.constant dense<0.000000e+00> : vector<8x128xf32>
    %241 = tpu.matmul %240, %239, %cst_166 {dimension_numbers = #tpu.dot_dimension_numbers<[1], [0], [0], [1], [0, 0, 1, 1], [], []>} : vector<8x128xbf16>, vector<128x128xbf16>, vector<8x128xf32> -> vector<8x128xf32>
    %242 = arith.addf %237, %241 : vector<8x128xf32>
    %c1_167 = arith.constant 1 : index
    %c0_168 = arith.constant 0 : index
    %c0_169 = arith.constant 0 : index
    %243 = vector.load %arg22[%c1_167, %c0_168, %c0_169] : memref<3x128x128xbf16, #tpu.memory_space<vmem>>, vector<1x128x128xbf16>
    %244 = vector.shape_cast %243 : vector<1x128x128xbf16> to vector<128x128xbf16>
    %245 = arith.truncf %168 : vector<8x128xf32> to vector<8x128xbf16>
    %cst_170 = arith.constant dense<0.000000e+00> : vector<8x128xf32>
    %246 = tpu.matmul %245, %244, %cst_170 {dimension_numbers = #tpu.dot_dimension_numbers<[1], [0], [0], [1], [0, 0, 1, 1], [], []>} : vector<8x128xbf16>, vector<128x128xbf16>, vector<8x128xf32> -> vector<8x128xf32>
    %247 = tpu.iota {dimensions = array<i32: 1>} : vector<8x8xi32>
    %248 = vector.broadcast %3 : vector<8x1xi32> to vector<8x8xi32>
    %249 = arith.cmpi eq, %247, %248 : vector<8x8xi32>
    %cst_171 = arith.constant 1.000000e+00 : f32
    %cst_172 = arith.constant 0.000000e+00 : f32
    %250 = vector.broadcast %cst_171 : f32 to vector<8x8xf32>
    %251 = vector.broadcast %cst_172 : f32 to vector<8x8xf32>
    %252 = arith.select %249, %250, %251 : vector<8x8xi1>, vector<8x8xf32>
    %cst_173 = arith.constant dense<0.000000e+00> : vector<8x128xf32>
    %253 = tpu.matmul %252, %246, %cst_173 {dimension_numbers = #tpu.dot_dimension_numbers<[1], [0], [0], [1], [0, 0, 1, 1], [], []>} : vector<8x8xf32>, vector<8x128xf32>, vector<8x128xf32> -> vector<8x128xf32>
    %254 = arith.addf %242, %253 : vector<8x128xf32>
    %c1_174 = arith.constant 1 : index
    %c0_175 = arith.constant 0 : index
    %c0_176 = arith.constant 0 : index
    %255 = vector.load %arg23[%c1_174, %c0_175, %c0_176] : memref<3x1x128xf32, #tpu.memory_space<vmem>>, vector<1x1x128xf32>
    %256 = vector.shape_cast %255 : vector<1x1x128xf32> to vector<1x128xf32>
    %257 = vector.broadcast %256 : vector<1x128xf32> to vector<8x128xf32>
    %258 = arith.addf %254, %257 : vector<8x128xf32>
    %cst_177 = arith.constant 0.000000e+00 : f32
    %259 = vector.broadcast %cst_177 : f32 to vector<8x128xf32>
    %260 = arith.maximumf %258, %259 : vector<8x128xf32>
    %c1_178 = arith.constant 1 : index
    %c0_179 = arith.constant 0 : index
    %c0_180 = arith.constant 0 : index
    %261 = vector.load %arg24[%c1_178, %c0_179, %c0_180] : memref<3x128x128xbf16, #tpu.memory_space<vmem>>, vector<1x128x128xbf16>
    %262 = vector.shape_cast %261 : vector<1x128x128xbf16> to vector<128x128xbf16>
    %263 = arith.truncf %260 : vector<8x128xf32> to vector<8x128xbf16>
    %cst_181 = arith.constant dense<0.000000e+00> : vector<8x128xf32>
    %264 = tpu.matmul %263, %262, %cst_181 {dimension_numbers = #tpu.dot_dimension_numbers<[1], [0], [0], [1], [0, 0, 1, 1], [], []>} : vector<8x128xbf16>, vector<128x128xbf16>, vector<8x128xf32> -> vector<8x128xf32>
    %c1_182 = arith.constant 1 : index
    %c0_183 = arith.constant 0 : index
    %c0_184 = arith.constant 0 : index
    %265 = vector.load %arg25[%c1_182, %c0_183, %c0_184] : memref<3x1x128xf32, #tpu.memory_space<vmem>>, vector<1x1x128xf32>
    %266 = vector.shape_cast %265 : vector<1x1x128xf32> to vector<1x128xf32>
    %267 = vector.broadcast %266 : vector<1x128xf32> to vector<8x128xf32>
    %268 = arith.addf %264, %267 : vector<8x128xf32>
    %269 = tpu.iota {dimensions = array<i32: 0>} : vector<8x8xi32>
    %270 = vector.broadcast %6 : vector<1x8xi32> to vector<8x8xi32>
    %271 = arith.cmpi eq, %269, %270 : vector<8x8xi32>
    %cst_185 = arith.constant 1.000000e+00 : f32
    %cst_186 = arith.constant 0.000000e+00 : f32
    %272 = vector.broadcast %cst_185 : f32 to vector<8x8xf32>
    %273 = vector.broadcast %cst_186 : f32 to vector<8x8xf32>
    %274 = arith.select %271, %272, %273 : vector<8x8xi1>, vector<8x8xf32>
    %275 = arith.truncf %274 : vector<8x8xf32> to vector<8x8xbf16>
    %276 = arith.truncf %268 : vector<8x128xf32> to vector<8x128xbf16>
    %cst_187 = arith.constant dense<0.000000e+00> : vector<8x128xf32>
    %277 = tpu.matmul %275, %276, %cst_187 {dimension_numbers = #tpu.dot_dimension_numbers<[1], [0], [0], [1], [0, 0, 1, 1], [], []>} : vector<8x8xbf16>, vector<8x128xbf16>, vector<8x128xf32> -> vector<8x128xf32>
    %278 = vector.broadcast %9 : vector<8x1xf32> to vector<8x128xf32>
    %279 = arith.mulf %277, %278 : vector<8x128xf32>
    %280 = tpu.iota {dimensions = array<i32: 0>} : vector<8x16xi32>
    %281 = vector.broadcast %5 : vector<1x16xi32> to vector<8x16xi32>
    %282 = arith.cmpi eq, %280, %281 : vector<8x16xi32>
    %cst_188 = arith.constant 1.000000e+00 : f32
    %cst_189 = arith.constant 0.000000e+00 : f32
    %283 = vector.broadcast %cst_188 : f32 to vector<8x16xf32>
    %284 = vector.broadcast %cst_189 : f32 to vector<8x16xf32>
    %285 = arith.select %282, %283, %284 : vector<8x16xi1>, vector<8x16xf32>
    %286 = arith.truncf %285 : vector<8x16xf32> to vector<8x16xbf16>
    %287 = arith.truncf %222 : vector<16x128xf32> to vector<16x128xbf16>
    %cst_190 = arith.constant dense<0.000000e+00> : vector<8x128xf32>
    %288 = tpu.matmul %286, %287, %cst_190 {dimension_numbers = #tpu.dot_dimension_numbers<[1], [0], [0], [1], [0, 0, 1, 1], [], []>} : vector<8x16xbf16>, vector<16x128xbf16>, vector<8x128xf32> -> vector<8x128xf32>
    %289 = vector.broadcast %8 : vector<8x1xf32> to vector<8x128xf32>
    %290 = arith.mulf %288, %289 : vector<8x128xf32>
    %c1_191 = arith.constant 1 : index
    %c0_192 = arith.constant 0 : index
    %c0_193 = arith.constant 0 : index
    %291 = vector.load %arg26[%c1_191, %c0_192, %c0_193] : memref<3x128x128xbf16, #tpu.memory_space<vmem>>, vector<1x128x128xbf16>
    %292 = vector.shape_cast %291 : vector<1x128x128xbf16> to vector<128x128xbf16>
    %293 = arith.truncf %279 : vector<8x128xf32> to vector<8x128xbf16>
    %cst_194 = arith.constant dense<0.000000e+00> : vector<8x128xf32>
    %294 = tpu.matmul %293, %292, %cst_194 {dimension_numbers = #tpu.dot_dimension_numbers<[1], [0], [0], [1], [0, 0, 1, 1], [], []>} : vector<8x128xbf16>, vector<128x128xbf16>, vector<8x128xf32> -> vector<8x128xf32>
    %c1_195 = arith.constant 1 : index
    %c0_196 = arith.constant 0 : index
    %c0_197 = arith.constant 0 : index
    %295 = vector.load %arg27[%c1_195, %c0_196, %c0_197] : memref<3x128x128xbf16, #tpu.memory_space<vmem>>, vector<1x128x128xbf16>
    %296 = vector.shape_cast %295 : vector<1x128x128xbf16> to vector<128x128xbf16>
    %297 = arith.truncf %290 : vector<8x128xf32> to vector<8x128xbf16>
    %cst_198 = arith.constant dense<0.000000e+00> : vector<8x128xf32>
    %298 = tpu.matmul %297, %296, %cst_198 {dimension_numbers = #tpu.dot_dimension_numbers<[1], [0], [0], [1], [0, 0, 1, 1], [], []>} : vector<8x128xbf16>, vector<128x128xbf16>, vector<8x128xf32> -> vector<8x128xf32>
    %299 = arith.addf %294, %298 : vector<8x128xf32>
    %c1_199 = arith.constant 1 : index
    %c0_200 = arith.constant 0 : index
    %c0_201 = arith.constant 0 : index
    %300 = vector.load %arg28[%c1_199, %c0_200, %c0_201] : memref<3x128x128xbf16, #tpu.memory_space<vmem>>, vector<1x128x128xbf16>
    %301 = vector.shape_cast %300 : vector<1x128x128xbf16> to vector<128x128xbf16>
    %302 = arith.truncf %168 : vector<8x128xf32> to vector<8x128xbf16>
    %cst_202 = arith.constant dense<0.000000e+00> : vector<8x128xf32>
    %303 = tpu.matmul %302, %301, %cst_202 {dimension_numbers = #tpu.dot_dimension_numbers<[1], [0], [0], [1], [0, 0, 1, 1], [], []>} : vector<8x128xbf16>, vector<128x128xbf16>, vector<8x128xf32> -> vector<8x128xf32>
    %304 = arith.addf %299, %303 : vector<8x128xf32>
    %c1_203 = arith.constant 1 : index
    %c0_204 = arith.constant 0 : index
    %c0_205 = arith.constant 0 : index
    %305 = vector.load %arg29[%c1_203, %c0_204, %c0_205] : memref<3x1x128xf32, #tpu.memory_space<vmem>>, vector<1x1x128xf32>
    %306 = vector.shape_cast %305 : vector<1x1x128xf32> to vector<1x128xf32>
    %307 = vector.broadcast %306 : vector<1x128xf32> to vector<8x128xf32>
    %308 = arith.addf %304, %307 : vector<8x128xf32>
    %cst_206 = arith.constant 0.000000e+00 : f32
    %309 = vector.broadcast %cst_206 : f32 to vector<8x128xf32>
    %310 = arith.maximumf %308, %309 : vector<8x128xf32>
    %c1_207 = arith.constant 1 : index
    %c0_208 = arith.constant 0 : index
    %c0_209 = arith.constant 0 : index
    %311 = vector.load %arg30[%c1_207, %c0_208, %c0_209] : memref<3x128x128xbf16, #tpu.memory_space<vmem>>, vector<1x128x128xbf16>
    %312 = vector.shape_cast %311 : vector<1x128x128xbf16> to vector<128x128xbf16>
    %313 = arith.truncf %310 : vector<8x128xf32> to vector<8x128xbf16>
    %cst_210 = arith.constant dense<0.000000e+00> : vector<8x128xf32>
    %314 = tpu.matmul %313, %312, %cst_210 {dimension_numbers = #tpu.dot_dimension_numbers<[1], [0], [0], [1], [0, 0, 1, 1], [], []>} : vector<8x128xbf16>, vector<128x128xbf16>, vector<8x128xf32> -> vector<8x128xf32>
    %c1_211 = arith.constant 1 : index
    %c0_212 = arith.constant 0 : index
    %c0_213 = arith.constant 0 : index
    %315 = vector.load %arg31[%c1_211, %c0_212, %c0_213] : memref<3x1x128xf32, #tpu.memory_space<vmem>>, vector<1x1x128xf32>
    %316 = vector.shape_cast %315 : vector<1x1x128xf32> to vector<1x128xf32>
    %317 = vector.broadcast %316 : vector<1x128xf32> to vector<8x128xf32>
    %318 = arith.addf %314, %317 : vector<8x128xf32>
    %cst_214 = arith.constant 0.000000e+00 : f32
    %319 = vector.broadcast %cst_214 : f32 to vector<8x128xf32>
    %320 = arith.maximumf %268, %319 : vector<8x128xf32>
    %cst_215 = arith.constant 0.000000e+00 : f32
    %321 = vector.broadcast %cst_215 : f32 to vector<16x128xf32>
    %322 = arith.maximumf %222, %321 : vector<16x128xf32>
    %cst_216 = arith.constant 0.000000e+00 : f32
    %323 = vector.broadcast %cst_216 : f32 to vector<8x128xf32>
    %324 = arith.maximumf %318, %323 : vector<8x128xf32>
    %c2 = arith.constant 2 : index
    %c0_217 = arith.constant 0 : index
    %c0_218 = arith.constant 0 : index
    %325 = vector.load %arg13[%c2, %c0_217, %c0_218] : memref<3x128x128xbf16, #tpu.memory_space<vmem>>, vector<1x128x128xbf16>
    %326 = vector.shape_cast %325 : vector<1x128x128xbf16> to vector<128x128xbf16>
    %327 = arith.truncf %320 : vector<8x128xf32> to vector<8x128xbf16>
    %cst_219 = arith.constant dense<0.000000e+00> : vector<8x128xf32>
    %328 = tpu.matmul %327, %326, %cst_219 {dimension_numbers = #tpu.dot_dimension_numbers<[1], [0], [0], [1], [0, 0, 1, 1], [], []>} : vector<8x128xbf16>, vector<128x128xbf16>, vector<8x128xf32> -> vector<8x128xf32>
    %329 = tpu.iota {dimensions = array<i32: 1>} : vector<16x8xi32>
    %330 = vector.broadcast %0 : vector<16x1xi32> to vector<16x8xi32>
    %331 = arith.cmpi eq, %329, %330 : vector<16x8xi32>
    %cst_220 = arith.constant 1.000000e+00 : f32
    %cst_221 = arith.constant 0.000000e+00 : f32
    %332 = vector.broadcast %cst_220 : f32 to vector<16x8xf32>
    %333 = vector.broadcast %cst_221 : f32 to vector<16x8xf32>
    %334 = arith.select %331, %332, %333 : vector<16x8xi1>, vector<16x8xf32>
    %cst_222 = arith.constant dense<0.000000e+00> : vector<16x128xf32>
    %335 = tpu.matmul %334, %328, %cst_222 {dimension_numbers = #tpu.dot_dimension_numbers<[1], [0], [0], [1], [0, 0, 1, 1], [], []>} : vector<16x8xf32>, vector<8x128xf32>, vector<16x128xf32> -> vector<16x128xf32>
    %c2_223 = arith.constant 2 : index
    %c0_224 = arith.constant 0 : index
    %c0_225 = arith.constant 0 : index
    %336 = vector.load %arg14[%c2_223, %c0_224, %c0_225] : memref<3x128x128xbf16, #tpu.memory_space<vmem>>, vector<1x128x128xbf16>
    %337 = vector.shape_cast %336 : vector<1x128x128xbf16> to vector<128x128xbf16>
    %338 = arith.truncf %320 : vector<8x128xf32> to vector<8x128xbf16>
    %cst_226 = arith.constant dense<0.000000e+00> : vector<8x128xf32>
    %339 = tpu.matmul %338, %337, %cst_226 {dimension_numbers = #tpu.dot_dimension_numbers<[1], [0], [0], [1], [0, 0, 1, 1], [], []>} : vector<8x128xbf16>, vector<128x128xbf16>, vector<8x128xf32> -> vector<8x128xf32>
    %340 = tpu.iota {dimensions = array<i32: 1>} : vector<16x8xi32>
    %341 = vector.broadcast %1 : vector<16x1xi32> to vector<16x8xi32>
    %342 = arith.cmpi eq, %340, %341 : vector<16x8xi32>
    %cst_227 = arith.constant 1.000000e+00 : f32
    %cst_228 = arith.constant 0.000000e+00 : f32
    %343 = vector.broadcast %cst_227 : f32 to vector<16x8xf32>
    %344 = vector.broadcast %cst_228 : f32 to vector<16x8xf32>
    %345 = arith.select %342, %343, %344 : vector<16x8xi1>, vector<16x8xf32>
    %cst_229 = arith.constant dense<0.000000e+00> : vector<16x128xf32>
    %346 = tpu.matmul %345, %339, %cst_229 {dimension_numbers = #tpu.dot_dimension_numbers<[1], [0], [0], [1], [0, 0, 1, 1], [], []>} : vector<16x8xf32>, vector<8x128xf32>, vector<16x128xf32> -> vector<16x128xf32>
    %347 = arith.addf %335, %346 : vector<16x128xf32>
    %c2_230 = arith.constant 2 : index
    %c0_231 = arith.constant 0 : index
    %c0_232 = arith.constant 0 : index
    %348 = vector.load %arg15[%c2_230, %c0_231, %c0_232] : memref<3x128x128xbf16, #tpu.memory_space<vmem>>, vector<1x128x128xbf16>
    %349 = vector.shape_cast %348 : vector<1x128x128xbf16> to vector<128x128xbf16>
    %350 = arith.truncf %322 : vector<16x128xf32> to vector<16x128xbf16>
    %cst_233 = arith.constant dense<0.000000e+00> : vector<16x128xf32>
    %351 = tpu.matmul %350, %349, %cst_233 {dimension_numbers = #tpu.dot_dimension_numbers<[1], [0], [0], [1], [0, 0, 1, 1], [], []>} : vector<16x128xbf16>, vector<128x128xbf16>, vector<16x128xf32> -> vector<16x128xf32>
    %352 = arith.addf %347, %351 : vector<16x128xf32>
    %c2_234 = arith.constant 2 : index
    %c0_235 = arith.constant 0 : index
    %c0_236 = arith.constant 0 : index
    %353 = vector.load %arg16[%c2_234, %c0_235, %c0_236] : memref<3x128x128xbf16, #tpu.memory_space<vmem>>, vector<1x128x128xbf16>
    %354 = vector.shape_cast %353 : vector<1x128x128xbf16> to vector<128x128xbf16>
    %355 = arith.truncf %324 : vector<8x128xf32> to vector<8x128xbf16>
    %cst_237 = arith.constant dense<0.000000e+00> : vector<8x128xf32>
    %356 = tpu.matmul %355, %354, %cst_237 {dimension_numbers = #tpu.dot_dimension_numbers<[1], [0], [0], [1], [0, 0, 1, 1], [], []>} : vector<8x128xbf16>, vector<128x128xbf16>, vector<8x128xf32> -> vector<8x128xf32>
    %357 = tpu.iota {dimensions = array<i32: 1>} : vector<16x8xi32>
    %358 = vector.broadcast %2 : vector<16x1xi32> to vector<16x8xi32>
    %359 = arith.cmpi eq, %357, %358 : vector<16x8xi32>
    %cst_238 = arith.constant 1.000000e+00 : f32
    %cst_239 = arith.constant 0.000000e+00 : f32
    %360 = vector.broadcast %cst_238 : f32 to vector<16x8xf32>
    %361 = vector.broadcast %cst_239 : f32 to vector<16x8xf32>
    %362 = arith.select %359, %360, %361 : vector<16x8xi1>, vector<16x8xf32>
    %cst_240 = arith.constant dense<0.000000e+00> : vector<16x128xf32>
    %363 = tpu.matmul %362, %356, %cst_240 {dimension_numbers = #tpu.dot_dimension_numbers<[1], [0], [0], [1], [0, 0, 1, 1], [], []>} : vector<16x8xf32>, vector<8x128xf32>, vector<16x128xf32> -> vector<16x128xf32>
    %364 = arith.addf %352, %363 : vector<16x128xf32>
    %c2_241 = arith.constant 2 : index
    %c0_242 = arith.constant 0 : index
    %c0_243 = arith.constant 0 : index
    %365 = vector.load %arg17[%c2_241, %c0_242, %c0_243] : memref<3x1x128xf32, #tpu.memory_space<vmem>>, vector<1x1x128xf32>
    %366 = vector.shape_cast %365 : vector<1x1x128xf32> to vector<1x128xf32>
    %367 = vector.broadcast %366 : vector<1x128xf32> to vector<16x128xf32>
    %368 = arith.addf %364, %367 : vector<16x128xf32>
    %cst_244 = arith.constant 0.000000e+00 : f32
    %369 = vector.broadcast %cst_244 : f32 to vector<16x128xf32>
    %370 = arith.maximumf %368, %369 : vector<16x128xf32>
    %c2_245 = arith.constant 2 : index
    %c0_246 = arith.constant 0 : index
    %c0_247 = arith.constant 0 : index
    %371 = vector.load %arg18[%c2_245, %c0_246, %c0_247] : memref<3x128x128xbf16, #tpu.memory_space<vmem>>, vector<1x128x128xbf16>
    %372 = vector.shape_cast %371 : vector<1x128x128xbf16> to vector<128x128xbf16>
    %373 = arith.truncf %370 : vector<16x128xf32> to vector<16x128xbf16>
    %cst_248 = arith.constant dense<0.000000e+00> : vector<16x128xf32>
    %374 = tpu.matmul %373, %372, %cst_248 {dimension_numbers = #tpu.dot_dimension_numbers<[1], [0], [0], [1], [0, 0, 1, 1], [], []>} : vector<16x128xbf16>, vector<128x128xbf16>, vector<16x128xf32> -> vector<16x128xf32>
    %c2_249 = arith.constant 2 : index
    %c0_250 = arith.constant 0 : index
    %c0_251 = arith.constant 0 : index
    %375 = vector.load %arg19[%c2_249, %c0_250, %c0_251] : memref<3x1x128xf32, #tpu.memory_space<vmem>>, vector<1x1x128xf32>
    %376 = vector.shape_cast %375 : vector<1x1x128xf32> to vector<1x128xf32>
    %377 = vector.broadcast %376 : vector<1x128xf32> to vector<16x128xf32>
    %378 = arith.addf %374, %377 : vector<16x128xf32>
    %379 = tpu.iota {dimensions = array<i32: 0>} : vector<8x16xi32>
    %380 = vector.broadcast %4 : vector<1x16xi32> to vector<8x16xi32>
    %381 = arith.cmpi eq, %379, %380 : vector<8x16xi32>
    %cst_252 = arith.constant 1.000000e+00 : f32
    %cst_253 = arith.constant 0.000000e+00 : f32
    %382 = vector.broadcast %cst_252 : f32 to vector<8x16xf32>
    %383 = vector.broadcast %cst_253 : f32 to vector<8x16xf32>
    %384 = arith.select %381, %382, %383 : vector<8x16xi1>, vector<8x16xf32>
    %385 = arith.truncf %384 : vector<8x16xf32> to vector<8x16xbf16>
    %386 = arith.truncf %378 : vector<16x128xf32> to vector<16x128xbf16>
    %cst_254 = arith.constant dense<0.000000e+00> : vector<8x128xf32>
    %387 = tpu.matmul %385, %386, %cst_254 {dimension_numbers = #tpu.dot_dimension_numbers<[1], [0], [0], [1], [0, 0, 1, 1], [], []>} : vector<8x16xbf16>, vector<16x128xbf16>, vector<8x128xf32> -> vector<8x128xf32>
    %388 = vector.broadcast %7 : vector<8x1xf32> to vector<8x128xf32>
    %389 = arith.mulf %387, %388 : vector<8x128xf32>
    %c2_255 = arith.constant 2 : index
    %c0_256 = arith.constant 0 : index
    %c0_257 = arith.constant 0 : index
    %390 = vector.load %arg20[%c2_255, %c0_256, %c0_257] : memref<3x128x128xbf16, #tpu.memory_space<vmem>>, vector<1x128x128xbf16>
    %391 = vector.shape_cast %390 : vector<1x128x128xbf16> to vector<128x128xbf16>
    %392 = arith.truncf %389 : vector<8x128xf32> to vector<8x128xbf16>
    %cst_258 = arith.constant dense<0.000000e+00> : vector<8x128xf32>
    %393 = tpu.matmul %392, %391, %cst_258 {dimension_numbers = #tpu.dot_dimension_numbers<[1], [0], [0], [1], [0, 0, 1, 1], [], []>} : vector<8x128xbf16>, vector<128x128xbf16>, vector<8x128xf32> -> vector<8x128xf32>
    %c2_259 = arith.constant 2 : index
    %c0_260 = arith.constant 0 : index
    %c0_261 = arith.constant 0 : index
    %394 = vector.load %arg21[%c2_259, %c0_260, %c0_261] : memref<3x128x128xbf16, #tpu.memory_space<vmem>>, vector<1x128x128xbf16>
    %395 = vector.shape_cast %394 : vector<1x128x128xbf16> to vector<128x128xbf16>
    %396 = arith.truncf %320 : vector<8x128xf32> to vector<8x128xbf16>
    %cst_262 = arith.constant dense<0.000000e+00> : vector<8x128xf32>
    %397 = tpu.matmul %396, %395, %cst_262 {dimension_numbers = #tpu.dot_dimension_numbers<[1], [0], [0], [1], [0, 0, 1, 1], [], []>} : vector<8x128xbf16>, vector<128x128xbf16>, vector<8x128xf32> -> vector<8x128xf32>
    %398 = arith.addf %393, %397 : vector<8x128xf32>
    %c2_263 = arith.constant 2 : index
    %c0_264 = arith.constant 0 : index
    %c0_265 = arith.constant 0 : index
    %399 = vector.load %arg22[%c2_263, %c0_264, %c0_265] : memref<3x128x128xbf16, #tpu.memory_space<vmem>>, vector<1x128x128xbf16>
    %400 = vector.shape_cast %399 : vector<1x128x128xbf16> to vector<128x128xbf16>
    %401 = arith.truncf %324 : vector<8x128xf32> to vector<8x128xbf16>
    %cst_266 = arith.constant dense<0.000000e+00> : vector<8x128xf32>
    %402 = tpu.matmul %401, %400, %cst_266 {dimension_numbers = #tpu.dot_dimension_numbers<[1], [0], [0], [1], [0, 0, 1, 1], [], []>} : vector<8x128xbf16>, vector<128x128xbf16>, vector<8x128xf32> -> vector<8x128xf32>
    %403 = tpu.iota {dimensions = array<i32: 1>} : vector<8x8xi32>
    %404 = vector.broadcast %3 : vector<8x1xi32> to vector<8x8xi32>
    %405 = arith.cmpi eq, %403, %404 : vector<8x8xi32>
    %cst_267 = arith.constant 1.000000e+00 : f32
    %cst_268 = arith.constant 0.000000e+00 : f32
    %406 = vector.broadcast %cst_267 : f32 to vector<8x8xf32>
    %407 = vector.broadcast %cst_268 : f32 to vector<8x8xf32>
    %408 = arith.select %405, %406, %407 : vector<8x8xi1>, vector<8x8xf32>
    %cst_269 = arith.constant dense<0.000000e+00> : vector<8x128xf32>
    %409 = tpu.matmul %408, %402, %cst_269 {dimension_numbers = #tpu.dot_dimension_numbers<[1], [0], [0], [1], [0, 0, 1, 1], [], []>} : vector<8x8xf32>, vector<8x128xf32>, vector<8x128xf32> -> vector<8x128xf32>
    %410 = arith.addf %398, %409 : vector<8x128xf32>
    %c2_270 = arith.constant 2 : index
    %c0_271 = arith.constant 0 : index
    %c0_272 = arith.constant 0 : index
    %411 = vector.load %arg23[%c2_270, %c0_271, %c0_272] : memref<3x1x128xf32, #tpu.memory_space<vmem>>, vector<1x1x128xf32>
    %412 = vector.shape_cast %411 : vector<1x1x128xf32> to vector<1x128xf32>
    %413 = vector.broadcast %412 : vector<1x128xf32> to vector<8x128xf32>
    %414 = arith.addf %410, %413 : vector<8x128xf32>
    %cst_273 = arith.constant 0.000000e+00 : f32
    %415 = vector.broadcast %cst_273 : f32 to vector<8x128xf32>
    %416 = arith.maximumf %414, %415 : vector<8x128xf32>
    %c2_274 = arith.constant 2 : index
    %c0_275 = arith.constant 0 : index
    %c0_276 = arith.constant 0 : index
    %417 = vector.load %arg24[%c2_274, %c0_275, %c0_276] : memref<3x128x128xbf16, #tpu.memory_space<vmem>>, vector<1x128x128xbf16>
    %418 = vector.shape_cast %417 : vector<1x128x128xbf16> to vector<128x128xbf16>
    %419 = arith.truncf %416 : vector<8x128xf32> to vector<8x128xbf16>
    %cst_277 = arith.constant dense<0.000000e+00> : vector<8x128xf32>
    %420 = tpu.matmul %419, %418, %cst_277 {dimension_numbers = #tpu.dot_dimension_numbers<[1], [0], [0], [1], [0, 0, 1, 1], [], []>} : vector<8x128xbf16>, vector<128x128xbf16>, vector<8x128xf32> -> vector<8x128xf32>
    %c2_278 = arith.constant 2 : index
    %c0_279 = arith.constant 0 : index
    %c0_280 = arith.constant 0 : index
    %421 = vector.load %arg25[%c2_278, %c0_279, %c0_280] : memref<3x1x128xf32, #tpu.memory_space<vmem>>, vector<1x1x128xf32>
    %422 = vector.shape_cast %421 : vector<1x1x128xf32> to vector<1x128xf32>
    %423 = vector.broadcast %422 : vector<1x128xf32> to vector<8x128xf32>
    %424 = arith.addf %420, %423 : vector<8x128xf32>
    %425 = tpu.iota {dimensions = array<i32: 0>} : vector<8x8xi32>
    %426 = vector.broadcast %6 : vector<1x8xi32> to vector<8x8xi32>
    %427 = arith.cmpi eq, %425, %426 : vector<8x8xi32>
    %cst_281 = arith.constant 1.000000e+00 : f32
    %cst_282 = arith.constant 0.000000e+00 : f32
    %428 = vector.broadcast %cst_281 : f32 to vector<8x8xf32>
    %429 = vector.broadcast %cst_282 : f32 to vector<8x8xf32>
    %430 = arith.select %427, %428, %429 : vector<8x8xi1>, vector<8x8xf32>
    %431 = arith.truncf %430 : vector<8x8xf32> to vector<8x8xbf16>
    %432 = arith.truncf %424 : vector<8x128xf32> to vector<8x128xbf16>
    %cst_283 = arith.constant dense<0.000000e+00> : vector<8x128xf32>
    %433 = tpu.matmul %431, %432, %cst_283 {dimension_numbers = #tpu.dot_dimension_numbers<[1], [0], [0], [1], [0, 0, 1, 1], [], []>} : vector<8x8xbf16>, vector<8x128xbf16>, vector<8x128xf32> -> vector<8x128xf32>
    %434 = vector.broadcast %9 : vector<8x1xf32> to vector<8x128xf32>
    %435 = arith.mulf %433, %434 : vector<8x128xf32>
    %436 = tpu.iota {dimensions = array<i32: 0>} : vector<8x16xi32>
    %437 = vector.broadcast %5 : vector<1x16xi32> to vector<8x16xi32>
    %438 = arith.cmpi eq, %436, %437 : vector<8x16xi32>
    %cst_284 = arith.constant 1.000000e+00 : f32
    %cst_285 = arith.constant 0.000000e+00 : f32
    %439 = vector.broadcast %cst_284 : f32 to vector<8x16xf32>
    %440 = vector.broadcast %cst_285 : f32 to vector<8x16xf32>
    %441 = arith.select %438, %439, %440 : vector<8x16xi1>, vector<8x16xf32>
    %442 = arith.truncf %441 : vector<8x16xf32> to vector<8x16xbf16>
    %443 = arith.truncf %378 : vector<16x128xf32> to vector<16x128xbf16>
    %cst_286 = arith.constant dense<0.000000e+00> : vector<8x128xf32>
    %444 = tpu.matmul %442, %443, %cst_286 {dimension_numbers = #tpu.dot_dimension_numbers<[1], [0], [0], [1], [0, 0, 1, 1], [], []>} : vector<8x16xbf16>, vector<16x128xbf16>, vector<8x128xf32> -> vector<8x128xf32>
    %445 = vector.broadcast %8 : vector<8x1xf32> to vector<8x128xf32>
    %446 = arith.mulf %444, %445 : vector<8x128xf32>
    %c2_287 = arith.constant 2 : index
    %c0_288 = arith.constant 0 : index
    %c0_289 = arith.constant 0 : index
    %447 = vector.load %arg26[%c2_287, %c0_288, %c0_289] : memref<3x128x128xbf16, #tpu.memory_space<vmem>>, vector<1x128x128xbf16>
    %448 = vector.shape_cast %447 : vector<1x128x128xbf16> to vector<128x128xbf16>
    %449 = arith.truncf %435 : vector<8x128xf32> to vector<8x128xbf16>
    %cst_290 = arith.constant dense<0.000000e+00> : vector<8x128xf32>
    %450 = tpu.matmul %449, %448, %cst_290 {dimension_numbers = #tpu.dot_dimension_numbers<[1], [0], [0], [1], [0, 0, 1, 1], [], []>} : vector<8x128xbf16>, vector<128x128xbf16>, vector<8x128xf32> -> vector<8x128xf32>
    %c2_291 = arith.constant 2 : index
    %c0_292 = arith.constant 0 : index
    %c0_293 = arith.constant 0 : index
    %451 = vector.load %arg27[%c2_291, %c0_292, %c0_293] : memref<3x128x128xbf16, #tpu.memory_space<vmem>>, vector<1x128x128xbf16>
    %452 = vector.shape_cast %451 : vector<1x128x128xbf16> to vector<128x128xbf16>
    %453 = arith.truncf %446 : vector<8x128xf32> to vector<8x128xbf16>
    %cst_294 = arith.constant dense<0.000000e+00> : vector<8x128xf32>
    %454 = tpu.matmul %453, %452, %cst_294 {dimension_numbers = #tpu.dot_dimension_numbers<[1], [0], [0], [1], [0, 0, 1, 1], [], []>} : vector<8x128xbf16>, vector<128x128xbf16>, vector<8x128xf32> -> vector<8x128xf32>
    %455 = arith.addf %450, %454 : vector<8x128xf32>
    %c2_295 = arith.constant 2 : index
    %c0_296 = arith.constant 0 : index
    %c0_297 = arith.constant 0 : index
    %456 = vector.load %arg28[%c2_295, %c0_296, %c0_297] : memref<3x128x128xbf16, #tpu.memory_space<vmem>>, vector<1x128x128xbf16>
    %457 = vector.shape_cast %456 : vector<1x128x128xbf16> to vector<128x128xbf16>
    %458 = arith.truncf %324 : vector<8x128xf32> to vector<8x128xbf16>
    %cst_298 = arith.constant dense<0.000000e+00> : vector<8x128xf32>
    %459 = tpu.matmul %458, %457, %cst_298 {dimension_numbers = #tpu.dot_dimension_numbers<[1], [0], [0], [1], [0, 0, 1, 1], [], []>} : vector<8x128xbf16>, vector<128x128xbf16>, vector<8x128xf32> -> vector<8x128xf32>
    %460 = arith.addf %455, %459 : vector<8x128xf32>
    %c2_299 = arith.constant 2 : index
    %c0_300 = arith.constant 0 : index
    %c0_301 = arith.constant 0 : index
    %461 = vector.load %arg29[%c2_299, %c0_300, %c0_301] : memref<3x1x128xf32, #tpu.memory_space<vmem>>, vector<1x1x128xf32>
    %462 = vector.shape_cast %461 : vector<1x1x128xf32> to vector<1x128xf32>
    %463 = vector.broadcast %462 : vector<1x128xf32> to vector<8x128xf32>
    %464 = arith.addf %460, %463 : vector<8x128xf32>
    %cst_302 = arith.constant 0.000000e+00 : f32
    %465 = vector.broadcast %cst_302 : f32 to vector<8x128xf32>
    %466 = arith.maximumf %464, %465 : vector<8x128xf32>
    %c2_303 = arith.constant 2 : index
    %c0_304 = arith.constant 0 : index
    %c0_305 = arith.constant 0 : index
    %467 = vector.load %arg30[%c2_303, %c0_304, %c0_305] : memref<3x128x128xbf16, #tpu.memory_space<vmem>>, vector<1x128x128xbf16>
    %468 = vector.shape_cast %467 : vector<1x128x128xbf16> to vector<128x128xbf16>
    %469 = arith.truncf %466 : vector<8x128xf32> to vector<8x128xbf16>
    %cst_306 = arith.constant dense<0.000000e+00> : vector<8x128xf32>
    %470 = tpu.matmul %469, %468, %cst_306 {dimension_numbers = #tpu.dot_dimension_numbers<[1], [0], [0], [1], [0, 0, 1, 1], [], []>} : vector<8x128xbf16>, vector<128x128xbf16>, vector<8x128xf32> -> vector<8x128xf32>
    %c2_307 = arith.constant 2 : index
    %c0_308 = arith.constant 0 : index
    %c0_309 = arith.constant 0 : index
    %471 = vector.load %arg31[%c2_307, %c0_308, %c0_309] : memref<3x1x128xf32, #tpu.memory_space<vmem>>, vector<1x1x128xf32>
    %472 = vector.shape_cast %471 : vector<1x1x128xf32> to vector<1x128xf32>
    %473 = vector.broadcast %472 : vector<1x128xf32> to vector<8x128xf32>
    %474 = arith.addf %470, %473 : vector<8x128xf32>
    %cst_310 = arith.constant 0.000000e+00 : f32
    %475 = vector.broadcast %cst_310 : f32 to vector<8x128xf32>
    %476 = arith.maximumf %424, %475 : vector<8x128xf32>
    %cst_311 = arith.constant 0.000000e+00 : f32
    %477 = vector.broadcast %cst_311 : f32 to vector<16x128xf32>
    %478 = arith.maximumf %378, %477 : vector<16x128xf32>
    %cst_312 = arith.constant 0.000000e+00 : f32
    %479 = vector.broadcast %cst_312 : f32 to vector<8x128xf32>
    %480 = arith.maximumf %474, %479 : vector<8x128xf32>
    %c0_313 = arith.constant 0 : index
    %c0_314 = arith.constant 0 : index
    %481 = vector.load %arg32[%c0_313, %c0_314] : memref<8x128xf32, #tpu.memory_space<vmem>>, vector<8x128xf32>
    tpu.vector_store %arg32[%c0_313, %c0_314], %476 {strides = array<i32>} : memref<8x128xf32, #tpu.memory_space<vmem>>, vector<8x128xf32>,
    %c0_315 = arith.constant 0 : index
    %c0_316 = arith.constant 0 : index
    %482 = vector.load %arg33[%c0_315, %c0_316] : memref<16x128xf32, #tpu.memory_space<vmem>>, vector<16x128xf32>
    tpu.vector_store %arg33[%c0_315, %c0_316], %478 {strides = array<i32>} : memref<16x128xf32, #tpu.memory_space<vmem>>, vector<16x128xf32>,
    %c0_317 = arith.constant 0 : index
    %c0_318 = arith.constant 0 : index
    %483 = vector.load %arg34[%c0_317, %c0_318] : memref<8x128xf32, #tpu.memory_space<vmem>>, vector<8x128xf32>
    tpu.vector_store %arg34[%c0_317, %c0_318], %480 {strides = array<i32>} : memref<8x128xf32, #tpu.memory_space<vmem>>, vector<8x128xf32>,
    return
  }
}

</mosaic_0001>

<llo_original>
// kernel: fidelity_gnn_forward.1
$region0: #{fidelity_gnn_forward.1}
  #allocation0 [shape = 'u32[]', space=smem, size = 0x4, offset = 0x4, fixed_abs, tag = 'smem constant byte address 0x4 - core index']
  #allocation1 [shape = 'u32[144,128]{1,0:T(1,128)}', space=vmem, size = 0x12000, scoped, tag = 'internal scratch']
  %s0 = inlined_call_operand.smem [shape: u32[35], index: -1, kind: input, shape index: {}]
  %s1 = sld [smem:[%s0]]
  %s2 = scalar_lea.smem %s0, 1
  %s3 = sld [smem:[%s2]]
  %s4 = scalar_lea.smem %s0, 2
  %s5 = sld [smem:[%s4]]
  %s6 = scalar_lea.smem %s0, 3
  %s7 = sld [smem:[%s6]]
  %s8 = scalar_lea.smem %s0, 4
  %s9 = sld [smem:[%s8]]
  %s10 = scalar_lea.smem %s0, 5
  %s11 = sld [smem:[%s10]]
  %s12 = scalar_lea.smem %s0, 6
  %s13 = sld [smem:[%s12]]
  %s14 = scalar_lea.smem %s0, 7
  %s15 = sld [smem:[%s14]]
  %s16 = scalar_lea.smem %s0, 8
  %s17 = sld [smem:[%s16]]
  %s18 = scalar_lea.smem %s0, 9
  %s19 = sld [smem:[%s18]]
  %s20 = scalar_lea.smem %s0, 10
  %s21 = sld [smem:[%s20]]
  %s22 = scalar_lea.smem %s0, 11
  %s23 = sld [smem:[%s22]]
  %s24 = scalar_lea.smem %s0, 12
  %s25 = sld [smem:[%s24]]
  %s26 = scalar_lea.smem %s0, 13
  %s27 = sld [smem:[%s26]]
  %s28 = scalar_lea.smem %s0, 14
  %s29 = sld [smem:[%s28]]
  %s30 = scalar_lea.smem %s0, 15
  %s31 = sld [smem:[%s30]]
  %s32 = scalar_lea.smem %s0, 16
  %s33 = sld [smem:[%s32]]
  %s34 = scalar_lea.smem %s0, 17
  %s35 = sld [smem:[%s34]]
  %s36 = scalar_lea.smem %s0, 18
  %s37 = sld [smem:[%s36]]
  %s38 = scalar_lea.smem %s0, 19
  %s39 = sld [smem:[%s38]]
  %s40 = scalar_lea.smem %s0, 20
  %s41 = sld [smem:[%s40]]
  %s42 = scalar_lea.smem %s0, 21
  %s43 = sld [smem:[%s42]]
  %s44 = scalar_lea.smem %s0, 22
  %s45 = sld [smem:[%s44]]
  %s46 = scalar_lea.smem %s0, 23
  %s47 = sld [smem:[%s46]]
  %s48 = scalar_lea.smem %s0, 24
  %s49 = sld [smem:[%s48]]
  %s50 = scalar_lea.smem %s0, 25
  %s51 = sld [smem:[%s50]]
  %s52 = scalar_lea.smem %s0, 26
  %s53 = sld [smem:[%s52]]
  %s54 = scalar_lea.smem %s0, 27
  %s55 = sld [smem:[%s54]]
  %s56 = scalar_lea.smem %s0, 28
  %s57 = sld [smem:[%s56]]
  %s58 = scalar_lea.smem %s0, 29
  %s59 = sld [smem:[%s58]]
  %s60 = scalar_lea.smem %s0, 30
  %s61 = sld [smem:[%s60]]
  %s62 = scalar_lea.smem %s0, 31
  %s63 = sld [smem:[%s62]]
  %s64 = scalar_lea.smem %s0, 32
  %s65 = sld [smem:[%s64]]
  %s66 = scalar_lea.smem %s0, 33
  %s67 = sld [smem:[%s66]]
  %s68 = scalar_lea.smem %s0, 34
  %s69 = sld [smem:[%s68]]
  %70 = xla_tuple %s65, %s67, %s69
  %s71 = sld [smem:[#allocation0]]
  $region154: #{fidelity_gnn_forward.1} parent=0
    _
  %s73 = ssub.s32 1, %s71
  %s74 = scalar_select 0, %s73, %s71
  // Predicated region
  $region2: #{fidelity_gnn_forward.1} parent=0 // pred_check
    _
  $region3: #{fidelity_gnn_forward.1} parent=0 // pred_check_branch
    %76 = sbr.rel (0) target = $region5
  $region4: #{fidelity_gnn_forward.1} parent=0 // pred_region
    _
  $region5: #{fidelity_gnn_forward.1} parent=0 // pred_fallthru
    _
  // Predicated region
  $region6: #{fidelity_gnn_forward.1} parent=0 // pred_check
    _
  $region7: #{fidelity_gnn_forward.1} parent=0 // pred_check_branch
    %78 = sbr.rel (0) target = $region9
  $region8: #{fidelity_gnn_forward.1} parent=0 // pred_region
    _
  $region9: #{fidelity_gnn_forward.1} parent=0 // pred_fallthru
    _
  // Predicated region
  $region10: #{fidelity_gnn_forward.1} parent=0 // pred_check
    _
  $region11: #{fidelity_gnn_forward.1} parent=0 // pred_check_branch
    %80 = sbr.rel (0) target = $region13
  $region12: #{fidelity_gnn_forward.1} parent=0 // pred_region
    _
  $region13: #{fidelity_gnn_forward.1} parent=0 // pred_fallthru
    _
  // Predicated region
  $region14: #{fidelity_gnn_forward.1} parent=0 // pred_check
    _
  $region15: #{fidelity_gnn_forward.1} parent=0 // pred_check_branch
    %82 = sbr.rel (0) target = $region17
  $region16: #{fidelity_gnn_forward.1} parent=0 // pred_region
    _
  $region17: #{fidelity_gnn_forward.1} parent=0 // pred_fallthru
    _
  // Predicated region
  $region18: #{fidelity_gnn_forward.1} parent=0 // pred_check
    _
  $region19: #{fidelity_gnn_forward.1} parent=0 // pred_check_branch
    %84 = sbr.rel (0) target = $region21
  $region20: #{fidelity_gnn_forward.1} parent=0 // pred_region
    _
  $region21: #{fidelity_gnn_forward.1} parent=0 // pred_fallthru
    _
  // Predicated region
  $region22: #{fidelity_gnn_forward.1} parent=0 // pred_check
    _
  $region23: #{fidelity_gnn_forward.1} parent=0 // pred_check_branch
    %86 = sbr.rel (0) target = $region25
  $region24: #{fidelity_gnn_forward.1} parent=0 // pred_region
    _
  $region25: #{fidelity_gnn_forward.1} parent=0 // pred_fallthru
    _
  // Predicated region
  $region26: #{fidelity_gnn_forward.1} parent=0 // pred_check
    _
  $region27: #{fidelity_gnn_forward.1} parent=0 // pred_check_branch
    %88 = sbr.rel (0) target = $region29
  $region28: #{fidelity_gnn_forward.1} parent=0 // pred_region
    _
  $region29: #{fidelity_gnn_forward.1} parent=0 // pred_fallthru
    _
  // Predicated region
  $region30: #{fidelity_gnn_forward.1} parent=0 // pred_check
    _
  $region31: #{fidelity_gnn_forward.1} parent=0 // pred_check_branch
    %90 = sbr.rel (0) target = $region33
  $region32: #{fidelity_gnn_forward.1} parent=0 // pred_region
    _
  $region33: #{fidelity_gnn_forward.1} parent=0 // pred_fallthru
    _
  // Predicated region
  $region34: #{fidelity_gnn_forward.1} parent=0 // pred_check
    _
  $region35: #{fidelity_gnn_forward.1} parent=0 // pred_check_branch
    %92 = sbr.rel (0) target = $region37
  $region36: #{fidelity_gnn_forward.1} parent=0 // pred_region
    _
  $region37: #{fidelity_gnn_forward.1} parent=0 // pred_fallthru
    _
  // Predicated region
  $region38: #{fidelity_gnn_forward.1} parent=0 // pred_check
    _
  $region39: #{fidelity_gnn_forward.1} parent=0 // pred_check_branch
    %94 = sbr.rel (0) target = $region41
  $region40: #{fidelity_gnn_forward.1} parent=0 // pred_region
    _
  $region41: #{fidelity_gnn_forward.1} parent=0 // pred_fallthru
    _
  // Predicated region
  $region42: #{fidelity_gnn_forward.1} parent=0 // pred_check
    _
  $region43: #{fidelity_gnn_forward.1} parent=0 // pred_check_branch
    %96 = sbr.rel (0) target = $region45
  $region44: #{fidelity_gnn_forward.1} parent=0 // pred_region
    _
  $region45: #{fidelity_gnn_forward.1} parent=0 // pred_fallthru
    _
  // Predicated region
  $region46: #{fidelity_gnn_forward.1} parent=0 // pred_check
    _
  $region47: #{fidelity_gnn_forward.1} parent=0 // pred_check_branch
    %98 = sbr.rel (0) target = $region49
  $region48: #{fidelity_gnn_forward.1} parent=0 // pred_region
    _
  $region49: #{fidelity_gnn_forward.1} parent=0 // pred_fallthru
    _
  // Predicated region
  $region50: #{fidelity_gnn_forward.1} parent=0 // pred_check
    _
  $region51: #{fidelity_gnn_forward.1} parent=0 // pred_check_branch
    %100 = sbr.rel (0) target = $region53
  $region52: #{fidelity_gnn_forward.1} parent=0 // pred_region
    _
  $region53: #{fidelity_gnn_forward.1} parent=0 // pred_fallthru
    _
  // Predicated region
  $region54: #{fidelity_gnn_forward.1} parent=0 // pred_check
    _
  $region55: #{fidelity_gnn_forward.1} parent=0 // pred_check_branch
    %102 = sbr.rel (0) target = $region57
  $region56: #{fidelity_gnn_forward.1} parent=0 // pred_region
    _
  $region57: #{fidelity_gnn_forward.1} parent=0 // pred_fallthru
    _
  // Predicated region
  $region58: #{fidelity_gnn_forward.1} parent=0 // pred_check
    _
  $region59: #{fidelity_gnn_forward.1} parent=0 // pred_check_branch
    %104 = sbr.rel (0) target = $region61
  $region60: #{fidelity_gnn_forward.1} parent=0 // pred_region
    _
  $region61: #{fidelity_gnn_forward.1} parent=0 // pred_fallthru
    _
  // Predicated region
  $region62: #{fidelity_gnn_forward.1} parent=0 // pred_check
    _
  $region63: #{fidelity_gnn_forward.1} parent=0 // pred_check_branch
    %106 = sbr.rel (0) target = $region65
  $region64: #{fidelity_gnn_forward.1} parent=0 // pred_region
    _
  $region65: #{fidelity_gnn_forward.1} parent=0 // pred_fallthru
    _
  // Predicated region
  $region66: #{fidelity_gnn_forward.1} parent=0 // pred_check
    _
  $region67: #{fidelity_gnn_forward.1} parent=0 // pred_check_branch
    %108 = sbr.rel (0) target = $region69
  $region68: #{fidelity_gnn_forward.1} parent=0 // pred_region
    _
  $region69: #{fidelity_gnn_forward.1} parent=0 // pred_fallthru
    _
  // Predicated region
  $region70: #{fidelity_gnn_forward.1} parent=0 // pred_check
    _
  $region71: #{fidelity_gnn_forward.1} parent=0 // pred_check_branch
    %110 = sbr.rel (0) target = $region73
  $region72: #{fidelity_gnn_forward.1} parent=0 // pred_region
    _
  $region73: #{fidelity_gnn_forward.1} parent=0 // pred_fallthru
    _
  // Predicated region
  $region74: #{fidelity_gnn_forward.1} parent=0 // pred_check
    _
  $region75: #{fidelity_gnn_forward.1} parent=0 // pred_check_branch
    %112 = sbr.rel (0) target = $region77
  $region76: #{fidelity_gnn_forward.1} parent=0 // pred_region
    _
  $region77: #{fidelity_gnn_forward.1} parent=0 // pred_fallthru
    _
  // Predicated region
  $region78: #{fidelity_gnn_forward.1} parent=0 // pred_check
    _
  $region79: #{fidelity_gnn_forward.1} parent=0 // pred_check_branch
    %114 = sbr.rel (0) target = $region81
  $region80: #{fidelity_gnn_forward.1} parent=0 // pred_region
    _
  $region81: #{fidelity_gnn_forward.1} parent=0 // pred_fallthru
    _
  // Predicated region
  $region82: #{fidelity_gnn_forward.1} parent=0 // pred_check
    _
  $region83: #{fidelity_gnn_forward.1} parent=0 // pred_check_branch
    %116 = sbr.rel (0) target = $region85
  $region84: #{fidelity_gnn_forward.1} parent=0 // pred_region
    _
  $region85: #{fidelity_gnn_forward.1} parent=0 // pred_fallthru
    _
  // Predicated region
  $region86: #{fidelity_gnn_forward.1} parent=0 // pred_check
    _
  $region87: #{fidelity_gnn_forward.1} parent=0 // pred_check_branch
    %118 = sbr.rel (0) target = $region89
  $region88: #{fidelity_gnn_forward.1} parent=0 // pred_region
    _
  $region89: #{fidelity_gnn_forward.1} parent=0 // pred_fallthru
    _
  // Predicated region
  $region90: #{fidelity_gnn_forward.1} parent=0 // pred_check
    _
  $region91: #{fidelity_gnn_forward.1} parent=0 // pred_check_branch
    %120 = sbr.rel (0) target = $region93
  $region92: #{fidelity_gnn_forward.1} parent=0 // pred_region
    _
  $region93: #{fidelity_gnn_forward.1} parent=0 // pred_fallthru
    _
  // Predicated region
  $region94: #{fidelity_gnn_forward.1} parent=0 // pred_check
    _
  $region95: #{fidelity_gnn_forward.1} parent=0 // pred_check_branch
    %122 = sbr.rel (0) target = $region97
  $region96: #{fidelity_gnn_forward.1} parent=0 // pred_region
    _
  $region97: #{fidelity_gnn_forward.1} parent=0 // pred_fallthru
    _
  // Predicated region
  $region98: #{fidelity_gnn_forward.1} parent=0 // pred_check
    _
  $region99: #{fidelity_gnn_forward.1} parent=0 // pred_check_branch
    %124 = sbr.rel (0) target = $region101
  $region100: #{fidelity_gnn_forward.1} parent=0 // pred_region
    _
  $region101: #{fidelity_gnn_forward.1} parent=0 // pred_fallthru
    _
  // Predicated region
  $region102: #{fidelity_gnn_forward.1} parent=0 // pred_check
    _
  $region103: #{fidelity_gnn_forward.1} parent=0 // pred_check_branch
    %126 = sbr.rel (0) target = $region105
  $region104: #{fidelity_gnn_forward.1} parent=0 // pred_region
    _
  $region105: #{fidelity_gnn_forward.1} parent=0 // pred_fallthru
    _
  // Predicated region
  $region106: #{fidelity_gnn_forward.1} parent=0 // pred_check
    _
  $region107: #{fidelity_gnn_forward.1} parent=0 // pred_check_branch
    %128 = sbr.rel (0) target = $region109
  $region108: #{fidelity_gnn_forward.1} parent=0 // pred_region
    _
  $region109: #{fidelity_gnn_forward.1} parent=0 // pred_fallthru
    _
  // Predicated region
  $region110: #{fidelity_gnn_forward.1} parent=0 // pred_check
    _
  $region111: #{fidelity_gnn_forward.1} parent=0 // pred_check_branch
    %130 = sbr.rel (0) target = $region113
  $region112: #{fidelity_gnn_forward.1} parent=0 // pred_region
    _
  $region113: #{fidelity_gnn_forward.1} parent=0 // pred_fallthru
    _
  // Predicated region
  $region114: #{fidelity_gnn_forward.1} parent=0 // pred_check
    _
  $region115: #{fidelity_gnn_forward.1} parent=0 // pred_check_branch
    %132 = sbr.rel (0) target = $region117
  $region116: #{fidelity_gnn_forward.1} parent=0 // pred_region
    _
  $region117: #{fidelity_gnn_forward.1} parent=0 // pred_fallthru
    _
  // Predicated region
  $region118: #{fidelity_gnn_forward.1} parent=0 // pred_check
    _
  $region119: #{fidelity_gnn_forward.1} parent=0 // pred_check_branch
    %134 = sbr.rel (0) target = $region121
  $region120: #{fidelity_gnn_forward.1} parent=0 // pred_region
    _
  $region121: #{fidelity_gnn_forward.1} parent=0 // pred_fallthru
    _
  // Predicated region
  $region122: #{fidelity_gnn_forward.1} parent=0 // pred_check
    _
  $region123: #{fidelity_gnn_forward.1} parent=0 // pred_check_branch
    %136 = sbr.rel (0) target = $region125
  $region124: #{fidelity_gnn_forward.1} parent=0 // pred_region
    _
  $region125: #{fidelity_gnn_forward.1} parent=0 // pred_fallthru
    _
  // Predicated region
  $region126: #{fidelity_gnn_forward.1} parent=0 // pred_check
    _
  $region127: #{fidelity_gnn_forward.1} parent=0 // pred_check_branch
    %138 = sbr.rel (0) target = $region129
  $region128: #{fidelity_gnn_forward.1} parent=0 // pred_region
    _
  $region129: #{fidelity_gnn_forward.1} parent=0 // pred_fallthru
    _
  %v140 = vld [vmem:[%s1] sm:$0xff]
  %v141 = vld [vmem:[%s1 + $0x8] sm:$0xff]
  %v142 = vld [vmem:[%s3] sm:$0xff]
  %v143 = vld [vmem:[%s3 + $0x8] sm:$0xff]
  %v144 = vld [vmem:[%s5] sm:$0xff]
  %v145 = vld [vmem:[%s5 + $0x8] sm:$0xff]
  %v146 = vld [vmem:[%s7] sm:$0xff]
  %v147 = vld [vmem:[%s9] sm:$0x1]
  %v148 = vld [vmem:[%s11] sm:$0x1]
  %v149 = vld [vmem:[%s13] sm:$0x1]
  %v150 = vld [vmem:[%s15] sm:$0xff]
  %v151 = vld [vmem:[%s17] sm:$0xff]
  %v152 = vld [vmem:[%s19] sm:$0xff]
  %v153 = vld [vmem:[%s21] sm:$0xff]
  %v154 = vld [vmem:[%s23] sm:$0xff]
  %v155 = vld [vmem:[%s23 + $0x8] sm:$0xff]
  %v156 = vld [vmem:[%s25] sm:$0xff]
  %v157 = vld [vmem:[%s27] sm:$0xf]
  %v158 = vld [vmem:[%s27 + $0x4] sm:$0xf]
  %v159 = vld [vmem:[%s27 + $0x8] sm:$0xf]
  %v160 = vld [vmem:[%s27 + $0xc] sm:$0xf]
  %v161 = vld [vmem:[%s27 + $0x10] sm:$0xf]
  %v162 = vld [vmem:[%s27 + $0x14] sm:$0xf]
  %v163 = vld [vmem:[%s27 + $0x18] sm:$0xf]
  %v164 = vld [vmem:[%s27 + $0x1c] sm:$0xf]
  %v165 = vld [vmem:[%s27 + $0x20] sm:$0xf]
  %v166 = vld [vmem:[%s27 + $0x24] sm:$0xf]
  %v167 = vld [vmem:[%s27 + $0x28] sm:$0xf]
  %v168 = vld [vmem:[%s27 + $0x2c] sm:$0xf]
  %v169 = vld [vmem:[%s27 + $0x30] sm:$0xf]
  %v170 = vld [vmem:[%s27 + $0x34] sm:$0xf]
  %v171 = vld [vmem:[%s27 + $0x38] sm:$0xf]
  %v172 = vld [vmem:[%s27 + $0x3c] sm:$0xf]
  %v173 = vpack.c.bf16 %v153, %v153
  %v190 = vunpack.c.l.b16 %v157
  %v191 = vunpack.c.l.b16 %v158
  %v192 = vunpack.c.l.b16 %v159
  %v193 = vunpack.c.l.b16 %v160
  %v194 = vunpack.c.l.b16 %v161
  %v195 = vunpack.c.l.b16 %v162
  %v196 = vunpack.c.l.b16 %v163
  %v197 = vunpack.c.l.b16 %v164
  %v198 = vunpack.c.l.b16 %v165
  %v199 = vunpack.c.l.b16 %v166
  %v200 = vunpack.c.l.b16 %v167
  %v201 = vunpack.c.l.b16 %v168
  %v202 = vunpack.c.l.b16 %v169
  %v203 = vunpack.c.l.b16 %v170
  %v204 = vunpack.c.l.b16 %v171
  %v205 = vunpack.c.l.b16 %v172
  %v206 = vpack.c.b16 %v191, %v190
  %v207 = vpack.c.b16 %v193, %v192
  %v208 = vpack.c.b16 %v195, %v194
  %v209 = vpack.c.b16 %v197, %v196
  %v210 = vpack.c.b16 %v199, %v198
  %v211 = vpack.c.b16 %v201, %v200
  %v212 = vpack.c.b16 %v203, %v202
  %v213 = vpack.c.b16 %v205, %v204
  %222 = vmatprep.subr.bf16.mxu0 0
  %223 = vmatpush1.bf16.msra.mxu0 %v206
  %224 = vmatprep.subr.bf16.mxu0 0
  %225 = vmatpush1.bf16.msra.mxu0 %v207
  %226 = vmatprep.subr.bf16.mxu0 0
  %227 = vmatpush1.bf16.msra.mxu0 %v208
  %228 = vmatprep.subr.bf16.mxu0 0
  %229 = vmatpush1.bf16.msra.mxu0 %v209
  %230 = vmatprep.subr.bf16.mxu0 0
  %231 = vmatpush1.bf16.msra.mxu0 %v210
  %232 = vmatprep.subr.bf16.mxu0 0
  %233 = vmatpush1.bf16.msra.mxu0 %v211
  %234 = vmatprep.subr.bf16.mxu0 0
  %235 = vmatpush1.bf16.msra.mxu0 %v212
  %236 = vmatprep.subr.bf16.mxu0 0
  %237 = vmatpush1.bf16.msra.mxu0 %v213
  %238 = vmatprep.subr.bf16.mxu0 0
  %239 = vmatpush1.bf16.msra.mxu0 0
  %240 = vmatprep.subr.bf16.mxu0 0
  %241 = vmatpush1.bf16.msra.mxu0 0
  %242 = vmatprep.subr.bf16.mxu0 0
  %243 = vmatpush1.bf16.msra.mxu0 0
  %244 = vmatprep.subr.bf16.mxu0 0
  %245 = vmatpush1.bf16.msra.mxu0 0
  %246 = vmatprep.subr.bf16.mxu0 0
  %247 = vmatpush1.bf16.msra.mxu0 0
  %248 = vmatprep.subr.bf16.mxu0 0
  %249 = vmatpush1.bf16.msra.mxu0 0
  %250 = vmatprep.subr.bf16.mxu0 0
  %251 = vmatpush1.bf16.msra.mxu0 0
  %252 = vmatprep.subr.bf16.mxu0 0
  %253 = vmatpush1.bf16.msra.mxu0 0
  %254 = vmatprep.mubr.bf16.mxu0 0
  %255 = vmatmul.mubr.bf16.gmra.mrb[0].mxu0 %v173
  %v256 = vpop.f32.mrb[0].mxu0
  %v257 = vadd.f32 0.0, %v256
  %v258 = vpop.f32.mrb[0].mxu0
  %v259 = vpop.f32.mrb[0].mxu0
  %v260 = vpop.f32.mrb[0].mxu0
  %261 = vdwg.mxu0
  %v262 = vlaneseq
  %v263 = vand.u32 %v262, 127
  %264 = vset.pattern.permute.xlu0 0
  %265 = vperm.xlu0 %264, %v140
  %v266 = vpop.permute.xlu0 %265
  %267 = vset.pattern.permute.xlu0 0
  %268 = vperm.xlu0 %267, %v141
  %v269 = vpop.permute.xlu0 %268
  %vm270 = vcmp.eq.s32.totalorder %v263, %v266
  %vm271 = vcmp.eq.s32.totalorder %v263, %v269
  %v272 = vsel %vm270, 1.0, 0.0
  %v273 = vsel %vm271, 1.0, 0.0
  %v274 = vld [vmem:[%s29] sm:$0xf]
  %v275 = vld [vmem:[%s29 + $0x4] sm:$0xf]
  %v276 = vld [vmem:[%s29 + $0x8] sm:$0xf]
  %v277 = vld [vmem:[%s29 + $0xc] sm:$0xf]
  %v278 = vld [vmem:[%s29 + $0x10] sm:$0xf]
  %v279 = vld [vmem:[%s29 + $0x14] sm:$0xf]
  %v280 = vld [vmem:[%s29 + $0x18] sm:$0xf]
  %v281 = vld [vmem:[%s29 + $0x1c] sm:$0xf]
  %v282 = vld [vmem:[%s29 + $0x20] sm:$0xf]
  %v283 = vld [vmem:[%s29 + $0x24] sm:$0xf]
  %v284 = vld [vmem:[%s29 + $0x28] sm:$0xf]
  %v285 = vld [vmem:[%s29 + $0x2c] sm:$0xf]
  %v286 = vld [vmem:[%s29 + $0x30] sm:$0xf]
  %v287 = vld [vmem:[%s29 + $0x34] sm:$0xf]
  %v288 = vld [vmem:[%s29 + $0x38] sm:$0xf]
  %v289 = vld [vmem:[%s29 + $0x3c] sm:$0xf]
  %v306 = vunpack.c.l.b16 %v274
  %v307 = vunpack.c.l.b16 %v275
  %v308 = vunpack.c.l.b16 %v276
  %v309 = vunpack.c.l.b16 %v277
  %v310 = vunpack.c.l.b16 %v278
  %v311 = vunpack.c.l.b16 %v279
  %v312 = vunpack.c.l.b16 %v280
  %v313 = vunpack.c.l.b16 %v281
  %v314 = vunpack.c.l.b16 %v282
  %v315 = vunpack.c.l.b16 %v283
  %v316 = vunpack.c.l.b16 %v284
  %v317 = vunpack.c.l.b16 %v285
  %v318 = vunpack.c.l.b16 %v286
  %v319 = vunpack.c.l.b16 %v287
  %v320 = vunpack.c.l.b16 %v288
  %v321 = vunpack.c.l.b16 %v289
  %v322 = vpack.c.b16 %v307, %v306
  %v323 = vpack.c.b16 %v309, %v308
  %v324 = vpack.c.b16 %v311, %v310
  %v325 = vpack.c.b16 %v313, %v312
  %v326 = vpack.c.b16 %v315, %v314
  %v327 = vpack.c.b16 %v317, %v316
  %v328 = vpack.c.b16 %v319, %v318
  %v329 = vpack.c.b16 %v321, %v320
  %338 = vmatprep.subr.bf16.mxu0 0
  %339 = vmatpush1.bf16.msra.mxu0 %v322
  %340 = vmatprep.subr.bf16.mxu0 0
  %341 = vmatpush1.bf16.msra.mxu0 %v323
  %342 = vmatprep.subr.bf16.mxu0 0
  %343 = vmatpush1.bf16.msra.mxu0 %v324
  %344 = vmatprep.subr.bf16.mxu0 0
  %345 = vmatpush1.bf16.msra.mxu0 %v325
  %346 = vmatprep.subr.bf16.mxu0 0
  %347 = vmatpush1.bf16.msra.mxu0 %v326
  %348 = vmatprep.subr.bf16.mxu0 0
  %349 = vmatpush1.bf16.msra.mxu0 %v327
  %350 = vmatprep.subr.bf16.mxu0 0
  %351 = vmatpush1.bf16.msra.mxu0 %v328
  %352 = vmatprep.subr.bf16.mxu0 0
  %353 = vmatpush1.bf16.msra.mxu0 %v329
  %354 = vmatprep.subr.bf16.mxu0 0
  %355 = vmatpush1.bf16.msra.mxu0 0
  %356 = vmatprep.subr.bf16.mxu0 0
  %357 = vmatpush1.bf16.msra.mxu0 0
  %358 = vmatprep.subr.bf16.mxu0 0
  %359 = vmatpush1.bf16.msra.mxu0 0
  %360 = vmatprep.subr.bf16.mxu0 0
  %361 = vmatpush1.bf16.msra.mxu0 0
  %362 = vmatprep.subr.bf16.mxu0 0
  %363 = vmatpush1.bf16.msra.mxu0 0
  %364 = vmatprep.subr.bf16.mxu0 0
  %365 = vmatpush1.bf16.msra.mxu0 0
  %366 = vmatprep.subr.bf16.mxu0 0
  %367 = vmatpush1.bf16.msra.mxu0 0
  %368 = vmatprep.subr.bf16.mxu0 0
  %369 = vmatpush1.bf16.msra.mxu0 0
  %370 = vmatprep.mubr.bf16.mxu0 0
  %371 = vmatmul.mubr.bf16.gmra.mrb[0].mxu0 %v173
  %v372 = vpop.f32.mrb[0].mxu0
  %v373 = vadd.f32 0.0, %v372
  %v374 = vpop.f32.mrb[0].mxu0
  %v375 = vpop.f32.mrb[0].mxu0
  %v376 = vpop.f32.mrb[0].mxu0
  %377 = vdwg.mxu0
  %378 = vset.pattern.permute.xlu0 0
  %379 = vperm.xlu0 %378, %v142
  %v380 = vpop.permute.xlu0 %379
  %381 = vset.pattern.permute.xlu0 0
  %382 = vperm.xlu0 %381, %v143
  %v383 = vpop.permute.xlu0 %382
  %vm384 = vcmp.eq.s32.totalorder %v263, %v380
  %vm385 = vcmp.eq.s32.totalorder %v263, %v383
  %v386 = vsel %vm384, 1.0, 0.0
  %v387 = vsel %vm385, 1.0, 0.0
  %vm388 = vcmask 64512
  %v390 = vsel %vm388, %v386, 0
  %v393 = vsel %vm388, %v387, 0
  %395 = vmatprep.subr.mxu0 0.0
  %396 = vmatpush1.msra.mxu0 %v373
  %397 = vmatprep.subr.mxu0 0.0
  %398 = vmatpush1.msra.mxu0 0.0
  %399 = vmatprep.subr.mxu0 0.0
  %400 = vmatpush1.msra.mxu0 0.0
  %401 = vmatprep.subr.mxu0 0.0
  %402 = vmatpush1.msra.mxu0 0.0
  %403 = vmatprep.subr.mxu0 0.0
  %404 = vmatpush1.msra.mxu0 0.0
  %405 = vmatprep.subr.mxu0 0.0
  %406 = vmatpush1.msra.mxu0 0.0
  %407 = vmatprep.subr.mxu0 0.0
  %408 = vmatpush1.msra.mxu0 0.0
  %409 = vmatprep.subr.mxu0 0.0
  %410 = vmatpush1.msra.mxu0 0.0
  %411 = vmatprep.subr.mxu0 0.0
  %412 = vmatpush1.msra.mxu0 0.0
  %413 = vmatprep.subr.mxu0 0.0
  %414 = vmatpush1.msra.mxu0 0.0
  %415 = vmatprep.subr.mxu0 0.0
  %416 = vmatpush1.msra.mxu0 0.0
  %417 = vmatprep.subr.mxu0 0.0
  %418 = vmatpush1.msra.mxu0 0.0
  %419 = vmatprep.subr.mxu0 0.0
  %420 = vmatpush1.msra.mxu0 0.0
  %421 = vmatprep.subr.mxu0 0.0
  %422 = vmatpush1.msra.mxu0 0.0
  %423 = vmatprep.subr.mxu0 0.0
  %424 = vmatpush1.msra.mxu0 0.0
  %425 = vmatprep.subr.mxu0 0.0
  %426 = vmatpush1.msra.mxu0 0.0
  %427 = vmatprep.subr.mxu0 0.0
  %428 = vmatpush1.msra.mxu0 0.0
  %429 = vmatprep.subr.mxu0 0.0
  %430 = vmatpush1.msra.mxu0 0.0
  %431 = vmatprep.subr.mxu0 0.0
  %432 = vmatpush1.msra.mxu0 0.0
  %433 = vmatprep.subr.mxu0 0.0
  %434 = vmatpush1.msra.mxu0 0.0
  %435 = vmatprep.subr.mxu0 0.0
  %436 = vmatpush1.msra.mxu0 0.0
  %437 = vmatprep.subr.mxu0 0.0
  %438 = vmatpush1.msra.mxu0 0.0
  %439 = vmatprep.subr.mxu0 0.0
  %440 = vmatpush1.msra.mxu0 0.0
  %441 = vmatprep.subr.mxu0 0.0
  %442 = vmatpush1.msra.mxu0 0.0
  %443 = vmatprep.subr.mxu0 0.0
  %444 = vmatpush1.msra.mxu0 0.0
  %445 = vmatprep.subr.mxu0 0.0
  %446 = vmatpush1.msra.mxu0 0.0
  %447 = vmatprep.subr.mxu0 0.0
  %448 = vmatpush1.msra.mxu0 0.0
  %449 = vmatprep.subr.mxu0 0.0
  %450 = vmatpush1.msra.mxu0 0.0
  %451 = vmatprep.subr.mxu0 0.0
  %452 = vmatpush1.msra.mxu0 0.0
  %453 = vmatprep.subr.mxu0 0.0
  %454 = vmatpush1.msra.mxu0 0.0
  %455 = vmatprep.subr.mxu0 0.0
  %456 = vmatpush1.msra.mxu0 0.0
  %457 = vmatprep.subr.mxu0 0.0
  %458 = vmatpush1.msra.mxu0 0.0
  %459 = vmatprep.mubr.f32.mxu0 0.0
  %460 = vmatmul.mubr.f32.gmra.mrb[0].mxu0 %v390
  %v461 = vpop.f32.mrb[0].mxu0
  %v462 = vadd.f32 0.0, %v461
  %v463 = vpop.f32.mrb[0].mxu0
  %464 = vmatprep.mubr.f32.mxu0 0.0
  %465 = vmatmul.mubr.f32.gmra.mrb[0].mxu0 %v393
  %v466 = vpop.f32.mrb[0].mxu0
  %v467 = vadd.f32 0.0, %v466
  %v468 = vpop.f32.mrb[0].mxu0
  %469 = vdwg.mxu0
  %v471 = vsel %vm388, %v272, 0
  %v474 = vsel %vm388, %v273, 0
  %476 = vmatprep.subr.mxu0 0.0
  %477 = vmatpush1.msra.mxu0 %v257
  %478 = vmatprep.subr.mxu0 0.0
  %479 = vmatpush1.msra.mxu0 0.0
  %480 = vmatprep.subr.mxu0 0.0
  %481 = vmatpush1.msra.mxu0 0.0
  %482 = vmatprep.subr.mxu0 0.0
  %483 = vmatpush1.msra.mxu0 0.0
  %484 = vmatprep.subr.mxu0 0.0
  %485 = vmatpush1.msra.mxu0 0.0
  %486 = vmatprep.subr.mxu0 0.0
  %487 = vmatpush1.msra.mxu0 0.0
  %488 = vmatprep.subr.mxu0 0.0
  %489 = vmatpush1.msra.mxu0 0.0
  %490 = vmatprep.subr.mxu0 0.0
  %491 = vmatpush1.msra.mxu0 0.0
  %492 = vmatprep.subr.mxu0 0.0
  %493 = vmatpush1.msra.mxu0 0.0
  %494 = vmatprep.subr.mxu0 0.0
  %495 = vmatpush1.msra.mxu0 0.0
  %496 = vmatprep.subr.mxu0 0.0
  %497 = vmatpush1.msra.mxu0 0.0
  %498 = vmatprep.subr.mxu0 0.0
  %499 = vmatpush1.msra.mxu0 0.0
  %500 = vmatprep.subr.mxu0 0.0
  %501 = vmatpush1.msra.mxu0 0.0
  %502 = vmatprep.subr.mxu0 0.0
  %503 = vmatpush1.msra.mxu0 0.0
  %504 = vmatprep.subr.mxu0 0.0
  %505 = vmatpush1.msra.mxu0 0.0
  %506 = vmatprep.subr.mxu0 0.0
  %507 = vmatpush1.msra.mxu0 0.0
  %508 = vmatprep.subr.mxu0 0.0
  %509 = vmatpush1.msra.mxu0 0.0
  %510 = vmatprep.subr.mxu0 0.0
  %511 = vmatpush1.msra.mxu0 0.0
  %512 = vmatprep.subr.mxu0 0.0
  %513 = vmatpush1.msra.mxu0 0.0
  %514 = vmatprep.subr.mxu0 0.0
  %515 = vmatpush1.msra.mxu0 0.0
  %516 = vmatprep.subr.mxu0 0.0
  %517 = vmatpush1.msra.mxu0 0.0
  %518 = vmatprep.subr.mxu0 0.0
  %519 = vmatpush1.msra.mxu0 0.0
  %520 = vmatprep.subr.mxu0 0.0
  %521 = vmatpush1.msra.mxu0 0.0
  %522 = vmatprep.subr.mxu0 0.0
  %523 = vmatpush1.msra.mxu0 0.0
  %524 = vmatprep.subr.mxu0 0.0
  %525 = vmatpush1.msra.mxu0 0.0
  %526 = vmatprep.subr.mxu0 0.0
  %527 = vmatpush1.msra.mxu0 0.0
  %528 = vmatprep.subr.mxu0 0.0
  %529 = vmatpush1.msra.mxu0 0.0
  %530 = vmatprep.subr.mxu0 0.0
  %531 = vmatpush1.msra.mxu0 0.0
  %532 = vmatprep.subr.mxu0 0.0
  %533 = vmatpush1.msra.mxu0 0.0
  %534 = vmatprep.subr.mxu0 0.0
  %535 = vmatpush1.msra.mxu0 0.0
  %536 = vmatprep.subr.mxu0 0.0
  %537 = vmatpush1.msra.mxu0 0.0
  %538 = vmatprep.subr.mxu0 0.0
  %539 = vmatpush1.msra.mxu0 0.0
  %540 = vmatprep.mubr.f32.mxu0 0.0
  %541 = vmatmul.mubr.f32.gmra.mrb[0].mxu0 %v471
  %v542 = vpop.f32.mrb[0].mxu0
  %v543 = vadd.f32 %v462, %v542
  %v544 = vpop.f32.mrb[0].mxu0
  %545 = vmatprep.mubr.f32.mxu0 0.0
  %546 = vmatmul.mubr.f32.gmra.mrb[0].mxu0 %v474
  %v547 = vpop.f32.mrb[0].mxu0
  %v548 = vadd.f32 %v467, %v547
  %v549 = vpop.f32.mrb[0].mxu0
  %550 = vdwg.mxu0
  %v551 = vld [vmem:[%s31] sm:$0xf]
  %v552 = vld [vmem:[%s31 + $0x4] sm:$0xf]
  %v553 = vld [vmem:[%s31 + $0x8] sm:$0xf]
  %v554 = vld [vmem:[%s31 + $0xc] sm:$0xf]
  %v555 = vld [vmem:[%s31 + $0x10] sm:$0xf]
  %v556 = vld [vmem:[%s31 + $0x14] sm:$0xf]
  %v557 = vld [vmem:[%s31 + $0x18] sm:$0xf]
  %v558 = vld [vmem:[%s31 + $0x1c] sm:$0xf]
  %v559 = vld [vmem:[%s31 + $0x20] sm:$0xf]
  %v560 = vld [vmem:[%s31 + $0x24] sm:$0xf]
  %v561 = vld [vmem:[%s31 + $0x28] sm:$0xf]
  %v562 = vld [vmem:[%s31 + $0x2c] sm:$0xf]
  %v563 = vld [vmem:[%s31 + $0x30] sm:$0xf]
  %v564 = vld [vmem:[%s31 + $0x34] sm:$0xf]
  %v565 = vld [vmem:[%s31 + $0x38] sm:$0xf]
  %v566 = vld [vmem:[%s31 + $0x3c] sm:$0xf]
  %v567 = vpack.c.bf16 %v155, %v154
  %v584 = vunpack.c.l.b16 %v551
  %v585 = vunpack.c.l.b16 %v552
  %v586 = vunpack.c.l.b16 %v553
  %v587 = vunpack.c.l.b16 %v554
  %v588 = vunpack.c.l.b16 %v555
  %v589 = vunpack.c.l.b16 %v556
  %v590 = vunpack.c.l.b16 %v557
  %v591 = vunpack.c.l.b16 %v558
  %v592 = vunpack.c.l.b16 %v559
  %v593 = vunpack.c.l.b16 %v560
  %v594 = vunpack.c.l.b16 %v561
  %v595 = vunpack.c.l.b16 %v562
  %v596 = vunpack.c.l.b16 %v563
  %v597 = vunpack.c.l.b16 %v564
  %v598 = vunpack.c.l.b16 %v565
  %v599 = vunpack.c.l.b16 %v566
  %v600 = vpack.c.b16 %v585, %v584
  %v601 = vpack.c.b16 %v587, %v586
  %v602 = vpack.c.b16 %v589, %v588
  %v603 = vpack.c.b16 %v591, %v590
  %v604 = vpack.c.b16 %v593, %v592
  %v605 = vpack.c.b16 %v595, %v594
  %v606 = vpack.c.b16 %v597, %v596
  %v607 = vpack.c.b16 %v599, %v598
  %616 = vmatprep.subr.bf16.mxu0 0
  %617 = vmatpush1.bf16.msra.mxu0 %v600
  %618 = vmatprep.subr.bf16.mxu0 0
  %619 = vmatpush1.bf16.msra.mxu0 %v601
  %620 = vmatprep.subr.bf16.mxu0 0
  %621 = vmatpush1.bf16.msra.mxu0 %v602
  %622 = vmatprep.subr.bf16.mxu0 0
  %623 = vmatpush1.bf16.msra.mxu0 %v603
  %624 = vmatprep.subr.bf16.mxu0 0
  %625 = vmatpush1.bf16.msra.mxu0 %v604
  %626 = vmatprep.subr.bf16.mxu0 0
  %627 = vmatpush1.bf16.msra.mxu0 %v605
  %628 = vmatprep.subr.bf16.mxu0 0
  %629 = vmatpush1.bf16.msra.mxu0 %v606
  %630 = vmatprep.subr.bf16.mxu0 0
  %631 = vmatpush1.bf16.msra.mxu0 %v607
  %632 = vmatprep.subr.bf16.mxu0 0
  %633 = vmatpush1.bf16.msra.mxu0 0
  %634 = vmatprep.subr.bf16.mxu0 0
  %635 = vmatpush1.bf16.msra.mxu0 0
  %636 = vmatprep.subr.bf16.mxu0 0
  %637 = vmatpush1.bf16.msra.mxu0 0
  %638 = vmatprep.subr.bf16.mxu0 0
  %639 = vmatpush1.bf16.msra.mxu0 0
  %640 = vmatprep.subr.bf16.mxu0 0
  %641 = vmatpush1.bf16.msra.mxu0 0
  %642 = vmatprep.subr.bf16.mxu0 0
  %643 = vmatpush1.bf16.msra.mxu0 0
  %644 = vmatprep.subr.bf16.mxu0 0
  %645 = vmatpush1.bf16.msra.mxu0 0
  %646 = vmatprep.subr.bf16.mxu0 0
  %647 = vmatpush1.bf16.msra.mxu0 0
  %648 = vmatprep.mubr.bf16.mxu0 0
  %649 = vmatmul.mubr.bf16.gmra.mrb[0].mxu0 %v567
  %v650 = vpop.f32.mrb[0].mxu0
  %v651 = vadd.f32 0.0, %v650
  %v652 = vpop.f32.mrb[0].mxu0
  %v653 = vpop.f32.mrb[0].mxu0
  %v654 = vadd.f32 0.0, %v653
  %v655 = vpop.f32.mrb[0].mxu0
  %656 = vdwg.mxu0
  %v657 = vadd.f32 %v543, %v651
  %v658 = vadd.f32 %v548, %v654
  %v659 = vld [vmem:[%s33] sm:$0xf]
  %v660 = vld [vmem:[%s33 + $0x4] sm:$0xf]
  %v661 = vld [vmem:[%s33 + $0x8] sm:$0xf]
  %v662 = vld [vmem:[%s33 + $0xc] sm:$0xf]
  %v663 = vld [vmem:[%s33 + $0x10] sm:$0xf]
  %v664 = vld [vmem:[%s33 + $0x14] sm:$0xf]
  %v665 = vld [vmem:[%s33 + $0x18] sm:$0xf]
  %v666 = vld [vmem:[%s33 + $0x1c] sm:$0xf]
  %v667 = vld [vmem:[%s33 + $0x20] sm:$0xf]
  %v668 = vld [vmem:[%s33 + $0x24] sm:$0xf]
  %v669 = vld [vmem:[%s33 + $0x28] sm:$0xf]
  %v670 = vld [vmem:[%s33 + $0x2c] sm:$0xf]
  %v671 = vld [vmem:[%s33 + $0x30] sm:$0xf]
  %v672 = vld [vmem:[%s33 + $0x34] sm:$0xf]
  %v673 = vld [vmem:[%s33 + $0x38] sm:$0xf]
  %v674 = vld [vmem:[%s33 + $0x3c] sm:$0xf]
  %v675 = vpack.c.bf16 %v156, %v156
  %v692 = vunpack.c.l.b16 %v659
  %v693 = vunpack.c.l.b16 %v660
  %v694 = vunpack.c.l.b16 %v661
  %v695 = vunpack.c.l.b16 %v662
  %v696 = vunpack.c.l.b16 %v663
  %v697 = vunpack.c.l.b16 %v664
  %v698 = vunpack.c.l.b16 %v665
  %v699 = vunpack.c.l.b16 %v666
  %v700 = vunpack.c.l.b16 %v667
  %v701 = vunpack.c.l.b16 %v668
  %v702 = vunpack.c.l.b16 %v669
  %v703 = vunpack.c.l.b16 %v670
  %v704 = vunpack.c.l.b16 %v671
  %v705 = vunpack.c.l.b16 %v672
  %v706 = vunpack.c.l.b16 %v673
  %v707 = vunpack.c.l.b16 %v674
  %v708 = vpack.c.b16 %v693, %v692
  %v709 = vpack.c.b16 %v695, %v694
  %v710 = vpack.c.b16 %v697, %v696
  %v711 = vpack.c.b16 %v699, %v698
  %v712 = vpack.c.b16 %v701, %v700
  %v713 = vpack.c.b16 %v703, %v702
  %v714 = vpack.c.b16 %v705, %v704
  %v715 = vpack.c.b16 %v707, %v706
  %724 = vmatprep.subr.bf16.mxu0 0
  %725 = vmatpush1.bf16.msra.mxu0 %v708
  %726 = vmatprep.subr.bf16.mxu0 0
  %727 = vmatpush1.bf16.msra.mxu0 %v709
  %728 = vmatprep.subr.bf16.mxu0 0
  %729 = vmatpush1.bf16.msra.mxu0 %v710
  %730 = vmatprep.subr.bf16.mxu0 0
  %731 = vmatpush1.bf16.msra.mxu0 %v711
  %732 = vmatprep.subr.bf16.mxu0 0
  %733 = vmatpush1.bf16.msra.mxu0 %v712
  %734 = vmatprep.subr.bf16.mxu0 0
  %735 = vmatpush1.bf16.msra.mxu0 %v713
  %736 = vmatprep.subr.bf16.mxu0 0
  %737 = vmatpush1.bf16.msra.mxu0 %v714
  %738 = vmatprep.subr.bf16.mxu0 0
  %739 = vmatpush1.bf16.msra.mxu0 %v715
  %740 = vmatprep.subr.bf16.mxu0 0
  %741 = vmatpush1.bf16.msra.mxu0 0
  %742 = vmatprep.subr.bf16.mxu0 0
  %743 = vmatpush1.bf16.msra.mxu0 0
  %744 = vmatprep.subr.bf16.mxu0 0
  %745 = vmatpush1.bf16.msra.mxu0 0
  %746 = vmatprep.subr.bf16.mxu0 0
  %747 = vmatpush1.bf16.msra.mxu0 0
  %748 = vmatprep.subr.bf16.mxu0 0
  %749 = vmatpush1.bf16.msra.mxu0 0
  %750 = vmatprep.subr.bf16.mxu0 0
  %751 = vmatpush1.bf16.msra.mxu0 0
  %752 = vmatprep.subr.bf16.mxu0 0
  %753 = vmatpush1.bf16.msra.mxu0 0
  %754 = vmatprep.subr.bf16.mxu0 0
  %755 = vmatpush1.bf16.msra.mxu0 0
  %756 = vmatprep.mubr.bf16.mxu0 0
  %757 = vmatmul.mubr.bf16.gmra.mrb[0].mxu0 %v675
  %v758 = vpop.f32.mrb[0].mxu0
  %v759 = vadd.f32 0.0, %v758
  %v760 = vpop.f32.mrb[0].mxu0
  %v761 = vpop.f32.mrb[0].mxu0
  %v762 = vpop.f32.mrb[0].mxu0
  %763 = vdwg.mxu0
  %764 = vset.pattern.permute.xlu0 0
  %765 = vperm.xlu0 %764, %v144
  %v766 = vpop.permute.xlu0 %765
  %767 = vset.pattern.permute.xlu0 0
  %768 = vperm.xlu0 %767, %v145
  %v769 = vpop.permute.xlu0 %768
  %vm770 = vcmp.eq.s32.totalorder %v263, %v766
  %vm771 = vcmp.eq.s32.totalorder %v263, %v769
  %v772 = vsel %vm770, 1.0, 0.0
  %v773 = vsel %vm771, 1.0, 0.0
  %v775 = vsel %vm388, %v772, 0
  %v778 = vsel %vm388, %v773, 0
  %780 = vmatprep.subr.mxu0 0.0
  %781 = vmatpush1.msra.mxu0 %v759
  %782 = vmatprep.subr.mxu0 0.0
  %783 = vmatpush1.msra.mxu0 0.0
  %784 = vmatprep.subr.mxu0 0.0
  %785 = vmatpush1.msra.mxu0 0.0
  %786 = vmatprep.subr.mxu0 0.0
  %787 = vmatpush1.msra.mxu0 0.0
  %788 = vmatprep.subr.mxu0 0.0
  %789 = vmatpush1.msra.mxu0 0.0
  %790 = vmatprep.subr.mxu0 0.0
  %791 = vmatpush1.msra.mxu0 0.0
  %792 = vmatprep.subr.mxu0 0.0
  %793 = vmatpush1.msra.mxu0 0.0
  %794 = vmatprep.subr.mxu0 0.0
  %795 = vmatpush1.msra.mxu0 0.0
  %796 = vmatprep.subr.mxu0 0.0
  %797 = vmatpush1.msra.mxu0 0.0
  %798 = vmatprep.subr.mxu0 0.0
  %799 = vmatpush1.msra.mxu0 0.0
  %800 = vmatprep.subr.mxu0 0.0
  %801 = vmatpush1.msra.mxu0 0.0
  %802 = vmatprep.subr.mxu0 0.0
  %803 = vmatpush1.msra.mxu0 0.0
  %804 = vmatprep.subr.mxu0 0.0
  %805 = vmatpush1.msra.mxu0 0.0
  %806 = vmatprep.subr.mxu0 0.0
  %807 = vmatpush1.msra.mxu0 0.0
  %808 = vmatprep.subr.mxu0 0.0
  %809 = vmatpush1.msra.mxu0 0.0
  %810 = vmatprep.subr.mxu0 0.0
  %811 = vmatpush1.msra.mxu0 0.0
  %812 = vmatprep.subr.mxu0 0.0
  %813 = vmatpush1.msra.mxu0 0.0
  %814 = vmatprep.subr.mxu0 0.0
  %815 = vmatpush1.msra.mxu0 0.0
  %816 = vmatprep.subr.mxu0 0.0
  %817 = vmatpush1.msra.mxu0 0.0
  %818 = vmatprep.subr.mxu0 0.0
  %819 = vmatpush1.msra.mxu0 0.0
  %820 = vmatprep.subr.mxu0 0.0
  %821 = vmatpush1.msra.mxu0 0.0
  %822 = vmatprep.subr.mxu0 0.0
  %823 = vmatpush1.msra.mxu0 0.0
  %824 = vmatprep.subr.mxu0 0.0
  %825 = vmatpush1.msra.mxu0 0.0
  %826 = vmatprep.subr.mxu0 0.0
  %827 = vmatpush1.msra.mxu0 0.0
  %828 = vmatprep.subr.mxu0 0.0
  %829 = vmatpush1.msra.mxu0 0.0
  %830 = vmatprep.subr.mxu0 0.0
  %831 = vmatpush1.msra.mxu0 0.0
  %832 = vmatprep.subr.mxu0 0.0
  %833 = vmatpush1.msra.mxu0 0.0
  %834 = vmatprep.subr.mxu0 0.0
  %835 = vmatpush1.msra.mxu0 0.0
  %836 = vmatprep.subr.mxu0 0.0
  %837 = vmatpush1.msra.mxu0 0.0
  %838 = vmatprep.subr.mxu0 0.0
  %839 = vmatpush1.msra.mxu0 0.0
  %840 = vmatprep.subr.mxu0 0.0
  %841 = vmatpush1.msra.mxu0 0.0
  %842 = vmatprep.subr.mxu0 0.0
  %843 = vmatpush1.msra.mxu0 0.0
  %844 = vmatprep.mubr.f32.mxu0 0.0
  %845 = vmatmul.mubr.f32.gmra.mrb[0].mxu0 %v775
  %v846 = vpop.f32.mrb[0].mxu0
  %v847 = vadd.f32 0.0, %v846
  %v848 = vpop.f32.mrb[0].mxu0
  %849 = vmatprep.mubr.f32.mxu0 0.0
  %850 = vmatmul.mubr.f32.gmra.mrb[0].mxu0 %v778
  %v851 = vpop.f32.mrb[0].mxu0
  %v852 = vadd.f32 0.0, %v851
  %v853 = vpop.f32.mrb[0].mxu0
  %854 = vdwg.mxu0
  %v855 = vadd.f32 %v657, %v847
  %v856 = vadd.f32 %v658, %v852
  %v857 = vld [vmem:[%s35] sm:$0x1]
  %v859 = vlaneseq
  %v860 = vshrl.u32 %v859, 7
  %v861 = vsub.s32 0, %v860
  %v862 = vrot.slane %v857, %v861
  %v864 = vadd.f32 %v855, %v862
  %v865 = vadd.f32 %v856, %v862
  %v866 = vmax.f32 %v864, 0.0
  %v867 = vmax.f32 %v865, 0.0
  %v868 = vld [vmem:[%s37] sm:$0xf]
  %v869 = vld [vmem:[%s37 + $0x4] sm:$0xf]
  %v870 = vld [vmem:[%s37 + $0x8] sm:$0xf]
  %v871 = vld [vmem:[%s37 + $0xc] sm:$0xf]
  %v872 = vld [vmem:[%s37 + $0x10] sm:$0xf]
  %v873 = vld [vmem:[%s37 + $0x14] sm:$0xf]
  %v874 = vld [vmem:[%s37 + $0x18] sm:$0xf]
  %v875 = vld [vmem:[%s37 + $0x1c] sm:$0xf]
  %v876 = vld [vmem:[%s37 + $0x20] sm:$0xf]
  %v877 = vld [vmem:[%s37 + $0x24] sm:$0xf]
  %v878 = vld [vmem:[%s37 + $0x28] sm:$0xf]
  %v879 = vld [vmem:[%s37 + $0x2c] sm:$0xf]
  %v880 = vld [vmem:[%s37 + $0x30] sm:$0xf]
  %v881 = vld [vmem:[%s37 + $0x34] sm:$0xf]
  %v882 = vld [vmem:[%s37 + $0x38] sm:$0xf]
  %v883 = vld [vmem:[%s37 + $0x3c] sm:$0xf]
  %v884 = vpack.c.bf16 %v867, %v866
  %v885 = vld [vmem:[%s39] sm:$0x1]
  %v887 = vlaneseq
  %v888 = vshrl.u32 %v887, 7
  %v889 = vsub.s32 0, %v888
  %v890 = vrot.slane %v885, %v889
  %v908 = vunpack.c.l.b16 %v868
  %v909 = vunpack.c.l.b16 %v869
  %v910 = vunpack.c.l.b16 %v870
  %v911 = vunpack.c.l.b16 %v871
  %v912 = vunpack.c.l.b16 %v872
  %v913 = vunpack.c.l.b16 %v873
  %v914 = vunpack.c.l.b16 %v874
  %v915 = vunpack.c.l.b16 %v875
  %v916 = vunpack.c.l.b16 %v876
  %v917 = vunpack.c.l.b16 %v877
  %v918 = vunpack.c.l.b16 %v878
  %v919 = vunpack.c.l.b16 %v879
  %v920 = vunpack.c.l.b16 %v880
  %v921 = vunpack.c.l.b16 %v881
  %v922 = vunpack.c.l.b16 %v882
  %v923 = vunpack.c.l.b16 %v883
  %v924 = vpack.c.b16 %v909, %v908
  %v925 = vpack.c.b16 %v911, %v910
  %v926 = vpack.c.b16 %v913, %v912
  %v927 = vpack.c.b16 %v915, %v914
  %v928 = vpack.c.b16 %v917, %v916
  %v929 = vpack.c.b16 %v919, %v918
  %v930 = vpack.c.b16 %v921, %v920
  %v931 = vpack.c.b16 %v923, %v922
  %940 = vmatprep.subr.bf16.mxu0 0
  %941 = vmatpush1.bf16.msra.mxu0 %v924
  %942 = vmatprep.subr.bf16.mxu0 0
  %943 = vmatpush1.bf16.msra.mxu0 %v925
  %944 = vmatprep.subr.bf16.mxu0 0
  %945 = vmatpush1.bf16.msra.mxu0 %v926
  %946 = vmatprep.subr.bf16.mxu0 0
  %947 = vmatpush1.bf16.msra.mxu0 %v927
  %948 = vmatprep.subr.bf16.mxu0 0
  %949 = vmatpush1.bf16.msra.mxu0 %v928
  %950 = vmatprep.subr.bf16.mxu0 0
  %951 = vmatpush1.bf16.msra.mxu0 %v929
  %952 = vmatprep.subr.bf16.mxu0 0
  %953 = vmatpush1.bf16.msra.mxu0 %v930
  %954 = vmatprep.subr.bf16.mxu0 0
  %955 = vmatpush1.bf16.msra.mxu0 %v931
  %956 = vmatprep.subr.bf16.mxu0 0
  %957 = vmatpush1.bf16.msra.mxu0 0
  %958 = vmatprep.subr.bf16.mxu0 0
  %959 = vmatpush1.bf16.msra.mxu0 0
  %960 = vmatprep.subr.bf16.mxu0 0
  %961 = vmatpush1.bf16.msra.mxu0 0
  %962 = vmatprep.subr.bf16.mxu0 0
  %963 = vmatpush1.bf16.msra.mxu0 0
  %964 = vmatprep.subr.bf16.mxu0 0
  %965 = vmatpush1.bf16.msra.mxu0 0
  %966 = vmatprep.subr.bf16.mxu0 0
  %967 = vmatpush1.bf16.msra.mxu0 0
  %968 = vmatprep.subr.bf16.mxu0 0
  %969 = vmatpush1.bf16.msra.mxu0 0
  %970 = vmatprep.subr.bf16.mxu0 0
  %971 = vmatpush1.bf16.msra.mxu0 0
  %972 = vmatprep.mubr.bf16.mxu0 0
  %973 = vmatmul.mubr.bf16.gmra.mrb[0].mxu0 %v884
  %v974 = vpop.f32.mrb[0].mxu0
  %v975 = vadd.f32 %v890, %v974
  %v976 = vpop.f32.mrb[0].mxu0
  %v977 = vpop.f32.mrb[0].mxu0
  %v978 = vadd.f32 %v890, %v977
  %v979 = vpop.f32.mrb[0].mxu0
  %980 = vdwg.mxu0
  %v981 = vlaneseq
  %v982 = vshrl.u32 %v981, 7
  %v983 = vlaneseq
  %v984 = vshrl.u32 %v983, 7
  %v985 = vsub.s32 0, %v984
  %v986 = vrot.slane %v147, %v985
  %vm987 = vcmp.eq.s32.totalorder %v982, %v986
  %v988 = vsel %vm987, 1.0, 0.0
  %v989 = vpack.c.bf16 %v988, %v988
  %v990 = vpack.c.bf16 %v978, %v975
  %vm991 = vcmask 130048
  %v993 = vsel %vm991, %v989, 0
  %995 = vmatprep.subr.bf16.mxu0 0
  %996 = vmatpush1.bf16.msra.mxu0 %v990
  %997 = vmatprep.subr.bf16.mxu0 0
  %998 = vmatpush1.bf16.msra.mxu0 0
  %999 = vmatprep.subr.bf16.mxu0 0
  %1000 = vmatpush1.bf16.msra.mxu0 0
  %1001 = vmatprep.subr.bf16.mxu0 0
  %1002 = vmatpush1.bf16.msra.mxu0 0
  %1003 = vmatprep.subr.bf16.mxu0 0
  %1004 = vmatpush1.bf16.msra.mxu0 0
  %1005 = vmatprep.subr.bf16.mxu0 0
  %1006 = vmatpush1.bf16.msra.mxu0 0
  %1007 = vmatprep.subr.bf16.mxu0 0
  %1008 = vmatpush1.bf16.msra.mxu0 0
  %1009 = vmatprep.subr.bf16.mxu0 0
  %1010 = vmatpush1.bf16.msra.mxu0 0
  %1011 = vmatprep.subr.bf16.mxu0 0
  %1012 = vmatpush1.bf16.msra.mxu0 0
  %1013 = vmatprep.subr.bf16.mxu0 0
  %1014 = vmatpush1.bf16.msra.mxu0 0
  %1015 = vmatprep.subr.bf16.mxu0 0
  %1016 = vmatpush1.bf16.msra.mxu0 0
  %1017 = vmatprep.subr.bf16.mxu0 0
  %1018 = vmatpush1.bf16.msra.mxu0 0
  %1019 = vmatprep.subr.bf16.mxu0 0
  %1020 = vmatpush1.bf16.msra.mxu0 0
  %1021 = vmatprep.subr.bf16.mxu0 0
  %1022 = vmatpush1.bf16.msra.mxu0 0
  %1023 = vmatprep.subr.bf16.mxu0 0
  %1024 = vmatpush1.bf16.msra.mxu0 0
  %1025 = vmatprep.subr.bf16.mxu0 0
  %1026 = vmatpush1.bf16.msra.mxu0 0
  %1027 = vmatprep.mubr.bf16.mxu0 0
  %1028 = vmatmul.mubr.bf16.gmra.mrb[0].mxu0 %v993
  %v1029 = vpop.f32.mrb[0].mxu0
  %v1030 = vadd.f32 0.0, %v1029
  %v1031 = vpop.f32.mrb[0].mxu0
  %v1032 = vpop.f32.mrb[0].mxu0
  %v1033 = vpop.f32.mrb[0].mxu0
  %1034 = vdwg.mxu0
  %1036 = vset.pattern.permute.xlu0 0
  %1037 = vperm.xlu0 %1036, %v150
  %v1038 = vpop.permute.xlu0 %1037
  %v1040 = vmul.f32 %v1030, %v1038
  %v1041 = vld [vmem:[%s41] sm:$0xf]
  %v1042 = vld [vmem:[%s41 + $0x4] sm:$0xf]
  %v1043 = vld [vmem:[%s41 + $0x8] sm:$0xf]
  %v1044 = vld [vmem:[%s41 + $0xc] sm:$0xf]
  %v1045 = vld [vmem:[%s41 + $0x10] sm:$0xf]
  %v1046 = vld [vmem:[%s41 + $0x14] sm:$0xf]
  %v1047 = vld [vmem:[%s41 + $0x18] sm:$0xf]
  %v1048 = vld [vmem:[%s41 + $0x1c] sm:$0xf]
  %v1049 = vld [vmem:[%s41 + $0x20] sm:$0xf]
  %v1050 = vld [vmem:[%s41 + $0x24] sm:$0xf]
  %v1051 = vld [vmem:[%s41 + $0x28] sm:$0xf]
  %v1052 = vld [vmem:[%s41 + $0x2c] sm:$0xf]
  %v1053 = vld [vmem:[%s41 + $0x30] sm:$0xf]
  %v1054 = vld [vmem:[%s41 + $0x34] sm:$0xf]
  %v1055 = vld [vmem:[%s41 + $0x38] sm:$0xf]
  %v1056 = vld [vmem:[%s41 + $0x3c] sm:$0xf]
  %v1057 = vpack.c.bf16 %v1040, %v1040
  %v1058 = vld [vmem:[%s43] sm:$0xf]
  %v1059 = vld [vmem:[%s43 + $0x4] sm:$0xf]
  %v1060 = vld [vmem:[%s43 + $0x8] sm:$0xf]
  %v1061 = vld [vmem:[%s43 + $0xc] sm:$0xf]
  %v1062 = vld [vmem:[%s43 + $0x10] sm:$0xf]
  %v1063 = vld [vmem:[%s43 + $0x14] sm:$0xf]
  %v1064 = vld [vmem:[%s43 + $0x18] sm:$0xf]
  %v1065 = vld [vmem:[%s43 + $0x1c] sm:$0xf]
  %v1066 = vld [vmem:[%s43 + $0x20] sm:$0xf]
  %v1067 = vld [vmem:[%s43 + $0x24] sm:$0xf]
  %v1068 = vld [vmem:[%s43 + $0x28] sm:$0xf]
  %v1069 = vld [vmem:[%s43 + $0x2c] sm:$0xf]
  %v1070 = vld [vmem:[%s43 + $0x30] sm:$0xf]
  %v1071 = vld [vmem:[%s43 + $0x34] sm:$0xf]
  %v1072 = vld [vmem:[%s43 + $0x38] sm:$0xf]
  %v1073 = vld [vmem:[%s43 + $0x3c] sm:$0xf]
  %v1090 = vunpack.c.l.b16 %v1058
  %v1091 = vunpack.c.l.b16 %v1059
  %v1092 = vunpack.c.l.b16 %v1060
  %v1093 = vunpack.c.l.b16 %v1061
  %v1094 = vunpack.c.l.b16 %v1062
  %v1095 = vunpack.c.l.b16 %v1063
  %v1096 = vunpack.c.l.b16 %v1064
  %v1097 = vunpack.c.l.b16 %v1065
  %v1098 = vunpack.c.l.b16 %v1066
  %v1099 = vunpack.c.l.b16 %v1067
  %v1100 = vunpack.c.l.b16 %v1068
  %v1101 = vunpack.c.l.b16 %v1069
  %v1102 = vunpack.c.l.b16 %v1070
  %v1103 = vunpack.c.l.b16 %v1071
  %v1104 = vunpack.c.l.b16 %v1072
  %v1105 = vunpack.c.l.b16 %v1073
  %v1106 = vpack.c.b16 %v1091, %v1090
  %v1107 = vpack.c.b16 %v1093, %v1092
  %v1108 = vpack.c.b16 %v1095, %v1094
  %v1109 = vpack.c.b16 %v1097, %v1096
  %v1110 = vpack.c.b16 %v1099, %v1098
  %v1111 = vpack.c.b16 %v1101, %v1100
  %v1112 = vpack.c.b16 %v1103, %v1102
  %v1113 = vpack.c.b16 %v1105, %v1104
  %1122 = vmatprep.subr.bf16.mxu0 0
  %1123 = vmatpush1.bf16.msra.mxu0 %v1106
  %1124 = vmatprep.subr.bf16.mxu0 0
  %1125 = vmatpush1.bf16.msra.mxu0 %v1107
  %1126 = vmatprep.subr.bf16.mxu0 0
  %1127 = vmatpush1.bf16.msra.mxu0 %v1108
  %1128 = vmatprep.subr.bf16.mxu0 0
  %1129 = vmatpush1.bf16.msra.mxu0 %v1109
  %1130 = vmatprep.subr.bf16.mxu0 0
  %1131 = vmatpush1.bf16.msra.mxu0 %v1110
  %1132 = vmatprep.subr.bf16.mxu0 0
  %1133 = vmatpush1.bf16.msra.mxu0 %v1111
  %1134 = vmatprep.subr.bf16.mxu0 0
  %1135 = vmatpush1.bf16.msra.mxu0 %v1112
  %1136 = vmatprep.subr.bf16.mxu0 0
  %1137 = vmatpush1.bf16.msra.mxu0 %v1113
  %1138 = vmatprep.subr.bf16.mxu0 0
  %1139 = vmatpush1.bf16.msra.mxu0 0
  %1140 = vmatprep.subr.bf16.mxu0 0
  %1141 = vmatpush1.bf16.msra.mxu0 0
  %1142 = vmatprep.subr.bf16.mxu0 0
  %1143 = vmatpush1.bf16.msra.mxu0 0
  %1144 = vmatprep.subr.bf16.mxu0 0
  %1145 = vmatpush1.bf16.msra.mxu0 0
  %1146 = vmatprep.subr.bf16.mxu0 0
  %1147 = vmatpush1.bf16.msra.mxu0 0
  %1148 = vmatprep.subr.bf16.mxu0 0
  %1149 = vmatpush1.bf16.msra.mxu0 0
  %1150 = vmatprep.subr.bf16.mxu0 0
  %1151 = vmatpush1.bf16.msra.mxu0 0
  %1152 = vmatprep.subr.bf16.mxu0 0
  %1153 = vmatpush1.bf16.msra.mxu0 0
  %1154 = vmatprep.mubr.bf16.mxu0 0
  %1155 = vmatmul.mubr.bf16.gmra.mrb[0].mxu0 %v173
  %v1156 = vpop.f32.mrb[0].mxu0
  %v1157 = vadd.f32 0.0, %v1156
  %v1158 = vpop.f32.mrb[0].mxu0
  %v1159 = vpop.f32.mrb[0].mxu0
  %v1160 = vpop.f32.mrb[0].mxu0
  %1161 = vdwg.mxu0
  %v1178 = vunpack.c.l.b16 %v1041
  %v1179 = vunpack.c.l.b16 %v1042
  %v1180 = vunpack.c.l.b16 %v1043
  %v1181 = vunpack.c.l.b16 %v1044
  %v1182 = vunpack.c.l.b16 %v1045
  %v1183 = vunpack.c.l.b16 %v1046
  %v1184 = vunpack.c.l.b16 %v1047
  %v1185 = vunpack.c.l.b16 %v1048
  %v1186 = vunpack.c.l.b16 %v1049
  %v1187 = vunpack.c.l.b16 %v1050
  %v1188 = vunpack.c.l.b16 %v1051
  %v1189 = vunpack.c.l.b16 %v1052
  %v1190 = vunpack.c.l.b16 %v1053
  %v1191 = vunpack.c.l.b16 %v1054
  %v1192 = vunpack.c.l.b16 %v1055
  %v1193 = vunpack.c.l.b16 %v1056
  %v1194 = vpack.c.b16 %v1179, %v1178
  %v1195 = vpack.c.b16 %v1181, %v1180
  %v1196 = vpack.c.b16 %v1183, %v1182
  %v1197 = vpack.c.b16 %v1185, %v1184
  %v1198 = vpack.c.b16 %v1187, %v1186
  %v1199 = vpack.c.b16 %v1189, %v1188
  %v1200 = vpack.c.b16 %v1191, %v1190
  %v1201 = vpack.c.b16 %v1193, %v1192
  %1210 = vmatprep.subr.bf16.mxu0 0
  %1211 = vmatpush1.bf16.msra.mxu0 %v1194
  %1212 = vmatprep.subr.bf16.mxu0 0
  %1213 = vmatpush1.bf16.msra.mxu0 %v1195
  %1214 = vmatprep.subr.bf16.mxu0 0
  %1215 = vmatpush1.bf16.msra.mxu0 %v1196
  %1216 = vmatprep.subr.bf16.mxu0 0
  %1217 = vmatpush1.bf16.msra.mxu0 %v1197
  %1218 = vmatprep.subr.bf16.mxu0 0
  %1219 = vmatpush1.bf16.msra.mxu0 %v1198
  %1220 = vmatprep.subr.bf16.mxu0 0
  %1221 = vmatpush1.bf16.msra.mxu0 %v1199
  %1222 = vmatprep.subr.bf16.mxu0 0
  %1223 = vmatpush1.bf16.msra.mxu0 %v1200
  %1224 = vmatprep.subr.bf16.mxu0 0
  %1225 = vmatpush1.bf16.msra.mxu0 %v1201
  %1226 = vmatprep.subr.bf16.mxu0 0
  %1227 = vmatpush1.bf16.msra.mxu0 0
  %1228 = vmatprep.subr.bf16.mxu0 0
  %1229 = vmatpush1.bf16.msra.mxu0 0
  %1230 = vmatprep.subr.bf16.mxu0 0
  %1231 = vmatpush1.bf16.msra.mxu0 0
  %1232 = vmatprep.subr.bf16.mxu0 0
  %1233 = vmatpush1.bf16.msra.mxu0 0
  %1234 = vmatprep.subr.bf16.mxu0 0
  %1235 = vmatpush1.bf16.msra.mxu0 0
  %1236 = vmatprep.subr.bf16.mxu0 0
  %1237 = vmatpush1.bf16.msra.mxu0 0
  %1238 = vmatprep.subr.bf16.mxu0 0
  %1239 = vmatpush1.bf16.msra.mxu0 0
  %1240 = vmatprep.subr.bf16.mxu0 0
  %1241 = vmatpush1.bf16.msra.mxu0 0
  %1242 = vmatprep.mubr.bf16.mxu0 0
  %1243 = vmatmul.mubr.bf16.gmra.mrb[0].mxu0 %v1057
  %v1244 = vpop.f32.mrb[0].mxu0
  %v1245 = vadd.f32 %v1157, %v1244
  %v1246 = vpop.f32.mrb[0].mxu0
  %v1247 = vpop.f32.mrb[0].mxu0
  %v1248 = vpop.f32.mrb[0].mxu0
  %1249 = vdwg.mxu0
  %v1250 = vld [vmem:[%s45] sm:$0xf]
  %v1251 = vld [vmem:[%s45 + $0x4] sm:$0xf]
  %v1252 = vld [vmem:[%s45 + $0x8] sm:$0xf]
  %v1253 = vld [vmem:[%s45 + $0xc] sm:$0xf]
  %v1254 = vld [vmem:[%s45 + $0x10] sm:$0xf]
  %v1255 = vld [vmem:[%s45 + $0x14] sm:$0xf]
  %v1256 = vld [vmem:[%s45 + $0x18] sm:$0xf]
  %v1257 = vld [vmem:[%s45 + $0x1c] sm:$0xf]
  %v1258 = vld [vmem:[%s45 + $0x20] sm:$0xf]
  %v1259 = vld [vmem:[%s45 + $0x24] sm:$0xf]
  %v1260 = vld [vmem:[%s45 + $0x28] sm:$0xf]
  %v1261 = vld [vmem:[%s45 + $0x2c] sm:$0xf]
  %v1262 = vld [vmem:[%s45 + $0x30] sm:$0xf]
  %v1263 = vld [vmem:[%s45 + $0x34] sm:$0xf]
  %v1264 = vld [vmem:[%s45 + $0x38] sm:$0xf]
  %v1265 = vld [vmem:[%s45 + $0x3c] sm:$0xf]
  %v1282 = vunpack.c.l.b16 %v1250
  %v1283 = vunpack.c.l.b16 %v1251
  %v1284 = vunpack.c.l.b16 %v1252
  %v1285 = vunpack.c.l.b16 %v1253
  %v1286 = vunpack.c.l.b16 %v1254
  %v1287 = vunpack.c.l.b16 %v1255
  %v1288 = vunpack.c.l.b16 %v1256
  %v1289 = vunpack.c.l.b16 %v1257
  %v1290 = vunpack.c.l.b16 %v1258
  %v1291 = vunpack.c.l.b16 %v1259
  %v1292 = vunpack.c.l.b16 %v1260
  %v1293 = vunpack.c.l.b16 %v1261
  %v1294 = vunpack.c.l.b16 %v1262
  %v1295 = vunpack.c.l.b16 %v1263
  %v1296 = vunpack.c.l.b16 %v1264
  %v1297 = vunpack.c.l.b16 %v1265
  %v1298 = vpack.c.b16 %v1283, %v1282
  %v1299 = vpack.c.b16 %v1285, %v1284
  %v1300 = vpack.c.b16 %v1287, %v1286
  %v1301 = vpack.c.b16 %v1289, %v1288
  %v1302 = vpack.c.b16 %v1291, %v1290
  %v1303 = vpack.c.b16 %v1293, %v1292
  %v1304 = vpack.c.b16 %v1295, %v1294
  %v1305 = vpack.c.b16 %v1297, %v1296
  %1314 = vmatprep.subr.bf16.mxu0 0
  %1315 = vmatpush1.bf16.msra.mxu0 %v1298
  %1316 = vmatprep.subr.bf16.mxu0 0
  %1317 = vmatpush1.bf16.msra.mxu0 %v1299
  %1318 = vmatprep.subr.bf16.mxu0 0
  %1319 = vmatpush1.bf16.msra.mxu0 %v1300
  %1320 = vmatprep.subr.bf16.mxu0 0
  %1321 = vmatpush1.bf16.msra.mxu0 %v1301
  %1322 = vmatprep.subr.bf16.mxu0 0
  %1323 = vmatpush1.bf16.msra.mxu0 %v1302
  %1324 = vmatprep.subr.bf16.mxu0 0
  %1325 = vmatpush1.bf16.msra.mxu0 %v1303
  %1326 = vmatprep.subr.bf16.mxu0 0
  %1327 = vmatpush1.bf16.msra.mxu0 %v1304
  %1328 = vmatprep.subr.bf16.mxu0 0
  %1329 = vmatpush1.bf16.msra.mxu0 %v1305
  %1330 = vmatprep.subr.bf16.mxu0 0
  %1331 = vmatpush1.bf16.msra.mxu0 0
  %1332 = vmatprep.subr.bf16.mxu0 0
  %1333 = vmatpush1.bf16.msra.mxu0 0
  %1334 = vmatprep.subr.bf16.mxu0 0
  %1335 = vmatpush1.bf16.msra.mxu0 0
  %1336 = vmatprep.subr.bf16.mxu0 0
  %1337 = vmatpush1.bf16.msra.mxu0 0
  %1338 = vmatprep.subr.bf16.mxu0 0
  %1339 = vmatpush1.bf16.msra.mxu0 0
  %1340 = vmatprep.subr.bf16.mxu0 0
  %1341 = vmatpush1.bf16.msra.mxu0 0
  %1342 = vmatprep.subr.bf16.mxu0 0
  %1343 = vmatpush1.bf16.msra.mxu0 0
  %1344 = vmatprep.subr.bf16.mxu0 0
  %1345 = vmatpush1.bf16.msra.mxu0 0
  %1346 = vmatprep.mubr.bf16.mxu0 0
  %1347 = vmatmul.mubr.bf16.gmra.mrb[0].mxu0 %v675
  %v1348 = vpop.f32.mrb[0].mxu0
  %v1349 = vadd.f32 0.0, %v1348
  %v1350 = vpop.f32.mrb[0].mxu0
  %v1351 = vpop.f32.mrb[0].mxu0
  %v1352 = vpop.f32.mrb[0].mxu0
  %1353 = vdwg.mxu0
  %1354 = vset.pattern.permute.xlu0 0
  %1355 = vperm.xlu0 %1354, %v146
  %v1356 = vpop.permute.xlu0 %1355
  %vm1357 = vcmp.eq.s32.totalorder %v263, %v1356
  %v1358 = vsel %vm1357, 1.0, 0.0
  %v1360 = vsel %vm388, %v1358, 0
  %1362 = vmatprep.subr.mxu0 0.0
  %1363 = vmatpush1.msra.mxu0 %v1349
  %1364 = vmatprep.subr.mxu0 0.0
  %1365 = vmatpush1.msra.mxu0 0.0
  %1366 = vmatprep.subr.mxu0 0.0
  %1367 = vmatpush1.msra.mxu0 0.0
  %1368 = vmatprep.subr.mxu0 0.0
  %1369 = vmatpush1.msra.mxu0 0.0
  %1370 = vmatprep.subr.mxu0 0.0
  %1371 = vmatpush1.msra.mxu0 0.0
  %1372 = vmatprep.subr.mxu0 0.0
  %1373 = vmatpush1.msra.mxu0 0.0
  %1374 = vmatprep.subr.mxu0 0.0
  %1375 = vmatpush1.msra.mxu0 0.0
  %1376 = vmatprep.subr.mxu0 0.0
  %1377 = vmatpush1.msra.mxu0 0.0
  %1378 = vmatprep.subr.mxu0 0.0
  %1379 = vmatpush1.msra.mxu0 0.0
  %1380 = vmatprep.subr.mxu0 0.0
  %1381 = vmatpush1.msra.mxu0 0.0
  %1382 = vmatprep.subr.mxu0 0.0
  %1383 = vmatpush1.msra.mxu0 0.0
  %1384 = vmatprep.subr.mxu0 0.0
  %1385 = vmatpush1.msra.mxu0 0.0
  %1386 = vmatprep.subr.mxu0 0.0
  %1387 = vmatpush1.msra.mxu0 0.0
  %1388 = vmatprep.subr.mxu0 0.0
  %1389 = vmatpush1.msra.mxu0 0.0
  %1390 = vmatprep.subr.mxu0 0.0
  %1391 = vmatpush1.msra.mxu0 0.0
  %1392 = vmatprep.subr.mxu0 0.0
  %1393 = vmatpush1.msra.mxu0 0.0
  %1394 = vmatprep.subr.mxu0 0.0
  %1395 = vmatpush1.msra.mxu0 0.0
  %1396 = vmatprep.subr.mxu0 0.0
  %1397 = vmatpush1.msra.mxu0 0.0
  %1398 = vmatprep.subr.mxu0 0.0
  %1399 = vmatpush1.msra.mxu0 0.0
  %1400 = vmatprep.subr.mxu0 0.0
  %1401 = vmatpush1.msra.mxu0 0.0
  %1402 = vmatprep.subr.mxu0 0.0
  %1403 = vmatpush1.msra.mxu0 0.0
  %1404 = vmatprep.subr.mxu0 0.0
  %1405 = vmatpush1.msra.mxu0 0.0
  %1406 = vmatprep.subr.mxu0 0.0
  %1407 = vmatpush1.msra.mxu0 0.0
  %1408 = vmatprep.subr.mxu0 0.0
  %1409 = vmatpush1.msra.mxu0 0.0
  %1410 = vmatprep.subr.mxu0 0.0
  %1411 = vmatpush1.msra.mxu0 0.0
  %1412 = vmatprep.subr.mxu0 0.0
  %1413 = vmatpush1.msra.mxu0 0.0
  %1414 = vmatprep.subr.mxu0 0.0
  %1415 = vmatpush1.msra.mxu0 0.0
  %1416 = vmatprep.subr.mxu0 0.0
  %1417 = vmatpush1.msra.mxu0 0.0
  %1418 = vmatprep.subr.mxu0 0.0
  %1419 = vmatpush1.msra.mxu0 0.0
  %1420 = vmatprep.subr.mxu0 0.0
  %1421 = vmatpush1.msra.mxu0 0.0
  %1422 = vmatprep.subr.mxu0 0.0
  %1423 = vmatpush1.msra.mxu0 0.0
  %1424 = vmatprep.subr.mxu0 0.0
  %1425 = vmatpush1.msra.mxu0 0.0
  %1426 = vmatprep.mubr.f32.mxu0 0.0
  %1427 = vmatmul.mubr.f32.gmra.mrb[0].mxu0 %v1360
  %v1428 = vpop.f32.mrb[0].mxu0
  %v1429 = vadd.f32 0.0, %v1428
  %v1430 = vpop.f32.mrb[0].mxu0
  %1431 = vdwg.mxu0
  %v1432 = vadd.f32 %v1245, %v1429
  %v1433 = vld [vmem:[%s47] sm:$0x1]
  %v1435 = vlaneseq
  %v1436 = vshrl.u32 %v1435, 7
  %v1437 = vsub.s32 0, %v1436
  %v1438 = vrot.slane %v1433, %v1437
  %v1440 = vadd.f32 %v1432, %v1438
  %v1441 = vmax.f32 %v1440, 0.0
  %v1442 = vld [vmem:[%s49] sm:$0xf]
  %v1443 = vld [vmem:[%s49 + $0x4] sm:$0xf]
  %v1444 = vld [vmem:[%s49 + $0x8] sm:$0xf]
  %v1445 = vld [vmem:[%s49 + $0xc] sm:$0xf]
  %v1446 = vld [vmem:[%s49 + $0x10] sm:$0xf]
  %v1447 = vld [vmem:[%s49 + $0x14] sm:$0xf]
  %v1448 = vld [vmem:[%s49 + $0x18] sm:$0xf]
  %v1449 = vld [vmem:[%s49 + $0x1c] sm:$0xf]
  %v1450 = vld [vmem:[%s49 + $0x20] sm:$0xf]
  %v1451 = vld [vmem:[%s49 + $0x24] sm:$0xf]
  %v1452 = vld [vmem:[%s49 + $0x28] sm:$0xf]
  %v1453 = vld [vmem:[%s49 + $0x2c] sm:$0xf]
  %v1454 = vld [vmem:[%s49 + $0x30] sm:$0xf]
  %v1455 = vld [vmem:[%s49 + $0x34] sm:$0xf]
  %v1456 = vld [vmem:[%s49 + $0x38] sm:$0xf]
  %v1457 = vld [vmem:[%s49 + $0x3c] sm:$0xf]
  %v1458 = vpack.c.bf16 %v1441, %v1441
  %v1459 = vld [vmem:[%s51] sm:$0x1]
  %v1461 = vlaneseq
  %v1462 = vshrl.u32 %v1461, 7
  %v1463 = vsub.s32 0, %v1462
  %v1464 = vrot.slane %v1459, %v1463
  %v1482 = vunpack.c.l.b16 %v1442
  %v1483 = vunpack.c.l.b16 %v1443
  %v1484 = vunpack.c.l.b16 %v1444
  %v1485 = vunpack.c.l.b16 %v1445
  %v1486 = vunpack.c.l.b16 %v1446
  %v1487 = vunpack.c.l.b16 %v1447
  %v1488 = vunpack.c.l.b16 %v1448
  %v1489 = vunpack.c.l.b16 %v1449
  %v1490 = vunpack.c.l.b16 %v1450
  %v1491 = vunpack.c.l.b16 %v1451
  %v1492 = vunpack.c.l.b16 %v1452
  %v1493 = vunpack.c.l.b16 %v1453
  %v1494 = vunpack.c.l.b16 %v1454
  %v1495 = vunpack.c.l.b16 %v1455
  %v1496 = vunpack.c.l.b16 %v1456
  %v1497 = vunpack.c.l.b16 %v1457
  %v1498 = vpack.c.b16 %v1483, %v1482
  %v1499 = vpack.c.b16 %v1485, %v1484
  %v1500 = vpack.c.b16 %v1487, %v1486
  %v1501 = vpack.c.b16 %v1489, %v1488
  %v1502 = vpack.c.b16 %v1491, %v1490
  %v1503 = vpack.c.b16 %v1493, %v1492
  %v1504 = vpack.c.b16 %v1495, %v1494
  %v1505 = vpack.c.b16 %v1497, %v1496
  %1514 = vmatprep.subr.bf16.mxu0 0
  %1515 = vmatpush1.bf16.msra.mxu0 %v1498
  %1516 = vmatprep.subr.bf16.mxu0 0
  %1517 = vmatpush1.bf16.msra.mxu0 %v1499
  %1518 = vmatprep.subr.bf16.mxu0 0
  %1519 = vmatpush1.bf16.msra.mxu0 %v1500
  %1520 = vmatprep.subr.bf16.mxu0 0
  %1521 = vmatpush1.bf16.msra.mxu0 %v1501
  %1522 = vmatprep.subr.bf16.mxu0 0
  %1523 = vmatpush1.bf16.msra.mxu0 %v1502
  %1524 = vmatprep.subr.bf16.mxu0 0
  %1525 = vmatpush1.bf16.msra.mxu0 %v1503
  %1526 = vmatprep.subr.bf16.mxu0 0
  %1527 = vmatpush1.bf16.msra.mxu0 %v1504
  %1528 = vmatprep.subr.bf16.mxu0 0
  %1529 = vmatpush1.bf16.msra.mxu0 %v1505
  %1530 = vmatprep.subr.bf16.mxu0 0
  %1531 = vmatpush1.bf16.msra.mxu0 0
  %1532 = vmatprep.subr.bf16.mxu0 0
  %1533 = vmatpush1.bf16.msra.mxu0 0
  %1534 = vmatprep.subr.bf16.mxu0 0
  %1535 = vmatpush1.bf16.msra.mxu0 0
  %1536 = vmatprep.subr.bf16.mxu0 0
  %1537 = vmatpush1.bf16.msra.mxu0 0
  %1538 = vmatprep.subr.bf16.mxu0 0
  %1539 = vmatpush1.bf16.msra.mxu0 0
  %1540 = vmatprep.subr.bf16.mxu0 0
  %1541 = vmatpush1.bf16.msra.mxu0 0
  %1542 = vmatprep.subr.bf16.mxu0 0
  %1543 = vmatpush1.bf16.msra.mxu0 0
  %1544 = vmatprep.subr.bf16.mxu0 0
  %1545 = vmatpush1.bf16.msra.mxu0 0
  %1546 = vmatprep.mubr.bf16.mxu0 0
  %1547 = vmatmul.mubr.bf16.gmra.mrb[0].mxu0 %v1458
  %v1548 = vpop.f32.mrb[0].mxu0
  %v1549 = vadd.f32 %v1464, %v1548
  %v1550 = vpop.f32.mrb[0].mxu0
  %v1551 = vpop.f32.mrb[0].mxu0
  %v1552 = vpop.f32.mrb[0].mxu0
  %1553 = vdwg.mxu0
  %v1554 = vlaneseq
  %v1555 = vshrl.u32 %v1554, 7
  %v1556 = vsub.s32 0, %v1555
  %v1557 = vrot.slane %v149, %v1556
  %vm1558 = vcmp.eq.s32.totalorder %v982, %v1557
  %v1559 = vsel %vm1558, 1.0, 0.0
  %v1560 = vpack.c.bf16 %v1559, %v1559
  %v1561 = vpack.c.bf16 %v1549, %v1549
  %v1563 = vsel %vm388, %v1560, 0
  %vm1565 = vcmask 1043456
  %v1567 = vsel %vm1565, %v1561, 0
  %1569 = vmatprep.subr.bf16.mxu0 0
  %1570 = vmatpush1.bf16.msra.mxu0 %v1567
  %1571 = vmatprep.subr.bf16.mxu0 0
  %1572 = vmatpush1.bf16.msra.mxu0 0
  %1573 = vmatprep.subr.bf16.mxu0 0
  %1574 = vmatpush1.bf16.msra.mxu0 0
  %1575 = vmatprep.subr.bf16.mxu0 0
  %1576 = vmatpush1.bf16.msra.mxu0 0
  %1577 = vmatprep.subr.bf16.mxu0 0
  %1578 = vmatpush1.bf16.msra.mxu0 0
  %1579 = vmatprep.subr.bf16.mxu0 0
  %1580 = vmatpush1.bf16.msra.mxu0 0
  %1581 = vmatprep.subr.bf16.mxu0 0
  %1582 = vmatpush1.bf16.msra.mxu0 0
  %1583 = vmatprep.subr.bf16.mxu0 0
  %1584 = vmatpush1.bf16.msra.mxu0 0
  %1585 = vmatprep.subr.bf16.mxu0 0
  %1586 = vmatpush1.bf16.msra.mxu0 0
  %1587 = vmatprep.subr.bf16.mxu0 0
  %1588 = vmatpush1.bf16.msra.mxu0 0
  %1589 = vmatprep.subr.bf16.mxu0 0
  %1590 = vmatpush1.bf16.msra.mxu0 0
  %1591 = vmatprep.subr.bf16.mxu0 0
  %1592 = vmatpush1.bf16.msra.mxu0 0
  %1593 = vmatprep.subr.bf16.mxu0 0
  %1594 = vmatpush1.bf16.msra.mxu0 0
  %1595 = vmatprep.subr.bf16.mxu0 0
  %1596 = vmatpush1.bf16.msra.mxu0 0
  %1597 = vmatprep.subr.bf16.mxu0 0
  %1598 = vmatpush1.bf16.msra.mxu0 0
  %1599 = vmatprep.subr.bf16.mxu0 0
  %1600 = vmatpush1.bf16.msra.mxu0 0
  %1601 = vmatprep.mubr.bf16.mxu0 0
  %1602 = vmatmul.mubr.bf16.gmra.mrb[0].mxu0 %v1563
  %v1603 = vpop.f32.mrb[0].mxu0
  %v1604 = vadd.f32 0.0, %v1603
  %v1605 = vpop.f32.mrb[0].mxu0
  %v1606 = vpop.f32.mrb[0].mxu0
  %v1607 = vpop.f32.mrb[0].mxu0
  %1608 = vdwg.mxu0
  %1610 = vset.pattern.permute.xlu0 0
  %1611 = vperm.xlu0 %1610, %v152
  %v1612 = vpop.permute.xlu0 %1611
  %v1614 = vmul.f32 %v1604, %v1612
  %v1615 = vlaneseq
  %v1616 = vshrl.u32 %v1615, 7
  %v1617 = vsub.s32 0, %v1616
  %v1618 = vrot.slane %v148, %v1617
  %vm1619 = vcmp.eq.s32.totalorder %v982, %v1618
  %v1620 = vsel %vm1619, 1.0, 0.0
  %v1621 = vpack.c.bf16 %v1620, %v1620
  %v1623 = vsel %vm991, %v1621, 0
  %1625 = vmatprep.subr.bf16.mxu0 0
  %1626 = vmatpush1.bf16.msra.mxu0 %v990
  %1627 = vmatprep.subr.bf16.mxu0 0
  %1628 = vmatpush1.bf16.msra.mxu0 0
  %1629 = vmatprep.subr.bf16.mxu0 0
  %1630 = vmatpush1.bf16.msra.mxu0 0
  %1631 = vmatprep.subr.bf16.mxu0 0
  %1632 = vmatpush1.bf16.msra.mxu0 0
  %1633 = vmatprep.subr.bf16.mxu0 0
  %1634 = vmatpush1.bf16.msra.mxu0 0
  %1635 = vmatprep.subr.bf16.mxu0 0
  %1636 = vmatpush1.bf16.msra.mxu0 0
  %1637 = vmatprep.subr.bf16.mxu0 0
  %1638 = vmatpush1.bf16.msra.mxu0 0
  %1639 = vmatprep.subr.bf16.mxu0 0
  %1640 = vmatpush1.bf16.msra.mxu0 0
  %1641 = vmatprep.subr.bf16.mxu0 0
  %1642 = vmatpush1.bf16.msra.mxu0 0
  %1643 = vmatprep.subr.bf16.mxu0 0
  %1644 = vmatpush1.bf16.msra.mxu0 0
  %1645 = vmatprep.subr.bf16.mxu0 0
  %1646 = vmatpush1.bf16.msra.mxu0 0
  %1647 = vmatprep.subr.bf16.mxu0 0
  %1648 = vmatpush1.bf16.msra.mxu0 0
  %1649 = vmatprep.subr.bf16.mxu0 0
  %1650 = vmatpush1.bf16.msra.mxu0 0
  %1651 = vmatprep.subr.bf16.mxu0 0
  %1652 = vmatpush1.bf16.msra.mxu0 0
  %1653 = vmatprep.subr.bf16.mxu0 0
  %1654 = vmatpush1.bf16.msra.mxu0 0
  %1655 = vmatprep.subr.bf16.mxu0 0
  %1656 = vmatpush1.bf16.msra.mxu0 0
  %1657 = vmatprep.mubr.bf16.mxu0 0
  %1658 = vmatmul.mubr.bf16.gmra.mrb[0].mxu0 %v1623
  %v1659 = vpop.f32.mrb[0].mxu0
  %v1660 = vadd.f32 0.0, %v1659
  %v1661 = vpop.f32.mrb[0].mxu0
  %v1662 = vpop.f32.mrb[0].mxu0
  %v1663 = vpop.f32.mrb[0].mxu0
  %1664 = vdwg.mxu0
  %1666 = vset.pattern.permute.xlu0 0
  %1667 = vperm.xlu0 %1666, %v151
  %v1668 = vpop.permute.xlu0 %1667
  %v1670 = vmul.f32 %v1660, %v1668
  %v1671 = vld [vmem:[%s53] sm:$0xf]
  %v1672 = vld [vmem:[%s53 + $0x4] sm:$0xf]
  %v1673 = vld [vmem:[%s53 + $0x8] sm:$0xf]
  %v1674 = vld [vmem:[%s53 + $0xc] sm:$0xf]
  %v1675 = vld [vmem:[%s53 + $0x10] sm:$0xf]
  %v1676 = vld [vmem:[%s53 + $0x14] sm:$0xf]
  %v1677 = vld [vmem:[%s53 + $0x18] sm:$0xf]
  %v1678 = vld [vmem:[%s53 + $0x1c] sm:$0xf]
  %v1679 = vld [vmem:[%s53 + $0x20] sm:$0xf]
  %v1680 = vld [vmem:[%s53 + $0x24] sm:$0xf]
  %v1681 = vld [vmem:[%s53 + $0x28] sm:$0xf]
  %v1682 = vld [vmem:[%s53 + $0x2c] sm:$0xf]
  %v1683 = vld [vmem:[%s53 + $0x30] sm:$0xf]
  %v1684 = vld [vmem:[%s53 + $0x34] sm:$0xf]
  %v1685 = vld [vmem:[%s53 + $0x38] sm:$0xf]
  %v1686 = vld [vmem:[%s53 + $0x3c] sm:$0xf]
  %v1687 = vpack.c.bf16 %v1614, %v1614
  %v1688 = vld [vmem:[%s55] sm:$0xf]
  %v1689 = vld [vmem:[%s55 + $0x4] sm:$0xf]
  %v1690 = vld [vmem:[%s55 + $0x8] sm:$0xf]
  %v1691 = vld [vmem:[%s55 + $0xc] sm:$0xf]
  %v1692 = vld [vmem:[%s55 + $0x10] sm:$0xf]
  %v1693 = vld [vmem:[%s55 + $0x14] sm:$0xf]
  %v1694 = vld [vmem:[%s55 + $0x18] sm:$0xf]
  %v1695 = vld [vmem:[%s55 + $0x1c] sm:$0xf]
  %v1696 = vld [vmem:[%s55 + $0x20] sm:$0xf]
  %v1697 = vld [vmem:[%s55 + $0x24] sm:$0xf]
  %v1698 = vld [vmem:[%s55 + $0x28] sm:$0xf]
  %v1699 = vld [vmem:[%s55 + $0x2c] sm:$0xf]
  %v1700 = vld [vmem:[%s55 + $0x30] sm:$0xf]
  %v1701 = vld [vmem:[%s55 + $0x34] sm:$0xf]
  %v1702 = vld [vmem:[%s55 + $0x38] sm:$0xf]
  %v1703 = vld [vmem:[%s55 + $0x3c] sm:$0xf]
  %v1704 = vpack.c.bf16 %v1670, %v1670
  %v1721 = vunpack.c.l.b16 %v1688
  %v1722 = vunpack.c.l.b16 %v1689
  %v1723 = vunpack.c.l.b16 %v1690
  %v1724 = vunpack.c.l.b16 %v1691
  %v1725 = vunpack.c.l.b16 %v1692
  %v1726 = vunpack.c.l.b16 %v1693
  %v1727 = vunpack.c.l.b16 %v1694
  %v1728 = vunpack.c.l.b16 %v1695
  %v1729 = vunpack.c.l.b16 %v1696
  %v1730 = vunpack.c.l.b16 %v1697
  %v1731 = vunpack.c.l.b16 %v1698
  %v1732 = vunpack.c.l.b16 %v1699
  %v1733 = vunpack.c.l.b16 %v1700
  %v1734 = vunpack.c.l.b16 %v1701
  %v1735 = vunpack.c.l.b16 %v1702
  %v1736 = vunpack.c.l.b16 %v1703
  %v1737 = vpack.c.b16 %v1722, %v1721
  %v1738 = vpack.c.b16 %v1724, %v1723
  %v1739 = vpack.c.b16 %v1726, %v1725
  %v1740 = vpack.c.b16 %v1728, %v1727
  %v1741 = vpack.c.b16 %v1730, %v1729
  %v1742 = vpack.c.b16 %v1732, %v1731
  %v1743 = vpack.c.b16 %v1734, %v1733
  %v1744 = vpack.c.b16 %v1736, %v1735
  %1753 = vmatprep.subr.bf16.mxu0 0
  %1754 = vmatpush1.bf16.msra.mxu0 %v1737
  %1755 = vmatprep.subr.bf16.mxu0 0
  %1756 = vmatpush1.bf16.msra.mxu0 %v1738
  %1757 = vmatprep.subr.bf16.mxu0 0
  %1758 = vmatpush1.bf16.msra.mxu0 %v1739
  %1759 = vmatprep.subr.bf16.mxu0 0
  %1760 = vmatpush1.bf16.msra.mxu0 %v1740
  %1761 = vmatprep.subr.bf16.mxu0 0
  %1762 = vmatpush1.bf16.msra.mxu0 %v1741
  %1763 = vmatprep.subr.bf16.mxu0 0
  %1764 = vmatpush1.bf16.msra.mxu0 %v1742
  %1765 = vmatprep.subr.bf16.mxu0 0
  %1766 = vmatpush1.bf16.msra.mxu0 %v1743
  %1767 = vmatprep.subr.bf16.mxu0 0
  %1768 = vmatpush1.bf16.msra.mxu0 %v1744
  %1769 = vmatprep.subr.bf16.mxu0 0
  %1770 = vmatpush1.bf16.msra.mxu0 0
  %1771 = vmatprep.subr.bf16.mxu0 0
  %1772 = vmatpush1.bf16.msra.mxu0 0
  %1773 = vmatprep.subr.bf16.mxu0 0
  %1774 = vmatpush1.bf16.msra.mxu0 0
  %1775 = vmatprep.subr.bf16.mxu0 0
  %1776 = vmatpush1.bf16.msra.mxu0 0
  %1777 = vmatprep.subr.bf16.mxu0 0
  %1778 = vmatpush1.bf16.msra.mxu0 0
  %1779 = vmatprep.subr.bf16.mxu0 0
  %1780 = vmatpush1.bf16.msra.mxu0 0
  %1781 = vmatprep.subr.bf16.mxu0 0
  %1782 = vmatpush1.bf16.msra.mxu0 0
  %1783 = vmatprep.subr.bf16.mxu0 0
  %1784 = vmatpush1.bf16.msra.mxu0 0
  %1785 = vmatprep.mubr.bf16.mxu0 0
  %1786 = vmatmul.mubr.bf16.gmra.mrb[0].mxu0 %v1704
  %v1787 = vpop.f32.mrb[0].mxu0
  %v1788 = vadd.f32 0.0, %v1787
  %v1789 = vpop.f32.mrb[0].mxu0
  %v1790 = vpop.f32.mrb[0].mxu0
  %v1791 = vpop.f32.mrb[0].mxu0
  %1792 = vdwg.mxu0
  %v1809 = vunpack.c.l.b16 %v1671
  %v1810 = vunpack.c.l.b16 %v1672
  %v1811 = vunpack.c.l.b16 %v1673
  %v1812 = vunpack.c.l.b16 %v1674
  %v1813 = vunpack.c.l.b16 %v1675
  %v1814 = vunpack.c.l.b16 %v1676
  %v1815 = vunpack.c.l.b16 %v1677
  %v1816 = vunpack.c.l.b16 %v1678
  %v1817 = vunpack.c.l.b16 %v1679
  %v1818 = vunpack.c.l.b16 %v1680
  %v1819 = vunpack.c.l.b16 %v1681
  %v1820 = vunpack.c.l.b16 %v1682
  %v1821 = vunpack.c.l.b16 %v1683
  %v1822 = vunpack.c.l.b16 %v1684
  %v1823 = vunpack.c.l.b16 %v1685
  %v1824 = vunpack.c.l.b16 %v1686
  %v1825 = vpack.c.b16 %v1810, %v1809
  %v1826 = vpack.c.b16 %v1812, %v1811
  %v1827 = vpack.c.b16 %v1814, %v1813
  %v1828 = vpack.c.b16 %v1816, %v1815
  %v1829 = vpack.c.b16 %v1818, %v1817
  %v1830 = vpack.c.b16 %v1820, %v1819
  %v1831 = vpack.c.b16 %v1822, %v1821
  %v1832 = vpack.c.b16 %v1824, %v1823
  %1841 = vmatprep.subr.bf16.mxu0 0
  %1842 = vmatpush1.bf16.msra.mxu0 %v1825
  %1843 = vmatprep.subr.bf16.mxu0 0
  %1844 = vmatpush1.bf16.msra.mxu0 %v1826
  %1845 = vmatprep.subr.bf16.mxu0 0
  %1846 = vmatpush1.bf16.msra.mxu0 %v1827
  %1847 = vmatprep.subr.bf16.mxu0 0
  %1848 = vmatpush1.bf16.msra.mxu0 %v1828
  %1849 = vmatprep.subr.bf16.mxu0 0
  %1850 = vmatpush1.bf16.msra.mxu0 %v1829
  %1851 = vmatprep.subr.bf16.mxu0 0
  %1852 = vmatpush1.bf16.msra.mxu0 %v1830
  %1853 = vmatprep.subr.bf16.mxu0 0
  %1854 = vmatpush1.bf16.msra.mxu0 %v1831
  %1855 = vmatprep.subr.bf16.mxu0 0
  %1856 = vmatpush1.bf16.msra.mxu0 %v1832
  %1857 = vmatprep.subr.bf16.mxu0 0
  %1858 = vmatpush1.bf16.msra.mxu0 0
  %1859 = vmatprep.subr.bf16.mxu0 0
  %1860 = vmatpush1.bf16.msra.mxu0 0
  %1861 = vmatprep.subr.bf16.mxu0 0
  %1862 = vmatpush1.bf16.msra.mxu0 0
  %1863 = vmatprep.subr.bf16.mxu0 0
  %1864 = vmatpush1.bf16.msra.mxu0 0
  %1865 = vmatprep.subr.bf16.mxu0 0
  %1866 = vmatpush1.bf16.msra.mxu0 0
  %1867 = vmatprep.subr.bf16.mxu0 0
  %1868 = vmatpush1.bf16.msra.mxu0 0
  %1869 = vmatprep.subr.bf16.mxu0 0
  %1870 = vmatpush1.bf16.msra.mxu0 0
  %1871 = vmatprep.subr.bf16.mxu0 0
  %1872 = vmatpush1.bf16.msra.mxu0 0
  %1873 = vmatprep.mubr.bf16.mxu0 0
  %1874 = vmatmul.mubr.bf16.gmra.mrb[0].mxu0 %v1687
  %v1875 = vpop.f32.mrb[0].mxu0
  %v1876 = vadd.f32 %v1788, %v1875
  %v1877 = vpop.f32.mrb[0].mxu0
  %v1878 = vpop.f32.mrb[0].mxu0
  %v1879 = vpop.f32.mrb[0].mxu0
  %1880 = vdwg.mxu0
  %v1881 = vld [vmem:[%s57] sm:$0xf]
  %v1882 = vld [vmem:[%s57 + $0x4] sm:$0xf]
  %v1883 = vld [vmem:[%s57 + $0x8] sm:$0xf]
  %v1884 = vld [vmem:[%s57 + $0xc] sm:$0xf]
  %v1885 = vld [vmem:[%s57 + $0x10] sm:$0xf]
  %v1886 = vld [vmem:[%s57 + $0x14] sm:$0xf]
  %v1887 = vld [vmem:[%s57 + $0x18] sm:$0xf]
  %v1888 = vld [vmem:[%s57 + $0x1c] sm:$0xf]
  %v1889 = vld [vmem:[%s57 + $0x20] sm:$0xf]
  %v1890 = vld [vmem:[%s57 + $0x24] sm:$0xf]
  %v1891 = vld [vmem:[%s57 + $0x28] sm:$0xf]
  %v1892 = vld [vmem:[%s57 + $0x2c] sm:$0xf]
  %v1893 = vld [vmem:[%s57 + $0x30] sm:$0xf]
  %v1894 = vld [vmem:[%s57 + $0x34] sm:$0xf]
  %v1895 = vld [vmem:[%s57 + $0x38] sm:$0xf]
  %v1896 = vld [vmem:[%s57 + $0x3c] sm:$0xf]
  %v1913 = vunpack.c.l.b16 %v1881
  %v1914 = vunpack.c.l.b16 %v1882
  %v1915 = vunpack.c.l.b16 %v1883
  %v1916 = vunpack.c.l.b16 %v1884
  %v1917 = vunpack.c.l.b16 %v1885
  %v1918 = vunpack.c.l.b16 %v1886
  %v1919 = vunpack.c.l.b16 %v1887
  %v1920 = vunpack.c.l.b16 %v1888
  %v1921 = vunpack.c.l.b16 %v1889
  %v1922 = vunpack.c.l.b16 %v1890
  %v1923 = vunpack.c.l.b16 %v1891
  %v1924 = vunpack.c.l.b16 %v1892
  %v1925 = vunpack.c.l.b16 %v1893
  %v1926 = vunpack.c.l.b16 %v1894
  %v1927 = vunpack.c.l.b16 %v1895
  %v1928 = vunpack.c.l.b16 %v1896
  %v1929 = vpack.c.b16 %v1914, %v1913
  %v1930 = vpack.c.b16 %v1916, %v1915
  %v1931 = vpack.c.b16 %v1918, %v1917
  %v1932 = vpack.c.b16 %v1920, %v1919
  %v1933 = vpack.c.b16 %v1922, %v1921
  %v1934 = vpack.c.b16 %v1924, %v1923
  %v1935 = vpack.c.b16 %v1926, %v1925
  %v1936 = vpack.c.b16 %v1928, %v1927
  %1945 = vmatprep.subr.bf16.mxu0 0
  %1946 = vmatpush1.bf16.msra.mxu0 %v1929
  %1947 = vmatprep.subr.bf16.mxu0 0
  %1948 = vmatpush1.bf16.msra.mxu0 %v1930
  %1949 = vmatprep.subr.bf16.mxu0 0
  %1950 = vmatpush1.bf16.msra.mxu0 %v1931
  %1951 = vmatprep.subr.bf16.mxu0 0
  %1952 = vmatpush1.bf16.msra.mxu0 %v1932
  %1953 = vmatprep.subr.bf16.mxu0 0
  %1954 = vmatpush1.bf16.msra.mxu0 %v1933
  %1955 = vmatprep.subr.bf16.mxu0 0
  %1956 = vmatpush1.bf16.msra.mxu0 %v1934
  %1957 = vmatprep.subr.bf16.mxu0 0
  %1958 = vmatpush1.bf16.msra.mxu0 %v1935
  %1959 = vmatprep.subr.bf16.mxu0 0
  %1960 = vmatpush1.bf16.msra.mxu0 %v1936
  %1961 = vmatprep.subr.bf16.mxu0 0
  %1962 = vmatpush1.bf16.msra.mxu0 0
  %1963 = vmatprep.subr.bf16.mxu0 0
  %1964 = vmatpush1.bf16.msra.mxu0 0
  %1965 = vmatprep.subr.bf16.mxu0 0
  %1966 = vmatpush1.bf16.msra.mxu0 0
  %1967 = vmatprep.subr.bf16.mxu0 0
  %1968 = vmatpush1.bf16.msra.mxu0 0
  %1969 = vmatprep.subr.bf16.mxu0 0
  %1970 = vmatpush1.bf16.msra.mxu0 0
  %1971 = vmatprep.subr.bf16.mxu0 0
  %1972 = vmatpush1.bf16.msra.mxu0 0
  %1973 = vmatprep.subr.bf16.mxu0 0
  %1974 = vmatpush1.bf16.msra.mxu0 0
  %1975 = vmatprep.subr.bf16.mxu0 0
  %1976 = vmatpush1.bf16.msra.mxu0 0
  %1977 = vmatprep.mubr.bf16.mxu0 0
  %1978 = vmatmul.mubr.bf16.gmra.mrb[0].mxu0 %v675
  %v1979 = vpop.f32.mrb[0].mxu0
  %v1980 = vadd.f32 0.0, %v1979
  %v1981 = vpop.f32.mrb[0].mxu0
  %v1982 = vpop.f32.mrb[0].mxu0
  %v1983 = vpop.f32.mrb[0].mxu0
  %1984 = vdwg.mxu0
  %v1985 = vadd.f32 %v1876, %v1980
  %v1986 = vld [vmem:[%s59] sm:$0x1]
  %v1988 = vlaneseq
  %v1989 = vshrl.u32 %v1988, 7
  %v1990 = vsub.s32 0, %v1989
  %v1991 = vrot.slane %v1986, %v1990
  %v1993 = vadd.f32 %v1985, %v1991
  %v1994 = vmax.f32 %v1993, 0.0
  %v1995 = vld [vmem:[%s61] sm:$0xf]
  %v1996 = vld [vmem:[%s61 + $0x4] sm:$0xf]
  %v1997 = vld [vmem:[%s61 + $0x8] sm:$0xf]
  %v1998 = vld [vmem:[%s61 + $0xc] sm:$0xf]
  %v1999 = vld [vmem:[%s61 + $0x10] sm:$0xf]
  %v2000 = vld [vmem:[%s61 + $0x14] sm:$0xf]
  %v2001 = vld [vmem:[%s61 + $0x18] sm:$0xf]
  %v2002 = vld [vmem:[%s61 + $0x1c] sm:$0xf]
  %v2003 = vld [vmem:[%s61 + $0x20] sm:$0xf]
  %v2004 = vld [vmem:[%s61 + $0x24] sm:$0xf]
  %v2005 = vld [vmem:[%s61 + $0x28] sm:$0xf]
  %v2006 = vld [vmem:[%s61 + $0x2c] sm:$0xf]
  %v2007 = vld [vmem:[%s61 + $0x30] sm:$0xf]
  %v2008 = vld [vmem:[%s61 + $0x34] sm:$0xf]
  %v2009 = vld [vmem:[%s61 + $0x38] sm:$0xf]
  %v2010 = vld [vmem:[%s61 + $0x3c] sm:$0xf]
  %v2011 = vpack.c.bf16 %v1994, %v1994
  %v2012 = vld [vmem:[%s63] sm:$0x1]
  %v2014 = vlaneseq
  %v2015 = vshrl.u32 %v2014, 7
  %v2016 = vsub.s32 0, %v2015
  %v2017 = vrot.slane %v2012, %v2016
  %v2035 = vunpack.c.l.b16 %v1995
  %v2036 = vunpack.c.l.b16 %v1996
  %v2037 = vunpack.c.l.b16 %v1997
  %v2038 = vunpack.c.l.b16 %v1998
  %v2039 = vunpack.c.l.b16 %v1999
  %v2040 = vunpack.c.l.b16 %v2000
  %v2041 = vunpack.c.l.b16 %v2001
  %v2042 = vunpack.c.l.b16 %v2002
  %v2043 = vunpack.c.l.b16 %v2003
  %v2044 = vunpack.c.l.b16 %v2004
  %v2045 = vunpack.c.l.b16 %v2005
  %v2046 = vunpack.c.l.b16 %v2006
  %v2047 = vunpack.c.l.b16 %v2007
  %v2048 = vunpack.c.l.b16 %v2008
  %v2049 = vunpack.c.l.b16 %v2009
  %v2050 = vunpack.c.l.b16 %v2010
  %v2051 = vpack.c.b16 %v2036, %v2035
  %v2052 = vpack.c.b16 %v2038, %v2037
  %v2053 = vpack.c.b16 %v2040, %v2039
  %v2054 = vpack.c.b16 %v2042, %v2041
  %v2055 = vpack.c.b16 %v2044, %v2043
  %v2056 = vpack.c.b16 %v2046, %v2045
  %v2057 = vpack.c.b16 %v2048, %v2047
  %v2058 = vpack.c.b16 %v2050, %v2049
  %2067 = vmatprep.subr.bf16.mxu0 0
  %2068 = vmatpush1.bf16.msra.mxu0 %v2051
  %2069 = vmatprep.subr.bf16.mxu0 0
  %2070 = vmatpush1.bf16.msra.mxu0 %v2052
  %2071 = vmatprep.subr.bf16.mxu0 0
  %2072 = vmatpush1.bf16.msra.mxu0 %v2053
  %2073 = vmatprep.subr.bf16.mxu0 0
  %2074 = vmatpush1.bf16.msra.mxu0 %v2054
  %2075 = vmatprep.subr.bf16.mxu0 0
  %2076 = vmatpush1.bf16.msra.mxu0 %v2055
  %2077 = vmatprep.subr.bf16.mxu0 0
  %2078 = vmatpush1.bf16.msra.mxu0 %v2056
  %2079 = vmatprep.subr.bf16.mxu0 0
  %2080 = vmatpush1.bf16.msra.mxu0 %v2057
  %2081 = vmatprep.subr.bf16.mxu0 0
  %2082 = vmatpush1.bf16.msra.mxu0 %v2058
  %2083 = vmatprep.subr.bf16.mxu0 0
  %2084 = vmatpush1.bf16.msra.mxu0 0
  %2085 = vmatprep.subr.bf16.mxu0 0
  %2086 = vmatpush1.bf16.msra.mxu0 0
  %2087 = vmatprep.subr.bf16.mxu0 0
  %2088 = vmatpush1.bf16.msra.mxu0 0
  %2089 = vmatprep.subr.bf16.mxu0 0
  %2090 = vmatpush1.bf16.msra.mxu0 0
  %2091 = vmatprep.subr.bf16.mxu0 0
  %2092 = vmatpush1.bf16.msra.mxu0 0
  %2093 = vmatprep.subr.bf16.mxu0 0
  %2094 = vmatpush1.bf16.msra.mxu0 0
  %2095 = vmatprep.subr.bf16.mxu0 0
  %2096 = vmatpush1.bf16.msra.mxu0 0
  %2097 = vmatprep.subr.bf16.mxu0 0
  %2098 = vmatpush1.bf16.msra.mxu0 0
  %2099 = vmatprep.mubr.bf16.mxu0 0
  %2100 = vmatmul.mubr.bf16.gmra.mrb[0].mxu0 %v2011
  %v2101 = vpop.f32.mrb[0].mxu0
  %v2102 = vadd.f32 %v2017, %v2101
  %v2103 = vpop.f32.mrb[0].mxu0
  %v2104 = vpop.f32.mrb[0].mxu0
  %v2105 = vpop.f32.mrb[0].mxu0
  %2106 = vdwg.mxu0
  %v2107 = vmax.f32 %v1549, 0.0
  %v2108 = vmax.f32 %v975, 0.0
  %v2109 = vmax.f32 %v978, 0.0
  %v2110 = vmax.f32 %v2102, 0.0
  %s2111 = scalar_lea.vmem %s27, 64
  %v2112 = vld [vmem:[%s2111] sm:$0xf]
  %v2113 = vld [vmem:[%s2111 + $0x4] sm:$0xf]
  %v2114 = vld [vmem:[%s2111 + $0x8] sm:$0xf]
  %v2115 = vld [vmem:[%s2111 + $0xc] sm:$0xf]
  %v2116 = vld [vmem:[%s2111 + $0x10] sm:$0xf]
  %v2117 = vld [vmem:[%s2111 + $0x14] sm:$0xf]
  %v2118 = vld [vmem:[%s2111 + $0x18] sm:$0xf]
  %v2119 = vld [vmem:[%s2111 + $0x1c] sm:$0xf]
  %v2120 = vld [vmem:[%s2111 + $0x20] sm:$0xf]
  %v2121 = vld [vmem:[%s2111 + $0x24] sm:$0xf]
  %v2122 = vld [vmem:[%s2111 + $0x28] sm:$0xf]
  %v2123 = vld [vmem:[%s2111 + $0x2c] sm:$0xf]
  %v2124 = vld [vmem:[%s2111 + $0x30] sm:$0xf]
  %v2125 = vld [vmem:[%s2111 + $0x34] sm:$0xf]
  %v2126 = vld [vmem:[%s2111 + $0x38] sm:$0xf]
  %v2127 = vld [vmem:[%s2111 + $0x3c] sm:$0xf]
  %v2128 = vpack.c.bf16 %v2107, %v2107
  %v2145 = vunpack.c.l.b16 %v2112
  %v2146 = vunpack.c.l.b16 %v2113
  %v2147 = vunpack.c.l.b16 %v2114
  %v2148 = vunpack.c.l.b16 %v2115
  %v2149 = vunpack.c.l.b16 %v2116
  %v2150 = vunpack.c.l.b16 %v2117
  %v2151 = vunpack.c.l.b16 %v2118
  %v2152 = vunpack.c.l.b16 %v2119
  %v2153 = vunpack.c.l.b16 %v2120
  %v2154 = vunpack.c.l.b16 %v2121
  %v2155 = vunpack.c.l.b16 %v2122
  %v2156 = vunpack.c.l.b16 %v2123
  %v2157 = vunpack.c.l.b16 %v2124
  %v2158 = vunpack.c.l.b16 %v2125
  %v2159 = vunpack.c.l.b16 %v2126
  %v2160 = vunpack.c.l.b16 %v2127
  %v2161 = vpack.c.b16 %v2146, %v2145
  %v2162 = vpack.c.b16 %v2148, %v2147
  %v2163 = vpack.c.b16 %v2150, %v2149
  %v2164 = vpack.c.b16 %v2152, %v2151
  %v2165 = vpack.c.b16 %v2154, %v2153
  %v2166 = vpack.c.b16 %v2156, %v2155
  %v2167 = vpack.c.b16 %v2158, %v2157
  %v2168 = vpack.c.b16 %v2160, %v2159
  %2177 = vmatprep.subr.bf16.mxu0 0
  %2178 = vmatpush1.bf16.msra.mxu0 %v2161
  %2179 = vmatprep.subr.bf16.mxu0 0
  %2180 = vmatpush1.bf16.msra.mxu0 %v2162
  %2181 = vmatprep.subr.bf16.mxu0 0
  %2182 = vmatpush1.bf16.msra.mxu0 %v2163
  %2183 = vmatprep.subr.bf16.mxu0 0
  %2184 = vmatpush1.bf16.msra.mxu0 %v2164
  %2185 = vmatprep.subr.bf16.mxu0 0
  %2186 = vmatpush1.bf16.msra.mxu0 %v2165
  %2187 = vmatprep.subr.bf16.mxu0 0
  %2188 = vmatpush1.bf16.msra.mxu0 %v2166
  %2189 = vmatprep.subr.bf16.mxu0 0
  %2190 = vmatpush1.bf16.msra.mxu0 %v2167
  %2191 = vmatprep.subr.bf16.mxu0 0
  %2192 = vmatpush1.bf16.msra.mxu0 %v2168
  %2193 = vmatprep.subr.bf16.mxu0 0
  %2194 = vmatpush1.bf16.msra.mxu0 0
  %2195 = vmatprep.subr.bf16.mxu0 0
  %2196 = vmatpush1.bf16.msra.mxu0 0
  %2197 = vmatprep.subr.bf16.mxu0 0
  %2198 = vmatpush1.bf16.msra.mxu0 0
  %2199 = vmatprep.subr.bf16.mxu0 0
  %2200 = vmatpush1.bf16.msra.mxu0 0
  %2201 = vmatprep.subr.bf16.mxu0 0
  %2202 = vmatpush1.bf16.msra.mxu0 0
  %2203 = vmatprep.subr.bf16.mxu0 0
  %2204 = vmatpush1.bf16.msra.mxu0 0
  %2205 = vmatprep.subr.bf16.mxu0 0
  %2206 = vmatpush1.bf16.msra.mxu0 0
  %2207 = vmatprep.subr.bf16.mxu0 0
  %2208 = vmatpush1.bf16.msra.mxu0 0
  %2209 = vmatprep.mubr.bf16.mxu0 0
  %2210 = vmatmul.mubr.bf16.gmra.mrb[0].mxu0 %v2128
  %v2211 = vpop.f32.mrb[0].mxu0
  %v2212 = vadd.f32 0.0, %v2211
  %v2213 = vpop.f32.mrb[0].mxu0
  %v2214 = vpop.f32.mrb[0].mxu0
  %v2215 = vpop.f32.mrb[0].mxu0
  %2216 = vdwg.mxu0
  %s2217 = scalar_lea.vmem %s29, 64
  %v2218 = vld [vmem:[%s2217] sm:$0xf]
  %v2219 = vld [vmem:[%s2217 + $0x4] sm:$0xf]
  %v2220 = vld [vmem:[%s2217 + $0x8] sm:$0xf]
  %v2221 = vld [vmem:[%s2217 + $0xc] sm:$0xf]
  %v2222 = vld [vmem:[%s2217 + $0x10] sm:$0xf]
  %v2223 = vld [vmem:[%s2217 + $0x14] sm:$0xf]
  %v2224 = vld [vmem:[%s2217 + $0x18] sm:$0xf]
  %v2225 = vld [vmem:[%s2217 + $0x1c] sm:$0xf]
  %v2226 = vld [vmem:[%s2217 + $0x20] sm:$0xf]
  %v2227 = vld [vmem:[%s2217 + $0x24] sm:$0xf]
  %v2228 = vld [vmem:[%s2217 + $0x28] sm:$0xf]
  %v2229 = vld [vmem:[%s2217 + $0x2c] sm:$0xf]
  %v2230 = vld [vmem:[%s2217 + $0x30] sm:$0xf]
  %v2231 = vld [vmem:[%s2217 + $0x34] sm:$0xf]
  %v2232 = vld [vmem:[%s2217 + $0x38] sm:$0xf]
  %v2233 = vld [vmem:[%s2217 + $0x3c] sm:$0xf]
  %v2250 = vunpack.c.l.b16 %v2218
  %v2251 = vunpack.c.l.b16 %v2219
  %v2252 = vunpack.c.l.b16 %v2220
  %v2253 = vunpack.c.l.b16 %v2221
  %v2254 = vunpack.c.l.b16 %v2222
  %v2255 = vunpack.c.l.b16 %v2223
  %v2256 = vunpack.c.l.b16 %v2224
  %v2257 = vunpack.c.l.b16 %v2225
  %v2258 = vunpack.c.l.b16 %v2226
  %v2259 = vunpack.c.l.b16 %v2227
  %v2260 = vunpack.c.l.b16 %v2228
  %v2261 = vunpack.c.l.b16 %v2229
  %v2262 = vunpack.c.l.b16 %v2230
  %v2263 = vunpack.c.l.b16 %v2231
  %v2264 = vunpack.c.l.b16 %v2232
  %v2265 = vunpack.c.l.b16 %v2233
  %v2266 = vpack.c.b16 %v2251, %v2250
  %v2267 = vpack.c.b16 %v2253, %v2252
  %v2268 = vpack.c.b16 %v2255, %v2254
  %v2269 = vpack.c.b16 %v2257, %v2256
  %v2270 = vpack.c.b16 %v2259, %v2258
  %v2271 = vpack.c.b16 %v2261, %v2260
  %v2272 = vpack.c.b16 %v2263, %v2262
  %v2273 = vpack.c.b16 %v2265, %v2264
  %2282 = vmatprep.subr.bf16.mxu0 0
  %2283 = vmatpush1.bf16.msra.mxu0 %v2266
  %2284 = vmatprep.subr.bf16.mxu0 0
  %2285 = vmatpush1.bf16.msra.mxu0 %v2267
  %2286 = vmatprep.subr.bf16.mxu0 0
  %2287 = vmatpush1.bf16.msra.mxu0 %v2268
  %2288 = vmatprep.subr.bf16.mxu0 0
  %2289 = vmatpush1.bf16.msra.mxu0 %v2269
  %2290 = vmatprep.subr.bf16.mxu0 0
  %2291 = vmatpush1.bf16.msra.mxu0 %v2270
  %2292 = vmatprep.subr.bf16.mxu0 0
  %2293 = vmatpush1.bf16.msra.mxu0 %v2271
  %2294 = vmatprep.subr.bf16.mxu0 0
  %2295 = vmatpush1.bf16.msra.mxu0 %v2272
  %2296 = vmatprep.subr.bf16.mxu0 0
  %2297 = vmatpush1.bf16.msra.mxu0 %v2273
  %2298 = vmatprep.subr.bf16.mxu0 0
  %2299 = vmatpush1.bf16.msra.mxu0 0
  %2300 = vmatprep.subr.bf16.mxu0 0
  %2301 = vmatpush1.bf16.msra.mxu0 0
  %2302 = vmatprep.subr.bf16.mxu0 0
  %2303 = vmatpush1.bf16.msra.mxu0 0
  %2304 = vmatprep.subr.bf16.mxu0 0
  %2305 = vmatpush1.bf16.msra.mxu0 0
  %2306 = vmatprep.subr.bf16.mxu0 0
  %2307 = vmatpush1.bf16.msra.mxu0 0
  %2308 = vmatprep.subr.bf16.mxu0 0
  %2309 = vmatpush1.bf16.msra.mxu0 0
  %2310 = vmatprep.subr.bf16.mxu0 0
  %2311 = vmatpush1.bf16.msra.mxu0 0
  %2312 = vmatprep.subr.bf16.mxu0 0
  %2313 = vmatpush1.bf16.msra.mxu0 0
  %2314 = vmatprep.mubr.bf16.mxu0 0
  %2315 = vmatmul.mubr.bf16.gmra.mrb[0].mxu0 %v2128
  %v2316 = vpop.f32.mrb[0].mxu0
  %v2317 = vadd.f32 0.0, %v2316
  %v2318 = vpop.f32.mrb[0].mxu0
  %v2319 = vpop.f32.mrb[0].mxu0
  %v2320 = vpop.f32.mrb[0].mxu0
  %2321 = vdwg.mxu0
  %2322 = vmatprep.subr.mxu0 0.0
  %2323 = vmatpush1.msra.mxu0 %v2317
  %2324 = vmatprep.subr.mxu0 0.0
  %2325 = vmatpush1.msra.mxu0 0.0
  %2326 = vmatprep.subr.mxu0 0.0
  %2327 = vmatpush1.msra.mxu0 0.0
  %2328 = vmatprep.subr.mxu0 0.0
  %2329 = vmatpush1.msra.mxu0 0.0
  %2330 = vmatprep.subr.mxu0 0.0
  %2331 = vmatpush1.msra.mxu0 0.0
  %2332 = vmatprep.subr.mxu0 0.0
  %2333 = vmatpush1.msra.mxu0 0.0
  %2334 = vmatprep.subr.mxu0 0.0
  %2335 = vmatpush1.msra.mxu0 0.0
  %2336 = vmatprep.subr.mxu0 0.0
  %2337 = vmatpush1.msra.mxu0 0.0
  %2338 = vmatprep.subr.mxu0 0.0
  %2339 = vmatpush1.msra.mxu0 0.0
  %2340 = vmatprep.subr.mxu0 0.0
  %2341 = vmatpush1.msra.mxu0 0.0
  %2342 = vmatprep.subr.mxu0 0.0
  %2343 = vmatpush1.msra.mxu0 0.0
  %2344 = vmatprep.subr.mxu0 0.0
  %2345 = vmatpush1.msra.mxu0 0.0
  %2346 = vmatprep.subr.mxu0 0.0
  %2347 = vmatpush1.msra.mxu0 0.0
  %2348 = vmatprep.subr.mxu0 0.0
  %2349 = vmatpush1.msra.mxu0 0.0
  %2350 = vmatprep.subr.mxu0 0.0
  %2351 = vmatpush1.msra.mxu0 0.0
  %2352 = vmatprep.subr.mxu0 0.0
  %2353 = vmatpush1.msra.mxu0 0.0
  %2354 = vmatprep.subr.mxu0 0.0
  %2355 = vmatpush1.msra.mxu0 0.0
  %2356 = vmatprep.subr.mxu0 0.0
  %2357 = vmatpush1.msra.mxu0 0.0
  %2358 = vmatprep.subr.mxu0 0.0
  %2359 = vmatpush1.msra.mxu0 0.0
  %2360 = vmatprep.subr.mxu0 0.0
  %2361 = vmatpush1.msra.mxu0 0.0
  %2362 = vmatprep.subr.mxu0 0.0
  %2363 = vmatpush1.msra.mxu0 0.0
  %2364 = vmatprep.subr.mxu0 0.0
  %2365 = vmatpush1.msra.mxu0 0.0
  %2366 = vmatprep.subr.mxu0 0.0
  %2367 = vmatpush1.msra.mxu0 0.0
  %2368 = vmatprep.subr.mxu0 0.0
  %2369 = vmatpush1.msra.mxu0 0.0
  %2370 = vmatprep.subr.mxu0 0.0
  %2371 = vmatpush1.msra.mxu0 0.0
  %2372 = vmatprep.subr.mxu0 0.0
  %2373 = vmatpush1.msra.mxu0 0.0
  %2374 = vmatprep.subr.mxu0 0.0
  %2375 = vmatpush1.msra.mxu0 0.0
  %2376 = vmatprep.subr.mxu0 0.0
  %2377 = vmatpush1.msra.mxu0 0.0
  %2378 = vmatprep.subr.mxu0 0.0
  %2379 = vmatpush1.msra.mxu0 0.0
  %2380 = vmatprep.subr.mxu0 0.0
  %2381 = vmatpush1.msra.mxu0 0.0
  %2382 = vmatprep.subr.mxu0 0.0
  %2383 = vmatpush1.msra.mxu0 0.0
  %2384 = vmatprep.subr.mxu0 0.0
  %2385 = vmatpush1.msra.mxu0 0.0
  %2386 = vmatprep.mubr.f32.mxu0 0.0
  %2387 = vmatmul.mubr.f32.gmra.mrb[0].mxu0 %v390
  %v2388 = vpop.f32.mrb[0].mxu0
  %v2389 = vadd.f32 0.0, %v2388
  %v2390 = vpop.f32.mrb[0].mxu0
  %2391 = vmatprep.mubr.f32.mxu0 0.0
  %2392 = vmatmul.mubr.f32.gmra.mrb[0].mxu0 %v393
  %v2393 = vpop.f32.mrb[0].mxu0
  %v2394 = vadd.f32 0.0, %v2393
  %v2395 = vpop.f32.mrb[0].mxu0
  %2396 = vdwg.mxu0
  %2397 = vmatprep.subr.mxu0 0.0
  %2398 = vmatpush1.msra.mxu0 %v2212
  %2399 = vmatprep.subr.mxu0 0.0
  %2400 = vmatpush1.msra.mxu0 0.0
  %2401 = vmatprep.subr.mxu0 0.0
  %2402 = vmatpush1.msra.mxu0 0.0
  %2403 = vmatprep.subr.mxu0 0.0
  %2404 = vmatpush1.msra.mxu0 0.0
  %2405 = vmatprep.subr.mxu0 0.0
  %2406 = vmatpush1.msra.mxu0 0.0
  %2407 = vmatprep.subr.mxu0 0.0
  %2408 = vmatpush1.msra.mxu0 0.0
  %2409 = vmatprep.subr.mxu0 0.0
  %2410 = vmatpush1.msra.mxu0 0.0
  %2411 = vmatprep.subr.mxu0 0.0
  %2412 = vmatpush1.msra.mxu0 0.0
  %2413 = vmatprep.subr.mxu0 0.0
  %2414 = vmatpush1.msra.mxu0 0.0
  %2415 = vmatprep.subr.mxu0 0.0
  %2416 = vmatpush1.msra.mxu0 0.0
  %2417 = vmatprep.subr.mxu0 0.0
  %2418 = vmatpush1.msra.mxu0 0.0
  %2419 = vmatprep.subr.mxu0 0.0
  %2420 = vmatpush1.msra.mxu0 0.0
  %2421 = vmatprep.subr.mxu0 0.0
  %2422 = vmatpush1.msra.mxu0 0.0
  %2423 = vmatprep.subr.mxu0 0.0
  %2424 = vmatpush1.msra.mxu0 0.0
  %2425 = vmatprep.subr.mxu0 0.0
  %2426 = vmatpush1.msra.mxu0 0.0
  %2427 = vmatprep.subr.mxu0 0.0
  %2428 = vmatpush1.msra.mxu0 0.0
  %2429 = vmatprep.subr.mxu0 0.0
  %2430 = vmatpush1.msra.mxu0 0.0
  %2431 = vmatprep.subr.mxu0 0.0
  %2432 = vmatpush1.msra.mxu0 0.0
  %2433 = vmatprep.subr.mxu0 0.0
  %2434 = vmatpush1.msra.mxu0 0.0
  %2435 = vmatprep.subr.mxu0 0.0
  %2436 = vmatpush1.msra.mxu0 0.0
  %2437 = vmatprep.subr.mxu0 0.0
  %2438 = vmatpush1.msra.mxu0 0.0
  %2439 = vmatprep.subr.mxu0 0.0
  %2440 = vmatpush1.msra.mxu0 0.0
  %2441 = vmatprep.subr.mxu0 0.0
  %2442 = vmatpush1.msra.mxu0 0.0
  %2443 = vmatprep.subr.mxu0 0.0
  %2444 = vmatpush1.msra.mxu0 0.0
  %2445 = vmatprep.subr.mxu0 0.0
  %2446 = vmatpush1.msra.mxu0 0.0
  %2447 = vmatprep.subr.mxu0 0.0
  %2448 = vmatpush1.msra.mxu0 0.0
  %2449 = vmatprep.subr.mxu0 0.0
  %2450 = vmatpush1.msra.mxu0 0.0
  %2451 = vmatprep.subr.mxu0 0.0
  %2452 = vmatpush1.msra.mxu0 0.0
  %2453 = vmatprep.subr.mxu0 0.0
  %2454 = vmatpush1.msra.mxu0 0.0
  %2455 = vmatprep.subr.mxu0 0.0
  %2456 = vmatpush1.msra.mxu0 0.0
  %2457 = vmatprep.subr.mxu0 0.0
  %2458 = vmatpush1.msra.mxu0 0.0
  %2459 = vmatprep.subr.mxu0 0.0
  %2460 = vmatpush1.msra.mxu0 0.0
  %2461 = vmatprep.mubr.f32.mxu0 0.0
  %2462 = vmatmul.mubr.f32.gmra.mrb[0].mxu0 %v471
  %v2463 = vpop.f32.mrb[0].mxu0
  %v2464 = vadd.f32 %v2389, %v2463
  %v2465 = vpop.f32.mrb[0].mxu0
  %2466 = vmatprep.mubr.f32.mxu0 0.0
  %2467 = vmatmul.mubr.f32.gmra.mrb[0].mxu0 %v474
  %v2468 = vpop.f32.mrb[0].mxu0
  %v2469 = vadd.f32 %v2394, %v2468
  %v2470 = vpop.f32.mrb[0].mxu0
  %2471 = vdwg.mxu0
  %s2472 = scalar_lea.vmem %s31, 64
  %v2473 = vld [vmem:[%s2472] sm:$0xf]
  %v2474 = vld [vmem:[%s2472 + $0x4] sm:$0xf]
  %v2475 = vld [vmem:[%s2472 + $0x8] sm:$0xf]
  %v2476 = vld [vmem:[%s2472 + $0xc] sm:$0xf]
  %v2477 = vld [vmem:[%s2472 + $0x10] sm:$0xf]
  %v2478 = vld [vmem:[%s2472 + $0x14] sm:$0xf]
  %v2479 = vld [vmem:[%s2472 + $0x18] sm:$0xf]
  %v2480 = vld [vmem:[%s2472 + $0x1c] sm:$0xf]
  %v2481 = vld [vmem:[%s2472 + $0x20] sm:$0xf]
  %v2482 = vld [vmem:[%s2472 + $0x24] sm:$0xf]
  %v2483 = vld [vmem:[%s2472 + $0x28] sm:$0xf]
  %v2484 = vld [vmem:[%s2472 + $0x2c] sm:$0xf]
  %v2485 = vld [vmem:[%s2472 + $0x30] sm:$0xf]
  %v2486 = vld [vmem:[%s2472 + $0x34] sm:$0xf]
  %v2487 = vld [vmem:[%s2472 + $0x38] sm:$0xf]
  %v2488 = vld [vmem:[%s2472 + $0x3c] sm:$0xf]
  %v2489 = vpack.c.bf16 %v2109, %v2108
  %v2506 = vunpack.c.l.b16 %v2473
  %v2507 = vunpack.c.l.b16 %v2474
  %v2508 = vunpack.c.l.b16 %v2475
  %v2509 = vunpack.c.l.b16 %v2476
  %v2510 = vunpack.c.l.b16 %v2477
  %v2511 = vunpack.c.l.b16 %v2478
  %v2512 = vunpack.c.l.b16 %v2479
  %v2513 = vunpack.c.l.b16 %v2480
  %v2514 = vunpack.c.l.b16 %v2481
  %v2515 = vunpack.c.l.b16 %v2482
  %v2516 = vunpack.c.l.b16 %v2483
  %v2517 = vunpack.c.l.b16 %v2484
  %v2518 = vunpack.c.l.b16 %v2485
  %v2519 = vunpack.c.l.b16 %v2486
  %v2520 = vunpack.c.l.b16 %v2487
  %v2521 = vunpack.c.l.b16 %v2488
  %v2522 = vpack.c.b16 %v2507, %v2506
  %v2523 = vpack.c.b16 %v2509, %v2508
  %v2524 = vpack.c.b16 %v2511, %v2510
  %v2525 = vpack.c.b16 %v2513, %v2512
  %v2526 = vpack.c.b16 %v2515, %v2514
  %v2527 = vpack.c.b16 %v2517, %v2516
  %v2528 = vpack.c.b16 %v2519, %v2518
  %v2529 = vpack.c.b16 %v2521, %v2520
  %2538 = vmatprep.subr.bf16.mxu0 0
  %2539 = vmatpush1.bf16.msra.mxu0 %v2522
  %2540 = vmatprep.subr.bf16.mxu0 0
  %2541 = vmatpush1.bf16.msra.mxu0 %v2523
  %2542 = vmatprep.subr.bf16.mxu0 0
  %2543 = vmatpush1.bf16.msra.mxu0 %v2524
  %2544 = vmatprep.subr.bf16.mxu0 0
  %2545 = vmatpush1.bf16.msra.mxu0 %v2525
  %2546 = vmatprep.subr.bf16.mxu0 0
  %2547 = vmatpush1.bf16.msra.mxu0 %v2526
  %2548 = vmatprep.subr.bf16.mxu0 0
  %2549 = vmatpush1.bf16.msra.mxu0 %v2527
  %2550 = vmatprep.subr.bf16.mxu0 0
  %2551 = vmatpush1.bf16.msra.mxu0 %v2528
  %2552 = vmatprep.subr.bf16.mxu0 0
  %2553 = vmatpush1.bf16.msra.mxu0 %v2529
  %2554 = vmatprep.subr.bf16.mxu0 0
  %2555 = vmatpush1.bf16.msra.mxu0 0
  %2556 = vmatprep.subr.bf16.mxu0 0
  %2557 = vmatpush1.bf16.msra.mxu0 0
  %2558 = vmatprep.subr.bf16.mxu0 0
  %2559 = vmatpush1.bf16.msra.mxu0 0
  %2560 = vmatprep.subr.bf16.mxu0 0
  %2561 = vmatpush1.bf16.msra.mxu0 0
  %2562 = vmatprep.subr.bf16.mxu0 0
  %2563 = vmatpush1.bf16.msra.mxu0 0
  %2564 = vmatprep.subr.bf16.mxu0 0
  %2565 = vmatpush1.bf16.msra.mxu0 0
  %2566 = vmatprep.subr.bf16.mxu0 0
  %2567 = vmatpush1.bf16.msra.mxu0 0
  %2568 = vmatprep.subr.bf16.mxu0 0
  %2569 = vmatpush1.bf16.msra.mxu0 0
  %2570 = vmatprep.mubr.bf16.mxu0 0
  %2571 = vmatmul.mubr.bf16.gmra.mrb[0].mxu0 %v2489
  %v2572 = vpop.f32.mrb[0].mxu0
  %v2573 = vadd.f32 0.0, %v2572
  %v2574 = vpop.f32.mrb[0].mxu0
  %v2575 = vpop.f32.mrb[0].mxu0
  %v2576 = vadd.f32 0.0, %v2575
  %v2577 = vpop.f32.mrb[0].mxu0
  %2578 = vdwg.mxu0
  %v2579 = vadd.f32 %v2464, %v2573
  %v2580 = vadd.f32 %v2469, %v2576
  %s2581 = scalar_lea.vmem %s33, 64
  %v2582 = vld [vmem:[%s2581] sm:$0xf]
  %v2583 = vld [vmem:[%s2581 + $0x4] sm:$0xf]
  %v2584 = vld [vmem:[%s2581 + $0x8] sm:$0xf]
  %v2585 = vld [vmem:[%s2581 + $0xc] sm:$0xf]
  %v2586 = vld [vmem:[%s2581 + $0x10] sm:$0xf]
  %v2587 = vld [vmem:[%s2581 + $0x14] sm:$0xf]
  %v2588 = vld [vmem:[%s2581 + $0x18] sm:$0xf]
  %v2589 = vld [vmem:[%s2581 + $0x1c] sm:$0xf]
  %v2590 = vld [vmem:[%s2581 + $0x20] sm:$0xf]
  %v2591 = vld [vmem:[%s2581 + $0x24] sm:$0xf]
  %v2592 = vld [vmem:[%s2581 + $0x28] sm:$0xf]
  %v2593 = vld [vmem:[%s2581 + $0x2c] sm:$0xf]
  %v2594 = vld [vmem:[%s2581 + $0x30] sm:$0xf]
  %v2595 = vld [vmem:[%s2581 + $0x34] sm:$0xf]
  %v2596 = vld [vmem:[%s2581 + $0x38] sm:$0xf]
  %v2597 = vld [vmem:[%s2581 + $0x3c] sm:$0xf]
  %v2598 = vpack.c.bf16 %v2110, %v2110
  %v2615 = vunpack.c.l.b16 %v2582
  %v2616 = vunpack.c.l.b16 %v2583
  %v2617 = vunpack.c.l.b16 %v2584
  %v2618 = vunpack.c.l.b16 %v2585
  %v2619 = vunpack.c.l.b16 %v2586
  %v2620 = vunpack.c.l.b16 %v2587
  %v2621 = vunpack.c.l.b16 %v2588
  %v2622 = vunpack.c.l.b16 %v2589
  %v2623 = vunpack.c.l.b16 %v2590
  %v2624 = vunpack.c.l.b16 %v2591
  %v2625 = vunpack.c.l.b16 %v2592
  %v2626 = vunpack.c.l.b16 %v2593
  %v2627 = vunpack.c.l.b16 %v2594
  %v2628 = vunpack.c.l.b16 %v2595
  %v2629 = vunpack.c.l.b16 %v2596
  %v2630 = vunpack.c.l.b16 %v2597
  %v2631 = vpack.c.b16 %v2616, %v2615
  %v2632 = vpack.c.b16 %v2618, %v2617
  %v2633 = vpack.c.b16 %v2620, %v2619
  %v2634 = vpack.c.b16 %v2622, %v2621
  %v2635 = vpack.c.b16 %v2624, %v2623
  %v2636 = vpack.c.b16 %v2626, %v2625
  %v2637 = vpack.c.b16 %v2628, %v2627
  %v2638 = vpack.c.b16 %v2630, %v2629
  %2647 = vmatprep.subr.bf16.mxu0 0
  %2648 = vmatpush1.bf16.msra.mxu0 %v2631
  %2649 = vmatprep.subr.bf16.mxu0 0
  %2650 = vmatpush1.bf16.msra.mxu0 %v2632
  %2651 = vmatprep.subr.bf16.mxu0 0
  %2652 = vmatpush1.bf16.msra.mxu0 %v2633
  %2653 = vmatprep.subr.bf16.mxu0 0
  %2654 = vmatpush1.bf16.msra.mxu0 %v2634
  %2655 = vmatprep.subr.bf16.mxu0 0
  %2656 = vmatpush1.bf16.msra.mxu0 %v2635
  %2657 = vmatprep.subr.bf16.mxu0 0
  %2658 = vmatpush1.bf16.msra.mxu0 %v2636
  %2659 = vmatprep.subr.bf16.mxu0 0
  %2660 = vmatpush1.bf16.msra.mxu0 %v2637
  %2661 = vmatprep.subr.bf16.mxu0 0
  %2662 = vmatpush1.bf16.msra.mxu0 %v2638
  %2663 = vmatprep.subr.bf16.mxu0 0
  %2664 = vmatpush1.bf16.msra.mxu0 0
  %2665 = vmatprep.subr.bf16.mxu0 0
  %2666 = vmatpush1.bf16.msra.mxu0 0
  %2667 = vmatprep.subr.bf16.mxu0 0
  %2668 = vmatpush1.bf16.msra.mxu0 0
  %2669 = vmatprep.subr.bf16.mxu0 0
  %2670 = vmatpush1.bf16.msra.mxu0 0
  %2671 = vmatprep.subr.bf16.mxu0 0
  %2672 = vmatpush1.bf16.msra.mxu0 0
  %2673 = vmatprep.subr.bf16.mxu0 0
  %2674 = vmatpush1.bf16.msra.mxu0 0
  %2675 = vmatprep.subr.bf16.mxu0 0
  %2676 = vmatpush1.bf16.msra.mxu0 0
  %2677 = vmatprep.subr.bf16.mxu0 0
  %2678 = vmatpush1.bf16.msra.mxu0 0
  %2679 = vmatprep.mubr.bf16.mxu0 0
  %2680 = vmatmul.mubr.bf16.gmra.mrb[0].mxu0 %v2598
  %v2681 = vpop.f32.mrb[0].mxu0
  %v2682 = vadd.f32 0.0, %v2681
  %v2683 = vpop.f32.mrb[0].mxu0
  %v2684 = vpop.f32.mrb[0].mxu0
  %v2685 = vpop.f32.mrb[0].mxu0
  %2686 = vdwg.mxu0
  %2687 = vmatprep.subr.mxu0 0.0
  %2688 = vmatpush1.msra.mxu0 %v2682
  %2689 = vmatprep.subr.mxu0 0.0
  %2690 = vmatpush1.msra.mxu0 0.0
  %2691 = vmatprep.subr.mxu0 0.0
  %2692 = vmatpush1.msra.mxu0 0.0
  %2693 = vmatprep.subr.mxu0 0.0
  %2694 = vmatpush1.msra.mxu0 0.0
  %2695 = vmatprep.subr.mxu0 0.0
  %2696 = vmatpush1.msra.mxu0 0.0
  %2697 = vmatprep.subr.mxu0 0.0
  %2698 = vmatpush1.msra.mxu0 0.0
  %2699 = vmatprep.subr.mxu0 0.0
  %2700 = vmatpush1.msra.mxu0 0.0
  %2701 = vmatprep.subr.mxu0 0.0
  %2702 = vmatpush1.msra.mxu0 0.0
  %2703 = vmatprep.subr.mxu0 0.0
  %2704 = vmatpush1.msra.mxu0 0.0
  %2705 = vmatprep.subr.mxu0 0.0
  %2706 = vmatpush1.msra.mxu0 0.0
  %2707 = vmatprep.subr.mxu0 0.0
  %2708 = vmatpush1.msra.mxu0 0.0
  %2709 = vmatprep.subr.mxu0 0.0
  %2710 = vmatpush1.msra.mxu0 0.0
  %2711 = vmatprep.subr.mxu0 0.0
  %2712 = vmatpush1.msra.mxu0 0.0
  %2713 = vmatprep.subr.mxu0 0.0
  %2714 = vmatpush1.msra.mxu0 0.0
  %2715 = vmatprep.subr.mxu0 0.0
  %2716 = vmatpush1.msra.mxu0 0.0
  %2717 = vmatprep.subr.mxu0 0.0
  %2718 = vmatpush1.msra.mxu0 0.0
  %2719 = vmatprep.subr.mxu0 0.0
  %2720 = vmatpush1.msra.mxu0 0.0
  %2721 = vmatprep.subr.mxu0 0.0
  %2722 = vmatpush1.msra.mxu0 0.0
  %2723 = vmatprep.subr.mxu0 0.0
  %2724 = vmatpush1.msra.mxu0 0.0
  %2725 = vmatprep.subr.mxu0 0.0
  %2726 = vmatpush1.msra.mxu0 0.0
  %2727 = vmatprep.subr.mxu0 0.0
  %2728 = vmatpush1.msra.mxu0 0.0
  %2729 = vmatprep.subr.mxu0 0.0
  %2730 = vmatpush1.msra.mxu0 0.0
  %2731 = vmatprep.subr.mxu0 0.0
  %2732 = vmatpush1.msra.mxu0 0.0
  %2733 = vmatprep.subr.mxu0 0.0
  %2734 = vmatpush1.msra.mxu0 0.0
  %2735 = vmatprep.subr.mxu0 0.0
  %2736 = vmatpush1.msra.mxu0 0.0
  %2737 = vmatprep.subr.mxu0 0.0
  %2738 = vmatpush1.msra.mxu0 0.0
  %2739 = vmatprep.subr.mxu0 0.0
  %2740 = vmatpush1.msra.mxu0 0.0
  %2741 = vmatprep.subr.mxu0 0.0
  %2742 = vmatpush1.msra.mxu0 0.0
  %2743 = vmatprep.subr.mxu0 0.0
  %2744 = vmatpush1.msra.mxu0 0.0
  %2745 = vmatprep.subr.mxu0 0.0
  %2746 = vmatpush1.msra.mxu0 0.0
  %2747 = vmatprep.subr.mxu0 0.0
  %2748 = vmatpush1.msra.mxu0 0.0
  %2749 = vmatprep.subr.mxu0 0.0
  %2750 = vmatpush1.msra.mxu0 0.0
  %2751 = vmatprep.mubr.f32.mxu0 0.0
  %2752 = vmatmul.mubr.f32.gmra.mrb[0].mxu0 %v775
  %v2753 = vpop.f32.mrb[0].mxu0
  %v2754 = vadd.f32 0.0, %v2753
  %v2755 = vpop.f32.mrb[0].mxu0
  %2756 = vmatprep.mubr.f32.mxu0 0.0
  %2757 = vmatmul.mubr.f32.gmra.mrb[0].mxu0 %v778
  %v2758 = vpop.f32.mrb[0].mxu0
  %v2759 = vadd.f32 0.0, %v2758
  %v2760 = vpop.f32.mrb[0].mxu0
  %2761 = vdwg.mxu0
  %v2762 = vadd.f32 %v2579, %v2754
  %v2763 = vadd.f32 %v2580, %v2759
  %s2764 = scalar_lea.vmem %s35, 1
  %v2765 = vld [vmem:[%s2764] sm:$0x1]
  %v2767 = vlaneseq
  %v2768 = vshrl.u32 %v2767, 7
  %v2769 = vsub.s32 0, %v2768
  %v2770 = vrot.slane %v2765, %v2769
  %v2772 = vadd.f32 %v2762, %v2770
  %v2773 = vadd.f32 %v2763, %v2770
  %v2774 = vmax.f32 %v2772, 0.0
  %v2775 = vmax.f32 %v2773, 0.0
  %s2776 = scalar_lea.vmem %s37, 64
  %v2777 = vld [vmem:[%s2776] sm:$0xf]
  %v2778 = vld [vmem:[%s2776 + $0x4] sm:$0xf]
  %v2779 = vld [vmem:[%s2776 + $0x8] sm:$0xf]
  %v2780 = vld [vmem:[%s2776 + $0xc] sm:$0xf]
  %v2781 = vld [vmem:[%s2776 + $0x10] sm:$0xf]
  %v2782 = vld [vmem:[%s2776 + $0x14] sm:$0xf]
  %v2783 = vld [vmem:[%s2776 + $0x18] sm:$0xf]
  %v2784 = vld [vmem:[%s2776 + $0x1c] sm:$0xf]
  %v2785 = vld [vmem:[%s2776 + $0x20] sm:$0xf]
  %v2786 = vld [vmem:[%s2776 + $0x24] sm:$0xf]
  %v2787 = vld [vmem:[%s2776 + $0x28] sm:$0xf]
  %v2788 = vld [vmem:[%s2776 + $0x2c] sm:$0xf]
  %v2789 = vld [vmem:[%s2776 + $0x30] sm:$0xf]
  %v2790 = vld [vmem:[%s2776 + $0x34] sm:$0xf]
  %v2791 = vld [vmem:[%s2776 + $0x38] sm:$0xf]
  %v2792 = vld [vmem:[%s2776 + $0x3c] sm:$0xf]
  %v2793 = vpack.c.bf16 %v2775, %v2774
  %s2794 = scalar_lea.vmem %s39, 1
  %v2795 = vld [vmem:[%s2794] sm:$0x1]
  %v2797 = vlaneseq
  %v2798 = vshrl.u32 %v2797, 7
  %v2799 = vsub.s32 0, %v2798
  %v2800 = vrot.slane %v2795, %v2799
  %v2818 = vunpack.c.l.b16 %v2777
  %v2819 = vunpack.c.l.b16 %v2778
  %v2820 = vunpack.c.l.b16 %v2779
  %v2821 = vunpack.c.l.b16 %v2780
  %v2822 = vunpack.c.l.b16 %v2781
  %v2823 = vunpack.c.l.b16 %v2782
  %v2824 = vunpack.c.l.b16 %v2783
  %v2825 = vunpack.c.l.b16 %v2784
  %v2826 = vunpack.c.l.b16 %v2785
  %v2827 = vunpack.c.l.b16 %v2786
  %v2828 = vunpack.c.l.b16 %v2787
  %v2829 = vunpack.c.l.b16 %v2788
  %v2830 = vunpack.c.l.b16 %v2789
  %v2831 = vunpack.c.l.b16 %v2790
  %v2832 = vunpack.c.l.b16 %v2791
  %v2833 = vunpack.c.l.b16 %v2792
  %v2834 = vpack.c.b16 %v2819, %v2818
  %v2835 = vpack.c.b16 %v2821, %v2820
  %v2836 = vpack.c.b16 %v2823, %v2822
  %v2837 = vpack.c.b16 %v2825, %v2824
  %v2838 = vpack.c.b16 %v2827, %v2826
  %v2839 = vpack.c.b16 %v2829, %v2828
  %v2840 = vpack.c.b16 %v2831, %v2830
  %v2841 = vpack.c.b16 %v2833, %v2832
  %2850 = vmatprep.subr.bf16.mxu0 0
  %2851 = vmatpush1.bf16.msra.mxu0 %v2834
  %2852 = vmatprep.subr.bf16.mxu0 0
  %2853 = vmatpush1.bf16.msra.mxu0 %v2835
  %2854 = vmatprep.subr.bf16.mxu0 0
  %2855 = vmatpush1.bf16.msra.mxu0 %v2836
  %2856 = vmatprep.subr.bf16.mxu0 0
  %2857 = vmatpush1.bf16.msra.mxu0 %v2837
  %2858 = vmatprep.subr.bf16.mxu0 0
  %2859 = vmatpush1.bf16.msra.mxu0 %v2838
  %2860 = vmatprep.subr.bf16.mxu0 0
  %2861 = vmatpush1.bf16.msra.mxu0 %v2839
  %2862 = vmatprep.subr.bf16.mxu0 0
  %2863 = vmatpush1.bf16.msra.mxu0 %v2840
  %2864 = vmatprep.subr.bf16.mxu0 0
  %2865 = vmatpush1.bf16.msra.mxu0 %v2841
  %2866 = vmatprep.subr.bf16.mxu0 0
  %2867 = vmatpush1.bf16.msra.mxu0 0
  %2868 = vmatprep.subr.bf16.mxu0 0
  %2869 = vmatpush1.bf16.msra.mxu0 0
  %2870 = vmatprep.subr.bf16.mxu0 0
  %2871 = vmatpush1.bf16.msra.mxu0 0
  %2872 = vmatprep.subr.bf16.mxu0 0
  %2873 = vmatpush1.bf16.msra.mxu0 0
  %2874 = vmatprep.subr.bf16.mxu0 0
  %2875 = vmatpush1.bf16.msra.mxu0 0
  %2876 = vmatprep.subr.bf16.mxu0 0
  %2877 = vmatpush1.bf16.msra.mxu0 0
  %2878 = vmatprep.subr.bf16.mxu0 0
  %2879 = vmatpush1.bf16.msra.mxu0 0
  %2880 = vmatprep.subr.bf16.mxu0 0
  %2881 = vmatpush1.bf16.msra.mxu0 0
  %2882 = vmatprep.mubr.bf16.mxu0 0
  %2883 = vmatmul.mubr.bf16.gmra.mrb[0].mxu0 %v2793
  %v2884 = vpop.f32.mrb[0].mxu0
  %v2885 = vadd.f32 %v2800, %v2884
  %v2886 = vpop.f32.mrb[0].mxu0
  %v2887 = vpop.f32.mrb[0].mxu0
  %v2888 = vadd.f32 %v2800, %v2887
  %v2889 = vpop.f32.mrb[0].mxu0
  %2890 = vdwg.mxu0
  %v2891 = vpack.c.bf16 %v2888, %v2885
  %2892 = vmatprep.subr.bf16.mxu0 0
  %2893 = vmatpush1.bf16.msra.mxu0 %v2891
  %2894 = vmatprep.subr.bf16.mxu0 0
  %2895 = vmatpush1.bf16.msra.mxu0 0
  %2896 = vmatprep.subr.bf16.mxu0 0
  %2897 = vmatpush1.bf16.msra.mxu0 0
  %2898 = vmatprep.subr.bf16.mxu0 0
  %2899 = vmatpush1.bf16.msra.mxu0 0
  %2900 = vmatprep.subr.bf16.mxu0 0
  %2901 = vmatpush1.bf16.msra.mxu0 0
  %2902 = vmatprep.subr.bf16.mxu0 0
  %2903 = vmatpush1.bf16.msra.mxu0 0
  %2904 = vmatprep.subr.bf16.mxu0 0
  %2905 = vmatpush1.bf16.msra.mxu0 0
  %2906 = vmatprep.subr.bf16.mxu0 0
  %2907 = vmatpush1.bf16.msra.mxu0 0
  %2908 = vmatprep.subr.bf16.mxu0 0
  %2909 = vmatpush1.bf16.msra.mxu0 0
  %2910 = vmatprep.subr.bf16.mxu0 0
  %2911 = vmatpush1.bf16.msra.mxu0 0
  %2912 = vmatprep.subr.bf16.mxu0 0
  %2913 = vmatpush1.bf16.msra.mxu0 0
  %2914 = vmatprep.subr.bf16.mxu0 0
  %2915 = vmatpush1.bf16.msra.mxu0 0
  %2916 = vmatprep.subr.bf16.mxu0 0
  %2917 = vmatpush1.bf16.msra.mxu0 0
  %2918 = vmatprep.subr.bf16.mxu0 0
  %2919 = vmatpush1.bf16.msra.mxu0 0
  %2920 = vmatprep.subr.bf16.mxu0 0
  %2921 = vmatpush1.bf16.msra.mxu0 0
  %2922 = vmatprep.subr.bf16.mxu0 0
  %2923 = vmatpush1.bf16.msra.mxu0 0
  %2924 = vmatprep.mubr.bf16.mxu0 0
  %2925 = vmatmul.mubr.bf16.gmra.mrb[0].mxu0 %v993
  %v2926 = vpop.f32.mrb[0].mxu0
  %v2927 = vadd.f32 0.0, %v2926
  %v2928 = vpop.f32.mrb[0].mxu0
  %v2929 = vpop.f32.mrb[0].mxu0
  %v2930 = vpop.f32.mrb[0].mxu0
  %2931 = vdwg.mxu0
  %v2932 = vmul.f32 %v2927, %v1038
  %s2933 = scalar_lea.vmem %s41, 64
  %v2934 = vld [vmem:[%s2933] sm:$0xf]
  %v2935 = vld [vmem:[%s2933 + $0x4] sm:$0xf]
  %v2936 = vld [vmem:[%s2933 + $0x8] sm:$0xf]
  %v2937 = vld [vmem:[%s2933 + $0xc] sm:$0xf]
  %v2938 = vld [vmem:[%s2933 + $0x10] sm:$0xf]
  %v2939 = vld [vmem:[%s2933 + $0x14] sm:$0xf]
  %v2940 = vld [vmem:[%s2933 + $0x18] sm:$0xf]
  %v2941 = vld [vmem:[%s2933 + $0x1c] sm:$0xf]
  %v2942 = vld [vmem:[%s2933 + $0x20] sm:$0xf]
  %v2943 = vld [vmem:[%s2933 + $0x24] sm:$0xf]
  %v2944 = vld [vmem:[%s2933 + $0x28] sm:$0xf]
  %v2945 = vld [vmem:[%s2933 + $0x2c] sm:$0xf]
  %v2946 = vld [vmem:[%s2933 + $0x30] sm:$0xf]
  %v2947 = vld [vmem:[%s2933 + $0x34] sm:$0xf]
  %v2948 = vld [vmem:[%s2933 + $0x38] sm:$0xf]
  %v2949 = vld [vmem:[%s2933 + $0x3c] sm:$0xf]
  %v2950 = vpack.c.bf16 %v2932, %v2932
  %s2951 = scalar_lea.vmem %s43, 64
  %v2952 = vld [vmem:[%s2951] sm:$0xf]
  %v2953 = vld [vmem:[%s2951 + $0x4] sm:$0xf]
  %v2954 = vld [vmem:[%s2951 + $0x8] sm:$0xf]
  %v2955 = vld [vmem:[%s2951 + $0xc] sm:$0xf]
  %v2956 = vld [vmem:[%s2951 + $0x10] sm:$0xf]
  %v2957 = vld [vmem:[%s2951 + $0x14] sm:$0xf]
  %v2958 = vld [vmem:[%s2951 + $0x18] sm:$0xf]
  %v2959 = vld [vmem:[%s2951 + $0x1c] sm:$0xf]
  %v2960 = vld [vmem:[%s2951 + $0x20] sm:$0xf]
  %v2961 = vld [vmem:[%s2951 + $0x24] sm:$0xf]
  %v2962 = vld [vmem:[%s2951 + $0x28] sm:$0xf]
  %v2963 = vld [vmem:[%s2951 + $0x2c] sm:$0xf]
  %v2964 = vld [vmem:[%s2951 + $0x30] sm:$0xf]
  %v2965 = vld [vmem:[%s2951 + $0x34] sm:$0xf]
  %v2966 = vld [vmem:[%s2951 + $0x38] sm:$0xf]
  %v2967 = vld [vmem:[%s2951 + $0x3c] sm:$0xf]
  %v2984 = vunpack.c.l.b16 %v2952
  %v2985 = vunpack.c.l.b16 %v2953
  %v2986 = vunpack.c.l.b16 %v2954
  %v2987 = vunpack.c.l.b16 %v2955
  %v2988 = vunpack.c.l.b16 %v2956
  %v2989 = vunpack.c.l.b16 %v2957
  %v2990 = vunpack.c.l.b16 %v2958
  %v2991 = vunpack.c.l.b16 %v2959
  %v2992 = vunpack.c.l.b16 %v2960
  %v2993 = vunpack.c.l.b16 %v2961
  %v2994 = vunpack.c.l.b16 %v2962
  %v2995 = vunpack.c.l.b16 %v2963
  %v2996 = vunpack.c.l.b16 %v2964
  %v2997 = vunpack.c.l.b16 %v2965
  %v2998 = vunpack.c.l.b16 %v2966
  %v2999 = vunpack.c.l.b16 %v2967
  %v3000 = vpack.c.b16 %v2985, %v2984
  %v3001 = vpack.c.b16 %v2987, %v2986
  %v3002 = vpack.c.b16 %v2989, %v2988
  %v3003 = vpack.c.b16 %v2991, %v2990
  %v3004 = vpack.c.b16 %v2993, %v2992
  %v3005 = vpack.c.b16 %v2995, %v2994
  %v3006 = vpack.c.b16 %v2997, %v2996
  %v3007 = vpack.c.b16 %v2999, %v2998
  %3016 = vmatprep.subr.bf16.mxu0 0
  %3017 = vmatpush1.bf16.msra.mxu0 %v3000
  %3018 = vmatprep.subr.bf16.mxu0 0
  %3019 = vmatpush1.bf16.msra.mxu0 %v3001
  %3020 = vmatprep.subr.bf16.mxu0 0
  %3021 = vmatpush1.bf16.msra.mxu0 %v3002
  %3022 = vmatprep.subr.bf16.mxu0 0
  %3023 = vmatpush1.bf16.msra.mxu0 %v3003
  %3024 = vmatprep.subr.bf16.mxu0 0
  %3025 = vmatpush1.bf16.msra.mxu0 %v3004
  %3026 = vmatprep.subr.bf16.mxu0 0
  %3027 = vmatpush1.bf16.msra.mxu0 %v3005
  %3028 = vmatprep.subr.bf16.mxu0 0
  %3029 = vmatpush1.bf16.msra.mxu0 %v3006
  %3030 = vmatprep.subr.bf16.mxu0 0
  %3031 = vmatpush1.bf16.msra.mxu0 %v3007
  %3032 = vmatprep.subr.bf16.mxu0 0
  %3033 = vmatpush1.bf16.msra.mxu0 0
  %3034 = vmatprep.subr.bf16.mxu0 0
  %3035 = vmatpush1.bf16.msra.mxu0 0
  %3036 = vmatprep.subr.bf16.mxu0 0
  %3037 = vmatpush1.bf16.msra.mxu0 0
  %3038 = vmatprep.subr.bf16.mxu0 0
  %3039 = vmatpush1.bf16.msra.mxu0 0
  %3040 = vmatprep.subr.bf16.mxu0 0
  %3041 = vmatpush1.bf16.msra.mxu0 0
  %3042 = vmatprep.subr.bf16.mxu0 0
  %3043 = vmatpush1.bf16.msra.mxu0 0
  %3044 = vmatprep.subr.bf16.mxu0 0
  %3045 = vmatpush1.bf16.msra.mxu0 0
  %3046 = vmatprep.subr.bf16.mxu0 0
  %3047 = vmatpush1.bf16.msra.mxu0 0
  %3048 = vmatprep.mubr.bf16.mxu0 0
  %3049 = vmatmul.mubr.bf16.gmra.mrb[0].mxu0 %v2128
  %v3050 = vpop.f32.mrb[0].mxu0
  %v3051 = vadd.f32 0.0, %v3050
  %v3052 = vpop.f32.mrb[0].mxu0
  %v3053 = vpop.f32.mrb[0].mxu0
  %v3054 = vpop.f32.mrb[0].mxu0
  %3055 = vdwg.mxu0
  %v3072 = vunpack.c.l.b16 %v2934
  %v3073 = vunpack.c.l.b16 %v2935
  %v3074 = vunpack.c.l.b16 %v2936
  %v3075 = vunpack.c.l.b16 %v2937
  %v3076 = vunpack.c.l.b16 %v2938
  %v3077 = vunpack.c.l.b16 %v2939
  %v3078 = vunpack.c.l.b16 %v2940
  %v3079 = vunpack.c.l.b16 %v2941
  %v3080 = vunpack.c.l.b16 %v2942
  %v3081 = vunpack.c.l.b16 %v2943
  %v3082 = vunpack.c.l.b16 %v2944
  %v3083 = vunpack.c.l.b16 %v2945
  %v3084 = vunpack.c.l.b16 %v2946
  %v3085 = vunpack.c.l.b16 %v2947
  %v3086 = vunpack.c.l.b16 %v2948
  %v3087 = vunpack.c.l.b16 %v2949
  %v3088 = vpack.c.b16 %v3073, %v3072
  %v3089 = vpack.c.b16 %v3075, %v3074
  %v3090 = vpack.c.b16 %v3077, %v3076
  %v3091 = vpack.c.b16 %v3079, %v3078
  %v3092 = vpack.c.b16 %v3081, %v3080
  %v3093 = vpack.c.b16 %v3083, %v3082
  %v3094 = vpack.c.b16 %v3085, %v3084
  %v3095 = vpack.c.b16 %v3087, %v3086
  %3104 = vmatprep.subr.bf16.mxu0 0
  %3105 = vmatpush1.bf16.msra.mxu0 %v3088
  %3106 = vmatprep.subr.bf16.mxu0 0
  %3107 = vmatpush1.bf16.msra.mxu0 %v3089
  %3108 = vmatprep.subr.bf16.mxu0 0
  %3109 = vmatpush1.bf16.msra.mxu0 %v3090
  %3110 = vmatprep.subr.bf16.mxu0 0
  %3111 = vmatpush1.bf16.msra.mxu0 %v3091
  %3112 = vmatprep.subr.bf16.mxu0 0
  %3113 = vmatpush1.bf16.msra.mxu0 %v3092
  %3114 = vmatprep.subr.bf16.mxu0 0
  %3115 = vmatpush1.bf16.msra.mxu0 %v3093
  %3116 = vmatprep.subr.bf16.mxu0 0
  %3117 = vmatpush1.bf16.msra.mxu0 %v3094
  %3118 = vmatprep.subr.bf16.mxu0 0
  %3119 = vmatpush1.bf16.msra.mxu0 %v3095
  %3120 = vmatprep.subr.bf16.mxu0 0
  %3121 = vmatpush1.bf16.msra.mxu0 0
  %3122 = vmatprep.subr.bf16.mxu0 0
  %3123 = vmatpush1.bf16.msra.mxu0 0
  %3124 = vmatprep.subr.bf16.mxu0 0
  %3125 = vmatpush1.bf16.msra.mxu0 0
  %3126 = vmatprep.subr.bf16.mxu0 0
  %3127 = vmatpush1.bf16.msra.mxu0 0
  %3128 = vmatprep.subr.bf16.mxu0 0
  %3129 = vmatpush1.bf16.msra.mxu0 0
  %3130 = vmatprep.subr.bf16.mxu0 0
  %3131 = vmatpush1.bf16.msra.mxu0 0
  %3132 = vmatprep.subr.bf16.mxu0 0
  %3133 = vmatpush1.bf16.msra.mxu0 0
  %3134 = vmatprep.subr.bf16.mxu0 0
  %3135 = vmatpush1.bf16.msra.mxu0 0
  %3136 = vmatprep.mubr.bf16.mxu0 0
  %3137 = vmatmul.mubr.bf16.gmra.mrb[0].mxu0 %v2950
  %v3138 = vpop.f32.mrb[0].mxu0
  %v3139 = vadd.f32 %v3051, %v3138
  %v3140 = vpop.f32.mrb[0].mxu0
  %v3141 = vpop.f32.mrb[0].mxu0
  %v3142 = vpop.f32.mrb[0].mxu0
  %3143 = vdwg.mxu0
  %s3144 = scalar_lea.vmem %s45, 64
  %v3145 = vld [vmem:[%s3144] sm:$0xf]
  %v3146 = vld [vmem:[%s3144 + $0x4] sm:$0xf]
  %v3147 = vld [vmem:[%s3144 + $0x8] sm:$0xf]
  %v3148 = vld [vmem:[%s3144 + $0xc] sm:$0xf]
  %v3149 = vld [vmem:[%s3144 + $0x10] sm:$0xf]
  %v3150 = vld [vmem:[%s3144 + $0x14] sm:$0xf]
  %v3151 = vld [vmem:[%s3144 + $0x18] sm:$0xf]
  %v3152 = vld [vmem:[%s3144 + $0x1c] sm:$0xf]
  %v3153 = vld [vmem:[%s3144 + $0x20] sm:$0xf]
  %v3154 = vld [vmem:[%s3144 + $0x24] sm:$0xf]
  %v3155 = vld [vmem:[%s3144 + $0x28] sm:$0xf]
  %v3156 = vld [vmem:[%s3144 + $0x2c] sm:$0xf]
  %v3157 = vld [vmem:[%s3144 + $0x30] sm:$0xf]
  %v3158 = vld [vmem:[%s3144 + $0x34] sm:$0xf]
  %v3159 = vld [vmem:[%s3144 + $0x38] sm:$0xf]
  %v3160 = vld [vmem:[%s3144 + $0x3c] sm:$0xf]
  %v3177 = vunpack.c.l.b16 %v3145
  %v3178 = vunpack.c.l.b16 %v3146
  %v3179 = vunpack.c.l.b16 %v3147
  %v3180 = vunpack.c.l.b16 %v3148
  %v3181 = vunpack.c.l.b16 %v3149
  %v3182 = vunpack.c.l.b16 %v3150
  %v3183 = vunpack.c.l.b16 %v3151
  %v3184 = vunpack.c.l.b16 %v3152
  %v3185 = vunpack.c.l.b16 %v3153
  %v3186 = vunpack.c.l.b16 %v3154
  %v3187 = vunpack.c.l.b16 %v3155
  %v3188 = vunpack.c.l.b16 %v3156
  %v3189 = vunpack.c.l.b16 %v3157
  %v3190 = vunpack.c.l.b16 %v3158
  %v3191 = vunpack.c.l.b16 %v3159
  %v3192 = vunpack.c.l.b16 %v3160
  %v3193 = vpack.c.b16 %v3178, %v3177
  %v3194 = vpack.c.b16 %v3180, %v3179
  %v3195 = vpack.c.b16 %v3182, %v3181
  %v3196 = vpack.c.b16 %v3184, %v3183
  %v3197 = vpack.c.b16 %v3186, %v3185
  %v3198 = vpack.c.b16 %v3188, %v3187
  %v3199 = vpack.c.b16 %v3190, %v3189
  %v3200 = vpack.c.b16 %v3192, %v3191
  %3209 = vmatprep.subr.bf16.mxu0 0
  %3210 = vmatpush1.bf16.msra.mxu0 %v3193
  %3211 = vmatprep.subr.bf16.mxu0 0
  %3212 = vmatpush1.bf16.msra.mxu0 %v3194
  %3213 = vmatprep.subr.bf16.mxu0 0
  %3214 = vmatpush1.bf16.msra.mxu0 %v3195
  %3215 = vmatprep.subr.bf16.mxu0 0
  %3216 = vmatpush1.bf16.msra.mxu0 %v3196
  %3217 = vmatprep.subr.bf16.mxu0 0
  %3218 = vmatpush1.bf16.msra.mxu0 %v3197
  %3219 = vmatprep.subr.bf16.mxu0 0
  %3220 = vmatpush1.bf16.msra.mxu0 %v3198
  %3221 = vmatprep.subr.bf16.mxu0 0
  %3222 = vmatpush1.bf16.msra.mxu0 %v3199
  %3223 = vmatprep.subr.bf16.mxu0 0
  %3224 = vmatpush1.bf16.msra.mxu0 %v3200
  %3225 = vmatprep.subr.bf16.mxu0 0
  %3226 = vmatpush1.bf16.msra.mxu0 0
  %3227 = vmatprep.subr.bf16.mxu0 0
  %3228 = vmatpush1.bf16.msra.mxu0 0
  %3229 = vmatprep.subr.bf16.mxu0 0
  %3230 = vmatpush1.bf16.msra.mxu0 0
  %3231 = vmatprep.subr.bf16.mxu0 0
  %3232 = vmatpush1.bf16.msra.mxu0 0
  %3233 = vmatprep.subr.bf16.mxu0 0
  %3234 = vmatpush1.bf16.msra.mxu0 0
  %3235 = vmatprep.subr.bf16.mxu0 0
  %3236 = vmatpush1.bf16.msra.mxu0 0
  %3237 = vmatprep.subr.bf16.mxu0 0
  %3238 = vmatpush1.bf16.msra.mxu0 0
  %3239 = vmatprep.subr.bf16.mxu0 0
  %3240 = vmatpush1.bf16.msra.mxu0 0
  %3241 = vmatprep.mubr.bf16.mxu0 0
  %3242 = vmatmul.mubr.bf16.gmra.mrb[0].mxu0 %v2598
  %v3243 = vpop.f32.mrb[0].mxu0
  %v3244 = vadd.f32 0.0, %v3243
  %v3245 = vpop.f32.mrb[0].mxu0
  %v3246 = vpop.f32.mrb[0].mxu0
  %v3247 = vpop.f32.mrb[0].mxu0
  %3248 = vdwg.mxu0
  %3249 = vmatprep.subr.mxu0 0.0
  %3250 = vmatpush1.msra.mxu0 %v3244
  %3251 = vmatprep.subr.mxu0 0.0
  %3252 = vmatpush1.msra.mxu0 0.0
  %3253 = vmatprep.subr.mxu0 0.0
  %3254 = vmatpush1.msra.mxu0 0.0
  %3255 = vmatprep.subr.mxu0 0.0
  %3256 = vmatpush1.msra.mxu0 0.0
  %3257 = vmatprep.subr.mxu0 0.0
  %3258 = vmatpush1.msra.mxu0 0.0
  %3259 = vmatprep.subr.mxu0 0.0
  %3260 = vmatpush1.msra.mxu0 0.0
  %3261 = vmatprep.subr.mxu0 0.0
  %3262 = vmatpush1.msra.mxu0 0.0
  %3263 = vmatprep.subr.mxu0 0.0
  %3264 = vmatpush1.msra.mxu0 0.0
  %3265 = vmatprep.subr.mxu0 0.0
  %3266 = vmatpush1.msra.mxu0 0.0
  %3267 = vmatprep.subr.mxu0 0.0
  %3268 = vmatpush1.msra.mxu0 0.0
  %3269 = vmatprep.subr.mxu0 0.0
  %3270 = vmatpush1.msra.mxu0 0.0
  %3271 = vmatprep.subr.mxu0 0.0
  %3272 = vmatpush1.msra.mxu0 0.0
  %3273 = vmatprep.subr.mxu0 0.0
  %3274 = vmatpush1.msra.mxu0 0.0
  %3275 = vmatprep.subr.mxu0 0.0
  %3276 = vmatpush1.msra.mxu0 0.0
  %3277 = vmatprep.subr.mxu0 0.0
  %3278 = vmatpush1.msra.mxu0 0.0
  %3279 = vmatprep.subr.mxu0 0.0
  %3280 = vmatpush1.msra.mxu0 0.0
  %3281 = vmatprep.subr.mxu0 0.0
  %3282 = vmatpush1.msra.mxu0 0.0
  %3283 = vmatprep.subr.mxu0 0.0
  %3284 = vmatpush1.msra.mxu0 0.0
  %3285 = vmatprep.subr.mxu0 0.0
  %3286 = vmatpush1.msra.mxu0 0.0
  %3287 = vmatprep.subr.mxu0 0.0
  %3288 = vmatpush1.msra.mxu0 0.0
  %3289 = vmatprep.subr.mxu0 0.0
  %3290 = vmatpush1.msra.mxu0 0.0
  %3291 = vmatprep.subr.mxu0 0.0
  %3292 = vmatpush1.msra.mxu0 0.0
  %3293 = vmatprep.subr.mxu0 0.0
  %3294 = vmatpush1.msra.mxu0 0.0
  %3295 = vmatprep.subr.mxu0 0.0
  %3296 = vmatpush1.msra.mxu0 0.0
  %3297 = vmatprep.subr.mxu0 0.0
  %3298 = vmatpush1.msra.mxu0 0.0
  %3299 = vmatprep.subr.mxu0 0.0
  %3300 = vmatpush1.msra.mxu0 0.0
  %3301 = vmatprep.subr.mxu0 0.0
  %3302 = vmatpush1.msra.mxu0 0.0
  %3303 = vmatprep.subr.mxu0 0.0
  %3304 = vmatpush1.msra.mxu0 0.0
  %3305 = vmatprep.subr.mxu0 0.0
  %3306 = vmatpush1.msra.mxu0 0.0
  %3307 = vmatprep.subr.mxu0 0.0
  %3308 = vmatpush1.msra.mxu0 0.0
  %3309 = vmatprep.subr.mxu0 0.0
  %3310 = vmatpush1.msra.mxu0 0.0
  %3311 = vmatprep.subr.mxu0 0.0
  %3312 = vmatpush1.msra.mxu0 0.0
  %3313 = vmatprep.mubr.f32.mxu0 0.0
  %3314 = vmatmul.mubr.f32.gmra.mrb[0].mxu0 %v1360
  %v3315 = vpop.f32.mrb[0].mxu0
  %v3316 = vadd.f32 0.0, %v3315
  %v3317 = vpop.f32.mrb[0].mxu0
  %3318 = vdwg.mxu0
  %v3319 = vadd.f32 %v3139, %v3316
  %s3320 = scalar_lea.vmem %s47, 1
  %v3321 = vld [vmem:[%s3320] sm:$0x1]
  %v3323 = vlaneseq
  %v3324 = vshrl.u32 %v3323, 7
  %v3325 = vsub.s32 0, %v3324
  %v3326 = vrot.slane %v3321, %v3325
  %v3328 = vadd.f32 %v3319, %v3326
  %v3329 = vmax.f32 %v3328, 0.0
  %s3330 = scalar_lea.vmem %s49, 64
  %v3331 = vld [vmem:[%s3330] sm:$0xf]
  %v3332 = vld [vmem:[%s3330 + $0x4] sm:$0xf]
  %v3333 = vld [vmem:[%s3330 + $0x8] sm:$0xf]
  %v3334 = vld [vmem:[%s3330 + $0xc] sm:$0xf]
  %v3335 = vld [vmem:[%s3330 + $0x10] sm:$0xf]
  %v3336 = vld [vmem:[%s3330 + $0x14] sm:$0xf]
  %v3337 = vld [vmem:[%s3330 + $0x18] sm:$0xf]
  %v3338 = vld [vmem:[%s3330 + $0x1c] sm:$0xf]
  %v3339 = vld [vmem:[%s3330 + $0x20] sm:$0xf]
  %v3340 = vld [vmem:[%s3330 + $0x24] sm:$0xf]
  %v3341 = vld [vmem:[%s3330 + $0x28] sm:$0xf]
  %v3342 = vld [vmem:[%s3330 + $0x2c] sm:$0xf]
  %v3343 = vld [vmem:[%s3330 + $0x30] sm:$0xf]
  %v3344 = vld [vmem:[%s3330 + $0x34] sm:$0xf]
  %v3345 = vld [vmem:[%s3330 + $0x38] sm:$0xf]
  %v3346 = vld [vmem:[%s3330 + $0x3c] sm:$0xf]
  %v3347 = vpack.c.bf16 %v3329, %v3329
  %s3348 = scalar_lea.vmem %s51, 1
  %v3349 = vld [vmem:[%s3348] sm:$0x1]
  %v3351 = vlaneseq
  %v3352 = vshrl.u32 %v3351, 7
  %v3353 = vsub.s32 0, %v3352
  %v3354 = vrot.slane %v3349, %v3353
  %v3372 = vunpack.c.l.b16 %v3331
  %v3373 = vunpack.c.l.b16 %v3332
  %v3374 = vunpack.c.l.b16 %v3333
  %v3375 = vunpack.c.l.b16 %v3334
  %v3376 = vunpack.c.l.b16 %v3335
  %v3377 = vunpack.c.l.b16 %v3336
  %v3378 = vunpack.c.l.b16 %v3337
  %v3379 = vunpack.c.l.b16 %v3338
  %v3380 = vunpack.c.l.b16 %v3339
  %v3381 = vunpack.c.l.b16 %v3340
  %v3382 = vunpack.c.l.b16 %v3341
  %v3383 = vunpack.c.l.b16 %v3342
  %v3384 = vunpack.c.l.b16 %v3343
  %v3385 = vunpack.c.l.b16 %v3344
  %v3386 = vunpack.c.l.b16 %v3345
  %v3387 = vunpack.c.l.b16 %v3346
  %v3388 = vpack.c.b16 %v3373, %v3372
  %v3389 = vpack.c.b16 %v3375, %v3374
  %v3390 = vpack.c.b16 %v3377, %v3376
  %v3391 = vpack.c.b16 %v3379, %v3378
  %v3392 = vpack.c.b16 %v3381, %v3380
  %v3393 = vpack.c.b16 %v3383, %v3382
  %v3394 = vpack.c.b16 %v3385, %v3384
  %v3395 = vpack.c.b16 %v3387, %v3386
  %3404 = vmatprep.subr.bf16.mxu0 0
  %3405 = vmatpush1.bf16.msra.mxu0 %v3388
  %3406 = vmatprep.subr.bf16.mxu0 0
  %3407 = vmatpush1.bf16.msra.mxu0 %v3389
  %3408 = vmatprep.subr.bf16.mxu0 0
  %3409 = vmatpush1.bf16.msra.mxu0 %v3390
  %3410 = vmatprep.subr.bf16.mxu0 0
  %3411 = vmatpush1.bf16.msra.mxu0 %v3391
  %3412 = vmatprep.subr.bf16.mxu0 0
  %3413 = vmatpush1.bf16.msra.mxu0 %v3392
  %3414 = vmatprep.subr.bf16.mxu0 0
  %3415 = vmatpush1.bf16.msra.mxu0 %v3393
  %3416 = vmatprep.subr.bf16.mxu0 0
  %3417 = vmatpush1.bf16.msra.mxu0 %v3394
  %3418 = vmatprep.subr.bf16.mxu0 0
  %3419 = vmatpush1.bf16.msra.mxu0 %v3395
  %3420 = vmatprep.subr.bf16.mxu0 0
  %3421 = vmatpush1.bf16.msra.mxu0 0
  %3422 = vmatprep.subr.bf16.mxu0 0
  %3423 = vmatpush1.bf16.msra.mxu0 0
  %3424 = vmatprep.subr.bf16.mxu0 0
  %3425 = vmatpush1.bf16.msra.mxu0 0
  %3426 = vmatprep.subr.bf16.mxu0 0
  %3427 = vmatpush1.bf16.msra.mxu0 0
  %3428 = vmatprep.subr.bf16.mxu0 0
  %3429 = vmatpush1.bf16.msra.mxu0 0
  %3430 = vmatprep.subr.bf16.mxu0 0
  %3431 = vmatpush1.bf16.msra.mxu0 0
  %3432 = vmatprep.subr.bf16.mxu0 0
  %3433 = vmatpush1.bf16.msra.mxu0 0
  %3434 = vmatprep.subr.bf16.mxu0 0
  %3435 = vmatpush1.bf16.msra.mxu0 0
  %3436 = vmatprep.mubr.bf16.mxu0 0
  %3437 = vmatmul.mubr.bf16.gmra.mrb[0].mxu0 %v3347
  %v3438 = vpop.f32.mrb[0].mxu0
  %v3439 = vadd.f32 %v3354, %v3438
  %v3440 = vpop.f32.mrb[0].mxu0
  %v3441 = vpop.f32.mrb[0].mxu0
  %v3442 = vpop.f32.mrb[0].mxu0
  %3443 = vdwg.mxu0
  %v3444 = vpack.c.bf16 %v3439, %v3439
  %v3446 = vsel %vm1565, %v3444, 0
  %3448 = vmatprep.subr.bf16.mxu0 0
  %3449 = vmatpush1.bf16.msra.mxu0 %v3446
  %3450 = vmatprep.subr.bf16.mxu0 0
  %3451 = vmatpush1.bf16.msra.mxu0 0
  %3452 = vmatprep.subr.bf16.mxu0 0
  %3453 = vmatpush1.bf16.msra.mxu0 0
  %3454 = vmatprep.subr.bf16.mxu0 0
  %3455 = vmatpush1.bf16.msra.mxu0 0
  %3456 = vmatprep.subr.bf16.mxu0 0
  %3457 = vmatpush1.bf16.msra.mxu0 0
  %3458 = vmatprep.subr.bf16.mxu0 0
  %3459 = vmatpush1.bf16.msra.mxu0 0
  %3460 = vmatprep.subr.bf16.mxu0 0
  %3461 = vmatpush1.bf16.msra.mxu0 0
  %3462 = vmatprep.subr.bf16.mxu0 0
  %3463 = vmatpush1.bf16.msra.mxu0 0
  %3464 = vmatprep.subr.bf16.mxu0 0
  %3465 = vmatpush1.bf16.msra.mxu0 0
  %3466 = vmatprep.subr.bf16.mxu0 0
  %3467 = vmatpush1.bf16.msra.mxu0 0
  %3468 = vmatprep.subr.bf16.mxu0 0
  %3469 = vmatpush1.bf16.msra.mxu0 0
  %3470 = vmatprep.subr.bf16.mxu0 0
  %3471 = vmatpush1.bf16.msra.mxu0 0
  %3472 = vmatprep.subr.bf16.mxu0 0
  %3473 = vmatpush1.bf16.msra.mxu0 0
  %3474 = vmatprep.subr.bf16.mxu0 0
  %3475 = vmatpush1.bf16.msra.mxu0 0
  %3476 = vmatprep.subr.bf16.mxu0 0
  %3477 = vmatpush1.bf16.msra.mxu0 0
  %3478 = vmatprep.subr.bf16.mxu0 0
  %3479 = vmatpush1.bf16.msra.mxu0 0
  %3480 = vmatprep.mubr.bf16.mxu0 0
  %3481 = vmatmul.mubr.bf16.gmra.mrb[0].mxu0 %v1563
  %v3482 = vpop.f32.mrb[0].mxu0
  %v3483 = vadd.f32 0.0, %v3482
  %v3484 = vpop.f32.mrb[0].mxu0
  %v3485 = vpop.f32.mrb[0].mxu0
  %v3486 = vpop.f32.mrb[0].mxu0
  %3487 = vdwg.mxu0
  %v3488 = vmul.f32 %v3483, %v1612
  %3489 = vmatprep.subr.bf16.mxu0 0
  %3490 = vmatpush1.bf16.msra.mxu0 %v2891
  %3491 = vmatprep.subr.bf16.mxu0 0
  %3492 = vmatpush1.bf16.msra.mxu0 0
  %3493 = vmatprep.subr.bf16.mxu0 0
  %3494 = vmatpush1.bf16.msra.mxu0 0
  %3495 = vmatprep.subr.bf16.mxu0 0
  %3496 = vmatpush1.bf16.msra.mxu0 0
  %3497 = vmatprep.subr.bf16.mxu0 0
  %3498 = vmatpush1.bf16.msra.mxu0 0
  %3499 = vmatprep.subr.bf16.mxu0 0
  %3500 = vmatpush1.bf16.msra.mxu0 0
  %3501 = vmatprep.subr.bf16.mxu0 0
  %3502 = vmatpush1.bf16.msra.mxu0 0
  %3503 = vmatprep.subr.bf16.mxu0 0
  %3504 = vmatpush1.bf16.msra.mxu0 0
  %3505 = vmatprep.subr.bf16.mxu0 0
  %3506 = vmatpush1.bf16.msra.mxu0 0
  %3507 = vmatprep.subr.bf16.mxu0 0
  %3508 = vmatpush1.bf16.msra.mxu0 0
  %3509 = vmatprep.subr.bf16.mxu0 0
  %3510 = vmatpush1.bf16.msra.mxu0 0
  %3511 = vmatprep.subr.bf16.mxu0 0
  %3512 = vmatpush1.bf16.msra.mxu0 0
  %3513 = vmatprep.subr.bf16.mxu0 0
  %3514 = vmatpush1.bf16.msra.mxu0 0
  %3515 = vmatprep.subr.bf16.mxu0 0
  %3516 = vmatpush1.bf16.msra.mxu0 0
  %3517 = vmatprep.subr.bf16.mxu0 0
  %3518 = vmatpush1.bf16.msra.mxu0 0
  %3519 = vmatprep.subr.bf16.mxu0 0
  %3520 = vmatpush1.bf16.msra.mxu0 0
  %3521 = vmatprep.mubr.bf16.mxu0 0
  %3522 = vmatmul.mubr.bf16.gmra.mrb[0].mxu0 %v1623
  %v3523 = vpop.f32.mrb[0].mxu0
  %v3524 = vadd.f32 0.0, %v3523
  %v3525 = vpop.f32.mrb[0].mxu0
  %v3526 = vpop.f32.mrb[0].mxu0
  %v3527 = vpop.f32.mrb[0].mxu0
  %3528 = vdwg.mxu0
  %v3529 = vmul.f32 %v3524, %v1668
  %s3530 = scalar_lea.vmem %s53, 64
  %v3531 = vld [vmem:[%s3530] sm:$0xf]
  %v3532 = vld [vmem:[%s3530 + $0x4] sm:$0xf]
  %v3533 = vld [vmem:[%s3530 + $0x8] sm:$0xf]
  %v3534 = vld [vmem:[%s3530 + $0xc] sm:$0xf]
  %v3535 = vld [vmem:[%s3530 + $0x10] sm:$0xf]
  %v3536 = vld [vmem:[%s3530 + $0x14] sm:$0xf]
  %v3537 = vld [vmem:[%s3530 + $0x18] sm:$0xf]
  %v3538 = vld [vmem:[%s3530 + $0x1c] sm:$0xf]
  %v3539 = vld [vmem:[%s3530 + $0x20] sm:$0xf]
  %v3540 = vld [vmem:[%s3530 + $0x24] sm:$0xf]
  %v3541 = vld [vmem:[%s3530 + $0x28] sm:$0xf]
  %v3542 = vld [vmem:[%s3530 + $0x2c] sm:$0xf]
  %v3543 = vld [vmem:[%s3530 + $0x30] sm:$0xf]
  %v3544 = vld [vmem:[%s3530 + $0x34] sm:$0xf]
  %v3545 = vld [vmem:[%s3530 + $0x38] sm:$0xf]
  %v3546 = vld [vmem:[%s3530 + $0x3c] sm:$0xf]
  %v3547 = vpack.c.bf16 %v3488, %v3488
  %s3548 = scalar_lea.vmem %s55, 64
  %v3549 = vld [vmem:[%s3548] sm:$0xf]
  %v3550 = vld [vmem:[%s3548 + $0x4] sm:$0xf]
  %v3551 = vld [vmem:[%s3548 + $0x8] sm:$0xf]
  %v3552 = vld [vmem:[%s3548 + $0xc] sm:$0xf]
  %v3553 = vld [vmem:[%s3548 + $0x10] sm:$0xf]
  %v3554 = vld [vmem:[%s3548 + $0x14] sm:$0xf]
  %v3555 = vld [vmem:[%s3548 + $0x18] sm:$0xf]
  %v3556 = vld [vmem:[%s3548 + $0x1c] sm:$0xf]
  %v3557 = vld [vmem:[%s3548 + $0x20] sm:$0xf]
  %v3558 = vld [vmem:[%s3548 + $0x24] sm:$0xf]
  %v3559 = vld [vmem:[%s3548 + $0x28] sm:$0xf]
  %v3560 = vld [vmem:[%s3548 + $0x2c] sm:$0xf]
  %v3561 = vld [vmem:[%s3548 + $0x30] sm:$0xf]
  %v3562 = vld [vmem:[%s3548 + $0x34] sm:$0xf]
  %v3563 = vld [vmem:[%s3548 + $0x38] sm:$0xf]
  %v3564 = vld [vmem:[%s3548 + $0x3c] sm:$0xf]
  %v3565 = vpack.c.bf16 %v3529, %v3529
  %v3582 = vunpack.c.l.b16 %v3549
  %v3583 = vunpack.c.l.b16 %v3550
  %v3584 = vunpack.c.l.b16 %v3551
  %v3585 = vunpack.c.l.b16 %v3552
  %v3586 = vunpack.c.l.b16 %v3553
  %v3587 = vunpack.c.l.b16 %v3554
  %v3588 = vunpack.c.l.b16 %v3555
  %v3589 = vunpack.c.l.b16 %v3556
  %v3590 = vunpack.c.l.b16 %v3557
  %v3591 = vunpack.c.l.b16 %v3558
  %v3592 = vunpack.c.l.b16 %v3559
  %v3593 = vunpack.c.l.b16 %v3560
  %v3594 = vunpack.c.l.b16 %v3561
  %v3595 = vunpack.c.l.b16 %v3562
  %v3596 = vunpack.c.l.b16 %v3563
  %v3597 = vunpack.c.l.b16 %v3564
  %v3598 = vpack.c.b16 %v3583, %v3582
  %v3599 = vpack.c.b16 %v3585, %v3584
  %v3600 = vpack.c.b16 %v3587, %v3586
  %v3601 = vpack.c.b16 %v3589, %v3588
  %v3602 = vpack.c.b16 %v3591, %v3590
  %v3603 = vpack.c.b16 %v3593, %v3592
  %v3604 = vpack.c.b16 %v3595, %v3594
  %v3605 = vpack.c.b16 %v3597, %v3596
  %3614 = vmatprep.subr.bf16.mxu0 0
  %3615 = vmatpush1.bf16.msra.mxu0 %v3598
  %3616 = vmatprep.subr.bf16.mxu0 0
  %3617 = vmatpush1.bf16.msra.mxu0 %v3599
  %3618 = vmatprep.subr.bf16.mxu0 0
  %3619 = vmatpush1.bf16.msra.mxu0 %v3600
  %3620 = vmatprep.subr.bf16.mxu0 0
  %3621 = vmatpush1.bf16.msra.mxu0 %v3601
  %3622 = vmatprep.subr.bf16.mxu0 0
  %3623 = vmatpush1.bf16.msra.mxu0 %v3602
  %3624 = vmatprep.subr.bf16.mxu0 0
  %3625 = vmatpush1.bf16.msra.mxu0 %v3603
  %3626 = vmatprep.subr.bf16.mxu0 0
  %3627 = vmatpush1.bf16.msra.mxu0 %v3604
  %3628 = vmatprep.subr.bf16.mxu0 0
  %3629 = vmatpush1.bf16.msra.mxu0 %v3605
  %3630 = vmatprep.subr.bf16.mxu0 0
  %3631 = vmatpush1.bf16.msra.mxu0 0
  %3632 = vmatprep.subr.bf16.mxu0 0
  %3633 = vmatpush1.bf16.msra.mxu0 0
  %3634 = vmatprep.subr.bf16.mxu0 0
  %3635 = vmatpush1.bf16.msra.mxu0 0
  %3636 = vmatprep.subr.bf16.mxu0 0
  %3637 = vmatpush1.bf16.msra.mxu0 0
  %3638 = vmatprep.subr.bf16.mxu0 0
  %3639 = vmatpush1.bf16.msra.mxu0 0
  %3640 = vmatprep.subr.bf16.mxu0 0
  %3641 = vmatpush1.bf16.msra.mxu0 0
  %3642 = vmatprep.subr.bf16.mxu0 0
  %3643 = vmatpush1.bf16.msra.mxu0 0
  %3644 = vmatprep.subr.bf16.mxu0 0
  %3645 = vmatpush1.bf16.msra.mxu0 0
  %3646 = vmatprep.mubr.bf16.mxu0 0
  %3647 = vmatmul.mubr.bf16.gmra.mrb[0].mxu0 %v3565
  %v3648 = vpop.f32.mrb[0].mxu0
  %v3649 = vadd.f32 0.0, %v3648
  %v3650 = vpop.f32.mrb[0].mxu0
  %v3651 = vpop.f32.mrb[0].mxu0
  %v3652 = vpop.f32.mrb[0].mxu0
  %3653 = vdwg.mxu0
  %v3670 = vunpack.c.l.b16 %v3531
  %v3671 = vunpack.c.l.b16 %v3532
  %v3672 = vunpack.c.l.b16 %v3533
  %v3673 = vunpack.c.l.b16 %v3534
  %v3674 = vunpack.c.l.b16 %v3535
  %v3675 = vunpack.c.l.b16 %v3536
  %v3676 = vunpack.c.l.b16 %v3537
  %v3677 = vunpack.c.l.b16 %v3538
  %v3678 = vunpack.c.l.b16 %v3539
  %v3679 = vunpack.c.l.b16 %v3540
  %v3680 = vunpack.c.l.b16 %v3541
  %v3681 = vunpack.c.l.b16 %v3542
  %v3682 = vunpack.c.l.b16 %v3543
  %v3683 = vunpack.c.l.b16 %v3544
  %v3684 = vunpack.c.l.b16 %v3545
  %v3685 = vunpack.c.l.b16 %v3546
  %v3686 = vpack.c.b16 %v3671, %v3670
  %v3687 = vpack.c.b16 %v3673, %v3672
  %v3688 = vpack.c.b16 %v3675, %v3674
  %v3689 = vpack.c.b16 %v3677, %v3676
  %v3690 = vpack.c.b16 %v3679, %v3678
  %v3691 = vpack.c.b16 %v3681, %v3680
  %v3692 = vpack.c.b16 %v3683, %v3682
  %v3693 = vpack.c.b16 %v3685, %v3684
  %3702 = vmatprep.subr.bf16.mxu0 0
  %3703 = vmatpush1.bf16.msra.mxu0 %v3686
  %3704 = vmatprep.subr.bf16.mxu0 0
  %3705 = vmatpush1.bf16.msra.mxu0 %v3687
  %3706 = vmatprep.subr.bf16.mxu0 0
  %3707 = vmatpush1.bf16.msra.mxu0 %v3688
  %3708 = vmatprep.subr.bf16.mxu0 0
  %3709 = vmatpush1.bf16.msra.mxu0 %v3689
  %3710 = vmatprep.subr.bf16.mxu0 0
  %3711 = vmatpush1.bf16.msra.mxu0 %v3690
  %3712 = vmatprep.subr.bf16.mxu0 0
  %3713 = vmatpush1.bf16.msra.mxu0 %v3691
  %3714 = vmatprep.subr.bf16.mxu0 0
  %3715 = vmatpush1.bf16.msra.mxu0 %v3692
  %3716 = vmatprep.subr.bf16.mxu0 0
  %3717 = vmatpush1.bf16.msra.mxu0 %v3693
  %3718 = vmatprep.subr.bf16.mxu0 0
  %3719 = vmatpush1.bf16.msra.mxu0 0
  %3720 = vmatprep.subr.bf16.mxu0 0
  %3721 = vmatpush1.bf16.msra.mxu0 0
  %3722 = vmatprep.subr.bf16.mxu0 0
  %3723 = vmatpush1.bf16.msra.mxu0 0
  %3724 = vmatprep.subr.bf16.mxu0 0
  %3725 = vmatpush1.bf16.msra.mxu0 0
  %3726 = vmatprep.subr.bf16.mxu0 0
  %3727 = vmatpush1.bf16.msra.mxu0 0
  %3728 = vmatprep.subr.bf16.mxu0 0
  %3729 = vmatpush1.bf16.msra.mxu0 0
  %3730 = vmatprep.subr.bf16.mxu0 0
  %3731 = vmatpush1.bf16.msra.mxu0 0
  %3732 = vmatprep.subr.bf16.mxu0 0
  %3733 = vmatpush1.bf16.msra.mxu0 0
  %3734 = vmatprep.mubr.bf16.mxu0 0
  %3735 = vmatmul.mubr.bf16.gmra.mrb[0].mxu0 %v3547
  %v3736 = vpop.f32.mrb[0].mxu0
  %v3737 = vadd.f32 %v3649, %v3736
  %v3738 = vpop.f32.mrb[0].mxu0
  %v3739 = vpop.f32.mrb[0].mxu0
  %v3740 = vpop.f32.mrb[0].mxu0
  %3741 = vdwg.mxu0
  %s3742 = scalar_lea.vmem %s57, 64
  %v3743 = vld [vmem:[%s3742] sm:$0xf]
  %v3744 = vld [vmem:[%s3742 + $0x4] sm:$0xf]
  %v3745 = vld [vmem:[%s3742 + $0x8] sm:$0xf]
  %v3746 = vld [vmem:[%s3742 + $0xc] sm:$0xf]
  %v3747 = vld [vmem:[%s3742 + $0x10] sm:$0xf]
  %v3748 = vld [vmem:[%s3742 + $0x14] sm:$0xf]
  %v3749 = vld [vmem:[%s3742 + $0x18] sm:$0xf]
  %v3750 = vld [vmem:[%s3742 + $0x1c] sm:$0xf]
  %v3751 = vld [vmem:[%s3742 + $0x20] sm:$0xf]
  %v3752 = vld [vmem:[%s3742 + $0x24] sm:$0xf]
  %v3753 = vld [vmem:[%s3742 + $0x28] sm:$0xf]
  %v3754 = vld [vmem:[%s3742 + $0x2c] sm:$0xf]
  %v3755 = vld [vmem:[%s3742 + $0x30] sm:$0xf]
  %v3756 = vld [vmem:[%s3742 + $0x34] sm:$0xf]
  %v3757 = vld [vmem:[%s3742 + $0x38] sm:$0xf]
  %v3758 = vld [vmem:[%s3742 + $0x3c] sm:$0xf]
  %v3775 = vunpack.c.l.b16 %v3743
  %v3776 = vunpack.c.l.b16 %v3744
  %v3777 = vunpack.c.l.b16 %v3745
  %v3778 = vunpack.c.l.b16 %v3746
  %v3779 = vunpack.c.l.b16 %v3747
  %v3780 = vunpack.c.l.b16 %v3748
  %v3781 = vunpack.c.l.b16 %v3749
  %v3782 = vunpack.c.l.b16 %v3750
  %v3783 = vunpack.c.l.b16 %v3751
  %v3784 = vunpack.c.l.b16 %v3752
  %v3785 = vunpack.c.l.b16 %v3753
  %v3786 = vunpack.c.l.b16 %v3754
  %v3787 = vunpack.c.l.b16 %v3755
  %v3788 = vunpack.c.l.b16 %v3756
  %v3789 = vunpack.c.l.b16 %v3757
  %v3790 = vunpack.c.l.b16 %v3758
  %v3791 = vpack.c.b16 %v3776, %v3775
  %v3792 = vpack.c.b16 %v3778, %v3777
  %v3793 = vpack.c.b16 %v3780, %v3779
  %v3794 = vpack.c.b16 %v3782, %v3781
  %v3795 = vpack.c.b16 %v3784, %v3783
  %v3796 = vpack.c.b16 %v3786, %v3785
  %v3797 = vpack.c.b16 %v3788, %v3787
  %v3798 = vpack.c.b16 %v3790, %v3789
  %3807 = vmatprep.subr.bf16.mxu0 0
  %3808 = vmatpush1.bf16.msra.mxu0 %v3791
  %3809 = vmatprep.subr.bf16.mxu0 0
  %3810 = vmatpush1.bf16.msra.mxu0 %v3792
  %3811 = vmatprep.subr.bf16.mxu0 0
  %3812 = vmatpush1.bf16.msra.mxu0 %v3793
  %3813 = vmatprep.subr.bf16.mxu0 0
  %3814 = vmatpush1.bf16.msra.mxu0 %v3794
  %3815 = vmatprep.subr.bf16.mxu0 0
  %3816 = vmatpush1.bf16.msra.mxu0 %v3795
  %3817 = vmatprep.subr.bf16.mxu0 0
  %3818 = vmatpush1.bf16.msra.mxu0 %v3796
  %3819 = vmatprep.subr.bf16.mxu0 0
  %3820 = vmatpush1.bf16.msra.mxu0 %v3797
  %3821 = vmatprep.subr.bf16.mxu0 0
  %3822 = vmatpush1.bf16.msra.mxu0 %v3798
  %3823 = vmatprep.subr.bf16.mxu0 0
  %3824 = vmatpush1.bf16.msra.mxu0 0
  %3825 = vmatprep.subr.bf16.mxu0 0
  %3826 = vmatpush1.bf16.msra.mxu0 0
  %3827 = vmatprep.subr.bf16.mxu0 0
  %3828 = vmatpush1.bf16.msra.mxu0 0
  %3829 = vmatprep.subr.bf16.mxu0 0
  %3830 = vmatpush1.bf16.msra.mxu0 0
  %3831 = vmatprep.subr.bf16.mxu0 0
  %3832 = vmatpush1.bf16.msra.mxu0 0
  %3833 = vmatprep.subr.bf16.mxu0 0
  %3834 = vmatpush1.bf16.msra.mxu0 0
  %3835 = vmatprep.subr.bf16.mxu0 0
  %3836 = vmatpush1.bf16.msra.mxu0 0
  %3837 = vmatprep.subr.bf16.mxu0 0
  %3838 = vmatpush1.bf16.msra.mxu0 0
  %3839 = vmatprep.mubr.bf16.mxu0 0
  %3840 = vmatmul.mubr.bf16.gmra.mrb[0].mxu0 %v2598
  %v3841 = vpop.f32.mrb[0].mxu0
  %v3842 = vadd.f32 0.0, %v3841
  %v3843 = vpop.f32.mrb[0].mxu0
  %v3844 = vpop.f32.mrb[0].mxu0
  %v3845 = vpop.f32.mrb[0].mxu0
  %3846 = vdwg.mxu0
  %v3847 = vadd.f32 %v3737, %v3842
  %s3848 = scalar_lea.vmem %s59, 1
  %v3849 = vld [vmem:[%s3848] sm:$0x1]
  %v3851 = vlaneseq
  %v3852 = vshrl.u32 %v3851, 7
  %v3853 = vsub.s32 0, %v3852
  %v3854 = vrot.slane %v3849, %v3853
  %v3856 = vadd.f32 %v3847, %v3854
  %v3857 = vmax.f32 %v3856, 0.0
  %s3858 = scalar_lea.vmem %s61, 64
  %v3859 = vld [vmem:[%s3858] sm:$0xf]
  %v3860 = vld [vmem:[%s3858 + $0x4] sm:$0xf]
  %v3861 = vld [vmem:[%s3858 + $0x8] sm:$0xf]
  %v3862 = vld [vmem:[%s3858 + $0xc] sm:$0xf]
  %v3863 = vld [vmem:[%s3858 + $0x10] sm:$0xf]
  %v3864 = vld [vmem:[%s3858 + $0x14] sm:$0xf]
  %v3865 = vld [vmem:[%s3858 + $0x18] sm:$0xf]
  %v3866 = vld [vmem:[%s3858 + $0x1c] sm:$0xf]
  %v3867 = vld [vmem:[%s3858 + $0x20] sm:$0xf]
  %v3868 = vld [vmem:[%s3858 + $0x24] sm:$0xf]
  %v3869 = vld [vmem:[%s3858 + $0x28] sm:$0xf]
  %v3870 = vld [vmem:[%s3858 + $0x2c] sm:$0xf]
  %v3871 = vld [vmem:[%s3858 + $0x30] sm:$0xf]
  %v3872 = vld [vmem:[%s3858 + $0x34] sm:$0xf]
  %v3873 = vld [vmem:[%s3858 + $0x38] sm:$0xf]
  %v3874 = vld [vmem:[%s3858 + $0x3c] sm:$0xf]
  %v3875 = vpack.c.bf16 %v3857, %v3857
  %s3876 = scalar_lea.vmem %s63, 1
  %v3877 = vld [vmem:[%s3876] sm:$0x1]
  %v3879 = vlaneseq
  %v3880 = vshrl.u32 %v3879, 7
  %v3881 = vsub.s32 0, %v3880
  %v3882 = vrot.slane %v3877, %v3881
  %v3900 = vunpack.c.l.b16 %v3859
  %v3901 = vunpack.c.l.b16 %v3860
  %v3902 = vunpack.c.l.b16 %v3861
  %v3903 = vunpack.c.l.b16 %v3862
  %v3904 = vunpack.c.l.b16 %v3863
  %v3905 = vunpack.c.l.b16 %v3864
  %v3906 = vunpack.c.l.b16 %v3865
  %v3907 = vunpack.c.l.b16 %v3866
  %v3908 = vunpack.c.l.b16 %v3867
  %v3909 = vunpack.c.l.b16 %v3868
  %v3910 = vunpack.c.l.b16 %v3869
  %v3911 = vunpack.c.l.b16 %v3870
  %v3912 = vunpack.c.l.b16 %v3871
  %v3913 = vunpack.c.l.b16 %v3872
  %v3914 = vunpack.c.l.b16 %v3873
  %v3915 = vunpack.c.l.b16 %v3874
  %v3916 = vpack.c.b16 %v3901, %v3900
  %v3917 = vpack.c.b16 %v3903, %v3902
  %v3918 = vpack.c.b16 %v3905, %v3904
  %v3919 = vpack.c.b16 %v3907, %v3906
  %v3920 = vpack.c.b16 %v3909, %v3908
  %v3921 = vpack.c.b16 %v3911, %v3910
  %v3922 = vpack.c.b16 %v3913, %v3912
  %v3923 = vpack.c.b16 %v3915, %v3914
  %3932 = vmatprep.subr.bf16.mxu0 0
  %3933 = vmatpush1.bf16.msra.mxu0 %v3916
  %3934 = vmatprep.subr.bf16.mxu0 0
  %3935 = vmatpush1.bf16.msra.mxu0 %v3917
  %3936 = vmatprep.subr.bf16.mxu0 0
  %3937 = vmatpush1.bf16.msra.mxu0 %v3918
  %3938 = vmatprep.subr.bf16.mxu0 0
  %3939 = vmatpush1.bf16.msra.mxu0 %v3919
  %3940 = vmatprep.subr.bf16.mxu0 0
  %3941 = vmatpush1.bf16.msra.mxu0 %v3920
  %3942 = vmatprep.subr.bf16.mxu0 0
  %3943 = vmatpush1.bf16.msra.mxu0 %v3921
  %3944 = vmatprep.subr.bf16.mxu0 0
  %3945 = vmatpush1.bf16.msra.mxu0 %v3922
  %3946 = vmatprep.subr.bf16.mxu0 0
  %3947 = vmatpush1.bf16.msra.mxu0 %v3923
  %3948 = vmatprep.subr.bf16.mxu0 0
  %3949 = vmatpush1.bf16.msra.mxu0 0
  %3950 = vmatprep.subr.bf16.mxu0 0
  %3951 = vmatpush1.bf16.msra.mxu0 0
  %3952 = vmatprep.subr.bf16.mxu0 0
  %3953 = vmatpush1.bf16.msra.mxu0 0
  %3954 = vmatprep.subr.bf16.mxu0 0
  %3955 = vmatpush1.bf16.msra.mxu0 0
  %3956 = vmatprep.subr.bf16.mxu0 0
  %3957 = vmatpush1.bf16.msra.mxu0 0
  %3958 = vmatprep.subr.bf16.mxu0 0
  %3959 = vmatpush1.bf16.msra.mxu0 0
  %3960 = vmatprep.subr.bf16.mxu0 0
  %3961 = vmatpush1.bf16.msra.mxu0 0
  %3962 = vmatprep.subr.bf16.mxu0 0
  %3963 = vmatpush1.bf16.msra.mxu0 0
  %3964 = vmatprep.mubr.bf16.mxu0 0
  %3965 = vmatmul.mubr.bf16.gmra.mrb[0].mxu0 %v3875
  %v3966 = vpop.f32.mrb[0].mxu0
  %v3967 = vadd.f32 %v3882, %v3966
  %v3968 = vpop.f32.mrb[0].mxu0
  %v3969 = vpop.f32.mrb[0].mxu0
  %v3970 = vpop.f32.mrb[0].mxu0
  %3971 = vdwg.mxu0
  %v3972 = vmax.f32 %v3439, 0.0
  %v3973 = vmax.f32 %v2885, 0.0
  %v3974 = vmax.f32 %v2888, 0.0
  %v3975 = vmax.f32 %v3967, 0.0
  %s3976 = scalar_lea.vmem %s27, 128
  %v3977 = vld [vmem:[%s3976] sm:$0xf]
  %v3978 = vld [vmem:[%s3976 + $0x4] sm:$0xf]
  %v3979 = vld [vmem:[%s3976 + $0x8] sm:$0xf]
  %v3980 = vld [vmem:[%s3976 + $0xc] sm:$0xf]
  %v3981 = vld [vmem:[%s3976 + $0x10] sm:$0xf]
  %v3982 = vld [vmem:[%s3976 + $0x14] sm:$0xf]
  %v3983 = vld [vmem:[%s3976 + $0x18] sm:$0xf]
  %v3984 = vld [vmem:[%s3976 + $0x1c] sm:$0xf]
  %v3985 = vld [vmem:[%s3976 + $0x20] sm:$0xf]
  %v3986 = vld [vmem:[%s3976 + $0x24] sm:$0xf]
  %v3987 = vld [vmem:[%s3976 + $0x28] sm:$0xf]
  %v3988 = vld [vmem:[%s3976 + $0x2c] sm:$0xf]
  %v3989 = vld [vmem:[%s3976 + $0x30] sm:$0xf]
  %v3990 = vld [vmem:[%s3976 + $0x34] sm:$0xf]
  %v3991 = vld [vmem:[%s3976 + $0x38] sm:$0xf]
  %v3992 = vld [vmem:[%s3976 + $0x3c] sm:$0xf]
  %v3993 = vpack.c.bf16 %v3972, %v3972
  %v4010 = vunpack.c.l.b16 %v3977
  %v4011 = vunpack.c.l.b16 %v3978
  %v4012 = vunpack.c.l.b16 %v3979
  %v4013 = vunpack.c.l.b16 %v3980
  %v4014 = vunpack.c.l.b16 %v3981
  %v4015 = vunpack.c.l.b16 %v3982
  %v4016 = vunpack.c.l.b16 %v3983
  %v4017 = vunpack.c.l.b16 %v3984
  %v4018 = vunpack.c.l.b16 %v3985
  %v4019 = vunpack.c.l.b16 %v3986
  %v4020 = vunpack.c.l.b16 %v3987
  %v4021 = vunpack.c.l.b16 %v3988
  %v4022 = vunpack.c.l.b16 %v3989
  %v4023 = vunpack.c.l.b16 %v3990
  %v4024 = vunpack.c.l.b16 %v3991
  %v4025 = vunpack.c.l.b16 %v3992
  %v4026 = vpack.c.b16 %v4011, %v4010
  %v4027 = vpack.c.b16 %v4013, %v4012
  %v4028 = vpack.c.b16 %v4015, %v4014
  %v4029 = vpack.c.b16 %v4017, %v4016
  %v4030 = vpack.c.b16 %v4019, %v4018
  %v4031 = vpack.c.b16 %v4021, %v4020
  %v4032 = vpack.c.b16 %v4023, %v4022
  %v4033 = vpack.c.b16 %v4025, %v4024
  %4042 = vmatprep.subr.bf16.mxu0 0
  %4043 = vmatpush1.bf16.msra.mxu0 %v4026
  %4044 = vmatprep.subr.bf16.mxu0 0
  %4045 = vmatpush1.bf16.msra.mxu0 %v4027
  %4046 = vmatprep.subr.bf16.mxu0 0
  %4047 = vmatpush1.bf16.msra.mxu0 %v4028
  %4048 = vmatprep.subr.bf16.mxu0 0
  %4049 = vmatpush1.bf16.msra.mxu0 %v4029
  %4050 = vmatprep.subr.bf16.mxu0 0
  %4051 = vmatpush1.bf16.msra.mxu0 %v4030
  %4052 = vmatprep.subr.bf16.mxu0 0
  %4053 = vmatpush1.bf16.msra.mxu0 %v4031
  %4054 = vmatprep.subr.bf16.mxu0 0
  %4055 = vmatpush1.bf16.msra.mxu0 %v4032
  %4056 = vmatprep.subr.bf16.mxu0 0
  %4057 = vmatpush1.bf16.msra.mxu0 %v4033
  %4058 = vmatprep.subr.bf16.mxu0 0
  %4059 = vmatpush1.bf16.msra.mxu0 0
  %4060 = vmatprep.subr.bf16.mxu0 0
  %4061 = vmatpush1.bf16.msra.mxu0 0
  %4062 = vmatprep.subr.bf16.mxu0 0
  %4063 = vmatpush1.bf16.msra.mxu0 0
  %4064 = vmatprep.subr.bf16.mxu0 0
  %4065 = vmatpush1.bf16.msra.mxu0 0
  %4066 = vmatprep.subr.bf16.mxu0 0
  %4067 = vmatpush1.bf16.msra.mxu0 0
  %4068 = vmatprep.subr.bf16.mxu0 0
  %4069 = vmatpush1.bf16.msra.mxu0 0
  %4070 = vmatprep.subr.bf16.mxu0 0
  %4071 = vmatpush1.bf16.msra.mxu0 0
  %4072 = vmatprep.subr.bf16.mxu0 0
  %4073 = vmatpush1.bf16.msra.mxu0 0
  %4074 = vmatprep.mubr.bf16.mxu0 0
  %4075 = vmatmul.mubr.bf16.gmra.mrb[0].mxu0 %v3993
  %v4076 = vpop.f32.mrb[0].mxu0
  %v4077 = vadd.f32 0.0, %v4076
  %v4078 = vpop.f32.mrb[0].mxu0
  %v4079 = vpop.f32.mrb[0].mxu0
  %v4080 = vpop.f32.mrb[0].mxu0
  %4081 = vdwg.mxu0
  %s4082 = scalar_lea.vmem %s29, 128
  %v4083 = vld [vmem:[%s4082] sm:$0xf]
  %v4084 = vld [vmem:[%s4082 + $0x4] sm:$0xf]
  %v4085 = vld [vmem:[%s4082 + $0x8] sm:$0xf]
  %v4086 = vld [vmem:[%s4082 + $0xc] sm:$0xf]
  %v4087 = vld [vmem:[%s4082 + $0x10] sm:$0xf]
  %v4088 = vld [vmem:[%s4082 + $0x14] sm:$0xf]
  %v4089 = vld [vmem:[%s4082 + $0x18] sm:$0xf]
  %v4090 = vld [vmem:[%s4082 + $0x1c] sm:$0xf]
  %v4091 = vld [vmem:[%s4082 + $0x20] sm:$0xf]
  %v4092 = vld [vmem:[%s4082 + $0x24] sm:$0xf]
  %v4093 = vld [vmem:[%s4082 + $0x28] sm:$0xf]
  %v4094 = vld [vmem:[%s4082 + $0x2c] sm:$0xf]
  %v4095 = vld [vmem:[%s4082 + $0x30] sm:$0xf]
  %v4096 = vld [vmem:[%s4082 + $0x34] sm:$0xf]
  %v4097 = vld [vmem:[%s4082 + $0x38] sm:$0xf]
  %v4098 = vld [vmem:[%s4082 + $0x3c] sm:$0xf]
  %v4115 = vunpack.c.l.b16 %v4083
  %v4116 = vunpack.c.l.b16 %v4084
  %v4117 = vunpack.c.l.b16 %v4085
  %v4118 = vunpack.c.l.b16 %v4086
  %v4119 = vunpack.c.l.b16 %v4087
  %v4120 = vunpack.c.l.b16 %v4088
  %v4121 = vunpack.c.l.b16 %v4089
  %v4122 = vunpack.c.l.b16 %v4090
  %v4123 = vunpack.c.l.b16 %v4091
  %v4124 = vunpack.c.l.b16 %v4092
  %v4125 = vunpack.c.l.b16 %v4093
  %v4126 = vunpack.c.l.b16 %v4094
  %v4127 = vunpack.c.l.b16 %v4095
  %v4128 = vunpack.c.l.b16 %v4096
  %v4129 = vunpack.c.l.b16 %v4097
  %v4130 = vunpack.c.l.b16 %v4098
  %v4131 = vpack.c.b16 %v4116, %v4115
  %v4132 = vpack.c.b16 %v4118, %v4117
  %v4133 = vpack.c.b16 %v4120, %v4119
  %v4134 = vpack.c.b16 %v4122, %v4121
  %v4135 = vpack.c.b16 %v4124, %v4123
  %v4136 = vpack.c.b16 %v4126, %v4125
  %v4137 = vpack.c.b16 %v4128, %v4127
  %v4138 = vpack.c.b16 %v4130, %v4129
  %4147 = vmatprep.subr.bf16.mxu0 0
  %4148 = vmatpush1.bf16.msra.mxu0 %v4131
  %4149 = vmatprep.subr.bf16.mxu0 0
  %4150 = vmatpush1.bf16.msra.mxu0 %v4132
  %4151 = vmatprep.subr.bf16.mxu0 0
  %4152 = vmatpush1.bf16.msra.mxu0 %v4133
  %4153 = vmatprep.subr.bf16.mxu0 0
  %4154 = vmatpush1.bf16.msra.mxu0 %v4134
  %4155 = vmatprep.subr.bf16.mxu0 0
  %4156 = vmatpush1.bf16.msra.mxu0 %v4135
  %4157 = vmatprep.subr.bf16.mxu0 0
  %4158 = vmatpush1.bf16.msra.mxu0 %v4136
  %4159 = vmatprep.subr.bf16.mxu0 0
  %4160 = vmatpush1.bf16.msra.mxu0 %v4137
  %4161 = vmatprep.subr.bf16.mxu0 0
  %4162 = vmatpush1.bf16.msra.mxu0 %v4138
  %4163 = vmatprep.subr.bf16.mxu0 0
  %4164 = vmatpush1.bf16.msra.mxu0 0
  %4165 = vmatprep.subr.bf16.mxu0 0
  %4166 = vmatpush1.bf16.msra.mxu0 0
  %4167 = vmatprep.subr.bf16.mxu0 0
  %4168 = vmatpush1.bf16.msra.mxu0 0
  %4169 = vmatprep.subr.bf16.mxu0 0
  %4170 = vmatpush1.bf16.msra.mxu0 0
  %4171 = vmatprep.subr.bf16.mxu0 0
  %4172 = vmatpush1.bf16.msra.mxu0 0
  %4173 = vmatprep.subr.bf16.mxu0 0
  %4174 = vmatpush1.bf16.msra.mxu0 0
  %4175 = vmatprep.subr.bf16.mxu0 0
  %4176 = vmatpush1.bf16.msra.mxu0 0
  %4177 = vmatprep.subr.bf16.mxu0 0
  %4178 = vmatpush1.bf16.msra.mxu0 0
  %4179 = vmatprep.mubr.bf16.mxu0 0
  %4180 = vmatmul.mubr.bf16.gmra.mrb[0].mxu0 %v3993
  %v4181 = vpop.f32.mrb[0].mxu0
  %v4182 = vadd.f32 0.0, %v4181
  %v4183 = vpop.f32.mrb[0].mxu0
  %v4184 = vpop.f32.mrb[0].mxu0
  %v4185 = vpop.f32.mrb[0].mxu0
  %4186 = vdwg.mxu0
  %4187 = vmatprep.subr.mxu0 0.0
  %4188 = vmatpush1.msra.mxu0 %v4182
  %4189 = vmatprep.subr.mxu0 0.0
  %4190 = vmatpush1.msra.mxu0 0.0
  %4191 = vmatprep.subr.mxu0 0.0
  %4192 = vmatpush1.msra.mxu0 0.0
  %4193 = vmatprep.subr.mxu0 0.0
  %4194 = vmatpush1.msra.mxu0 0.0
  %4195 = vmatprep.subr.mxu0 0.0
  %4196 = vmatpush1.msra.mxu0 0.0
  %4197 = vmatprep.subr.mxu0 0.0
  %4198 = vmatpush1.msra.mxu0 0.0
  %4199 = vmatprep.subr.mxu0 0.0
  %4200 = vmatpush1.msra.mxu0 0.0
  %4201 = vmatprep.subr.mxu0 0.0
  %4202 = vmatpush1.msra.mxu0 0.0
  %4203 = vmatprep.subr.mxu0 0.0
  %4204 = vmatpush1.msra.mxu0 0.0
  %4205 = vmatprep.subr.mxu0 0.0
  %4206 = vmatpush1.msra.mxu0 0.0
  %4207 = vmatprep.subr.mxu0 0.0
  %4208 = vmatpush1.msra.mxu0 0.0
  %4209 = vmatprep.subr.mxu0 0.0
  %4210 = vmatpush1.msra.mxu0 0.0
  %4211 = vmatprep.subr.mxu0 0.0
  %4212 = vmatpush1.msra.mxu0 0.0
  %4213 = vmatprep.subr.mxu0 0.0
  %4214 = vmatpush1.msra.mxu0 0.0
  %4215 = vmatprep.subr.mxu0 0.0
  %4216 = vmatpush1.msra.mxu0 0.0
  %4217 = vmatprep.subr.mxu0 0.0
  %4218 = vmatpush1.msra.mxu0 0.0
  %4219 = vmatprep.subr.mxu0 0.0
  %4220 = vmatpush1.msra.mxu0 0.0
  %4221 = vmatprep.subr.mxu0 0.0
  %4222 = vmatpush1.msra.mxu0 0.0
  %4223 = vmatprep.subr.mxu0 0.0
  %4224 = vmatpush1.msra.mxu0 0.0
  %4225 = vmatprep.subr.mxu0 0.0
  %4226 = vmatpush1.msra.mxu0 0.0
  %4227 = vmatprep.subr.mxu0 0.0
  %4228 = vmatpush1.msra.mxu0 0.0
  %4229 = vmatprep.subr.mxu0 0.0
  %4230 = vmatpush1.msra.mxu0 0.0
  %4231 = vmatprep.subr.mxu0 0.0
  %4232 = vmatpush1.msra.mxu0 0.0
  %4233 = vmatprep.subr.mxu0 0.0
  %4234 = vmatpush1.msra.mxu0 0.0
  %4235 = vmatprep.subr.mxu0 0.0
  %4236 = vmatpush1.msra.mxu0 0.0
  %4237 = vmatprep.subr.mxu0 0.0
  %4238 = vmatpush1.msra.mxu0 0.0
  %4239 = vmatprep.subr.mxu0 0.0
  %4240 = vmatpush1.msra.mxu0 0.0
  %4241 = vmatprep.subr.mxu0 0.0
  %4242 = vmatpush1.msra.mxu0 0.0
  %4243 = vmatprep.subr.mxu0 0.0
  %4244 = vmatpush1.msra.mxu0 0.0
  %4245 = vmatprep.subr.mxu0 0.0
  %4246 = vmatpush1.msra.mxu0 0.0
  %4247 = vmatprep.subr.mxu0 0.0
  %4248 = vmatpush1.msra.mxu0 0.0
  %4249 = vmatprep.subr.mxu0 0.0
  %4250 = vmatpush1.msra.mxu0 0.0
  %4251 = vmatprep.mubr.f32.mxu0 0.0
  %4252 = vmatmul.mubr.f32.gmra.mrb[0].mxu0 %v390
  %v4253 = vpop.f32.mrb[0].mxu0
  %v4254 = vadd.f32 0.0, %v4253
  %v4255 = vpop.f32.mrb[0].mxu0
  %4256 = vmatprep.mubr.f32.mxu0 0.0
  %4257 = vmatmul.mubr.f32.gmra.mrb[0].mxu0 %v393
  %v4258 = vpop.f32.mrb[0].mxu0
  %v4259 = vadd.f32 0.0, %v4258
  %v4260 = vpop.f32.mrb[0].mxu0
  %4261 = vdwg.mxu0
  %4262 = vmatprep.subr.mxu0 0.0
  %4263 = vmatpush1.msra.mxu0 %v4077
  %4264 = vmatprep.subr.mxu0 0.0
  %4265 = vmatpush1.msra.mxu0 0.0
  %4266 = vmatprep.subr.mxu0 0.0
  %4267 = vmatpush1.msra.mxu0 0.0
  %4268 = vmatprep.subr.mxu0 0.0
  %4269 = vmatpush1.msra.mxu0 0.0
  %4270 = vmatprep.subr.mxu0 0.0
  %4271 = vmatpush1.msra.mxu0 0.0
  %4272 = vmatprep.subr.mxu0 0.0
  %4273 = vmatpush1.msra.mxu0 0.0
  %4274 = vmatprep.subr.mxu0 0.0
  %4275 = vmatpush1.msra.mxu0 0.0
  %4276 = vmatprep.subr.mxu0 0.0
  %4277 = vmatpush1.msra.mxu0 0.0
  %4278 = vmatprep.subr.mxu0 0.0
  %4279 = vmatpush1.msra.mxu0 0.0
  %4280 = vmatprep.subr.mxu0 0.0
  %4281 = vmatpush1.msra.mxu0 0.0
  %4282 = vmatprep.subr.mxu0 0.0
  %4283 = vmatpush1.msra.mxu0 0.0
  %4284 = vmatprep.subr.mxu0 0.0
  %4285 = vmatpush1.msra.mxu0 0.0
  %4286 = vmatprep.subr.mxu0 0.0
  %4287 = vmatpush1.msra.mxu0 0.0
  %4288 = vmatprep.subr.mxu0 0.0
  %4289 = vmatpush1.msra.mxu0 0.0
  %4290 = vmatprep.subr.mxu0 0.0
  %4291 = vmatpush1.msra.mxu0 0.0
  %4292 = vmatprep.subr.mxu0 0.0
  %4293 = vmatpush1.msra.mxu0 0.0
  %4294 = vmatprep.subr.mxu0 0.0
  %4295 = vmatpush1.msra.mxu0 0.0
  %4296 = vmatprep.subr.mxu0 0.0
  %4297 = vmatpush1.msra.mxu0 0.0
  %4298 = vmatprep.subr.mxu0 0.0
  %4299 = vmatpush1.msra.mxu0 0.0
  %4300 = vmatprep.subr.mxu0 0.0
  %4301 = vmatpush1.msra.mxu0 0.0
  %4302 = vmatprep.subr.mxu0 0.0
  %4303 = vmatpush1.msra.mxu0 0.0
  %4304 = vmatprep.subr.mxu0 0.0
  %4305 = vmatpush1.msra.mxu0 0.0
  %4306 = vmatprep.subr.mxu0 0.0
  %4307 = vmatpush1.msra.mxu0 0.0
  %4308 = vmatprep.subr.mxu0 0.0
  %4309 = vmatpush1.msra.mxu0 0.0
  %4310 = vmatprep.subr.mxu0 0.0
  %4311 = vmatpush1.msra.mxu0 0.0
  %4312 = vmatprep.subr.mxu0 0.0
  %4313 = vmatpush1.msra.mxu0 0.0
  %4314 = vmatprep.subr.mxu0 0.0
  %4315 = vmatpush1.msra.mxu0 0.0
  %4316 = vmatprep.subr.mxu0 0.0
  %4317 = vmatpush1.msra.mxu0 0.0
  %4318 = vmatprep.subr.mxu0 0.0
  %4319 = vmatpush1.msra.mxu0 0.0
  %4320 = vmatprep.subr.mxu0 0.0
  %4321 = vmatpush1.msra.mxu0 0.0
  %4322 = vmatprep.subr.mxu0 0.0
  %4323 = vmatpush1.msra.mxu0 0.0
  %4324 = vmatprep.subr.mxu0 0.0
  %4325 = vmatpush1.msra.mxu0 0.0
  %4326 = vmatprep.mubr.f32.mxu0 0.0
  %4327 = vmatmul.mubr.f32.gmra.mrb[0].mxu0 %v471
  %v4328 = vpop.f32.mrb[0].mxu0
  %v4329 = vadd.f32 %v4254, %v4328
  %v4330 = vpop.f32.mrb[0].mxu0
  %4331 = vmatprep.mubr.f32.mxu0 0.0
  %4332 = vmatmul.mubr.f32.gmra.mrb[0].mxu0 %v474
  %v4333 = vpop.f32.mrb[0].mxu0
  %v4334 = vadd.f32 %v4259, %v4333
  %v4335 = vpop.f32.mrb[0].mxu0
  %4336 = vdwg.mxu0
  %s4337 = scalar_lea.vmem %s31, 128
  %v4338 = vld [vmem:[%s4337] sm:$0xf]
  %v4339 = vld [vmem:[%s4337 + $0x4] sm:$0xf]
  %v4340 = vld [vmem:[%s4337 + $0x8] sm:$0xf]
  %v4341 = vld [vmem:[%s4337 + $0xc] sm:$0xf]
  %v4342 = vld [vmem:[%s4337 + $0x10] sm:$0xf]
  %v4343 = vld [vmem:[%s4337 + $0x14] sm:$0xf]
  %v4344 = vld [vmem:[%s4337 + $0x18] sm:$0xf]
  %v4345 = vld [vmem:[%s4337 + $0x1c] sm:$0xf]
  %v4346 = vld [vmem:[%s4337 + $0x20] sm:$0xf]
  %v4347 = vld [vmem:[%s4337 + $0x24] sm:$0xf]
  %v4348 = vld [vmem:[%s4337 + $0x28] sm:$0xf]
  %v4349 = vld [vmem:[%s4337 + $0x2c] sm:$0xf]
  %v4350 = vld [vmem:[%s4337 + $0x30] sm:$0xf]
  %v4351 = vld [vmem:[%s4337 + $0x34] sm:$0xf]
  %v4352 = vld [vmem:[%s4337 + $0x38] sm:$0xf]
  %v4353 = vld [vmem:[%s4337 + $0x3c] sm:$0xf]
  %v4354 = vpack.c.bf16 %v3974, %v3973
  %v4371 = vunpack.c.l.b16 %v4338
  %v4372 = vunpack.c.l.b16 %v4339
  %v4373 = vunpack.c.l.b16 %v4340
  %v4374 = vunpack.c.l.b16 %v4341
  %v4375 = vunpack.c.l.b16 %v4342
  %v4376 = vunpack.c.l.b16 %v4343
  %v4377 = vunpack.c.l.b16 %v4344
  %v4378 = vunpack.c.l.b16 %v4345
  %v4379 = vunpack.c.l.b16 %v4346
  %v4380 = vunpack.c.l.b16 %v4347
  %v4381 = vunpack.c.l.b16 %v4348
  %v4382 = vunpack.c.l.b16 %v4349
  %v4383 = vunpack.c.l.b16 %v4350
  %v4384 = vunpack.c.l.b16 %v4351
  %v4385 = vunpack.c.l.b16 %v4352
  %v4386 = vunpack.c.l.b16 %v4353
  %v4387 = vpack.c.b16 %v4372, %v4371
  %v4388 = vpack.c.b16 %v4374, %v4373
  %v4389 = vpack.c.b16 %v4376, %v4375
  %v4390 = vpack.c.b16 %v4378, %v4377
  %v4391 = vpack.c.b16 %v4380, %v4379
  %v4392 = vpack.c.b16 %v4382, %v4381
  %v4393 = vpack.c.b16 %v4384, %v4383
  %v4394 = vpack.c.b16 %v4386, %v4385
  %4403 = vmatprep.subr.bf16.mxu0 0
  %4404 = vmatpush1.bf16.msra.mxu0 %v4387
  %4405 = vmatprep.subr.bf16.mxu0 0
  %4406 = vmatpush1.bf16.msra.mxu0 %v4388
  %4407 = vmatprep.subr.bf16.mxu0 0
  %4408 = vmatpush1.bf16.msra.mxu0 %v4389
  %4409 = vmatprep.subr.bf16.mxu0 0
  %4410 = vmatpush1.bf16.msra.mxu0 %v4390
  %4411 = vmatprep.subr.bf16.mxu0 0
  %4412 = vmatpush1.bf16.msra.mxu0 %v4391
  %4413 = vmatprep.subr.bf16.mxu0 0
  %4414 = vmatpush1.bf16.msra.mxu0 %v4392
  %4415 = vmatprep.subr.bf16.mxu0 0
  %4416 = vmatpush1.bf16.msra.mxu0 %v4393
  %4417 = vmatprep.subr.bf16.mxu0 0
  %4418 = vmatpush1.bf16.msra.mxu0 %v4394
  %4419 = vmatprep.subr.bf16.mxu0 0
  %4420 = vmatpush1.bf16.msra.mxu0 0
  %4421 = vmatprep.subr.bf16.mxu0 0
  %4422 = vmatpush1.bf16.msra.mxu0 0
  %4423 = vmatprep.subr.bf16.mxu0 0
  %4424 = vmatpush1.bf16.msra.mxu0 0
  %4425 = vmatprep.subr.bf16.mxu0 0
  %4426 = vmatpush1.bf16.msra.mxu0 0
  %4427 = vmatprep.subr.bf16.mxu0 0
  %4428 = vmatpush1.bf16.msra.mxu0 0
  %4429 = vmatprep.subr.bf16.mxu0 0
  %4430 = vmatpush1.bf16.msra.mxu0 0
  %4431 = vmatprep.subr.bf16.mxu0 0
  %4432 = vmatpush1.bf16.msra.mxu0 0
  %4433 = vmatprep.subr.bf16.mxu0 0
  %4434 = vmatpush1.bf16.msra.mxu0 0
  %4435 = vmatprep.mubr.bf16.mxu0 0
  %4436 = vmatmul.mubr.bf16.gmra.mrb[0].mxu0 %v4354
  %v4437 = vpop.f32.mrb[0].mxu0
  %v4438 = vadd.f32 0.0, %v4437
  %v4439 = vpop.f32.mrb[0].mxu0
  %v4440 = vpop.f32.mrb[0].mxu0
  %v4441 = vadd.f32 0.0, %v4440
  %v4442 = vpop.f32.mrb[0].mxu0
  %4443 = vdwg.mxu0
  %v4444 = vadd.f32 %v4329, %v4438
  %v4445 = vadd.f32 %v4334, %v4441
  %s4446 = scalar_lea.vmem %s33, 128
  %v4447 = vld [vmem:[%s4446] sm:$0xf]
  %v4448 = vld [vmem:[%s4446 + $0x4] sm:$0xf]
  %v4449 = vld [vmem:[%s4446 + $0x8] sm:$0xf]
  %v4450 = vld [vmem:[%s4446 + $0xc] sm:$0xf]
  %v4451 = vld [vmem:[%s4446 + $0x10] sm:$0xf]
  %v4452 = vld [vmem:[%s4446 + $0x14] sm:$0xf]
  %v4453 = vld [vmem:[%s4446 + $0x18] sm:$0xf]
  %v4454 = vld [vmem:[%s4446 + $0x1c] sm:$0xf]
  %v4455 = vld [vmem:[%s4446 + $0x20] sm:$0xf]
  %v4456 = vld [vmem:[%s4446 + $0x24] sm:$0xf]
  %v4457 = vld [vmem:[%s4446 + $0x28] sm:$0xf]
  %v4458 = vld [vmem:[%s4446 + $0x2c] sm:$0xf]
  %v4459 = vld [vmem:[%s4446 + $0x30] sm:$0xf]
  %v4460 = vld [vmem:[%s4446 + $0x34] sm:$0xf]
  %v4461 = vld [vmem:[%s4446 + $0x38] sm:$0xf]
  %v4462 = vld [vmem:[%s4446 + $0x3c] sm:$0xf]
  %v4463 = vpack.c.bf16 %v3975, %v3975
  %v4480 = vunpack.c.l.b16 %v4447
  %v4481 = vunpack.c.l.b16 %v4448
  %v4482 = vunpack.c.l.b16 %v4449
  %v4483 = vunpack.c.l.b16 %v4450
  %v4484 = vunpack.c.l.b16 %v4451
  %v4485 = vunpack.c.l.b16 %v4452
  %v4486 = vunpack.c.l.b16 %v4453
  %v4487 = vunpack.c.l.b16 %v4454
  %v4488 = vunpack.c.l.b16 %v4455
  %v4489 = vunpack.c.l.b16 %v4456
  %v4490 = vunpack.c.l.b16 %v4457
  %v4491 = vunpack.c.l.b16 %v4458
  %v4492 = vunpack.c.l.b16 %v4459
  %v4493 = vunpack.c.l.b16 %v4460
  %v4494 = vunpack.c.l.b16 %v4461
  %v4495 = vunpack.c.l.b16 %v4462
  %v4496 = vpack.c.b16 %v4481, %v4480
  %v4497 = vpack.c.b16 %v4483, %v4482
  %v4498 = vpack.c.b16 %v4485, %v4484
  %v4499 = vpack.c.b16 %v4487, %v4486
  %v4500 = vpack.c.b16 %v4489, %v4488
  %v4501 = vpack.c.b16 %v4491, %v4490
  %v4502 = vpack.c.b16 %v4493, %v4492
  %v4503 = vpack.c.b16 %v4495, %v4494
  %4512 = vmatprep.subr.bf16.mxu0 0
  %4513 = vmatpush1.bf16.msra.mxu0 %v4496
  %4514 = vmatprep.subr.bf16.mxu0 0
  %4515 = vmatpush1.bf16.msra.mxu0 %v4497
  %4516 = vmatprep.subr.bf16.mxu0 0
  %4517 = vmatpush1.bf16.msra.mxu0 %v4498
  %4518 = vmatprep.subr.bf16.mxu0 0
  %4519 = vmatpush1.bf16.msra.mxu0 %v4499
  %4520 = vmatprep.subr.bf16.mxu0 0
  %4521 = vmatpush1.bf16.msra.mxu0 %v4500
  %4522 = vmatprep.subr.bf16.mxu0 0
  %4523 = vmatpush1.bf16.msra.mxu0 %v4501
  %4524 = vmatprep.subr.bf16.mxu0 0
  %4525 = vmatpush1.bf16.msra.mxu0 %v4502
  %4526 = vmatprep.subr.bf16.mxu0 0
  %4527 = vmatpush1.bf16.msra.mxu0 %v4503
  %4528 = vmatprep.subr.bf16.mxu0 0
  %4529 = vmatpush1.bf16.msra.mxu0 0
  %4530 = vmatprep.subr.bf16.mxu0 0
  %4531 = vmatpush1.bf16.msra.mxu0 0
  %4532 = vmatprep.subr.bf16.mxu0 0
  %4533 = vmatpush1.bf16.msra.mxu0 0
  %4534 = vmatprep.subr.bf16.mxu0 0
  %4535 = vmatpush1.bf16.msra.mxu0 0
  %4536 = vmatprep.subr.bf16.mxu0 0
  %4537 = vmatpush1.bf16.msra.mxu0 0
  %4538 = vmatprep.subr.bf16.mxu0 0
  %4539 = vmatpush1.bf16.msra.mxu0 0
  %4540 = vmatprep.subr.bf16.mxu0 0
  %4541 = vmatpush1.bf16.msra.mxu0 0
  %4542 = vmatprep.subr.bf16.mxu0 0
  %4543 = vmatpush1.bf16.msra.mxu0 0
  %4544 = vmatprep.mubr.bf16.mxu0 0
  %4545 = vmatmul.mubr.bf16.gmra.mrb[0].mxu0 %v4463
  %v4546 = vpop.f32.mrb[0].mxu0
  %v4547 = vadd.f32 0.0, %v4546
  %v4548 = vpop.f32.mrb[0].mxu0
  %v4549 = vpop.f32.mrb[0].mxu0
  %v4550 = vpop.f32.mrb[0].mxu0
  %4551 = vdwg.mxu0
  %4552 = vmatprep.subr.mxu0 0.0
  %4553 = vmatpush1.msra.mxu0 %v4547
  %4554 = vmatprep.subr.mxu0 0.0
  %4555 = vmatpush1.msra.mxu0 0.0
  %4556 = vmatprep.subr.mxu0 0.0
  %4557 = vmatpush1.msra.mxu0 0.0
  %4558 = vmatprep.subr.mxu0 0.0
  %4559 = vmatpush1.msra.mxu0 0.0
  %4560 = vmatprep.subr.mxu0 0.0
  %4561 = vmatpush1.msra.mxu0 0.0
  %4562 = vmatprep.subr.mxu0 0.0
  %4563 = vmatpush1.msra.mxu0 0.0
  %4564 = vmatprep.subr.mxu0 0.0
  %4565 = vmatpush1.msra.mxu0 0.0
  %4566 = vmatprep.subr.mxu0 0.0
  %4567 = vmatpush1.msra.mxu0 0.0
  %4568 = vmatprep.subr.mxu0 0.0
  %4569 = vmatpush1.msra.mxu0 0.0
  %4570 = vmatprep.subr.mxu0 0.0
  %4571 = vmatpush1.msra.mxu0 0.0
  %4572 = vmatprep.subr.mxu0 0.0
  %4573 = vmatpush1.msra.mxu0 0.0
  %4574 = vmatprep.subr.mxu0 0.0
  %4575 = vmatpush1.msra.mxu0 0.0
  %4576 = vmatprep.subr.mxu0 0.0
  %4577 = vmatpush1.msra.mxu0 0.0
  %4578 = vmatprep.subr.mxu0 0.0
  %4579 = vmatpush1.msra.mxu0 0.0
  %4580 = vmatprep.subr.mxu0 0.0
  %4581 = vmatpush1.msra.mxu0 0.0
  %4582 = vmatprep.subr.mxu0 0.0
  %4583 = vmatpush1.msra.mxu0 0.0
  %4584 = vmatprep.subr.mxu0 0.0
  %4585 = vmatpush1.msra.mxu0 0.0
  %4586 = vmatprep.subr.mxu0 0.0
  %4587 = vmatpush1.msra.mxu0 0.0
  %4588 = vmatprep.subr.mxu0 0.0
  %4589 = vmatpush1.msra.mxu0 0.0
  %4590 = vmatprep.subr.mxu0 0.0
  %4591 = vmatpush1.msra.mxu0 0.0
  %4592 = vmatprep.subr.mxu0 0.0
  %4593 = vmatpush1.msra.mxu0 0.0
  %4594 = vmatprep.subr.mxu0 0.0
  %4595 = vmatpush1.msra.mxu0 0.0
  %4596 = vmatprep.subr.mxu0 0.0
  %4597 = vmatpush1.msra.mxu0 0.0
  %4598 = vmatprep.subr.mxu0 0.0
  %4599 = vmatpush1.msra.mxu0 0.0
  %4600 = vmatprep.subr.mxu0 0.0
  %4601 = vmatpush1.msra.mxu0 0.0
  %4602 = vmatprep.subr.mxu0 0.0
  %4603 = vmatpush1.msra.mxu0 0.0
  %4604 = vmatprep.subr.mxu0 0.0
  %4605 = vmatpush1.msra.mxu0 0.0
  %4606 = vmatprep.subr.mxu0 0.0
  %4607 = vmatpush1.msra.mxu0 0.0
  %4608 = vmatprep.subr.mxu0 0.0
  %4609 = vmatpush1.msra.mxu0 0.0
  %4610 = vmatprep.subr.mxu0 0.0
  %4611 = vmatpush1.msra.mxu0 0.0
  %4612 = vmatprep.subr.mxu0 0.0
  %4613 = vmatpush1.msra.mxu0 0.0
  %4614 = vmatprep.subr.mxu0 0.0
  %4615 = vmatpush1.msra.mxu0 0.0
  %4616 = vmatprep.mubr.f32.mxu0 0.0
  %4617 = vmatmul.mubr.f32.gmra.mrb[0].mxu0 %v775
  %v4618 = vpop.f32.mrb[0].mxu0
  %v4619 = vadd.f32 0.0, %v4618
  %v4620 = vpop.f32.mrb[0].mxu0
  %4621 = vmatprep.mubr.f32.mxu0 0.0
  %4622 = vmatmul.mubr.f32.gmra.mrb[0].mxu0 %v778
  %v4623 = vpop.f32.mrb[0].mxu0
  %v4624 = vadd.f32 0.0, %v4623
  %v4625 = vpop.f32.mrb[0].mxu0
  %4626 = vdwg.mxu0
  %v4627 = vadd.f32 %v4444, %v4619
  %v4628 = vadd.f32 %v4445, %v4624
  %s4629 = scalar_lea.vmem %s35, 2
  %v4630 = vld [vmem:[%s4629] sm:$0x1]
  %v4632 = vlaneseq
  %v4633 = vshrl.u32 %v4632, 7
  %v4634 = vsub.s32 0, %v4633
  %v4635 = vrot.slane %v4630, %v4634
  %v4637 = vadd.f32 %v4627, %v4635
  %v4638 = vadd.f32 %v4628, %v4635
  %v4639 = vmax.f32 %v4637, 0.0
  %v4640 = vmax.f32 %v4638, 0.0
  %s4641 = scalar_lea.vmem %s37, 128
  %v4642 = vld [vmem:[%s4641] sm:$0xf]
  %v4643 = vld [vmem:[%s4641 + $0x4] sm:$0xf]
  %v4644 = vld [vmem:[%s4641 + $0x8] sm:$0xf]
  %v4645 = vld [vmem:[%s4641 + $0xc] sm:$0xf]
  %v4646 = vld [vmem:[%s4641 + $0x10] sm:$0xf]
  %v4647 = vld [vmem:[%s4641 + $0x14] sm:$0xf]
  %v4648 = vld [vmem:[%s4641 + $0x18] sm:$0xf]
  %v4649 = vld [vmem:[%s4641 + $0x1c] sm:$0xf]
  %v4650 = vld [vmem:[%s4641 + $0x20] sm:$0xf]
  %v4651 = vld [vmem:[%s4641 + $0x24] sm:$0xf]
  %v4652 = vld [vmem:[%s4641 + $0x28] sm:$0xf]
  %v4653 = vld [vmem:[%s4641 + $0x2c] sm:$0xf]
  %v4654 = vld [vmem:[%s4641 + $0x30] sm:$0xf]
  %v4655 = vld [vmem:[%s4641 + $0x34] sm:$0xf]
  %v4656 = vld [vmem:[%s4641 + $0x38] sm:$0xf]
  %v4657 = vld [vmem:[%s4641 + $0x3c] sm:$0xf]
  %v4658 = vpack.c.bf16 %v4640, %v4639
  %s4659 = scalar_lea.vmem %s39, 2
  %v4660 = vld [vmem:[%s4659] sm:$0x1]
  %v4662 = vlaneseq
  %v4663 = vshrl.u32 %v4662, 7
  %v4664 = vsub.s32 0, %v4663
  %v4665 = vrot.slane %v4660, %v4664
  %v4683 = vunpack.c.l.b16 %v4642
  %v4684 = vunpack.c.l.b16 %v4643
  %v4685 = vunpack.c.l.b16 %v4644
  %v4686 = vunpack.c.l.b16 %v4645
  %v4687 = vunpack.c.l.b16 %v4646
  %v4688 = vunpack.c.l.b16 %v4647
  %v4689 = vunpack.c.l.b16 %v4648
  %v4690 = vunpack.c.l.b16 %v4649
  %v4691 = vunpack.c.l.b16 %v4650
  %v4692 = vunpack.c.l.b16 %v4651
  %v4693 = vunpack.c.l.b16 %v4652
  %v4694 = vunpack.c.l.b16 %v4653
  %v4695 = vunpack.c.l.b16 %v4654
  %v4696 = vunpack.c.l.b16 %v4655
  %v4697 = vunpack.c.l.b16 %v4656
  %v4698 = vunpack.c.l.b16 %v4657
  %v4699 = vpack.c.b16 %v4684, %v4683
  %v4700 = vpack.c.b16 %v4686, %v4685
  %v4701 = vpack.c.b16 %v4688, %v4687
  %v4702 = vpack.c.b16 %v4690, %v4689
  %v4703 = vpack.c.b16 %v4692, %v4691
  %v4704 = vpack.c.b16 %v4694, %v4693
  %v4705 = vpack.c.b16 %v4696, %v4695
  %v4706 = vpack.c.b16 %v4698, %v4697
  %4715 = vmatprep.subr.bf16.mxu0 0
  %4716 = vmatpush1.bf16.msra.mxu0 %v4699
  %4717 = vmatprep.subr.bf16.mxu0 0
  %4718 = vmatpush1.bf16.msra.mxu0 %v4700
  %4719 = vmatprep.subr.bf16.mxu0 0
  %4720 = vmatpush1.bf16.msra.mxu0 %v4701
  %4721 = vmatprep.subr.bf16.mxu0 0
  %4722 = vmatpush1.bf16.msra.mxu0 %v4702
  %4723 = vmatprep.subr.bf16.mxu0 0
  %4724 = vmatpush1.bf16.msra.mxu0 %v4703
  %4725 = vmatprep.subr.bf16.mxu0 0
  %4726 = vmatpush1.bf16.msra.mxu0 %v4704
  %4727 = vmatprep.subr.bf16.mxu0 0
  %4728 = vmatpush1.bf16.msra.mxu0 %v4705
  %4729 = vmatprep.subr.bf16.mxu0 0
  %4730 = vmatpush1.bf16.msra.mxu0 %v4706
  %4731 = vmatprep.subr.bf16.mxu0 0
  %4732 = vmatpush1.bf16.msra.mxu0 0
  %4733 = vmatprep.subr.bf16.mxu0 0
  %4734 = vmatpush1.bf16.msra.mxu0 0
  %4735 = vmatprep.subr.bf16.mxu0 0
  %4736 = vmatpush1.bf16.msra.mxu0 0
  %4737 = vmatprep.subr.bf16.mxu0 0
  %4738 = vmatpush1.bf16.msra.mxu0 0
  %4739 = vmatprep.subr.bf16.mxu0 0
  %4740 = vmatpush1.bf16.msra.mxu0 0
  %4741 = vmatprep.subr.bf16.mxu0 0
  %4742 = vmatpush1.bf16.msra.mxu0 0
  %4743 = vmatprep.subr.bf16.mxu0 0
  %4744 = vmatpush1.bf16.msra.mxu0 0
  %4745 = vmatprep.subr.bf16.mxu0 0
  %4746 = vmatpush1.bf16.msra.mxu0 0
  %4747 = vmatprep.mubr.bf16.mxu0 0
  %4748 = vmatmul.mubr.bf16.gmra.mrb[0].mxu0 %v4658
  %v4749 = vpop.f32.mrb[0].mxu0
  %v4750 = vadd.f32 %v4665, %v4749
  %v4751 = vpop.f32.mrb[0].mxu0
  %v4752 = vpop.f32.mrb[0].mxu0
  %v4753 = vadd.f32 %v4665, %v4752
  %v4754 = vpop.f32.mrb[0].mxu0
  %4755 = vdwg.mxu0
  %v4756 = vpack.c.bf16 %v4753, %v4750
  %4757 = vmatprep.subr.bf16.mxu0 0
  %4758 = vmatpush1.bf16.msra.mxu0 %v4756
  %4759 = vmatprep.subr.bf16.mxu0 0
  %4760 = vmatpush1.bf16.msra.mxu0 0
  %4761 = vmatprep.subr.bf16.mxu0 0
  %4762 = vmatpush1.bf16.msra.mxu0 0
  %4763 = vmatprep.subr.bf16.mxu0 0
  %4764 = vmatpush1.bf16.msra.mxu0 0
  %4765 = vmatprep.subr.bf16.mxu0 0
  %4766 = vmatpush1.bf16.msra.mxu0 0
  %4767 = vmatprep.subr.bf16.mxu0 0
  %4768 = vmatpush1.bf16.msra.mxu0 0
  %4769 = vmatprep.subr.bf16.mxu0 0
  %4770 = vmatpush1.bf16.msra.mxu0 0
  %4771 = vmatprep.subr.bf16.mxu0 0
  %4772 = vmatpush1.bf16.msra.mxu0 0
  %4773 = vmatprep.subr.bf16.mxu0 0
  %4774 = vmatpush1.bf16.msra.mxu0 0
  %4775 = vmatprep.subr.bf16.mxu0 0
  %4776 = vmatpush1.bf16.msra.mxu0 0
  %4777 = vmatprep.subr.bf16.mxu0 0
  %4778 = vmatpush1.bf16.msra.mxu0 0
  %4779 = vmatprep.subr.bf16.mxu0 0
  %4780 = vmatpush1.bf16.msra.mxu0 0
  %4781 = vmatprep.subr.bf16.mxu0 0
  %4782 = vmatpush1.bf16.msra.mxu0 0
  %4783 = vmatprep.subr.bf16.mxu0 0
  %4784 = vmatpush1.bf16.msra.mxu0 0
  %4785 = vmatprep.subr.bf16.mxu0 0
  %4786 = vmatpush1.bf16.msra.mxu0 0
  %4787 = vmatprep.subr.bf16.mxu0 0
  %4788 = vmatpush1.bf16.msra.mxu0 0
  %4789 = vmatprep.mubr.bf16.mxu0 0
  %4790 = vmatmul.mubr.bf16.gmra.mrb[0].mxu0 %v993
  %v4791 = vpop.f32.mrb[0].mxu0
  %v4792 = vadd.f32 0.0, %v4791
  %v4793 = vpop.f32.mrb[0].mxu0
  %v4794 = vpop.f32.mrb[0].mxu0
  %v4795 = vpop.f32.mrb[0].mxu0
  %4796 = vdwg.mxu0
  %v4797 = vmul.f32 %v4792, %v1038
  %s4798 = scalar_lea.vmem %s41, 128
  %v4799 = vld [vmem:[%s4798] sm:$0xf]
  %v4800 = vld [vmem:[%s4798 + $0x4] sm:$0xf]
  %v4801 = vld [vmem:[%s4798 + $0x8] sm:$0xf]
  %v4802 = vld [vmem:[%s4798 + $0xc] sm:$0xf]
  %v4803 = vld [vmem:[%s4798 + $0x10] sm:$0xf]
  %v4804 = vld [vmem:[%s4798 + $0x14] sm:$0xf]
  %v4805 = vld [vmem:[%s4798 + $0x18] sm:$0xf]
  %v4806 = vld [vmem:[%s4798 + $0x1c] sm:$0xf]
  %v4807 = vld [vmem:[%s4798 + $0x20] sm:$0xf]
  %v4808 = vld [vmem:[%s4798 + $0x24] sm:$0xf]
  %v4809 = vld [vmem:[%s4798 + $0x28] sm:$0xf]
  %v4810 = vld [vmem:[%s4798 + $0x2c] sm:$0xf]
  %v4811 = vld [vmem:[%s4798 + $0x30] sm:$0xf]
  %v4812 = vld [vmem:[%s4798 + $0x34] sm:$0xf]
  %v4813 = vld [vmem:[%s4798 + $0x38] sm:$0xf]
  %v4814 = vld [vmem:[%s4798 + $0x3c] sm:$0xf]
  %v4815 = vpack.c.bf16 %v4797, %v4797
  %s4816 = scalar_lea.vmem %s43, 128
  %v4817 = vld [vmem:[%s4816] sm:$0xf]
  %v4818 = vld [vmem:[%s4816 + $0x4] sm:$0xf]
  %v4819 = vld [vmem:[%s4816 + $0x8] sm:$0xf]
  %v4820 = vld [vmem:[%s4816 + $0xc] sm:$0xf]
  %v4821 = vld [vmem:[%s4816 + $0x10] sm:$0xf]
  %v4822 = vld [vmem:[%s4816 + $0x14] sm:$0xf]
  %v4823 = vld [vmem:[%s4816 + $0x18] sm:$0xf]
  %v4824 = vld [vmem:[%s4816 + $0x1c] sm:$0xf]
  %v4825 = vld [vmem:[%s4816 + $0x20] sm:$0xf]
  %v4826 = vld [vmem:[%s4816 + $0x24] sm:$0xf]
  %v4827 = vld [vmem:[%s4816 + $0x28] sm:$0xf]
  %v4828 = vld [vmem:[%s4816 + $0x2c] sm:$0xf]
  %v4829 = vld [vmem:[%s4816 + $0x30] sm:$0xf]
  %v4830 = vld [vmem:[%s4816 + $0x34] sm:$0xf]
  %v4831 = vld [vmem:[%s4816 + $0x38] sm:$0xf]
  %v4832 = vld [vmem:[%s4816 + $0x3c] sm:$0xf]
  %v4849 = vunpack.c.l.b16 %v4817
  %v4850 = vunpack.c.l.b16 %v4818
  %v4851 = vunpack.c.l.b16 %v4819
  %v4852 = vunpack.c.l.b16 %v4820
  %v4853 = vunpack.c.l.b16 %v4821
  %v4854 = vunpack.c.l.b16 %v4822
  %v4855 = vunpack.c.l.b16 %v4823
  %v4856 = vunpack.c.l.b16 %v4824
  %v4857 = vunpack.c.l.b16 %v4825
  %v4858 = vunpack.c.l.b16 %v4826
  %v4859 = vunpack.c.l.b16 %v4827
  %v4860 = vunpack.c.l.b16 %v4828
  %v4861 = vunpack.c.l.b16 %v4829
  %v4862 = vunpack.c.l.b16 %v4830
  %v4863 = vunpack.c.l.b16 %v4831
  %v4864 = vunpack.c.l.b16 %v4832
  %v4865 = vpack.c.b16 %v4850, %v4849
  %v4866 = vpack.c.b16 %v4852, %v4851
  %v4867 = vpack.c.b16 %v4854, %v4853
  %v4868 = vpack.c.b16 %v4856, %v4855
  %v4869 = vpack.c.b16 %v4858, %v4857
  %v4870 = vpack.c.b16 %v4860, %v4859
  %v4871 = vpack.c.b16 %v4862, %v4861
  %v4872 = vpack.c.b16 %v4864, %v4863
  %4881 = vmatprep.subr.bf16.mxu0 0
  %4882 = vmatpush1.bf16.msra.mxu0 %v4865
  %4883 = vmatprep.subr.bf16.mxu0 0
  %4884 = vmatpush1.bf16.msra.mxu0 %v4866
  %4885 = vmatprep.subr.bf16.mxu0 0
  %4886 = vmatpush1.bf16.msra.mxu0 %v4867
  %4887 = vmatprep.subr.bf16.mxu0 0
  %4888 = vmatpush1.bf16.msra.mxu0 %v4868
  %4889 = vmatprep.subr.bf16.mxu0 0
  %4890 = vmatpush1.bf16.msra.mxu0 %v4869
  %4891 = vmatprep.subr.bf16.mxu0 0
  %4892 = vmatpush1.bf16.msra.mxu0 %v4870
  %4893 = vmatprep.subr.bf16.mxu0 0
  %4894 = vmatpush1.bf16.msra.mxu0 %v4871
  %4895 = vmatprep.subr.bf16.mxu0 0
  %4896 = vmatpush1.bf16.msra.mxu0 %v4872
  %4897 = vmatprep.subr.bf16.mxu0 0
  %4898 = vmatpush1.bf16.msra.mxu0 0
  %4899 = vmatprep.subr.bf16.mxu0 0
  %4900 = vmatpush1.bf16.msra.mxu0 0
  %4901 = vmatprep.subr.bf16.mxu0 0
  %4902 = vmatpush1.bf16.msra.mxu0 0
  %4903 = vmatprep.subr.bf16.mxu0 0
  %4904 = vmatpush1.bf16.msra.mxu0 0
  %4905 = vmatprep.subr.bf16.mxu0 0
  %4906 = vmatpush1.bf16.msra.mxu0 0
  %4907 = vmatprep.subr.bf16.mxu0 0
  %4908 = vmatpush1.bf16.msra.mxu0 0
  %4909 = vmatprep.subr.bf16.mxu0 0
  %4910 = vmatpush1.bf16.msra.mxu0 0
  %4911 = vmatprep.subr.bf16.mxu0 0
  %4912 = vmatpush1.bf16.msra.mxu0 0
  %4913 = vmatprep.mubr.bf16.mxu0 0
  %4914 = vmatmul.mubr.bf16.gmra.mrb[0].mxu0 %v3993
  %v4915 = vpop.f32.mrb[0].mxu0
  %v4916 = vadd.f32 0.0, %v4915
  %v4917 = vpop.f32.mrb[0].mxu0
  %v4918 = vpop.f32.mrb[0].mxu0
  %v4919 = vpop.f32.mrb[0].mxu0
  %4920 = vdwg.mxu0
  %v4937 = vunpack.c.l.b16 %v4799
  %v4938 = vunpack.c.l.b16 %v4800
  %v4939 = vunpack.c.l.b16 %v4801
  %v4940 = vunpack.c.l.b16 %v4802
  %v4941 = vunpack.c.l.b16 %v4803
  %v4942 = vunpack.c.l.b16 %v4804
  %v4943 = vunpack.c.l.b16 %v4805
  %v4944 = vunpack.c.l.b16 %v4806
  %v4945 = vunpack.c.l.b16 %v4807
  %v4946 = vunpack.c.l.b16 %v4808
  %v4947 = vunpack.c.l.b16 %v4809
  %v4948 = vunpack.c.l.b16 %v4810
  %v4949 = vunpack.c.l.b16 %v4811
  %v4950 = vunpack.c.l.b16 %v4812
  %v4951 = vunpack.c.l.b16 %v4813
  %v4952 = vunpack.c.l.b16 %v4814
  %v4953 = vpack.c.b16 %v4938, %v4937
  %v4954 = vpack.c.b16 %v4940, %v4939
  %v4955 = vpack.c.b16 %v4942, %v4941
  %v4956 = vpack.c.b16 %v4944, %v4943
  %v4957 = vpack.c.b16 %v4946, %v4945
  %v4958 = vpack.c.b16 %v4948, %v4947
  %v4959 = vpack.c.b16 %v4950, %v4949
  %v4960 = vpack.c.b16 %v4952, %v4951
  %4969 = vmatprep.subr.bf16.mxu0 0
  %4970 = vmatpush1.bf16.msra.mxu0 %v4953
  %4971 = vmatprep.subr.bf16.mxu0 0
  %4972 = vmatpush1.bf16.msra.mxu0 %v4954
  %4973 = vmatprep.subr.bf16.mxu0 0
  %4974 = vmatpush1.bf16.msra.mxu0 %v4955
  %4975 = vmatprep.subr.bf16.mxu0 0
  %4976 = vmatpush1.bf16.msra.mxu0 %v4956
  %4977 = vmatprep.subr.bf16.mxu0 0
  %4978 = vmatpush1.bf16.msra.mxu0 %v4957
  %4979 = vmatprep.subr.bf16.mxu0 0
  %4980 = vmatpush1.bf16.msra.mxu0 %v4958
  %4981 = vmatprep.subr.bf16.mxu0 0
  %4982 = vmatpush1.bf16.msra.mxu0 %v4959
  %4983 = vmatprep.subr.bf16.mxu0 0
  %4984 = vmatpush1.bf16.msra.mxu0 %v4960
  %4985 = vmatprep.subr.bf16.mxu0 0
  %4986 = vmatpush1.bf16.msra.mxu0 0
  %4987 = vmatprep.subr.bf16.mxu0 0
  %4988 = vmatpush1.bf16.msra.mxu0 0
  %4989 = vmatprep.subr.bf16.mxu0 0
  %4990 = vmatpush1.bf16.msra.mxu0 0
  %4991 = vmatprep.subr.bf16.mxu0 0
  %4992 = vmatpush1.bf16.msra.mxu0 0
  %4993 = vmatprep.subr.bf16.mxu0 0
  %4994 = vmatpush1.bf16.msra.mxu0 0
  %4995 = vmatprep.subr.bf16.mxu0 0
  %4996 = vmatpush1.bf16.msra.mxu0 0
  %4997 = vmatprep.subr.bf16.mxu0 0
  %4998 = vmatpush1.bf16.msra.mxu0 0
  %4999 = vmatprep.subr.bf16.mxu0 0
  %5000 = vmatpush1.bf16.msra.mxu0 0
  %5001 = vmatprep.mubr.bf16.mxu0 0
  %5002 = vmatmul.mubr.bf16.gmra.mrb[0].mxu0 %v4815
  %v5003 = vpop.f32.mrb[0].mxu0
  %v5004 = vadd.f32 %v4916, %v5003
  %v5005 = vpop.f32.mrb[0].mxu0
  %v5006 = vpop.f32.mrb[0].mxu0
  %v5007 = vpop.f32.mrb[0].mxu0
  %5008 = vdwg.mxu0
  %s5009 = scalar_lea.vmem %s45, 128
  %v5010 = vld [vmem:[%s5009] sm:$0xf]
  %v5011 = vld [vmem:[%s5009 + $0x4] sm:$0xf]
  %v5012 = vld [vmem:[%s5009 + $0x8] sm:$0xf]
  %v5013 = vld [vmem:[%s5009 + $0xc] sm:$0xf]
  %v5014 = vld [vmem:[%s5009 + $0x10] sm:$0xf]
  %v5015 = vld [vmem:[%s5009 + $0x14] sm:$0xf]
  %v5016 = vld [vmem:[%s5009 + $0x18] sm:$0xf]
  %v5017 = vld [vmem:[%s5009 + $0x1c] sm:$0xf]
  %v5018 = vld [vmem:[%s5009 + $0x20] sm:$0xf]
  %v5019 = vld [vmem:[%s5009 + $0x24] sm:$0xf]
  %v5020 = vld [vmem:[%s5009 + $0x28] sm:$0xf]
  %v5021 = vld [vmem:[%s5009 + $0x2c] sm:$0xf]
  %v5022 = vld [vmem:[%s5009 + $0x30] sm:$0xf]
  %v5023 = vld [vmem:[%s5009 + $0x34] sm:$0xf]
  %v5024 = vld [vmem:[%s5009 + $0x38] sm:$0xf]
  %v5025 = vld [vmem:[%s5009 + $0x3c] sm:$0xf]
  %v5042 = vunpack.c.l.b16 %v5010
  %v5043 = vunpack.c.l.b16 %v5011
  %v5044 = vunpack.c.l.b16 %v5012
  %v5045 = vunpack.c.l.b16 %v5013
  %v5046 = vunpack.c.l.b16 %v5014
  %v5047 = vunpack.c.l.b16 %v5015
  %v5048 = vunpack.c.l.b16 %v5016
  %v5049 = vunpack.c.l.b16 %v5017
  %v5050 = vunpack.c.l.b16 %v5018
  %v5051 = vunpack.c.l.b16 %v5019
  %v5052 = vunpack.c.l.b16 %v5020
  %v5053 = vunpack.c.l.b16 %v5021
  %v5054 = vunpack.c.l.b16 %v5022
  %v5055 = vunpack.c.l.b16 %v5023
  %v5056 = vunpack.c.l.b16 %v5024
  %v5057 = vunpack.c.l.b16 %v5025
  %v5058 = vpack.c.b16 %v5043, %v5042
  %v5059 = vpack.c.b16 %v5045, %v5044
  %v5060 = vpack.c.b16 %v5047, %v5046
  %v5061 = vpack.c.b16 %v5049, %v5048
  %v5062 = vpack.c.b16 %v5051, %v5050
  %v5063 = vpack.c.b16 %v5053, %v5052
  %v5064 = vpack.c.b16 %v5055, %v5054
  %v5065 = vpack.c.b16 %v5057, %v5056
  %5074 = vmatprep.subr.bf16.mxu0 0
  %5075 = vmatpush1.bf16.msra.mxu0 %v5058
  %5076 = vmatprep.subr.bf16.mxu0 0
  %5077 = vmatpush1.bf16.msra.mxu0 %v5059
  %5078 = vmatprep.subr.bf16.mxu0 0
  %5079 = vmatpush1.bf16.msra.mxu0 %v5060
  %5080 = vmatprep.subr.bf16.mxu0 0
  %5081 = vmatpush1.bf16.msra.mxu0 %v5061
  %5082 = vmatprep.subr.bf16.mxu0 0
  %5083 = vmatpush1.bf16.msra.mxu0 %v5062
  %5084 = vmatprep.subr.bf16.mxu0 0
  %5085 = vmatpush1.bf16.msra.mxu0 %v5063
  %5086 = vmatprep.subr.bf16.mxu0 0
  %5087 = vmatpush1.bf16.msra.mxu0 %v5064
  %5088 = vmatprep.subr.bf16.mxu0 0
  %5089 = vmatpush1.bf16.msra.mxu0 %v5065
  %5090 = vmatprep.subr.bf16.mxu0 0
  %5091 = vmatpush1.bf16.msra.mxu0 0
  %5092 = vmatprep.subr.bf16.mxu0 0
  %5093 = vmatpush1.bf16.msra.mxu0 0
  %5094 = vmatprep.subr.bf16.mxu0 0
  %5095 = vmatpush1.bf16.msra.mxu0 0
  %5096 = vmatprep.subr.bf16.mxu0 0
  %5097 = vmatpush1.bf16.msra.mxu0 0
  %5098 = vmatprep.subr.bf16.mxu0 0
  %5099 = vmatpush1.bf16.msra.mxu0 0
  %5100 = vmatprep.subr.bf16.mxu0 0
  %5101 = vmatpush1.bf16.msra.mxu0 0
  %5102 = vmatprep.subr.bf16.mxu0 0
  %5103 = vmatpush1.bf16.msra.mxu0 0
  %5104 = vmatprep.subr.bf16.mxu0 0
  %5105 = vmatpush1.bf16.msra.mxu0 0
  %5106 = vmatprep.mubr.bf16.mxu0 0
  %5107 = vmatmul.mubr.bf16.gmra.mrb[0].mxu0 %v4463
  %v5108 = vpop.f32.mrb[0].mxu0
  %v5109 = vadd.f32 0.0, %v5108
  %v5110 = vpop.f32.mrb[0].mxu0
  %v5111 = vpop.f32.mrb[0].mxu0
  %v5112 = vpop.f32.mrb[0].mxu0
  %5113 = vdwg.mxu0
  %5114 = vmatprep.subr.mxu0 0.0
  %5115 = vmatpush1.msra.mxu0 %v5109
  %5116 = vmatprep.subr.mxu0 0.0
  %5117 = vmatpush1.msra.mxu0 0.0
  %5118 = vmatprep.subr.mxu0 0.0
  %5119 = vmatpush1.msra.mxu0 0.0
  %5120 = vmatprep.subr.mxu0 0.0
  %5121 = vmatpush1.msra.mxu0 0.0
  %5122 = vmatprep.subr.mxu0 0.0
  %5123 = vmatpush1.msra.mxu0 0.0
  %5124 = vmatprep.subr.mxu0 0.0
  %5125 = vmatpush1.msra.mxu0 0.0
  %5126 = vmatprep.subr.mxu0 0.0
  %5127 = vmatpush1.msra.mxu0 0.0
  %5128 = vmatprep.subr.mxu0 0.0
  %5129 = vmatpush1.msra.mxu0 0.0
  %5130 = vmatprep.subr.mxu0 0.0
  %5131 = vmatpush1.msra.mxu0 0.0
  %5132 = vmatprep.subr.mxu0 0.0
  %5133 = vmatpush1.msra.mxu0 0.0
  %5134 = vmatprep.subr.mxu0 0.0
  %5135 = vmatpush1.msra.mxu0 0.0
  %5136 = vmatprep.subr.mxu0 0.0
  %5137 = vmatpush1.msra.mxu0 0.0
  %5138 = vmatprep.subr.mxu0 0.0
  %5139 = vmatpush1.msra.mxu0 0.0
  %5140 = vmatprep.subr.mxu0 0.0
  %5141 = vmatpush1.msra.mxu0 0.0
  %5142 = vmatprep.subr.mxu0 0.0
  %5143 = vmatpush1.msra.mxu0 0.0
  %5144 = vmatprep.subr.mxu0 0.0
  %5145 = vmatpush1.msra.mxu0 0.0
  %5146 = vmatprep.subr.mxu0 0.0
  %5147 = vmatpush1.msra.mxu0 0.0
  %5148 = vmatprep.subr.mxu0 0.0
  %5149 = vmatpush1.msra.mxu0 0.0
  %5150 = vmatprep.subr.mxu0 0.0
  %5151 = vmatpush1.msra.mxu0 0.0
  %5152 = vmatprep.subr.mxu0 0.0
  %5153 = vmatpush1.msra.mxu0 0.0
  %5154 = vmatprep.subr.mxu0 0.0
  %5155 = vmatpush1.msra.mxu0 0.0
  %5156 = vmatprep.subr.mxu0 0.0
  %5157 = vmatpush1.msra.mxu0 0.0
  %5158 = vmatprep.subr.mxu0 0.0
  %5159 = vmatpush1.msra.mxu0 0.0
  %5160 = vmatprep.subr.mxu0 0.0
  %5161 = vmatpush1.msra.mxu0 0.0
  %5162 = vmatprep.subr.mxu0 0.0
  %5163 = vmatpush1.msra.mxu0 0.0
  %5164 = vmatprep.subr.mxu0 0.0
  %5165 = vmatpush1.msra.mxu0 0.0
  %5166 = vmatprep.subr.mxu0 0.0
  %5167 = vmatpush1.msra.mxu0 0.0
  %5168 = vmatprep.subr.mxu0 0.0
  %5169 = vmatpush1.msra.mxu0 0.0
  %5170 = vmatprep.subr.mxu0 0.0
  %5171 = vmatpush1.msra.mxu0 0.0
  %5172 = vmatprep.subr.mxu0 0.0
  %5173 = vmatpush1.msra.mxu0 0.0
  %5174 = vmatprep.subr.mxu0 0.0
  %5175 = vmatpush1.msra.mxu0 0.0
  %5176 = vmatprep.subr.mxu0 0.0
  %5177 = vmatpush1.msra.mxu0 0.0
  %5178 = vmatprep.mubr.f32.mxu0 0.0
  %5179 = vmatmul.mubr.f32.gmra.mrb[0].mxu0 %v1360
  %v5180 = vpop.f32.mrb[0].mxu0
  %v5181 = vadd.f32 0.0, %v5180
  %v5182 = vpop.f32.mrb[0].mxu0
  %5183 = vdwg.mxu0
  %v5184 = vadd.f32 %v5004, %v5181
  %s5185 = scalar_lea.vmem %s47, 2
  %v5186 = vld [vmem:[%s5185] sm:$0x1]
  %v5188 = vlaneseq
  %v5189 = vshrl.u32 %v5188, 7
  %v5190 = vsub.s32 0, %v5189
  %v5191 = vrot.slane %v5186, %v5190
  %v5193 = vadd.f32 %v5184, %v5191
  %v5194 = vmax.f32 %v5193, 0.0
  %s5195 = scalar_lea.vmem %s49, 128
  %v5196 = vld [vmem:[%s5195] sm:$0xf]
  %v5197 = vld [vmem:[%s5195 + $0x4] sm:$0xf]
  %v5198 = vld [vmem:[%s5195 + $0x8] sm:$0xf]
  %v5199 = vld [vmem:[%s5195 + $0xc] sm:$0xf]
  %v5200 = vld [vmem:[%s5195 + $0x10] sm:$0xf]
  %v5201 = vld [vmem:[%s5195 + $0x14] sm:$0xf]
  %v5202 = vld [vmem:[%s5195 + $0x18] sm:$0xf]
  %v5203 = vld [vmem:[%s5195 + $0x1c] sm:$0xf]
  %v5204 = vld [vmem:[%s5195 + $0x20] sm:$0xf]
  %v5205 = vld [vmem:[%s5195 + $0x24] sm:$0xf]
  %v5206 = vld [vmem:[%s5195 + $0x28] sm:$0xf]
  %v5207 = vld [vmem:[%s5195 + $0x2c] sm:$0xf]
  %v5208 = vld [vmem:[%s5195 + $0x30] sm:$0xf]
  %v5209 = vld [vmem:[%s5195 + $0x34] sm:$0xf]
  %v5210 = vld [vmem:[%s5195 + $0x38] sm:$0xf]
  %v5211 = vld [vmem:[%s5195 + $0x3c] sm:$0xf]
  %v5212 = vpack.c.bf16 %v5194, %v5194
  %s5213 = scalar_lea.vmem %s51, 2
  %v5214 = vld [vmem:[%s5213] sm:$0x1]
  %v5216 = vlaneseq
  %v5217 = vshrl.u32 %v5216, 7
  %v5218 = vsub.s32 0, %v5217
  %v5219 = vrot.slane %v5214, %v5218
  %v5237 = vunpack.c.l.b16 %v5196
  %v5238 = vunpack.c.l.b16 %v5197
  %v5239 = vunpack.c.l.b16 %v5198
  %v5240 = vunpack.c.l.b16 %v5199
  %v5241 = vunpack.c.l.b16 %v5200
  %v5242 = vunpack.c.l.b16 %v5201
  %v5243 = vunpack.c.l.b16 %v5202
  %v5244 = vunpack.c.l.b16 %v5203
  %v5245 = vunpack.c.l.b16 %v5204
  %v5246 = vunpack.c.l.b16 %v5205
  %v5247 = vunpack.c.l.b16 %v5206
  %v5248 = vunpack.c.l.b16 %v5207
  %v5249 = vunpack.c.l.b16 %v5208
  %v5250 = vunpack.c.l.b16 %v5209
  %v5251 = vunpack.c.l.b16 %v5210
  %v5252 = vunpack.c.l.b16 %v5211
  %v5253 = vpack.c.b16 %v5238, %v5237
  %v5254 = vpack.c.b16 %v5240, %v5239
  %v5255 = vpack.c.b16 %v5242, %v5241
  %v5256 = vpack.c.b16 %v5244, %v5243
  %v5257 = vpack.c.b16 %v5246, %v5245
  %v5258 = vpack.c.b16 %v5248, %v5247
  %v5259 = vpack.c.b16 %v5250, %v5249
  %v5260 = vpack.c.b16 %v5252, %v5251
  %5269 = vmatprep.subr.bf16.mxu0 0
  %5270 = vmatpush1.bf16.msra.mxu0 %v5253
  %5271 = vmatprep.subr.bf16.mxu0 0
  %5272 = vmatpush1.bf16.msra.mxu0 %v5254
  %5273 = vmatprep.subr.bf16.mxu0 0
  %5274 = vmatpush1.bf16.msra.mxu0 %v5255
  %5275 = vmatprep.subr.bf16.mxu0 0
  %5276 = vmatpush1.bf16.msra.mxu0 %v5256
  %5277 = vmatprep.subr.bf16.mxu0 0
  %5278 = vmatpush1.bf16.msra.mxu0 %v5257
  %5279 = vmatprep.subr.bf16.mxu0 0
  %5280 = vmatpush1.bf16.msra.mxu0 %v5258
  %5281 = vmatprep.subr.bf16.mxu0 0
  %5282 = vmatpush1.bf16.msra.mxu0 %v5259
  %5283 = vmatprep.subr.bf16.mxu0 0
  %5284 = vmatpush1.bf16.msra.mxu0 %v5260
  %5285 = vmatprep.subr.bf16.mxu0 0
  %5286 = vmatpush1.bf16.msra.mxu0 0
  %5287 = vmatprep.subr.bf16.mxu0 0
  %5288 = vmatpush1.bf16.msra.mxu0 0
  %5289 = vmatprep.subr.bf16.mxu0 0
  %5290 = vmatpush1.bf16.msra.mxu0 0
  %5291 = vmatprep.subr.bf16.mxu0 0
  %5292 = vmatpush1.bf16.msra.mxu0 0
  %5293 = vmatprep.subr.bf16.mxu0 0
  %5294 = vmatpush1.bf16.msra.mxu0 0
  %5295 = vmatprep.subr.bf16.mxu0 0
  %5296 = vmatpush1.bf16.msra.mxu0 0
  %5297 = vmatprep.subr.bf16.mxu0 0
  %5298 = vmatpush1.bf16.msra.mxu0 0
  %5299 = vmatprep.subr.bf16.mxu0 0
  %5300 = vmatpush1.bf16.msra.mxu0 0
  %5301 = vmatprep.mubr.bf16.mxu0 0
  %5302 = vmatmul.mubr.bf16.gmra.mrb[0].mxu0 %v5212
  %v5303 = vpop.f32.mrb[0].mxu0
  %v5304 = vadd.f32 %v5219, %v5303
  %v5305 = vpop.f32.mrb[0].mxu0
  %v5306 = vpop.f32.mrb[0].mxu0
  %v5307 = vpop.f32.mrb[0].mxu0
  %5308 = vdwg.mxu0
  %v5309 = vpack.c.bf16 %v5304, %v5304
  %v5311 = vsel %vm1565, %v5309, 0
  %5313 = vmatprep.subr.bf16.mxu0 0
  %5314 = vmatpush1.bf16.msra.mxu0 %v5311
  %5315 = vmatprep.subr.bf16.mxu0 0
  %5316 = vmatpush1.bf16.msra.mxu0 0
  %5317 = vmatprep.subr.bf16.mxu0 0
  %5318 = vmatpush1.bf16.msra.mxu0 0
  %5319 = vmatprep.subr.bf16.mxu0 0
  %5320 = vmatpush1.bf16.msra.mxu0 0
  %5321 = vmatprep.subr.bf16.mxu0 0
  %5322 = vmatpush1.bf16.msra.mxu0 0
  %5323 = vmatprep.subr.bf16.mxu0 0
  %5324 = vmatpush1.bf16.msra.mxu0 0
  %5325 = vmatprep.subr.bf16.mxu0 0
  %5326 = vmatpush1.bf16.msra.mxu0 0
  %5327 = vmatprep.subr.bf16.mxu0 0
  %5328 = vmatpush1.bf16.msra.mxu0 0
  %5329 = vmatprep.subr.bf16.mxu0 0
  %5330 = vmatpush1.bf16.msra.mxu0 0
  %5331 = vmatprep.subr.bf16.mxu0 0
  %5332 = vmatpush1.bf16.msra.mxu0 0
  %5333 = vmatprep.subr.bf16.mxu0 0
  %5334 = vmatpush1.bf16.msra.mxu0 0
  %5335 = vmatprep.subr.bf16.mxu0 0
  %5336 = vmatpush1.bf16.msra.mxu0 0
  %5337 = vmatprep.subr.bf16.mxu0 0
  %5338 = vmatpush1.bf16.msra.mxu0 0
  %5339 = vmatprep.subr.bf16.mxu0 0
  %5340 = vmatpush1.bf16.msra.mxu0 0
  %5341 = vmatprep.subr.bf16.mxu0 0
  %5342 = vmatpush1.bf16.msra.mxu0 0
  %5343 = vmatprep.subr.bf16.mxu0 0
  %5344 = vmatpush1.bf16.msra.mxu0 0
  %5345 = vmatprep.mubr.bf16.mxu0 0
  %5346 = vmatmul.mubr.bf16.gmra.mrb[0].mxu0 %v1563
  %v5347 = vpop.f32.mrb[0].mxu0
  %v5348 = vadd.f32 0.0, %v5347
  %v5349 = vpop.f32.mrb[0].mxu0
  %v5350 = vpop.f32.mrb[0].mxu0
  %v5351 = vpop.f32.mrb[0].mxu0
  %5352 = vdwg.mxu0
  %v5353 = vmul.f32 %v5348, %v1612
  %5354 = vmatprep.subr.bf16.mxu0 0
  %5355 = vmatpush1.bf16.msra.mxu0 %v4756
  %5356 = vmatprep.subr.bf16.mxu0 0
  %5357 = vmatpush1.bf16.msra.mxu0 0
  %5358 = vmatprep.subr.bf16.mxu0 0
  %5359 = vmatpush1.bf16.msra.mxu0 0
  %5360 = vmatprep.subr.bf16.mxu0 0
  %5361 = vmatpush1.bf16.msra.mxu0 0
  %5362 = vmatprep.subr.bf16.mxu0 0
  %5363 = vmatpush1.bf16.msra.mxu0 0
  %5364 = vmatprep.subr.bf16.mxu0 0
  %5365 = vmatpush1.bf16.msra.mxu0 0
  %5366 = vmatprep.subr.bf16.mxu0 0
  %5367 = vmatpush1.bf16.msra.mxu0 0
  %5368 = vmatprep.subr.bf16.mxu0 0
  %5369 = vmatpush1.bf16.msra.mxu0 0
  %5370 = vmatprep.subr.bf16.mxu0 0
  %5371 = vmatpush1.bf16.msra.mxu0 0
  %5372 = vmatprep.subr.bf16.mxu0 0
  %5373 = vmatpush1.bf16.msra.mxu0 0
  %5374 = vmatprep.subr.bf16.mxu0 0
  %5375 = vmatpush1.bf16.msra.mxu0 0
  %5376 = vmatprep.subr.bf16.mxu0 0
  %5377 = vmatpush1.bf16.msra.mxu0 0
  %5378 = vmatprep.subr.bf16.mxu0 0
  %5379 = vmatpush1.bf16.msra.mxu0 0
  %5380 = vmatprep.subr.bf16.mxu0 0
  %5381 = vmatpush1.bf16.msra.mxu0 0
  %5382 = vmatprep.subr.bf16.mxu0 0
  %5383 = vmatpush1.bf16.msra.mxu0 0
  %5384 = vmatprep.subr.bf16.mxu0 0
  %5385 = vmatpush1.bf16.msra.mxu0 0
  %5386 = vmatprep.mubr.bf16.mxu0 0
  %5387 = vmatmul.mubr.bf16.gmra.mrb[0].mxu0 %v1623
  %v5388 = vpop.f32.mrb[0].mxu0
  %v5389 = vadd.f32 0.0, %v5388
  %v5390 = vpop.f32.mrb[0].mxu0
  %v5391 = vpop.f32.mrb[0].mxu0
  %v5392 = vpop.f32.mrb[0].mxu0
  %5393 = vdwg.mxu0
  %v5394 = vmul.f32 %v5389, %v1668
  %s5395 = scalar_lea.vmem %s53, 128
  %v5396 = vld [vmem:[%s5395] sm:$0xf]
  %v5397 = vld [vmem:[%s5395 + $0x4] sm:$0xf]
  %v5398 = vld [vmem:[%s5395 + $0x8] sm:$0xf]
  %v5399 = vld [vmem:[%s5395 + $0xc] sm:$0xf]
  %v5400 = vld [vmem:[%s5395 + $0x10] sm:$0xf]
  %v5401 = vld [vmem:[%s5395 + $0x14] sm:$0xf]
  %v5402 = vld [vmem:[%s5395 + $0x18] sm:$0xf]
  %v5403 = vld [vmem:[%s5395 + $0x1c] sm:$0xf]
  %v5404 = vld [vmem:[%s5395 + $0x20] sm:$0xf]
  %v5405 = vld [vmem:[%s5395 + $0x24] sm:$0xf]
  %v5406 = vld [vmem:[%s5395 + $0x28] sm:$0xf]
  %v5407 = vld [vmem:[%s5395 + $0x2c] sm:$0xf]
  %v5408 = vld [vmem:[%s5395 + $0x30] sm:$0xf]
  %v5409 = vld [vmem:[%s5395 + $0x34] sm:$0xf]
  %v5410 = vld [vmem:[%s5395 + $0x38] sm:$0xf]
  %v5411 = vld [vmem:[%s5395 + $0x3c] sm:$0xf]
  %v5412 = vpack.c.bf16 %v5353, %v5353
  %s5413 = scalar_lea.vmem %s55, 128
  %v5414 = vld [vmem:[%s5413] sm:$0xf]
  %v5415 = vld [vmem:[%s5413 + $0x4] sm:$0xf]
  %v5416 = vld [vmem:[%s5413 + $0x8] sm:$0xf]
  %v5417 = vld [vmem:[%s5413 + $0xc] sm:$0xf]
  %v5418 = vld [vmem:[%s5413 + $0x10] sm:$0xf]
  %v5419 = vld [vmem:[%s5413 + $0x14] sm:$0xf]
  %v5420 = vld [vmem:[%s5413 + $0x18] sm:$0xf]
  %v5421 = vld [vmem:[%s5413 + $0x1c] sm:$0xf]
  %v5422 = vld [vmem:[%s5413 + $0x20] sm:$0xf]
  %v5423 = vld [vmem:[%s5413 + $0x24] sm:$0xf]
  %v5424 = vld [vmem:[%s5413 + $0x28] sm:$0xf]
  %v5425 = vld [vmem:[%s5413 + $0x2c] sm:$0xf]
  %v5426 = vld [vmem:[%s5413 + $0x30] sm:$0xf]
  %v5427 = vld [vmem:[%s5413 + $0x34] sm:$0xf]
  %v5428 = vld [vmem:[%s5413 + $0x38] sm:$0xf]
  %v5429 = vld [vmem:[%s5413 + $0x3c] sm:$0xf]
  %v5430 = vpack.c.bf16 %v5394, %v5394
  %v5447 = vunpack.c.l.b16 %v5414
  %v5448 = vunpack.c.l.b16 %v5415
  %v5449 = vunpack.c.l.b16 %v5416
  %v5450 = vunpack.c.l.b16 %v5417
  %v5451 = vunpack.c.l.b16 %v5418
  %v5452 = vunpack.c.l.b16 %v5419
  %v5453 = vunpack.c.l.b16 %v5420
  %v5454 = vunpack.c.l.b16 %v5421
  %v5455 = vunpack.c.l.b16 %v5422
  %v5456 = vunpack.c.l.b16 %v5423
  %v5457 = vunpack.c.l.b16 %v5424
  %v5458 = vunpack.c.l.b16 %v5425
  %v5459 = vunpack.c.l.b16 %v5426
  %v5460 = vunpack.c.l.b16 %v5427
  %v5461 = vunpack.c.l.b16 %v5428
  %v5462 = vunpack.c.l.b16 %v5429
  %v5463 = vpack.c.b16 %v5448, %v5447
  %v5464 = vpack.c.b16 %v5450, %v5449
  %v5465 = vpack.c.b16 %v5452, %v5451
  %v5466 = vpack.c.b16 %v5454, %v5453
  %v5467 = vpack.c.b16 %v5456, %v5455
  %v5468 = vpack.c.b16 %v5458, %v5457
  %v5469 = vpack.c.b16 %v5460, %v5459
  %v5470 = vpack.c.b16 %v5462, %v5461
  %5479 = vmatprep.subr.bf16.mxu0 0
  %5480 = vmatpush1.bf16.msra.mxu0 %v5463
  %5481 = vmatprep.subr.bf16.mxu0 0
  %5482 = vmatpush1.bf16.msra.mxu0 %v5464
  %5483 = vmatprep.subr.bf16.mxu0 0
  %5484 = vmatpush1.bf16.msra.mxu0 %v5465
  %5485 = vmatprep.subr.bf16.mxu0 0
  %5486 = vmatpush1.bf16.msra.mxu0 %v5466
  %5487 = vmatprep.subr.bf16.mxu0 0
  %5488 = vmatpush1.bf16.msra.mxu0 %v5467
  %5489 = vmatprep.subr.bf16.mxu0 0
  %5490 = vmatpush1.bf16.msra.mxu0 %v5468
  %5491 = vmatprep.subr.bf16.mxu0 0
  %5492 = vmatpush1.bf16.msra.mxu0 %v5469
  %5493 = vmatprep.subr.bf16.mxu0 0
  %5494 = vmatpush1.bf16.msra.mxu0 %v5470
  %5495 = vmatprep.subr.bf16.mxu0 0
  %5496 = vmatpush1.bf16.msra.mxu0 0
  %5497 = vmatprep.subr.bf16.mxu0 0
  %5498 = vmatpush1.bf16.msra.mxu0 0
  %5499 = vmatprep.subr.bf16.mxu0 0
  %5500 = vmatpush1.bf16.msra.mxu0 0
  %5501 = vmatprep.subr.bf16.mxu0 0
  %5502 = vmatpush1.bf16.msra.mxu0 0
  %5503 = vmatprep.subr.bf16.mxu0 0
  %5504 = vmatpush1.bf16.msra.mxu0 0
  %5505 = vmatprep.subr.bf16.mxu0 0
  %5506 = vmatpush1.bf16.msra.mxu0 0
  %5507 = vmatprep.subr.bf16.mxu0 0
  %5508 = vmatpush1.bf16.msra.mxu0 0
  %5509 = vmatprep.subr.bf16.mxu0 0
  %5510 = vmatpush1.bf16.msra.mxu0 0
  %5511 = vmatprep.mubr.bf16.mxu0 0
  %5512 = vmatmul.mubr.bf16.gmra.mrb[0].mxu0 %v5430
  %v5513 = vpop.f32.mrb[0].mxu0
  %v5514 = vadd.f32 0.0, %v5513
  %v5515 = vpop.f32.mrb[0].mxu0
  %v5516 = vpop.f32.mrb[0].mxu0
  %v5517 = vpop.f32.mrb[0].mxu0
  %5518 = vdwg.mxu0
  %v5535 = vunpack.c.l.b16 %v5396
  %v5536 = vunpack.c.l.b16 %v5397
  %v5537 = vunpack.c.l.b16 %v5398
  %v5538 = vunpack.c.l.b16 %v5399
  %v5539 = vunpack.c.l.b16 %v5400
  %v5540 = vunpack.c.l.b16 %v5401
  %v5541 = vunpack.c.l.b16 %v5402
  %v5542 = vunpack.c.l.b16 %v5403
  %v5543 = vunpack.c.l.b16 %v5404
  %v5544 = vunpack.c.l.b16 %v5405
  %v5545 = vunpack.c.l.b16 %v5406
  %v5546 = vunpack.c.l.b16 %v5407
  %v5547 = vunpack.c.l.b16 %v5408
  %v5548 = vunpack.c.l.b16 %v5409
  %v5549 = vunpack.c.l.b16 %v5410
  %v5550 = vunpack.c.l.b16 %v5411
  %v5551 = vpack.c.b16 %v5536, %v5535
  %v5552 = vpack.c.b16 %v5538, %v5537
  %v5553 = vpack.c.b16 %v5540, %v5539
  %v5554 = vpack.c.b16 %v5542, %v5541
  %v5555 = vpack.c.b16 %v5544, %v5543
  %v5556 = vpack.c.b16 %v5546, %v5545
  %v5557 = vpack.c.b16 %v5548, %v5547
  %v5558 = vpack.c.b16 %v5550, %v5549
  %5567 = vmatprep.subr.bf16.mxu0 0
  %5568 = vmatpush1.bf16.msra.mxu0 %v5551
  %5569 = vmatprep.subr.bf16.mxu0 0
  %5570 = vmatpush1.bf16.msra.mxu0 %v5552
  %5571 = vmatprep.subr.bf16.mxu0 0
  %5572 = vmatpush1.bf16.msra.mxu0 %v5553
  %5573 = vmatprep.subr.bf16.mxu0 0
  %5574 = vmatpush1.bf16.msra.mxu0 %v5554
  %5575 = vmatprep.subr.bf16.mxu0 0
  %5576 = vmatpush1.bf16.msra.mxu0 %v5555
  %5577 = vmatprep.subr.bf16.mxu0 0
  %5578 = vmatpush1.bf16.msra.mxu0 %v5556
  %5579 = vmatprep.subr.bf16.mxu0 0
  %5580 = vmatpush1.bf16.msra.mxu0 %v5557
  %5581 = vmatprep.subr.bf16.mxu0 0
  %5582 = vmatpush1.bf16.msra.mxu0 %v5558
  %5583 = vmatprep.subr.bf16.mxu0 0
  %5584 = vmatpush1.bf16.msra.mxu0 0
  %5585 = vmatprep.subr.bf16.mxu0 0
  %5586 = vmatpush1.bf16.msra.mxu0 0
  %5587 = vmatprep.subr.bf16.mxu0 0
  %5588 = vmatpush1.bf16.msra.mxu0 0
  %5589 = vmatprep.subr.bf16.mxu0 0
  %5590 = vmatpush1.bf16.msra.mxu0 0
  %5591 = vmatprep.subr.bf16.mxu0 0
  %5592 = vmatpush1.bf16.msra.mxu0 0
  %5593 = vmatprep.subr.bf16.mxu0 0
  %5594 = vmatpush1.bf16.msra.mxu0 0
  %5595 = vmatprep.subr.bf16.mxu0 0
  %5596 = vmatpush1.bf16.msra.mxu0 0
  %5597 = vmatprep.subr.bf16.mxu0 0
  %5598 = vmatpush1.bf16.msra.mxu0 0
  %5599 = vmatprep.mubr.bf16.mxu0 0
  %5600 = vmatmul.mubr.bf16.gmra.mrb[0].mxu0 %v5412
  %v5601 = vpop.f32.mrb[0].mxu0
  %v5602 = vadd.f32 %v5514, %v5601
  %v5603 = vpop.f32.mrb[0].mxu0
  %v5604 = vpop.f32.mrb[0].mxu0
  %v5605 = vpop.f32.mrb[0].mxu0
  %5606 = vdwg.mxu0
  %s5607 = scalar_lea.vmem %s57, 128
  %v5608 = vld [vmem:[%s5607] sm:$0xf]
  %v5609 = vld [vmem:[%s5607 + $0x4] sm:$0xf]
  %v5610 = vld [vmem:[%s5607 + $0x8] sm:$0xf]
  %v5611 = vld [vmem:[%s5607 + $0xc] sm:$0xf]
  %v5612 = vld [vmem:[%s5607 + $0x10] sm:$0xf]
  %v5613 = vld [vmem:[%s5607 + $0x14] sm:$0xf]
  %v5614 = vld [vmem:[%s5607 + $0x18] sm:$0xf]
  %v5615 = vld [vmem:[%s5607 + $0x1c] sm:$0xf]
  %v5616 = vld [vmem:[%s5607 + $0x20] sm:$0xf]
  %v5617 = vld [vmem:[%s5607 + $0x24] sm:$0xf]
  %v5618 = vld [vmem:[%s5607 + $0x28] sm:$0xf]
  %v5619 = vld [vmem:[%s5607 + $0x2c] sm:$0xf]
  %v5620 = vld [vmem:[%s5607 + $0x30] sm:$0xf]
  %v5621 = vld [vmem:[%s5607 + $0x34] sm:$0xf]
  %v5622 = vld [vmem:[%s5607 + $0x38] sm:$0xf]
  %v5623 = vld [vmem:[%s5607 + $0x3c] sm:$0xf]
  %v5640 = vunpack.c.l.b16 %v5608
  %v5641 = vunpack.c.l.b16 %v5609
  %v5642 = vunpack.c.l.b16 %v5610
  %v5643 = vunpack.c.l.b16 %v5611
  %v5644 = vunpack.c.l.b16 %v5612
  %v5645 = vunpack.c.l.b16 %v5613
  %v5646 = vunpack.c.l.b16 %v5614
  %v5647 = vunpack.c.l.b16 %v5615
  %v5648 = vunpack.c.l.b16 %v5616
  %v5649 = vunpack.c.l.b16 %v5617
  %v5650 = vunpack.c.l.b16 %v5618
  %v5651 = vunpack.c.l.b16 %v5619
  %v5652 = vunpack.c.l.b16 %v5620
  %v5653 = vunpack.c.l.b16 %v5621
  %v5654 = vunpack.c.l.b16 %v5622
  %v5655 = vunpack.c.l.b16 %v5623
  %v5656 = vpack.c.b16 %v5641, %v5640
  %v5657 = vpack.c.b16 %v5643, %v5642
  %v5658 = vpack.c.b16 %v5645, %v5644
  %v5659 = vpack.c.b16 %v5647, %v5646
  %v5660 = vpack.c.b16 %v5649, %v5648
  %v5661 = vpack.c.b16 %v5651, %v5650
  %v5662 = vpack.c.b16 %v5653, %v5652
  %v5663 = vpack.c.b16 %v5655, %v5654
  %5672 = vmatprep.subr.bf16.mxu0 0
  %5673 = vmatpush1.bf16.msra.mxu0 %v5656
  %5674 = vmatprep.subr.bf16.mxu0 0
  %5675 = vmatpush1.bf16.msra.mxu0 %v5657
  %5676 = vmatprep.subr.bf16.mxu0 0
  %5677 = vmatpush1.bf16.msra.mxu0 %v5658
  %5678 = vmatprep.subr.bf16.mxu0 0
  %5679 = vmatpush1.bf16.msra.mxu0 %v5659
  %5680 = vmatprep.subr.bf16.mxu0 0
  %5681 = vmatpush1.bf16.msra.mxu0 %v5660
  %5682 = vmatprep.subr.bf16.mxu0 0
  %5683 = vmatpush1.bf16.msra.mxu0 %v5661
  %5684 = vmatprep.subr.bf16.mxu0 0
  %5685 = vmatpush1.bf16.msra.mxu0 %v5662
  %5686 = vmatprep.subr.bf16.mxu0 0
  %5687 = vmatpush1.bf16.msra.mxu0 %v5663
  %5688 = vmatprep.subr.bf16.mxu0 0
  %5689 = vmatpush1.bf16.msra.mxu0 0
  %5690 = vmatprep.subr.bf16.mxu0 0
  %5691 = vmatpush1.bf16.msra.mxu0 0
  %5692 = vmatprep.subr.bf16.mxu0 0
  %5693 = vmatpush1.bf16.msra.mxu0 0
  %5694 = vmatprep.subr.bf16.mxu0 0
  %5695 = vmatpush1.bf16.msra.mxu0 0
  %5696 = vmatprep.subr.bf16.mxu0 0
  %5697 = vmatpush1.bf16.msra.mxu0 0
  %5698 = vmatprep.subr.bf16.mxu0 0
  %5699 = vmatpush1.bf16.msra.mxu0 0
  %5700 = vmatprep.subr.bf16.mxu0 0
  %5701 = vmatpush1.bf16.msra.mxu0 0
  %5702 = vmatprep.subr.bf16.mxu0 0
  %5703 = vmatpush1.bf16.msra.mxu0 0
  %5704 = vmatprep.mubr.bf16.mxu0 0
  %5705 = vmatmul.mubr.bf16.gmra.mrb[0].mxu0 %v4463
  %v5706 = vpop.f32.mrb[0].mxu0
  %v5707 = vadd.f32 0.0, %v5706
  %v5708 = vpop.f32.mrb[0].mxu0
  %v5709 = vpop.f32.mrb[0].mxu0
  %v5710 = vpop.f32.mrb[0].mxu0
  %5711 = vdwg.mxu0
  %v5712 = vadd.f32 %v5602, %v5707
  %s5713 = scalar_lea.vmem %s59, 2
  %v5714 = vld [vmem:[%s5713] sm:$0x1]
  %v5716 = vlaneseq
  %v5717 = vshrl.u32 %v5716, 7
  %v5718 = vsub.s32 0, %v5717
  %v5719 = vrot.slane %v5714, %v5718
  %v5721 = vadd.f32 %v5712, %v5719
  %v5722 = vmax.f32 %v5721, 0.0
  %s5723 = scalar_lea.vmem %s61, 128
  %v5724 = vld [vmem:[%s5723] sm:$0xf]
  %v5725 = vld [vmem:[%s5723 + $0x4] sm:$0xf]
  %v5726 = vld [vmem:[%s5723 + $0x8] sm:$0xf]
  %v5727 = vld [vmem:[%s5723 + $0xc] sm:$0xf]
  %v5728 = vld [vmem:[%s5723 + $0x10] sm:$0xf]
  %v5729 = vld [vmem:[%s5723 + $0x14] sm:$0xf]
  %v5730 = vld [vmem:[%s5723 + $0x18] sm:$0xf]
  %v5731 = vld [vmem:[%s5723 + $0x1c] sm:$0xf]
  %v5732 = vld [vmem:[%s5723 + $0x20] sm:$0xf]
  %v5733 = vld [vmem:[%s5723 + $0x24] sm:$0xf]
  %v5734 = vld [vmem:[%s5723 + $0x28] sm:$0xf]
  %v5735 = vld [vmem:[%s5723 + $0x2c] sm:$0xf]
  %v5736 = vld [vmem:[%s5723 + $0x30] sm:$0xf]
  %v5737 = vld [vmem:[%s5723 + $0x34] sm:$0xf]
  %v5738 = vld [vmem:[%s5723 + $0x38] sm:$0xf]
  %v5739 = vld [vmem:[%s5723 + $0x3c] sm:$0xf]
  %v5740 = vpack.c.bf16 %v5722, %v5722
  %s5741 = scalar_lea.vmem %s63, 2
  %v5742 = vld [vmem:[%s5741] sm:$0x1]
  %v5744 = vlaneseq
  %v5745 = vshrl.u32 %v5744, 7
  %v5746 = vsub.s32 0, %v5745
  %v5747 = vrot.slane %v5742, %v5746
  %v5765 = vunpack.c.l.b16 %v5724
  %v5766 = vunpack.c.l.b16 %v5725
  %v5767 = vunpack.c.l.b16 %v5726
  %v5768 = vunpack.c.l.b16 %v5727
  %v5769 = vunpack.c.l.b16 %v5728
  %v5770 = vunpack.c.l.b16 %v5729
  %v5771 = vunpack.c.l.b16 %v5730
  %v5772 = vunpack.c.l.b16 %v5731
  %v5773 = vunpack.c.l.b16 %v5732
  %v5774 = vunpack.c.l.b16 %v5733
  %v5775 = vunpack.c.l.b16 %v5734
  %v5776 = vunpack.c.l.b16 %v5735
  %v5777 = vunpack.c.l.b16 %v5736
  %v5778 = vunpack.c.l.b16 %v5737
  %v5779 = vunpack.c.l.b16 %v5738
  %v5780 = vunpack.c.l.b16 %v5739
  %v5781 = vpack.c.b16 %v5766, %v5765
  %v5782 = vpack.c.b16 %v5768, %v5767
  %v5783 = vpack.c.b16 %v5770, %v5769
  %v5784 = vpack.c.b16 %v5772, %v5771
  %v5785 = vpack.c.b16 %v5774, %v5773
  %v5786 = vpack.c.b16 %v5776, %v5775
  %v5787 = vpack.c.b16 %v5778, %v5777
  %v5788 = vpack.c.b16 %v5780, %v5779
  %5797 = vmatprep.subr.bf16.mxu0 0
  %5798 = vmatpush1.bf16.msra.mxu0 %v5781
  %5799 = vmatprep.subr.bf16.mxu0 0
  %5800 = vmatpush1.bf16.msra.mxu0 %v5782
  %5801 = vmatprep.subr.bf16.mxu0 0
  %5802 = vmatpush1.bf16.msra.mxu0 %v5783
  %5803 = vmatprep.subr.bf16.mxu0 0
  %5804 = vmatpush1.bf16.msra.mxu0 %v5784
  %5805 = vmatprep.subr.bf16.mxu0 0
  %5806 = vmatpush1.bf16.msra.mxu0 %v5785
  %5807 = vmatprep.subr.bf16.mxu0 0
  %5808 = vmatpush1.bf16.msra.mxu0 %v5786
  %5809 = vmatprep.subr.bf16.mxu0 0
  %5810 = vmatpush1.bf16.msra.mxu0 %v5787
  %5811 = vmatprep.subr.bf16.mxu0 0
  %5812 = vmatpush1.bf16.msra.mxu0 %v5788
  %5813 = vmatprep.subr.bf16.mxu0 0
  %5814 = vmatpush1.bf16.msra.mxu0 0
  %5815 = vmatprep.subr.bf16.mxu0 0
  %5816 = vmatpush1.bf16.msra.mxu0 0
  %5817 = vmatprep.subr.bf16.mxu0 0
  %5818 = vmatpush1.bf16.msra.mxu0 0
  %5819 = vmatprep.subr.bf16.mxu0 0
  %5820 = vmatpush1.bf16.msra.mxu0 0
  %5821 = vmatprep.subr.bf16.mxu0 0
  %5822 = vmatpush1.bf16.msra.mxu0 0
  %5823 = vmatprep.subr.bf16.mxu0 0
  %5824 = vmatpush1.bf16.msra.mxu0 0
  %5825 = vmatprep.subr.bf16.mxu0 0
  %5826 = vmatpush1.bf16.msra.mxu0 0
  %5827 = vmatprep.subr.bf16.mxu0 0
  %5828 = vmatpush1.bf16.msra.mxu0 0
  %5829 = vmatprep.mubr.bf16.mxu0 0
  %5830 = vmatmul.mubr.bf16.gmra.mrb[0].mxu0 %v5740
  %v5831 = vpop.f32.mrb[0].mxu0
  %v5832 = vadd.f32 %v5747, %v5831
  %v5833 = vpop.f32.mrb[0].mxu0
  %v5834 = vpop.f32.mrb[0].mxu0
  %v5835 = vpop.f32.mrb[0].mxu0
  %5836 = vdwg.mxu0
  %v5837 = vmax.f32 %v5304, 0.0
  %v5838 = vmax.f32 %v4750, 0.0
  %v5839 = vmax.f32 %v4753, 0.0
  %v5840 = vmax.f32 %v5832, 0.0
  %5841 = vst [vmem:[%s65] sm:$0xff] %v5837
  %5842 = vst [vmem:[%s67] sm:$0xff] %v5838
  %5843 = vst [vmem:[%s67 + $0x8] sm:$0xff] %v5839
  %5844 = vst [vmem:[%s69] sm:$0xff] %v5840
  // Predicated region
  $region130: #{fidelity_gnn_forward.1} parent=0 // pred_check
    _
  $region131: #{fidelity_gnn_forward.1} parent=0 // pred_check_branch
    %5846 = sbr.rel (0) target = $region133
  $region132: #{fidelity_gnn_forward.1} parent=0 // pred_region
    _
  $region133: #{fidelity_gnn_forward.1} parent=0 // pred_fallthru
    _
  // Predicated region
  $region134: #{fidelity_gnn_forward.1} parent=0 // pred_check
    _
  $region135: #{fidelity_gnn_forward.1} parent=0 // pred_check_branch
    %5848 = sbr.rel (0) target = $region137
  $region136: #{fidelity_gnn_forward.1} parent=0 // pred_region
    _
  $region137: #{fidelity_gnn_forward.1} parent=0 // pred_fallthru
    _
  // Predicated region
  $region138: #{fidelity_gnn_forward.1} parent=0 // pred_check
    _
  $region139: #{fidelity_gnn_forward.1} parent=0 // pred_check_branch
    %5850 = sbr.rel (0) target = $region141
  $region140: #{fidelity_gnn_forward.1} parent=0 // pred_region
    _
  $region141: #{fidelity_gnn_forward.1} parent=0 // pred_fallthru
    _
  // Predicated region
  $region142: #{fidelity_gnn_forward.1} parent=0 // pred_check
    _
  $region143: #{fidelity_gnn_forward.1} parent=0 // pred_check_branch
    %5852 = sbr.rel (0) target = $region145
  $region144: #{fidelity_gnn_forward.1} parent=0 // pred_region
    _
  $region145: #{fidelity_gnn_forward.1} parent=0 // pred_fallthru
    _
  // Predicated region
  $region146: #{fidelity_gnn_forward.1} parent=0 // pred_check
    _
  $region147: #{fidelity_gnn_forward.1} parent=0 // pred_check_branch
    %5854 = sbr.rel (0) target = $region149
  $region148: #{fidelity_gnn_forward.1} parent=0 // pred_region
    _
  $region149: #{fidelity_gnn_forward.1} parent=0 // pred_fallthru
    _
  // Predicated region
  $region150: #{fidelity_gnn_forward.1} parent=0 // pred_check
    _
  $region151: #{fidelity_gnn_forward.1} parent=0 // pred_check_branch
    %5856 = sbr.rel (0) target = $region153
  $region152: #{fidelity_gnn_forward.1} parent=0 // pred_region
    _
  $region153: #{fidelity_gnn_forward.1} parent=0 // pred_fallthru
    _

</llo_original>
